<compile_context>
chip_gen: v7x
topology: tpu7x:2x2x1
jax: 0.10.0
libtpu: 0.0.40
codegen_flags: <defaults>
</compile_context>

<pallas_src>
import jax
import jax.numpy as jnp
from jax.experimental import pallas as pl
from jax.experimental.pallas import tpu as pltpu


INPUT_DIM = 320
HIDDEN_DIM = 128
LATENT_DIM = 64


def _vae_kernel(x_ref, eps_ref,
                w1_ref, b1_ref,
                w2122_ref, b2122_ref,
                w3_ref, b3_ref,
                w4_ref, b4_ref,
                recon_ref, mulogvar_ref):
    # ---- encode: h1 = relu(x @ W1 + b1) -------------------------------------
    x = x_ref[...].astype(jnp.bfloat16)                       # (TB, 320) bf16
    h1 = jnp.dot(x, w1_ref[...],
                 preferred_element_type=jnp.float32) + b1_ref[...]
    h1 = jnp.maximum(h1, 0.0)                                  # (TB, 128) f32

    # ---- fused fc21|fc22: one 128-wide matmul, lane-dense output ------------
    ml = jnp.dot(h1.astype(jnp.bfloat16), w2122_ref[...],
                 preferred_element_type=jnp.float32) + b2122_ref[...]
    mu = ml[:, :LATENT_DIM]                                    # (TB, 64)
    logvar = ml[:, LATENT_DIM:]                                # (TB, 64)

    # ---- reparameterize: z = mu + eps * exp(0.5 * logvar) -------------------
    eps = eps_ref[...].astype(jnp.float32)
    z = mu + eps * jnp.exp(0.5 * logvar)                       # (TB, 64) f32

    # ---- decode: recon = relu(z @ W3 + b3) @ W4 + b4 ------------------------
    h3 = jnp.dot(z.astype(jnp.bfloat16), w3_ref[...],
                 preferred_element_type=jnp.float32) + b3_ref[...]
    h3 = jnp.maximum(h3, 0.0)
    recon = jnp.dot(h3.astype(jnp.bfloat16), w4_ref[...],
                    preferred_element_type=jnp.float32) + b4_ref[...]

    recon_ref[...] = recon.astype(recon_ref.dtype)             # bf16 store
    mulogvar_ref[...] = ml                                     # f32 (mu | logvar)


def prepare_params(params):
    """One-time conversion from PyTorch layout ((out,in) W, (out,) b) to the
    kernel's device layout: bf16 (in,out) weights, f32 (1,out) biases, with
    fc21/fc22 packed into a single 128-wide head. Do this ONCE, not per call."""
    def w(name):
        return jnp.asarray(params[name]).T.astype(jnp.bfloat16)

    def b(name):
        return jnp.asarray(params[name]).reshape(1, -1).astype(jnp.float32)

    return {
        "w1": w("fc1_w"), "b1": b("fc1_b"),
        "w2122": jnp.concatenate([w("fc21_w"), w("fc22_w")], axis=1),  # (128, 128)
        "b2122": jnp.concatenate([b("fc21_b"), b("fc22_b")], axis=1),  # (1, 128)
        "w3": w("fc3_w"), "b3": b("fc3_b"),
        "w4": w("fc4_w"), "b4": b("fc4_b"),
    }


def vae_forward(x, eps, dparams, *, batch_tile=1024, vmem_limit_bytes=None):
    """Run the fused VAE forward.

    x:   (B, INPUT_DIM)  bf16 (or f32) input
    eps: (B, LATENT_DIM) bf16 (or f32) reparameterization noise
    dparams: output of prepare_params()
    batch_tile: rows per grid step. Keep >= 512-1024 for HBM efficiency;
        cap around 2048 on v7x (64 MiB VMEM). For tiles > ~2048 on v5e/v6e,
        pass an explicit vmem_limit_bytes sized to the working set.
    Returns (recon[bf16], mu[f32], logvar[f32]).
    """
    B = x.shape[0]
    tb = min(batch_tile, B)
    if tb < B:
        tb = max(8, (tb // 8) * 8)        # keep the (8,128) sublane constraint
    nb = pl.cdiv(B, tb)                   # ragged last tile handled by Pallas

    def batch_spec(cols):
        # blocked over batch, full feature width
        return pl.BlockSpec((tb, cols), lambda i: (i, 0))

    def resident_spec(shape):
        # weights / biases: same block every step -> stay VMEM resident
        return pl.BlockSpec(shape, lambda i: (0, 0))

    args = (x, eps,
            dparams["w1"], dparams["b1"],
            dparams["w2122"], dparams["b2122"],
            dparams["w3"], dparams["b3"],
            dparams["w4"], dparams["b4"])

    in_specs = [batch_spec(INPUT_DIM), batch_spec(LATENT_DIM)]
    in_specs += [resident_spec(a.shape) for a in args[2:]]

    out_shape = (
        jax.ShapeDtypeStruct((B, INPUT_DIM), jnp.bfloat16),       # recon (bf16)
        jax.ShapeDtypeStruct((B, 2 * LATENT_DIM), jnp.float32),   # mu | logvar
    )
    out_specs = (batch_spec(INPUT_DIM), batch_spec(2 * LATENT_DIM))

    # Advisory cost hint for XLA's scheduler.
    itemsize = lambda a: jnp.dtype(a.dtype).itemsize
    flops = 2 * B * (INPUT_DIM * HIDDEN_DIM + HIDDEN_DIM * 2 * LATENT_DIM
                     + LATENT_DIM * HIDDEN_DIM + HIDDEN_DIM * INPUT_DIM)
    bytes_accessed = (
        int(x.size) * itemsize(x) + int(eps.size) * itemsize(eps)   # inputs
        + B * INPUT_DIM * 2                                         # recon bf16
        + B * 2 * LATENT_DIM * 4                                    # mu|logvar f32
        + sum(int(a.size) * itemsize(a) for a in args[2:])           # params
    )
    cost = pl.CostEstimate(flops=flops, transcendentals=B * LATENT_DIM,
                           bytes_accessed=bytes_accessed)

    cp_kwargs = dict(dimension_semantics=("parallel",))
    if vmem_limit_bytes is not None:
        cp_kwargs["vmem_limit_bytes"] = vmem_limit_bytes

    recon, mulogvar = pl.pallas_call(
        _vae_kernel,
        grid=(nb,),
        in_specs=in_specs,
        out_specs=out_specs,
        out_shape=out_shape,
        cost_estimate=cost,
        compiler_params=pltpu.CompilerParams(**cp_kwargs),
    )(*args)

    mu = mulogvar[:, :LATENT_DIM]
    logvar = mulogvar[:, LATENT_DIM:]
    return recon, mu, logvar


def init_params(key):
    """Deterministic synthetic parameter init (PyTorch Linear shapes)."""
    ks = jax.random.split(key, 10)

    def linear(kw, kb, out_dim, in_dim):
        bound = 1.0 / jnp.sqrt(in_dim)
        w = jax.random.uniform(kw, (out_dim, in_dim), jnp.float32, -bound, bound)
        b = jax.random.uniform(kb, (out_dim,), jnp.float32, -bound, bound)
        return w, b

    p = {}
    p["fc1_w"], p["fc1_b"] = linear(ks[0], ks[1], HIDDEN_DIM, INPUT_DIM)
    p["fc21_w"], p["fc21_b"] = linear(ks[2], ks[3], LATENT_DIM, HIDDEN_DIM)
    p["fc22_w"], p["fc22_b"] = linear(ks[4], ks[5], LATENT_DIM, HIDDEN_DIM)
    p["fc3_w"], p["fc3_b"] = linear(ks[6], ks[7], HIDDEN_DIM, LATENT_DIM)
    p["fc4_w"], p["fc4_b"] = linear(ks[8], ks[9], INPUT_DIM, HIDDEN_DIM)
    return p


def vae_reference(x, eps, params):
    """Pure-JAX reference with the same numerics as the kernel
    (bf16 matmul operands, f32 accumulation and biases)."""
    def mm(a, w_torch_layout):
        return jnp.dot(a.astype(jnp.bfloat16),
                       w_torch_layout.T.astype(jnp.bfloat16),
                       preferred_element_type=jnp.float32)

    h1 = jnp.maximum(mm(x, params["fc1_w"]) + params["fc1_b"], 0.0)
    mu = mm(h1, params["fc21_w"]) + params["fc21_b"]
    logvar = mm(h1, params["fc22_w"]) + params["fc22_b"]
    z = mu + eps.astype(jnp.float32) * jnp.exp(0.5 * logvar)
    h3 = jnp.maximum(mm(z, params["fc3_w"]) + params["fc3_b"], 0.0)
    recon = mm(h3, params["fc4_w"]) + params["fc4_b"]
    return recon, mu, logvar


if __name__ == "__main__":
    key = jax.random.PRNGKey(0)
    k_param, k_x, k_eps = jax.random.split(key, 3)

    # 2 full 1024-row tiles + a ragged 192-row tail -> exercises both the
    # batch pipeline and the pad-free ragged-last-block path.
    B = 2240
    params = init_params(k_param)
    dparams = prepare_params(params)  # one-time device-layout conversion

    # bf16 I/O on the bandwidth-dominant streams (x, eps, recon).
    x = jax.random.normal(k_x, (B, INPUT_DIM), jnp.float32).astype(jnp.bfloat16)
    # eps is the reparameterization noise (torch.randn_like(std) in the module);
    # supplied externally so the kernel stays deterministic and checkable.
    eps = jax.random.normal(k_eps, (B, LATENT_DIM), jnp.float32).astype(jnp.bfloat16)

    recon, mu, logvar = vae_forward(x, eps, dparams)
    jax.block_until_ready((recon, mu, logvar))

    # Numerical check against a plain-JAX reference with matching precision
    # (reference recon rounded to bf16 to match the kernel's output dtype).
    r_ref, mu_ref, lv_ref = vae_reference(x, eps, params)
    r_ref_bf16 = r_ref.astype(jnp.bfloat16).astype(jnp.float32)
    assert jnp.allclose(recon.astype(jnp.float32), r_ref_bf16, atol=2e-2, rtol=2e-2)
    assert jnp.allclose(mu, mu_ref, atol=2e-2, rtol=2e-2)
    assert jnp.allclose(logvar, lv_ref, atol=2e-2, rtol=2e-2)

    print("KERNEL_OK")
</pallas_src>

<mosaic_0001>
module attributes {stable_mosaic.version = 11 : i64} {
  func.func @_vae_kernel(%arg0: i32, %arg1: memref<1024x320xbf16, #tpu.memory_space<vmem>>, %arg2: memref<1024x64xbf16, #tpu.memory_space<vmem>>, %arg3: memref<320x128xbf16, #tpu.memory_space<vmem>>, %arg4: memref<1x128xf32, #tpu.memory_space<vmem>>, %arg5: memref<128x128xbf16, #tpu.memory_space<vmem>>, %arg6: memref<1x128xf32, #tpu.memory_space<vmem>>, %arg7: memref<64x128xbf16, #tpu.memory_space<vmem>>, %arg8: memref<1x128xf32, #tpu.memory_space<vmem>>, %arg9: memref<128x320xbf16, #tpu.memory_space<vmem>>, %arg10: memref<1x320xf32, #tpu.memory_space<vmem>>, %arg11: memref<1024x320xbf16, #tpu.memory_space<vmem>>, %arg12: memref<1024x128xf32, #tpu.memory_space<vmem>>) attributes {dimension_semantics = [#tpu.dimension_semantics<parallel>], iteration_bounds = array<i64: 3>, scalar_prefetch = 0 : i64, scratch_operands = 0 : i64, tpu.core_type = #tpu.core_type<tc>, window_params = [{transform_indices = @transform_0, window_bounds = array<i64: 1024, 320>}, {transform_indices = @transform_1, window_bounds = array<i64: 1024, 64>}, {pipeline_mode = #tpu.pipeline_mode<synchronous>, transform_indices = @transform_2, window_bounds = array<i64: 320, 128>}, {pipeline_mode = #tpu.pipeline_mode<synchronous>, transform_indices = @transform_3, window_bounds = array<i64: 1, 128>}, {pipeline_mode = #tpu.pipeline_mode<synchronous>, transform_indices = @transform_4, window_bounds = array<i64: 128, 128>}, {pipeline_mode = #tpu.pipeline_mode<synchronous>, transform_indices = @transform_5, window_bounds = array<i64: 1, 128>}, {pipeline_mode = #tpu.pipeline_mode<synchronous>, transform_indices = @transform_6, window_bounds = array<i64: 64, 128>}, {pipeline_mode = #tpu.pipeline_mode<synchronous>, transform_indices = @transform_7, window_bounds = array<i64: 1, 128>}, {pipeline_mode = #tpu.pipeline_mode<synchronous>, transform_indices = @transform_8, window_bounds = array<i64: 128, 320>}, {pipeline_mode = #tpu.pipeline_mode<synchronous>, transform_indices = @transform_9, window_bounds = array<i64: 1, 320>}, {transform_indices = @transform_10, window_bounds = array<i64: 1024, 320>}, {transform_indices = @transform_11, window_bounds = array<i64: 1024, 128>}]} {
    %c0 = arith.constant 0 : index
    %c0_0 = arith.constant 0 : index
    %0 = vector.load %arg1[%c0, %c0_0] : memref<1024x320xbf16, #tpu.memory_space<vmem>>, vector<1024x320xbf16>
    %c0_1 = arith.constant 0 : index
    %c0_2 = arith.constant 0 : index
    %1 = vector.load %arg3[%c0_1, %c0_2] : memref<320x128xbf16, #tpu.memory_space<vmem>>, vector<320x128xbf16>
    %cst = arith.constant dense<0.000000e+00> : vector<1024x128xf32>
    %2 = tpu.matmul %0, %1, %cst {dimension_numbers = #tpu.dot_dimension_numbers<[1], [0], [0], [1], [0, 0, 1, 1], [], []>} : vector<1024x320xbf16>, vector<320x128xbf16>, vector<1024x128xf32> -> vector<1024x128xf32>
    %c0_3 = arith.constant 0 : index
    %c0_4 = arith.constant 0 : index
    %3 = vector.load %arg4[%c0_3, %c0_4] : memref<1x128xf32, #tpu.memory_space<vmem>>, vector<1x128xf32>
    %4 = vector.broadcast %3 : vector<1x128xf32> to vector<1024x128xf32>
    %5 = arith.addf %2, %4 : vector<1024x128xf32>
    %cst_5 = arith.constant 0.000000e+00 : f32
    %6 = vector.broadcast %cst_5 : f32 to vector<1024x128xf32>
    %7 = arith.maximumf %5, %6 : vector<1024x128xf32>
    %8 = arith.truncf %7 : vector<1024x128xf32> to vector<1024x128xbf16>
    %c0_6 = arith.constant 0 : index
    %c0_7 = arith.constant 0 : index
    %9 = vector.load %arg5[%c0_6, %c0_7] : memref<128x128xbf16, #tpu.memory_space<vmem>>, vector<128x128xbf16>
    %cst_8 = arith.constant dense<0.000000e+00> : vector<1024x128xf32>
    %10 = tpu.matmul %8, %9, %cst_8 {dimension_numbers = #tpu.dot_dimension_numbers<[1], [0], [0], [1], [0, 0, 1, 1], [], []>} : vector<1024x128xbf16>, vector<128x128xbf16>, vector<1024x128xf32> -> vector<1024x128xf32>
    %c0_9 = arith.constant 0 : index
    %c0_10 = arith.constant 0 : index
    %11 = vector.load %arg6[%c0_9, %c0_10] : memref<1x128xf32, #tpu.memory_space<vmem>>, vector<1x128xf32>
    %12 = vector.broadcast %11 : vector<1x128xf32> to vector<1024x128xf32>
    %13 = arith.addf %10, %12 : vector<1024x128xf32>
    %14 = vector.extract_strided_slice %13 {offsets = [0, 0], sizes = [1024, 64], strides = [1, 1]} : vector<1024x128xf32> to vector<1024x64xf32>
    %15 = vector.extract_strided_slice %13 {offsets = [0, 64], sizes = [1024, 64], strides = [1, 1]} : vector<1024x128xf32> to vector<1024x64xf32>
    %c0_11 = arith.constant 0 : index
    %c0_12 = arith.constant 0 : index
    %16 = vector.load %arg2[%c0_11, %c0_12] : memref<1024x64xbf16, #tpu.memory_space<vmem>>, vector<1024x64xbf16>
    %17 = arith.extf %16 : vector<1024x64xbf16> to vector<1024x64xf32>
    %cst_13 = arith.constant 5.000000e-01 : f32
    %18 = vector.broadcast %cst_13 : f32 to vector<1024x64xf32>
    %19 = arith.mulf %18, %15 : vector<1024x64xf32>
    %20 = math.exp %19 : vector<1024x64xf32>
    %21 = arith.mulf %17, %20 : vector<1024x64xf32>
    %22 = arith.addf %14, %21 : vector<1024x64xf32>
    %23 = arith.truncf %22 : vector<1024x64xf32> to vector<1024x64xbf16>
    %c0_14 = arith.constant 0 : index
    %c0_15 = arith.constant 0 : index
    %24 = vector.load %arg7[%c0_14, %c0_15] : memref<64x128xbf16, #tpu.memory_space<vmem>>, vector<64x128xbf16>
    %cst_16 = arith.constant dense<0.000000e+00> : vector<1024x128xf32>
    %25 = tpu.matmul %23, %24, %cst_16 {dimension_numbers = #tpu.dot_dimension_numbers<[1], [0], [0], [1], [0, 0, 1, 1], [], []>} : vector<1024x64xbf16>, vector<64x128xbf16>, vector<1024x128xf32> -> vector<1024x128xf32>
    %c0_17 = arith.constant 0 : index
    %c0_18 = arith.constant 0 : index
    %26 = vector.load %arg8[%c0_17, %c0_18] : memref<1x128xf32, #tpu.memory_space<vmem>>, vector<1x128xf32>
    %27 = vector.broadcast %26 : vector<1x128xf32> to vector<1024x128xf32>
    %28 = arith.addf %25, %27 : vector<1024x128xf32>
    %cst_19 = arith.constant 0.000000e+00 : f32
    %29 = vector.broadcast %cst_19 : f32 to vector<1024x128xf32>
    %30 = arith.maximumf %28, %29 : vector<1024x128xf32>
    %31 = arith.truncf %30 : vector<1024x128xf32> to vector<1024x128xbf16>
    %c0_20 = arith.constant 0 : index
    %c0_21 = arith.constant 0 : index
    %32 = vector.load %arg9[%c0_20, %c0_21] : memref<128x320xbf16, #tpu.memory_space<vmem>>, vector<128x320xbf16>
    %cst_22 = arith.constant dense<0.000000e+00> : vector<1024x320xf32>
    %33 = tpu.matmul %31, %32, %cst_22 {dimension_numbers = #tpu.dot_dimension_numbers<[1], [0], [0], [1], [0, 0, 1, 1], [], []>} : vector<1024x128xbf16>, vector<128x320xbf16>, vector<1024x320xf32> -> vector<1024x320xf32>
    %c0_23 = arith.constant 0 : index
    %c0_24 = arith.constant 0 : index
    %34 = vector.load %arg10[%c0_23, %c0_24] : memref<1x320xf32, #tpu.memory_space<vmem>>, vector<1x320xf32>
    %35 = vector.broadcast %34 : vector<1x320xf32> to vector<1024x320xf32>
    %36 = arith.addf %33, %35 : vector<1024x320xf32>
    %37 = arith.truncf %36 : vector<1024x320xf32> to vector<1024x320xbf16>
    %c0_25 = arith.constant 0 : index
    %c0_26 = arith.constant 0 : index
    %38 = vector.load %arg11[%c0_25, %c0_26] : memref<1024x320xbf16, #tpu.memory_space<vmem>>, vector<1024x320xbf16>
    tpu.vector_store %arg11[%c0_25, %c0_26], %37 {strides = array<i32>} : memref<1024x320xbf16, #tpu.memory_space<vmem>>, vector<1024x320xbf16>,
    %c0_27 = arith.constant 0 : index
    %c0_28 = arith.constant 0 : index
    %39 = vector.load %arg12[%c0_27, %c0_28] : memref<1024x128xf32, #tpu.memory_space<vmem>>, vector<1024x128xf32>
    tpu.vector_store %arg12[%c0_27, %c0_28], %13 {strides = array<i32>} : memref<1024x128xf32, #tpu.memory_space<vmem>>, vector<1024x128xf32>,
    return
  }
  func.func @transform_0(%arg0: i32) -> (i32, i32) {
    %c0_i32 = arith.constant 0 : i32
    %c0_i32_0 = arith.constant 0 : i32
    return %arg0, %c0_i32 : i32, i32
  }
  func.func @transform_1(%arg0: i32) -> (i32, i32) {
    %c0_i32 = arith.constant 0 : i32
    %c0_i32_0 = arith.constant 0 : i32
    return %arg0, %c0_i32 : i32, i32
  }
  func.func @transform_2(%arg0: i32) -> (i32, i32) {
    %c0_i32 = arith.constant 0 : i32
    %c0_i32_0 = arith.constant 0 : i32
    %c0_i32_1 = arith.constant 0 : i32
    return %c0_i32, %c0_i32_0 : i32, i32
  }
  func.func @transform_3(%arg0: i32) -> (i32, i32) {
    %c0_i32 = arith.constant 0 : i32
    %c0_i32_0 = arith.constant 0 : i32
    %c0_i32_1 = arith.constant 0 : i32
    return %c0_i32, %c0_i32_0 : i32, i32
  }
  func.func @transform_4(%arg0: i32) -> (i32, i32) {
    %c0_i32 = arith.constant 0 : i32
    %c0_i32_0 = arith.constant 0 : i32
    %c0_i32_1 = arith.constant 0 : i32
    return %c0_i32, %c0_i32_0 : i32, i32
  }
  func.func @transform_5(%arg0: i32) -> (i32, i32) {
    %c0_i32 = arith.constant 0 : i32
    %c0_i32_0 = arith.constant 0 : i32
    %c0_i32_1 = arith.constant 0 : i32
    return %c0_i32, %c0_i32_0 : i32, i32
  }
  func.func @transform_6(%arg0: i32) -> (i32, i32) {
    %c0_i32 = arith.constant 0 : i32
    %c0_i32_0 = arith.constant 0 : i32
    %c0_i32_1 = arith.constant 0 : i32
    return %c0_i32, %c0_i32_0 : i32, i32
  }
  func.func @transform_7(%arg0: i32) -> (i32, i32) {
    %c0_i32 = arith.constant 0 : i32
    %c0_i32_0 = arith.constant 0 : i32
    %c0_i32_1 = arith.constant 0 : i32
    return %c0_i32, %c0_i32_0 : i32, i32
  }
  func.func @transform_8(%arg0: i32) -> (i32, i32) {
    %c0_i32 = arith.constant 0 : i32
    %c0_i32_0 = arith.constant 0 : i32
    %c0_i32_1 = arith.constant 0 : i32
    return %c0_i32, %c0_i32_0 : i32, i32
  }
  func.func @transform_9(%arg0: i32) -> (i32, i32) {
    %c0_i32 = arith.constant 0 : i32
    %c0_i32_0 = arith.constant 0 : i32
    %c0_i32_1 = arith.constant 0 : i32
    return %c0_i32, %c0_i32_0 : i32, i32
  }
  func.func @transform_10(%arg0: i32) -> (i32, i32) {
    %c0_i32 = arith.constant 0 : i32
    %c0_i32_0 = arith.constant 0 : i32
    return %arg0, %c0_i32 : i32, i32
  }
  func.func @transform_11(%arg0: i32) -> (i32, i32) {
    %c0_i32 = arith.constant 0 : i32
    %c0_i32_0 = arith.constant 0 : i32
    return %arg0, %c0_i32 : i32, i32
  }
}

</mosaic_0001>

<llo_original>
// kernel: tpu_custom_call.1
$region0: #{tpu_custom_call.1}
  #allocation0 [shape = 'u32[]', space=smem, size = 0x4, offset = 0x4, fixed_abs, tag = 'smem constant byte address 0x4 - core index']
  #allocation1 [shape = 'u32[144,128]{1,0:T(1,128)}', space=vmem, size = 0x12000, scoped, tag = 'internal scratch']
  %s0 = inlined_call_operand.vmem [shape: bf16[2240,320], index: 0, kind: input, shape index: {}]
  %s1 = inlined_call_operand.vmem [shape: bf16[2240,64], index: 1, kind: input, shape index: {}]
  %s2 = inlined_call_operand.vmem [shape: bf16[320,128], index: 2, kind: input, shape index: {}]
  %s3 = inlined_call_operand.vmem [shape: f32[1,128], index: 3, kind: input, shape index: {}]
  %s4 = inlined_call_operand.vmem [shape: bf16[128,128], index: 4, kind: input, shape index: {}]
  %s5 = inlined_call_operand.vmem [shape: f32[1,128], index: 5, kind: input, shape index: {}]
  %s6 = inlined_call_operand.vmem [shape: bf16[64,128], index: 6, kind: input, shape index: {}]
  %s7 = inlined_call_operand.vmem [shape: f32[1,128], index: 7, kind: input, shape index: {}]
  %s8 = inlined_call_operand.vmem [shape: bf16[128,320], index: 8, kind: input, shape index: {}]
  %s9 = inlined_call_operand.vmem [shape: f32[1,320], index: 9, kind: input, shape index: {}]
  %s10 = inlined_call_operand.vmem [shape: bf16[2240,320], index: 10, kind: output, shape index: {0}]
  %s11 = inlined_call_operand.hbm [shape: f32[2240,128], index: 11, kind: output, shape index: {1}]
  %12 = xla_tuple %s10, %s11
  %s13 = sld [smem:[#allocation0]]
  $region117: #{tpu_custom_call.1} parent=0
    _
  %s15 = ssub.s32 1, %s13
  %s16 = scalar_select 0, %s15, %s13
  $region1: #{tpu_custom_call.1} parent=0
    #allocation2 [shape = 'u8[1572864]{0}', space=vmem, size = 0x180000, scoped, tag = 'output window, operand 0']
    #allocation3 [shape = 'u8[1048576]{0}', space=vmem, size = 0x100000, scoped, tag = 'output window, operand 1']
    #allocation4 [shape = 's32[2]{0}', space=sflag, size = 0x8, scoped, tag = 'scoped memory for tpu_custom_call.1']
    %17 = vsyncpa [#allocation4], 0
    %s18 = scalar_lea.sflag [#allocation4], 1
    %19 = vsyncpa %s18, 0
    loop: start=0, step=1, limit=5
    $region2: #{tpu_custom_call.1} parent=1 // loop_pre_header
      _
    $region3: #{tpu_custom_call.1} parent=1 // loop_header
      %s21 = sphi 0, %s25
      %p22 = scmp.ge.s32.totalorder %s21, 5
      %s31 = sphi 0, %s33
      %s34 = sphi 0, %s31
      %s35 = sphi 0, %s34
      %s51 = sphi 0, %s35
      %s57 = sphi 0, %s59
      %s60 = sphi 0, %s57
      %s61 = sphi 0, %s60
      %s77 = sphi 0, %s61
      %s81 = sphi 0, %s81
      %s83 = sphi 0, %s81
      %s84 = sphi 0, %s83
      %s98 = sphi 0, %s84
      %s102 = sphi 0, %s102
      %s104 = sphi 0, %s102
      %s105 = sphi 0, %s104
      %s119 = sphi 0, %s105
      %s123 = sphi 0, %s123
      %s125 = sphi 0, %s123
      %s126 = sphi 0, %s125
      %s140 = sphi 0, %s126
      %s144 = sphi 0, %s144
      %s146 = sphi 0, %s144
      %s147 = sphi 0, %s146
      %s161 = sphi 0, %s147
      %s165 = sphi 0, %s165
      %s167 = sphi 0, %s165
      %s168 = sphi 0, %s167
      %s182 = sphi 0, %s168
      %s186 = sphi 0, %s186
      %s188 = sphi 0, %s186
      %s189 = sphi 0, %s188
      %s203 = sphi 0, %s189
      %s207 = sphi 0, %s207
      %s209 = sphi 0, %s207
      %s210 = sphi 0, %s209
      %s224 = sphi 0, %s210
      %s228 = sphi 0, %s228
      %s230 = sphi 0, %s228
      %s231 = sphi 0, %s230
      %s245 = sphi 0, %s231
      %s251 = sphi 0, %s253
      %s254 = sphi 0, %s251
      %s255 = sphi 0, %s254
      %s271 = sphi 0, %s255
      %s277 = sphi 0, %s279
      %s280 = sphi 0, %s277
      %s281 = sphi 0, %s280
      %s297 = sphi 0, %s281
    $region4: #{tpu_custom_call.1} parent=1 // loop_header_branch
      %24 = sbr.rel (%p22) target = $region8
    $region5: #{tpu_custom_call.1} parent=1 // loop_body
      %s26 = ssub.s32 %s21, 1
      %s27 = ssub.s32 %s21, 2
      %s28 = sadd.s32 %s21, 1
      %s29 = ssub.s32 %s21, %s28
      %p30 = scmp.eq.s32.totalorder %s29, 0
      %s32 = sadd.s32 %s31, 1
      %s33 = scalar_select %p30, %s31, %s32
      %p36 = pneg %p30
      %p37 = scmp.eq.s32.totalorder %s21, 2
      %p38 = por %p36, %p37
      %p39 = scmp.ne.s32.totalorder %s31, %s34
      %p40 = scmp.eq.s32.totalorder %s21, 0
      %p41 = por %p39, %p40
      %p42 = scmp.ne.s32.totalorder %s31, %s34
      %p43 = scmp.eq.s32.totalorder %s26, 2
      %p44 = por %p42, %p43
      %p45 = scmp.ne.s32.totalorder %s34, %s35
      %p46 = scmp.eq.s32.totalorder %s26, 0
      %p47 = por %p45, %p46
      %p48 = scmp.ne.s32.totalorder %s34, %s35
      %p49 = scmp.eq.s32.totalorder %s27, 2
      %p50 = por %p48, %p49
      %p52 = scmp.ne.s32.totalorder %s35, %s51
      %p53 = scmp.eq.s32.totalorder %s27, 0
      %p54 = por %p52, %p53
      %s55 = ssub.s32 %s21, %s28
      %p56 = scmp.eq.s32.totalorder %s55, 0
      %s58 = sadd.s32 %s57, 1
      %s59 = scalar_select %p56, %s57, %s58
      %p62 = pneg %p56
      %p63 = scmp.eq.s32.totalorder %s21, 2
      %p64 = por %p62, %p63
      %p65 = scmp.ne.s32.totalorder %s57, %s60
      %p66 = scmp.eq.s32.totalorder %s21, 0
      %p67 = por %p65, %p66
      %p68 = scmp.ne.s32.totalorder %s57, %s60
      %p69 = scmp.eq.s32.totalorder %s26, 2
      %p70 = por %p68, %p69
      %p71 = scmp.ne.s32.totalorder %s60, %s61
      %p72 = scmp.eq.s32.totalorder %s26, 0
      %p73 = por %p71, %p72
      %p74 = scmp.ne.s32.totalorder %s60, %s61
      %p75 = scmp.eq.s32.totalorder %s27, 2
      %p76 = por %p74, %p75
      %p78 = scmp.ne.s32.totalorder %s61, %s77
      %p79 = scmp.eq.s32.totalorder %s27, 0
      %p80 = por %p78, %p79
      %s82 = sadd.s32 %s81, 1
      %p85 = scmp.eq.s32.totalorder %s21, 2
      %p86 = scmp.ne.s32.totalorder %s81, %s83
      %p87 = scmp.eq.s32.totalorder %s21, 0
      %p88 = por %p86, %p87
      %p89 = scmp.ne.s32.totalorder %s81, %s83
      %p90 = scmp.eq.s32.totalorder %s26, 2
      %p91 = por %p89, %p90
      %p92 = scmp.ne.s32.totalorder %s83, %s84
      %p93 = scmp.eq.s32.totalorder %s26, 0
      %p94 = por %p92, %p93
      %p95 = scmp.ne.s32.totalorder %s83, %s84
      %p96 = scmp.eq.s32.totalorder %s27, 2
      %p97 = por %p95, %p96
      %p99 = scmp.ne.s32.totalorder %s84, %s98
      %p100 = scmp.eq.s32.totalorder %s27, 0
      %p101 = por %p99, %p100
      %s103 = sadd.s32 %s102, 1
      %p106 = scmp.eq.s32.totalorder %s21, 2
      %p107 = scmp.ne.s32.totalorder %s102, %s104
      %p108 = scmp.eq.s32.totalorder %s21, 0
      %p109 = por %p107, %p108
      %p110 = scmp.ne.s32.totalorder %s102, %s104
      %p111 = scmp.eq.s32.totalorder %s26, 2
      %p112 = por %p110, %p111
      %p113 = scmp.ne.s32.totalorder %s104, %s105
      %p114 = scmp.eq.s32.totalorder %s26, 0
      %p115 = por %p113, %p114
      %p116 = scmp.ne.s32.totalorder %s104, %s105
      %p117 = scmp.eq.s32.totalorder %s27, 2
      %p118 = por %p116, %p117
      %p120 = scmp.ne.s32.totalorder %s105, %s119
      %p121 = scmp.eq.s32.totalorder %s27, 0
      %p122 = por %p120, %p121
      %s124 = sadd.s32 %s123, 1
      %p127 = scmp.eq.s32.totalorder %s21, 2
      %p128 = scmp.ne.s32.totalorder %s123, %s125
      %p129 = scmp.eq.s32.totalorder %s21, 0
      %p130 = por %p128, %p129
      %p131 = scmp.ne.s32.totalorder %s123, %s125
      %p132 = scmp.eq.s32.totalorder %s26, 2
      %p133 = por %p131, %p132
      %p134 = scmp.ne.s32.totalorder %s125, %s126
      %p135 = scmp.eq.s32.totalorder %s26, 0
      %p136 = por %p134, %p135
      %p137 = scmp.ne.s32.totalorder %s125, %s126
      %p138 = scmp.eq.s32.totalorder %s27, 2
      %p139 = por %p137, %p138
      %p141 = scmp.ne.s32.totalorder %s126, %s140
      %p142 = scmp.eq.s32.totalorder %s27, 0
      %p143 = por %p141, %p142
      %s145 = sadd.s32 %s144, 1
      %p148 = scmp.eq.s32.totalorder %s21, 2
      %p149 = scmp.ne.s32.totalorder %s144, %s146
      %p150 = scmp.eq.s32.totalorder %s21, 0
      %p151 = por %p149, %p150
      %p152 = scmp.ne.s32.totalorder %s144, %s146
      %p153 = scmp.eq.s32.totalorder %s26, 2
      %p154 = por %p152, %p153
      %p155 = scmp.ne.s32.totalorder %s146, %s147
      %p156 = scmp.eq.s32.totalorder %s26, 0
      %p157 = por %p155, %p156
      %p158 = scmp.ne.s32.totalorder %s146, %s147
      %p159 = scmp.eq.s32.totalorder %s27, 2
      %p160 = por %p158, %p159
      %p162 = scmp.ne.s32.totalorder %s147, %s161
      %p163 = scmp.eq.s32.totalorder %s27, 0
      %p164 = por %p162, %p163
      %s166 = sadd.s32 %s165, 1
      %p169 = scmp.eq.s32.totalorder %s21, 2
      %p170 = scmp.ne.s32.totalorder %s165, %s167
      %p171 = scmp.eq.s32.totalorder %s21, 0
      %p172 = por %p170, %p171
      %p173 = scmp.ne.s32.totalorder %s165, %s167
      %p174 = scmp.eq.s32.totalorder %s26, 2
      %p175 = por %p173, %p174
      %p176 = scmp.ne.s32.totalorder %s167, %s168
      %p177 = scmp.eq.s32.totalorder %s26, 0
      %p178 = por %p176, %p177
      %p179 = scmp.ne.s32.totalorder %s167, %s168
      %p180 = scmp.eq.s32.totalorder %s27, 2
      %p181 = por %p179, %p180
      %p183 = scmp.ne.s32.totalorder %s168, %s182
      %p184 = scmp.eq.s32.totalorder %s27, 0
      %p185 = por %p183, %p184
      %s187 = sadd.s32 %s186, 1
      %p190 = scmp.eq.s32.totalorder %s21, 2
      %p191 = scmp.ne.s32.totalorder %s186, %s188
      %p192 = scmp.eq.s32.totalorder %s21, 0
      %p193 = por %p191, %p192
      %p194 = scmp.ne.s32.totalorder %s186, %s188
      %p195 = scmp.eq.s32.totalorder %s26, 2
      %p196 = por %p194, %p195
      %p197 = scmp.ne.s32.totalorder %s188, %s189
      %p198 = scmp.eq.s32.totalorder %s26, 0
      %p199 = por %p197, %p198
      %p200 = scmp.ne.s32.totalorder %s188, %s189
      %p201 = scmp.eq.s32.totalorder %s27, 2
      %p202 = por %p200, %p201
      %p204 = scmp.ne.s32.totalorder %s189, %s203
      %p205 = scmp.eq.s32.totalorder %s27, 0
      %p206 = por %p204, %p205
      %s208 = sadd.s32 %s207, 1
      %p211 = scmp.eq.s32.totalorder %s21, 2
      %p212 = scmp.ne.s32.totalorder %s207, %s209
      %p213 = scmp.eq.s32.totalorder %s21, 0
      %p214 = por %p212, %p213
      %p215 = scmp.ne.s32.totalorder %s207, %s209
      %p216 = scmp.eq.s32.totalorder %s26, 2
      %p217 = por %p215, %p216
      %p218 = scmp.ne.s32.totalorder %s209, %s210
      %p219 = scmp.eq.s32.totalorder %s26, 0
      %p220 = por %p218, %p219
      %p221 = scmp.ne.s32.totalorder %s209, %s210
      %p222 = scmp.eq.s32.totalorder %s27, 2
      %p223 = por %p221, %p222
      %p225 = scmp.ne.s32.totalorder %s210, %s224
      %p226 = scmp.eq.s32.totalorder %s27, 0
      %p227 = por %p225, %p226
      %s229 = sadd.s32 %s228, 1
      %p232 = scmp.eq.s32.totalorder %s21, 2
      %p233 = scmp.ne.s32.totalorder %s228, %s230
      %p234 = scmp.eq.s32.totalorder %s21, 0
      %p235 = por %p233, %p234
      %p236 = scmp.ne.s32.totalorder %s228, %s230
      %p237 = scmp.eq.s32.totalorder %s26, 2
      %p238 = por %p236, %p237
      %p239 = scmp.ne.s32.totalorder %s230, %s231
      %p240 = scmp.eq.s32.totalorder %s26, 0
      %p241 = por %p239, %p240
      %p242 = scmp.ne.s32.totalorder %s230, %s231
      %p243 = scmp.eq.s32.totalorder %s27, 2
      %p244 = por %p242, %p243
      %p246 = scmp.ne.s32.totalorder %s231, %s245
      %p247 = scmp.eq.s32.totalorder %s27, 0
      %p248 = por %p246, %p247
      %s249 = ssub.s32 %s21, %s28
      %p250 = scmp.eq.s32.totalorder %s249, 0
      %s252 = sadd.s32 %s251, 1
      %s253 = scalar_select %p250, %s251, %s252
      %p256 = pneg %p250
      %p257 = scmp.eq.s32.totalorder %s21, 2
      %p258 = por %p256, %p257
      %p259 = scmp.ne.s32.totalorder %s251, %s254
      %p260 = scmp.eq.s32.totalorder %s21, 0
      %p261 = por %p259, %p260
      %p262 = scmp.ne.s32.totalorder %s251, %s254
      %p263 = scmp.eq.s32.totalorder %s26, 2
      %p264 = por %p262, %p263
      %p265 = scmp.ne.s32.totalorder %s254, %s255
      %p266 = scmp.eq.s32.totalorder %s26, 0
      %p267 = por %p265, %p266
      %p268 = scmp.ne.s32.totalorder %s254, %s255
      %p269 = scmp.eq.s32.totalorder %s27, 2
      %p270 = por %p268, %p269
      %p272 = scmp.ne.s32.totalorder %s255, %s271
      %p273 = scmp.eq.s32.totalorder %s27, 0
      %p274 = por %p272, %p273
      %s275 = ssub.s32 %s21, %s28
      %p276 = scmp.eq.s32.totalorder %s275, 0
      %s278 = sadd.s32 %s277, 1
      %s279 = scalar_select %p276, %s277, %s278
      %p282 = pneg %p276
      %p283 = scmp.eq.s32.totalorder %s21, 2
      %p284 = por %p282, %p283
      %p285 = scmp.ne.s32.totalorder %s277, %s280
      %p286 = scmp.eq.s32.totalorder %s21, 0
      %p287 = por %p285, %p286
      %p288 = scmp.ne.s32.totalorder %s277, %s280
      %p289 = scmp.eq.s32.totalorder %s26, 2
      %p290 = por %p288, %p289
      %p291 = scmp.ne.s32.totalorder %s280, %s281
      %p292 = scmp.eq.s32.totalorder %s26, 0
      %p293 = por %p291, %p292
      %p294 = scmp.ne.s32.totalorder %s280, %s281
      %p295 = scmp.eq.s32.totalorder %s27, 2
      %p296 = por %p294, %p295
      %p298 = scmp.ne.s32.totalorder %s281, %s297
      %p299 = scmp.eq.s32.totalorder %s27, 0
      %p300 = por %p298, %p299
      %p301 = scmp.le.s32.totalorder 1, %s21
      %p302 = scmp.lt.s32.totalorder %s21, 4
      %p303 = pnand %p301, %p302
      %p304 = pneg %p303
      // Predicated region
      $region9: #{tpu_custom_call.1} parent=5 // pred_check
        _
      $region10: #{tpu_custom_call.1} parent=5 // pred_check_branch
        %306 = sbr.rel (%p303) target = $region12
      $region11: #{tpu_custom_call.1} parent=5 // pred_region
        %s307 = ssub.s32 %s21, 1
        // Predicated region
        $region13: #{tpu_custom_call.1} parent=11 // pred_check
          %p308 = pneg %p94
        $region14: #{tpu_custom_call.1} parent=11 // pred_check_branch
          %310 = sbr.rel (%p308) target = $region16
        $region15: #{tpu_custom_call.1} parent=11 // pred_region
          _
        $region16: #{tpu_custom_call.1} parent=11 // pred_fallthru
          _
        // Predicated region
        $region17: #{tpu_custom_call.1} parent=11 // pred_check
          %p311 = pneg %p115
        $region18: #{tpu_custom_call.1} parent=11 // pred_check_branch
          %313 = sbr.rel (%p311) target = $region20
        $region19: #{tpu_custom_call.1} parent=11 // pred_region
          _
        $region20: #{tpu_custom_call.1} parent=11 // pred_fallthru
          _
        // Predicated region
        $region21: #{tpu_custom_call.1} parent=11 // pred_check
          %p314 = pneg %p136
        $region22: #{tpu_custom_call.1} parent=11 // pred_check_branch
          %316 = sbr.rel (%p314) target = $region24
        $region23: #{tpu_custom_call.1} parent=11 // pred_region
          _
        $region24: #{tpu_custom_call.1} parent=11 // pred_fallthru
          _
        // Predicated region
        $region25: #{tpu_custom_call.1} parent=11 // pred_check
          %p317 = pneg %p157
        $region26: #{tpu_custom_call.1} parent=11 // pred_check_branch
          %319 = sbr.rel (%p317) target = $region28
        $region27: #{tpu_custom_call.1} parent=11 // pred_region
          _
        $region28: #{tpu_custom_call.1} parent=11 // pred_fallthru
          _
        // Predicated region
        $region29: #{tpu_custom_call.1} parent=11 // pred_check
          %p320 = pneg %p178
        $region30: #{tpu_custom_call.1} parent=11 // pred_check_branch
          %322 = sbr.rel (%p320) target = $region32
        $region31: #{tpu_custom_call.1} parent=11 // pred_region
          _
        $region32: #{tpu_custom_call.1} parent=11 // pred_fallthru
          _
        // Predicated region
        $region33: #{tpu_custom_call.1} parent=11 // pred_check
          %p323 = pneg %p199
        $region34: #{tpu_custom_call.1} parent=11 // pred_check_branch
          %325 = sbr.rel (%p323) target = $region36
        $region35: #{tpu_custom_call.1} parent=11 // pred_region
          _
        $region36: #{tpu_custom_call.1} parent=11 // pred_fallthru
          _
        // Predicated region
        $region37: #{tpu_custom_call.1} parent=11 // pred_check
          %p326 = pneg %p220
        $region38: #{tpu_custom_call.1} parent=11 // pred_check_branch
          %328 = sbr.rel (%p326) target = $region40
        $region39: #{tpu_custom_call.1} parent=11 // pred_region
          _
        $region40: #{tpu_custom_call.1} parent=11 // pred_fallthru
          _
        // Predicated region
        $region41: #{tpu_custom_call.1} parent=11 // pred_check
          %p329 = pneg %p241
        $region42: #{tpu_custom_call.1} parent=11 // pred_check_branch
          %331 = sbr.rel (%p329) target = $region44
        $region43: #{tpu_custom_call.1} parent=11 // pred_region
          _
        $region44: #{tpu_custom_call.1} parent=11 // pred_fallthru
          _
      $region12: #{tpu_custom_call.1} parent=5 // pred_fallthru
        _
      %p332 = scmp.lt.s32.totalorder %s21, 3
      // Predicated region
      $region45: #{tpu_custom_call.1} parent=5 // pred_check
        %p333 = pneg %p332
      $region46: #{tpu_custom_call.1} parent=5 // pred_check_branch
        %335 = sbr.rel (%p333) target = $region48
      $region47: #{tpu_custom_call.1} parent=5 // pred_region
        // Predicated region
        $region49: #{tpu_custom_call.1} parent=47 // pred_check
          %p336 = pneg %p41
        $region50: #{tpu_custom_call.1} parent=47 // pred_check_branch
          %338 = sbr.rel (%p336) target = $region52
        $region51: #{tpu_custom_call.1} parent=47 // pred_region
          %s339 = smul.u32 128, %s21
          %s340 = ssub.s32 280, %s339
          %p341 = scmp.lt.s32.totalorder %s340, 128
          %s342 = scalar_select %p341, %s340, 128
          %s343 = smul.u32 64, %s342
          %s344 = smul.u32 %s343, 3
          %p345 = scmp.lt.s32.totalorder %s339, 279
          %s346 = scalar_select %p345, %s339, 279
          %s347 = smul.addr %s346, 3
          %s348 = smul.addr %s347, 4
          %s349 = scalar_lea.vmem %s0, %s348
          %s350 = smul.u32 128, %s21
          %s351 = ssub.s32 280, %s350
          %p352 = scmp.lt.s32.totalorder %s351, 128
          %s353 = scalar_select %p352, %s351, 128
          %s354 = smul.u32 64, %s353
          %s355 = smul.u32 %s354, 3
        $region52: #{tpu_custom_call.1} parent=47 // pred_fallthru
          _
        // Predicated region
        $region53: #{tpu_custom_call.1} parent=47 // pred_check
          %p356 = pneg %p67
        $region54: #{tpu_custom_call.1} parent=47 // pred_check_branch
          %358 = sbr.rel (%p356) target = $region56
        $region55: #{tpu_custom_call.1} parent=47 // pred_region
          %s359 = smul.u32 128, %s21
          %s360 = ssub.s32 280, %s359
          %p361 = scmp.lt.s32.totalorder %s360, 128
          %s362 = scalar_select %p361, %s360, 128
          %s363 = smul.u32 64, %s362
          %p364 = scmp.lt.s32.totalorder %s359, 279
          %s365 = scalar_select %p364, %s359, 279
          %s366 = smul.addr %s365, 4
          %s367 = scalar_lea.vmem %s1, %s366
          %s368 = smul.u32 128, %s21
          %s369 = ssub.s32 280, %s368
          %p370 = scmp.lt.s32.totalorder %s369, 128
          %s371 = scalar_select %p370, %s369, 128
          %s372 = smul.u32 64, %s371
        $region56: #{tpu_custom_call.1} parent=47 // pred_fallthru
          _
      $region48: #{tpu_custom_call.1} parent=5 // pred_fallthru
        _
      %p373 = scmp.le.s32.totalorder 1, %s21
      %p374 = scmp.lt.s32.totalorder %s21, 4
      %p375 = pnand %p373, %p374
      %p376 = pneg %p375
      // Predicated region
      $region57: #{tpu_custom_call.1} parent=5 // pred_check
        _
      $region58: #{tpu_custom_call.1} parent=5 // pred_check_branch
        %378 = sbr.rel (%p375) target = $region60
      $region59: #{tpu_custom_call.1} parent=5 // pred_region
        %s379 = ssub.s32 %s21, 1
        %s380 = smul.u32 128, %s26
        %s381 = ssub.s32 280, %s380
        %p382 = scmp.lt.s32.totalorder %s381, 128
        %s383 = scalar_select %p382, %s381, 128
        %s384 = smul.u32 64, %s383
        %s385 = smul.u32 %s384, 3
        %p386 = scmp.lt.s32.totalorder %s380, 279
        %s387 = scalar_select %p386, %s380, 279
        %s388 = smul.addr %s387, 3
        %s389 = smul.addr %s388, 4
        %s390 = scalar_lea.vmem %s0, %s389
        %p391 = pneg %p47
        %p392 = pneg %p44
        %s393 = smul.u32 128, %s26
        %s394 = ssub.s32 280, %s393
        %p395 = scmp.lt.s32.totalorder %s394, 128
        %s396 = scalar_select %p395, %s394, 128
        %s397 = smul.u32 64, %s396
        %p398 = scmp.lt.s32.totalorder %s393, 279
        %s399 = scalar_select %p398, %s393, 279
        %s400 = smul.addr %s399, 4
        %s401 = scalar_lea.vmem %s1, %s400
        %p402 = pneg %p73
        %p403 = pneg %p70
        %p404 = pneg %p94
        %p405 = pneg %p91
        %p406 = pneg %p115
        %p407 = pneg %p112
        %p408 = pneg %p136
        %p409 = pneg %p133
        %p410 = pneg %p157
        %p411 = pneg %p154
        %p412 = pneg %p178
        %p413 = pneg %p175
        %p414 = pneg %p199
        %p415 = pneg %p196
        %p416 = pneg %p220
        %p417 = pneg %p217
        %p418 = pneg %p241
        %p419 = pneg %p238
        %p420 = pneg %p267
        %p421 = pneg %p264
        %s422 = sand.u32 %s254, 1
        %s423 = sand.u32 %s254, 1
        %s424 = smul.addr %s423, 1536
        %s425 = scalar_lea.vmem [#allocation2], %s424
        %p426 = pneg %p293
        %p427 = pneg %p290
        %s428 = sand.u32 %s280, 1
        %s429 = scalar_lea.sflag [#allocation4], %s428
        %s430 = sand.u32 %s280, 1
        %s431 = smul.addr %s430, 1024
        %s432 = scalar_lea.vmem [#allocation3], %s431
        %s433 = smul.u32 128, %s26
        %s434 = ssub.s32 280, %s433
        %p435 = scmp.lt.s32.totalorder %s434, 128
        %s436 = scalar_select %p435, %s434, 128
        %s437 = smul.u32 64, %s436
        %s438 = smul.u32 %s437, 3
        %p439 = scmp.lt.s32.totalorder %s433, 279
        %s440 = scalar_select %p439, %s433, 279
        %s441 = smul.addr %s440, 3
        %s442 = smul.addr %s441, 4
        %s443 = scalar_lea.vmem %s0, %s442
        %s444 = smul.u32 128, %s26
        %s445 = ssub.s32 280, %s444
        %p446 = scmp.lt.s32.totalorder %s445, 128
        %s447 = scalar_select %p446, %s445, 128
        %s448 = smul.u32 64, %s447
        %s449 = smul.u32 %s448, 3
        %s450 = smul.u32 128, %s26
        %s451 = ssub.s32 280, %s450
        %p452 = scmp.lt.s32.totalorder %s451, 128
        %s453 = scalar_select %p452, %s451, 128
        %s454 = smul.u32 64, %s453
        %p455 = scmp.lt.s32.totalorder %s450, 279
        %s456 = scalar_select %p455, %s450, 279
        %s457 = smul.addr %s456, 4
        %s458 = scalar_lea.vmem %s1, %s457
        %s459 = smul.u32 128, %s26
        %s460 = ssub.s32 280, %s459
        %p461 = scmp.lt.s32.totalorder %s460, 128
        %s462 = scalar_select %p461, %s460, 128
        %s463 = smul.u32 64, %s462
        %s464 = smul.u32 128, %s26
        %s465 = ssub.s32 280, %s464
        %p466 = scmp.lt.s32.totalorder %s465, 128
        %s467 = scalar_select %p466, %s465, 128
        %s468 = smul.u32 64, %s467
        %s469 = smul.u32 %s468, 3
        %s470 = smul.u32 128, %s26
        %s471 = ssub.s32 280, %s470
        %p472 = scmp.lt.s32.totalorder %s471, 128
        %s473 = scalar_select %p472, %s471, 128
        %s474 = smul.u32 128, %s473
        %v476 = vld [vmem:[%s443] sm:$0xff]
        %v477 = vld [vmem:[%s443 + $0x8] sm:$0xf]
        %v478 = vld [vmem:[%s443 + $0xc] sm:$0xff]
        %v479 = vld [vmem:[%s443 + $0x14] sm:$0xf]
        %v480 = vld [vmem:[%s443 + $0x18] sm:$0xff]
        %v481 = vld [vmem:[%s443 + $0x20] sm:$0xf]
        %v482 = vld [vmem:[%s443 + $0x24] sm:$0xff]
        %v483 = vld [vmem:[%s443 + $0x2c] sm:$0xf]
        %v484 = vld [vmem:[%s443 + $0x30] sm:$0xff]
        %v485 = vld [vmem:[%s443 + $0x38] sm:$0xf]
        %v486 = vld [vmem:[%s443 + $0x3c] sm:$0xff]
        %v487 = vld [vmem:[%s443 + $0x44] sm:$0xf]
        %v488 = vld [vmem:[%s443 + $0x48] sm:$0xff]
        %v489 = vld [vmem:[%s443 + $0x50] sm:$0xf]
        %v490 = vld [vmem:[%s443 + $0x54] sm:$0xff]
        %v491 = vld [vmem:[%s443 + $0x5c] sm:$0xf]
        %v492 = vld [vmem:[%s443 + $0x60] sm:$0xff]
        %v493 = vld [vmem:[%s443 + $0x68] sm:$0xf]
        %v494 = vld [vmem:[%s443 + $0x6c] sm:$0xff]
        %v495 = vld [vmem:[%s443 + $0x74] sm:$0xf]
        %v496 = vld [vmem:[%s443 + $0x78] sm:$0xff]
        %v497 = vld [vmem:[%s443 + $0x80] sm:$0xf]
        %v498 = vld [vmem:[%s443 + $0x84] sm:$0xff]
        %v499 = vld [vmem:[%s443 + $0x8c] sm:$0xf]
        %v500 = vld [vmem:[%s443 + $0x90] sm:$0xff]
        %v501 = vld [vmem:[%s443 + $0x98] sm:$0xf]
        %v502 = vld [vmem:[%s443 + $0x9c] sm:$0xff]
        %v503 = vld [vmem:[%s443 + $0xa4] sm:$0xf]
        %v504 = vld [vmem:[%s443 + $0xa8] sm:$0xff]
        %v505 = vld [vmem:[%s443 + $0xb0] sm:$0xf]
        %v506 = vld [vmem:[%s443 + $0xb4] sm:$0xff]
        %v507 = vld [vmem:[%s443 + $0xbc] sm:$0xf]
        %v508 = vld [vmem:[%s443 + $0xc0] sm:$0xff]
        %v509 = vld [vmem:[%s443 + $0xc8] sm:$0xf]
        %v510 = vld [vmem:[%s443 + $0xcc] sm:$0xff]
        %v511 = vld [vmem:[%s443 + $0xd4] sm:$0xf]
        %v512 = vld [vmem:[%s443 + $0xd8] sm:$0xff]
        %v513 = vld [vmem:[%s443 + $0xe0] sm:$0xf]
        %v514 = vld [vmem:[%s443 + $0xe4] sm:$0xff]
        %v515 = vld [vmem:[%s443 + $0xec] sm:$0xf]
        %v516 = vld [vmem:[%s443 + $0xf0] sm:$0xff]
        %v517 = vld [vmem:[%s443 + $0xf8] sm:$0xf]
        %v518 = vld [vmem:[%s443 + $0xfc] sm:$0xff]
        %v519 = vld [vmem:[%s443 + $0x104] sm:$0xf]
        %v520 = vld [vmem:[%s443 + $0x108] sm:$0xff]
        %v521 = vld [vmem:[%s443 + $0x110] sm:$0xf]
        %v522 = vld [vmem:[%s443 + $0x114] sm:$0xff]
        %v523 = vld [vmem:[%s443 + $0x11c] sm:$0xf]
        %v524 = vld [vmem:[%s443 + $0x120] sm:$0xff]
        %v525 = vld [vmem:[%s443 + $0x128] sm:$0xf]
        %v526 = vld [vmem:[%s443 + $0x12c] sm:$0xff]
        %v527 = vld [vmem:[%s443 + $0x134] sm:$0xf]
        %v528 = vld [vmem:[%s443 + $0x138] sm:$0xff]
        %v529 = vld [vmem:[%s443 + $0x140] sm:$0xf]
        %v530 = vld [vmem:[%s443 + $0x144] sm:$0xff]
        %v531 = vld [vmem:[%s443 + $0x14c] sm:$0xf]
        %v532 = vld [vmem:[%s443 + $0x150] sm:$0xff]
        %v533 = vld [vmem:[%s443 + $0x158] sm:$0xf]
        %v534 = vld [vmem:[%s443 + $0x15c] sm:$0xff]
        %v535 = vld [vmem:[%s443 + $0x164] sm:$0xf]
        %v536 = vld [vmem:[%s443 + $0x168] sm:$0xff]
        %v537 = vld [vmem:[%s443 + $0x170] sm:$0xf]
        %v538 = vld [vmem:[%s443 + $0x174] sm:$0xff]
        %v539 = vld [vmem:[%s443 + $0x17c] sm:$0xf]
        %v540 = vld [vmem:[%s443 + $0x180] sm:$0xff]
        %v541 = vld [vmem:[%s443 + $0x188] sm:$0xf]
        %v542 = vld [vmem:[%s443 + $0x18c] sm:$0xff]
        %v543 = vld [vmem:[%s443 + $0x194] sm:$0xf]
        %v544 = vld [vmem:[%s443 + $0x198] sm:$0xff]
        %v545 = vld [vmem:[%s443 + $0x1a0] sm:$0xf]
        %v546 = vld [vmem:[%s443 + $0x1a4] sm:$0xff]
        %v547 = vld [vmem:[%s443 + $0x1ac] sm:$0xf]
        %v548 = vld [vmem:[%s443 + $0x1b0] sm:$0xff]
        %v549 = vld [vmem:[%s443 + $0x1b8] sm:$0xf]
        %v550 = vld [vmem:[%s443 + $0x1bc] sm:$0xff]
        %v551 = vld [vmem:[%s443 + $0x1c4] sm:$0xf]
        %v552 = vld [vmem:[%s443 + $0x1c8] sm:$0xff]
        %v553 = vld [vmem:[%s443 + $0x1d0] sm:$0xf]
        %v554 = vld [vmem:[%s443 + $0x1d4] sm:$0xff]
        %v555 = vld [vmem:[%s443 + $0x1dc] sm:$0xf]
        %v556 = vld [vmem:[%s443 + $0x1e0] sm:$0xff]
        %v557 = vld [vmem:[%s443 + $0x1e8] sm:$0xf]
        %v558 = vld [vmem:[%s443 + $0x1ec] sm:$0xff]
        %v559 = vld [vmem:[%s443 + $0x1f4] sm:$0xf]
        %v560 = vld [vmem:[%s443 + $0x1f8] sm:$0xff]
        %v561 = vld [vmem:[%s443 + $0x200] sm:$0xf]
        %v562 = vld [vmem:[%s443 + $0x204] sm:$0xff]
        %v563 = vld [vmem:[%s443 + $0x20c] sm:$0xf]
        %v564 = vld [vmem:[%s443 + $0x210] sm:$0xff]
        %v565 = vld [vmem:[%s443 + $0x218] sm:$0xf]
        %v566 = vld [vmem:[%s443 + $0x21c] sm:$0xff]
        %v567 = vld [vmem:[%s443 + $0x224] sm:$0xf]
        %v568 = vld [vmem:[%s443 + $0x228] sm:$0xff]
        %v569 = vld [vmem:[%s443 + $0x230] sm:$0xf]
        %v570 = vld [vmem:[%s443 + $0x234] sm:$0xff]
        %v571 = vld [vmem:[%s443 + $0x23c] sm:$0xf]
        %v572 = vld [vmem:[%s443 + $0x240] sm:$0xff]
        %v573 = vld [vmem:[%s443 + $0x248] sm:$0xf]
        %v574 = vld [vmem:[%s443 + $0x24c] sm:$0xff]
        %v575 = vld [vmem:[%s443 + $0x254] sm:$0xf]
        %v576 = vld [vmem:[%s443 + $0x258] sm:$0xff]
        %v577 = vld [vmem:[%s443 + $0x260] sm:$0xf]
        %v578 = vld [vmem:[%s443 + $0x264] sm:$0xff]
        %v579 = vld [vmem:[%s443 + $0x26c] sm:$0xf]
        %v580 = vld [vmem:[%s443 + $0x270] sm:$0xff]
        %v581 = vld [vmem:[%s443 + $0x278] sm:$0xf]
        %v582 = vld [vmem:[%s443 + $0x27c] sm:$0xff]
        %v583 = vld [vmem:[%s443 + $0x284] sm:$0xf]
        %v584 = vld [vmem:[%s443 + $0x288] sm:$0xff]
        %v585 = vld [vmem:[%s443 + $0x290] sm:$0xf]
        %v586 = vld [vmem:[%s443 + $0x294] sm:$0xff]
        %v587 = vld [vmem:[%s443 + $0x29c] sm:$0xf]
        %v588 = vld [vmem:[%s443 + $0x2a0] sm:$0xff]
        %v589 = vld [vmem:[%s443 + $0x2a8] sm:$0xf]
        %v590 = vld [vmem:[%s443 + $0x2ac] sm:$0xff]
        %v591 = vld [vmem:[%s443 + $0x2b4] sm:$0xf]
        %v592 = vld [vmem:[%s443 + $0x2b8] sm:$0xff]
        %v593 = vld [vmem:[%s443 + $0x2c0] sm:$0xf]
        %v594 = vld [vmem:[%s443 + $0x2c4] sm:$0xff]
        %v595 = vld [vmem:[%s443 + $0x2cc] sm:$0xf]
        %v596 = vld [vmem:[%s443 + $0x2d0] sm:$0xff]
        %v597 = vld [vmem:[%s443 + $0x2d8] sm:$0xf]
        %v598 = vld [vmem:[%s443 + $0x2dc] sm:$0xff]
        %v599 = vld [vmem:[%s443 + $0x2e4] sm:$0xf]
        %v600 = vld [vmem:[%s443 + $0x2e8] sm:$0xff]
        %v601 = vld [vmem:[%s443 + $0x2f0] sm:$0xf]
        %v602 = vld [vmem:[%s443 + $0x2f4] sm:$0xff]
        %v603 = vld [vmem:[%s443 + $0x2fc] sm:$0xf]
        %v604 = vld [vmem:[%s443 + $0x300] sm:$0xff]
        %v605 = vld [vmem:[%s443 + $0x308] sm:$0xf]
        %v606 = vld [vmem:[%s443 + $0x30c] sm:$0xff]
        %v607 = vld [vmem:[%s443 + $0x314] sm:$0xf]
        %v608 = vld [vmem:[%s443 + $0x318] sm:$0xff]
        %v609 = vld [vmem:[%s443 + $0x320] sm:$0xf]
        %v610 = vld [vmem:[%s443 + $0x324] sm:$0xff]
        %v611 = vld [vmem:[%s443 + $0x32c] sm:$0xf]
        %v612 = vld [vmem:[%s443 + $0x330] sm:$0xff]
        %v613 = vld [vmem:[%s443 + $0x338] sm:$0xf]
        %v614 = vld [vmem:[%s443 + $0x33c] sm:$0xff]
        %v615 = vld [vmem:[%s443 + $0x344] sm:$0xf]
        %v616 = vld [vmem:[%s443 + $0x348] sm:$0xff]
        %v617 = vld [vmem:[%s443 + $0x350] sm:$0xf]
        %v618 = vld [vmem:[%s443 + $0x354] sm:$0xff]
        %v619 = vld [vmem:[%s443 + $0x35c] sm:$0xf]
        %v620 = vld [vmem:[%s443 + $0x360] sm:$0xff]
        %v621 = vld [vmem:[%s443 + $0x368] sm:$0xf]
        %v622 = vld [vmem:[%s443 + $0x36c] sm:$0xff]
        %v623 = vld [vmem:[%s443 + $0x374] sm:$0xf]
        %v624 = vld [vmem:[%s443 + $0x378] sm:$0xff]
        %v625 = vld [vmem:[%s443 + $0x380] sm:$0xf]
        %v626 = vld [vmem:[%s443 + $0x384] sm:$0xff]
        %v627 = vld [vmem:[%s443 + $0x38c] sm:$0xf]
        %v628 = vld [vmem:[%s443 + $0x390] sm:$0xff]
        %v629 = vld [vmem:[%s443 + $0x398] sm:$0xf]
        %v630 = vld [vmem:[%s443 + $0x39c] sm:$0xff]
        %v631 = vld [vmem:[%s443 + $0x3a4] sm:$0xf]
        %v632 = vld [vmem:[%s443 + $0x3a8] sm:$0xff]
        %v633 = vld [vmem:[%s443 + $0x3b0] sm:$0xf]
        %v634 = vld [vmem:[%s443 + $0x3b4] sm:$0xff]
        %v635 = vld [vmem:[%s443 + $0x3bc] sm:$0xf]
        %v636 = vld [vmem:[%s443 + $0x3c0] sm:$0xff]
        %v637 = vld [vmem:[%s443 + $0x3c8] sm:$0xf]
        %v638 = vld [vmem:[%s443 + $0x3cc] sm:$0xff]
        %v639 = vld [vmem:[%s443 + $0x3d4] sm:$0xf]
        %v640 = vld [vmem:[%s443 + $0x3d8] sm:$0xff]
        %v641 = vld [vmem:[%s443 + $0x3e0] sm:$0xf]
        %v642 = vld [vmem:[%s443 + $0x3e4] sm:$0xff]
        %v643 = vld [vmem:[%s443 + $0x3ec] sm:$0xf]
        %v644 = vld [vmem:[%s443 + $0x3f0] sm:$0xff]
        %v645 = vld [vmem:[%s443 + $0x3f8] sm:$0xf]
        %v646 = vld [vmem:[%s443 + $0x3fc] sm:$0xff]
        %v647 = vld [vmem:[%s443 + $0x404] sm:$0xf]
        %v648 = vld [vmem:[%s443 + $0x408] sm:$0xff]
        %v649 = vld [vmem:[%s443 + $0x410] sm:$0xf]
        %v650 = vld [vmem:[%s443 + $0x414] sm:$0xff]
        %v651 = vld [vmem:[%s443 + $0x41c] sm:$0xf]
        %v652 = vld [vmem:[%s443 + $0x420] sm:$0xff]
        %v653 = vld [vmem:[%s443 + $0x428] sm:$0xf]
        %v654 = vld [vmem:[%s443 + $0x42c] sm:$0xff]
        %v655 = vld [vmem:[%s443 + $0x434] sm:$0xf]
        %v656 = vld [vmem:[%s443 + $0x438] sm:$0xff]
        %v657 = vld [vmem:[%s443 + $0x440] sm:$0xf]
        %v658 = vld [vmem:[%s443 + $0x444] sm:$0xff]
        %v659 = vld [vmem:[%s443 + $0x44c] sm:$0xf]
        %v660 = vld [vmem:[%s443 + $0x450] sm:$0xff]
        %v661 = vld [vmem:[%s443 + $0x458] sm:$0xf]
        %v662 = vld [vmem:[%s443 + $0x45c] sm:$0xff]
        %v663 = vld [vmem:[%s443 + $0x464] sm:$0xf]
        %v664 = vld [vmem:[%s443 + $0x468] sm:$0xff]
        %v665 = vld [vmem:[%s443 + $0x470] sm:$0xf]
        %v666 = vld [vmem:[%s443 + $0x474] sm:$0xff]
        %v667 = vld [vmem:[%s443 + $0x47c] sm:$0xf]
        %v668 = vld [vmem:[%s443 + $0x480] sm:$0xff]
        %v669 = vld [vmem:[%s443 + $0x488] sm:$0xf]
        %v670 = vld [vmem:[%s443 + $0x48c] sm:$0xff]
        %v671 = vld [vmem:[%s443 + $0x494] sm:$0xf]
        %v672 = vld [vmem:[%s443 + $0x498] sm:$0xff]
        %v673 = vld [vmem:[%s443 + $0x4a0] sm:$0xf]
        %v674 = vld [vmem:[%s443 + $0x4a4] sm:$0xff]
        %v675 = vld [vmem:[%s443 + $0x4ac] sm:$0xf]
        %v676 = vld [vmem:[%s443 + $0x4b0] sm:$0xff]
        %v677 = vld [vmem:[%s443 + $0x4b8] sm:$0xf]
        %v678 = vld [vmem:[%s443 + $0x4bc] sm:$0xff]
        %v679 = vld [vmem:[%s443 + $0x4c4] sm:$0xf]
        %v680 = vld [vmem:[%s443 + $0x4c8] sm:$0xff]
        %v681 = vld [vmem:[%s443 + $0x4d0] sm:$0xf]
        %v682 = vld [vmem:[%s443 + $0x4d4] sm:$0xff]
        %v683 = vld [vmem:[%s443 + $0x4dc] sm:$0xf]
        %v684 = vld [vmem:[%s443 + $0x4e0] sm:$0xff]
        %v685 = vld [vmem:[%s443 + $0x4e8] sm:$0xf]
        %v686 = vld [vmem:[%s443 + $0x4ec] sm:$0xff]
        %v687 = vld [vmem:[%s443 + $0x4f4] sm:$0xf]
        %v688 = vld [vmem:[%s443 + $0x4f8] sm:$0xff]
        %v689 = vld [vmem:[%s443 + $0x500] sm:$0xf]
        %v690 = vld [vmem:[%s443 + $0x504] sm:$0xff]
        %v691 = vld [vmem:[%s443 + $0x50c] sm:$0xf]
        %v692 = vld [vmem:[%s443 + $0x510] sm:$0xff]
        %v693 = vld [vmem:[%s443 + $0x518] sm:$0xf]
        %v694 = vld [vmem:[%s443 + $0x51c] sm:$0xff]
        %v695 = vld [vmem:[%s443 + $0x524] sm:$0xf]
        %v696 = vld [vmem:[%s443 + $0x528] sm:$0xff]
        %v697 = vld [vmem:[%s443 + $0x530] sm:$0xf]
        %v698 = vld [vmem:[%s443 + $0x534] sm:$0xff]
        %v699 = vld [vmem:[%s443 + $0x53c] sm:$0xf]
        %v700 = vld [vmem:[%s443 + $0x540] sm:$0xff]
        %v701 = vld [vmem:[%s443 + $0x548] sm:$0xf]
        %v702 = vld [vmem:[%s443 + $0x54c] sm:$0xff]
        %v703 = vld [vmem:[%s443 + $0x554] sm:$0xf]
        %v704 = vld [vmem:[%s443 + $0x558] sm:$0xff]
        %v705 = vld [vmem:[%s443 + $0x560] sm:$0xf]
        %v706 = vld [vmem:[%s443 + $0x564] sm:$0xff]
        %v707 = vld [vmem:[%s443 + $0x56c] sm:$0xf]
        %v708 = vld [vmem:[%s443 + $0x570] sm:$0xff]
        %v709 = vld [vmem:[%s443 + $0x578] sm:$0xf]
        %v710 = vld [vmem:[%s443 + $0x57c] sm:$0xff]
        %v711 = vld [vmem:[%s443 + $0x584] sm:$0xf]
        %v712 = vld [vmem:[%s443 + $0x588] sm:$0xff]
        %v713 = vld [vmem:[%s443 + $0x590] sm:$0xf]
        %v714 = vld [vmem:[%s443 + $0x594] sm:$0xff]
        %v715 = vld [vmem:[%s443 + $0x59c] sm:$0xf]
        %v716 = vld [vmem:[%s443 + $0x5a0] sm:$0xff]
        %v717 = vld [vmem:[%s443 + $0x5a8] sm:$0xf]
        %v718 = vld [vmem:[%s443 + $0x5ac] sm:$0xff]
        %v719 = vld [vmem:[%s443 + $0x5b4] sm:$0xf]
        %v720 = vld [vmem:[%s443 + $0x5b8] sm:$0xff]
        %v721 = vld [vmem:[%s443 + $0x5c0] sm:$0xf]
        %v722 = vld [vmem:[%s443 + $0x5c4] sm:$0xff]
        %v723 = vld [vmem:[%s443 + $0x5cc] sm:$0xf]
        %v724 = vld [vmem:[%s443 + $0x5d0] sm:$0xff]
        %v725 = vld [vmem:[%s443 + $0x5d8] sm:$0xf]
        %v726 = vld [vmem:[%s443 + $0x5dc] sm:$0xff]
        %v727 = vld [vmem:[%s443 + $0x5e4] sm:$0xf]
        %v728 = vld [vmem:[%s443 + $0x5e8] sm:$0xff]
        %v729 = vld [vmem:[%s443 + $0x5f0] sm:$0xf]
        %v730 = vld [vmem:[%s443 + $0x5f4] sm:$0xff]
        %v731 = vld [vmem:[%s443 + $0x5fc] sm:$0xf]
        %v732 = vld [vmem:[%s2] sm:$0xf]
        %v733 = vld [vmem:[%s2 + $0x4] sm:$0xf]
        %v734 = vld [vmem:[%s2 + $0x8] sm:$0xf]
        %v735 = vld [vmem:[%s2 + $0xc] sm:$0xf]
        %v736 = vld [vmem:[%s2 + $0x10] sm:$0xf]
        %v737 = vld [vmem:[%s2 + $0x14] sm:$0xf]
        %v738 = vld [vmem:[%s2 + $0x18] sm:$0xf]
        %v739 = vld [vmem:[%s2 + $0x1c] sm:$0xf]
        %v740 = vld [vmem:[%s2 + $0x20] sm:$0xf]
        %v741 = vld [vmem:[%s2 + $0x24] sm:$0xf]
        %v742 = vld [vmem:[%s2 + $0x28] sm:$0xf]
        %v743 = vld [vmem:[%s2 + $0x2c] sm:$0xf]
        %v744 = vld [vmem:[%s2 + $0x30] sm:$0xf]
        %v745 = vld [vmem:[%s2 + $0x34] sm:$0xf]
        %v746 = vld [vmem:[%s2 + $0x38] sm:$0xf]
        %v747 = vld [vmem:[%s2 + $0x3c] sm:$0xf]
        %v748 = vld [vmem:[%s2 + $0x40] sm:$0xf]
        %v749 = vld [vmem:[%s2 + $0x44] sm:$0xf]
        %v750 = vld [vmem:[%s2 + $0x48] sm:$0xf]
        %v751 = vld [vmem:[%s2 + $0x4c] sm:$0xf]
        %v752 = vld [vmem:[%s2 + $0x50] sm:$0xf]
        %v753 = vld [vmem:[%s2 + $0x54] sm:$0xf]
        %v754 = vld [vmem:[%s2 + $0x58] sm:$0xf]
        %v755 = vld [vmem:[%s2 + $0x5c] sm:$0xf]
        %v756 = vld [vmem:[%s2 + $0x60] sm:$0xf]
        %v757 = vld [vmem:[%s2 + $0x64] sm:$0xf]
        %v758 = vld [vmem:[%s2 + $0x68] sm:$0xf]
        %v759 = vld [vmem:[%s2 + $0x6c] sm:$0xf]
        %v760 = vld [vmem:[%s2 + $0x70] sm:$0xf]
        %v761 = vld [vmem:[%s2 + $0x74] sm:$0xf]
        %v762 = vld [vmem:[%s2 + $0x78] sm:$0xf]
        %v763 = vld [vmem:[%s2 + $0x7c] sm:$0xf]
        %v764 = vld [vmem:[%s2 + $0x80] sm:$0xf]
        %v765 = vld [vmem:[%s2 + $0x84] sm:$0xf]
        %v766 = vld [vmem:[%s2 + $0x88] sm:$0xf]
        %v767 = vld [vmem:[%s2 + $0x8c] sm:$0xf]
        %v768 = vld [vmem:[%s2 + $0x90] sm:$0xf]
        %v769 = vld [vmem:[%s2 + $0x94] sm:$0xf]
        %v770 = vld [vmem:[%s2 + $0x98] sm:$0xf]
        %v771 = vld [vmem:[%s2 + $0x9c] sm:$0xf]
        %v772 = vld [vmem:[%s3] sm:$0x1]
        %v774 = vlaneseq
        %v775 = vshrl.u32 %v774, 7
        %v776 = vsub.s32 0, %v775
        %v777 = vrot.slane %v772, %v776
        %v1035 = vunpack.c.l.b16 %v476
        %v1036 = vunpack.c.h.b16 %v476
        %v1037 = vunpack.c.l.b16 %v477
        %v1038 = vunpack.c.l.b16 %v478
        %v1039 = vunpack.c.h.b16 %v478
        %v1040 = vunpack.c.l.b16 %v479
        %v1041 = vunpack.c.l.b16 %v480
        %v1042 = vunpack.c.h.b16 %v480
        %v1043 = vunpack.c.l.b16 %v481
        %v1044 = vunpack.c.l.b16 %v482
        %v1045 = vunpack.c.h.b16 %v482
        %v1046 = vunpack.c.l.b16 %v483
        %v1047 = vunpack.c.l.b16 %v484
        %v1048 = vunpack.c.h.b16 %v484
        %v1049 = vunpack.c.l.b16 %v485
        %v1050 = vunpack.c.l.b16 %v486
        %v1051 = vunpack.c.h.b16 %v486
        %v1052 = vunpack.c.l.b16 %v487
        %v1053 = vunpack.c.l.b16 %v488
        %v1054 = vunpack.c.h.b16 %v488
        %v1055 = vunpack.c.l.b16 %v489
        %v1056 = vunpack.c.l.b16 %v490
        %v1057 = vunpack.c.h.b16 %v490
        %v1058 = vunpack.c.l.b16 %v491
        %v1059 = vunpack.c.l.b16 %v492
        %v1060 = vunpack.c.h.b16 %v492
        %v1061 = vunpack.c.l.b16 %v493
        %v1062 = vunpack.c.l.b16 %v494
        %v1063 = vunpack.c.h.b16 %v494
        %v1064 = vunpack.c.l.b16 %v495
        %v1065 = vunpack.c.l.b16 %v496
        %v1066 = vunpack.c.h.b16 %v496
        %v1067 = vunpack.c.l.b16 %v497
        %v1068 = vunpack.c.l.b16 %v498
        %v1069 = vunpack.c.h.b16 %v498
        %v1070 = vunpack.c.l.b16 %v499
        %v1071 = vunpack.c.l.b16 %v500
        %v1072 = vunpack.c.h.b16 %v500
        %v1073 = vunpack.c.l.b16 %v501
        %v1074 = vunpack.c.l.b16 %v502
        %v1075 = vunpack.c.h.b16 %v502
        %v1076 = vunpack.c.l.b16 %v503
        %v1077 = vunpack.c.l.b16 %v504
        %v1078 = vunpack.c.h.b16 %v504
        %v1079 = vunpack.c.l.b16 %v505
        %v1080 = vunpack.c.l.b16 %v506
        %v1081 = vunpack.c.h.b16 %v506
        %v1082 = vunpack.c.l.b16 %v507
        %v1083 = vunpack.c.l.b16 %v508
        %v1084 = vunpack.c.h.b16 %v508
        %v1085 = vunpack.c.l.b16 %v509
        %v1086 = vunpack.c.l.b16 %v510
        %v1087 = vunpack.c.h.b16 %v510
        %v1088 = vunpack.c.l.b16 %v511
        %v1089 = vunpack.c.l.b16 %v512
        %v1090 = vunpack.c.h.b16 %v512
        %v1091 = vunpack.c.l.b16 %v513
        %v1092 = vunpack.c.l.b16 %v514
        %v1093 = vunpack.c.h.b16 %v514
        %v1094 = vunpack.c.l.b16 %v515
        %v1095 = vunpack.c.l.b16 %v516
        %v1096 = vunpack.c.h.b16 %v516
        %v1097 = vunpack.c.l.b16 %v517
        %v1098 = vunpack.c.l.b16 %v518
        %v1099 = vunpack.c.h.b16 %v518
        %v1100 = vunpack.c.l.b16 %v519
        %v1101 = vunpack.c.l.b16 %v520
        %v1102 = vunpack.c.h.b16 %v520
        %v1103 = vunpack.c.l.b16 %v521
        %v1104 = vunpack.c.l.b16 %v522
        %v1105 = vunpack.c.h.b16 %v522
        %v1106 = vunpack.c.l.b16 %v523
        %v1107 = vunpack.c.l.b16 %v524
        %v1108 = vunpack.c.h.b16 %v524
        %v1109 = vunpack.c.l.b16 %v525
        %v1110 = vunpack.c.l.b16 %v526
        %v1111 = vunpack.c.h.b16 %v526
        %v1112 = vunpack.c.l.b16 %v527
        %v1113 = vunpack.c.l.b16 %v528
        %v1114 = vunpack.c.h.b16 %v528
        %v1115 = vunpack.c.l.b16 %v529
        %v1116 = vunpack.c.l.b16 %v530
        %v1117 = vunpack.c.h.b16 %v530
        %v1118 = vunpack.c.l.b16 %v531
        %v1119 = vunpack.c.l.b16 %v532
        %v1120 = vunpack.c.h.b16 %v532
        %v1121 = vunpack.c.l.b16 %v533
        %v1122 = vunpack.c.l.b16 %v534
        %v1123 = vunpack.c.h.b16 %v534
        %v1124 = vunpack.c.l.b16 %v535
        %v1125 = vunpack.c.l.b16 %v536
        %v1126 = vunpack.c.h.b16 %v536
        %v1127 = vunpack.c.l.b16 %v537
        %v1128 = vunpack.c.l.b16 %v538
        %v1129 = vunpack.c.h.b16 %v538
        %v1130 = vunpack.c.l.b16 %v539
        %v1131 = vunpack.c.l.b16 %v540
        %v1132 = vunpack.c.h.b16 %v540
        %v1133 = vunpack.c.l.b16 %v541
        %v1134 = vunpack.c.l.b16 %v542
        %v1135 = vunpack.c.h.b16 %v542
        %v1136 = vunpack.c.l.b16 %v543
        %v1137 = vunpack.c.l.b16 %v544
        %v1138 = vunpack.c.h.b16 %v544
        %v1139 = vunpack.c.l.b16 %v545
        %v1140 = vunpack.c.l.b16 %v546
        %v1141 = vunpack.c.h.b16 %v546
        %v1142 = vunpack.c.l.b16 %v547
        %v1143 = vunpack.c.l.b16 %v548
        %v1144 = vunpack.c.h.b16 %v548
        %v1145 = vunpack.c.l.b16 %v549
        %v1146 = vunpack.c.l.b16 %v550
        %v1147 = vunpack.c.h.b16 %v550
        %v1148 = vunpack.c.l.b16 %v551
        %v1149 = vunpack.c.l.b16 %v552
        %v1150 = vunpack.c.h.b16 %v552
        %v1151 = vunpack.c.l.b16 %v553
        %v1152 = vunpack.c.l.b16 %v554
        %v1153 = vunpack.c.h.b16 %v554
        %v1154 = vunpack.c.l.b16 %v555
        %v1155 = vunpack.c.l.b16 %v556
        %v1156 = vunpack.c.h.b16 %v556
        %v1157 = vunpack.c.l.b16 %v557
        %v1158 = vunpack.c.l.b16 %v558
        %v1159 = vunpack.c.h.b16 %v558
        %v1160 = vunpack.c.l.b16 %v559
        %v1161 = vunpack.c.l.b16 %v560
        %v1162 = vunpack.c.h.b16 %v560
        %v1163 = vunpack.c.l.b16 %v561
        %v1164 = vunpack.c.l.b16 %v562
        %v1165 = vunpack.c.h.b16 %v562
        %v1166 = vunpack.c.l.b16 %v563
        %v1167 = vunpack.c.l.b16 %v564
        %v1168 = vunpack.c.h.b16 %v564
        %v1169 = vunpack.c.l.b16 %v565
        %v1170 = vunpack.c.l.b16 %v566
        %v1171 = vunpack.c.h.b16 %v566
        %v1172 = vunpack.c.l.b16 %v567
        %v1173 = vunpack.c.l.b16 %v568
        %v1174 = vunpack.c.h.b16 %v568
        %v1175 = vunpack.c.l.b16 %v569
        %v1176 = vunpack.c.l.b16 %v570
        %v1177 = vunpack.c.h.b16 %v570
        %v1178 = vunpack.c.l.b16 %v571
        %v1179 = vunpack.c.l.b16 %v572
        %v1180 = vunpack.c.h.b16 %v572
        %v1181 = vunpack.c.l.b16 %v573
        %v1182 = vunpack.c.l.b16 %v574
        %v1183 = vunpack.c.h.b16 %v574
        %v1184 = vunpack.c.l.b16 %v575
        %v1185 = vunpack.c.l.b16 %v576
        %v1186 = vunpack.c.h.b16 %v576
        %v1187 = vunpack.c.l.b16 %v577
        %v1188 = vunpack.c.l.b16 %v578
        %v1189 = vunpack.c.h.b16 %v578
        %v1190 = vunpack.c.l.b16 %v579
        %v1191 = vunpack.c.l.b16 %v580
        %v1192 = vunpack.c.h.b16 %v580
        %v1193 = vunpack.c.l.b16 %v581
        %v1194 = vunpack.c.l.b16 %v582
        %v1195 = vunpack.c.h.b16 %v582
        %v1196 = vunpack.c.l.b16 %v583
        %v1197 = vunpack.c.l.b16 %v584
        %v1198 = vunpack.c.h.b16 %v584
        %v1199 = vunpack.c.l.b16 %v585
        %v1200 = vunpack.c.l.b16 %v586
        %v1201 = vunpack.c.h.b16 %v586
        %v1202 = vunpack.c.l.b16 %v587
        %v1203 = vunpack.c.l.b16 %v588
        %v1204 = vunpack.c.h.b16 %v588
        %v1205 = vunpack.c.l.b16 %v589
        %v1206 = vunpack.c.l.b16 %v590
        %v1207 = vunpack.c.h.b16 %v590
        %v1208 = vunpack.c.l.b16 %v591
        %v1209 = vunpack.c.l.b16 %v592
        %v1210 = vunpack.c.h.b16 %v592
        %v1211 = vunpack.c.l.b16 %v593
        %v1212 = vunpack.c.l.b16 %v594
        %v1213 = vunpack.c.h.b16 %v594
        %v1214 = vunpack.c.l.b16 %v595
        %v1215 = vunpack.c.l.b16 %v596
        %v1216 = vunpack.c.h.b16 %v596
        %v1217 = vunpack.c.l.b16 %v597
        %v1218 = vunpack.c.l.b16 %v598
        %v1219 = vunpack.c.h.b16 %v598
        %v1220 = vunpack.c.l.b16 %v599
        %v1221 = vunpack.c.l.b16 %v600
        %v1222 = vunpack.c.h.b16 %v600
        %v1223 = vunpack.c.l.b16 %v601
        %v1224 = vunpack.c.l.b16 %v602
        %v1225 = vunpack.c.h.b16 %v602
        %v1226 = vunpack.c.l.b16 %v603
        %v1227 = vunpack.c.l.b16 %v604
        %v1228 = vunpack.c.h.b16 %v604
        %v1229 = vunpack.c.l.b16 %v605
        %v1230 = vunpack.c.l.b16 %v606
        %v1231 = vunpack.c.h.b16 %v606
        %v1232 = vunpack.c.l.b16 %v607
        %v1233 = vunpack.c.l.b16 %v608
        %v1234 = vunpack.c.h.b16 %v608
        %v1235 = vunpack.c.l.b16 %v609
        %v1236 = vunpack.c.l.b16 %v610
        %v1237 = vunpack.c.h.b16 %v610
        %v1238 = vunpack.c.l.b16 %v611
        %v1239 = vunpack.c.l.b16 %v612
        %v1240 = vunpack.c.h.b16 %v612
        %v1241 = vunpack.c.l.b16 %v613
        %v1242 = vunpack.c.l.b16 %v614
        %v1243 = vunpack.c.h.b16 %v614
        %v1244 = vunpack.c.l.b16 %v615
        %v1245 = vunpack.c.l.b16 %v616
        %v1246 = vunpack.c.h.b16 %v616
        %v1247 = vunpack.c.l.b16 %v617
        %v1248 = vunpack.c.l.b16 %v618
        %v1249 = vunpack.c.h.b16 %v618
        %v1250 = vunpack.c.l.b16 %v619
        %v1251 = vunpack.c.l.b16 %v620
        %v1252 = vunpack.c.h.b16 %v620
        %v1253 = vunpack.c.l.b16 %v621
        %v1254 = vunpack.c.l.b16 %v622
        %v1255 = vunpack.c.h.b16 %v622
        %v1256 = vunpack.c.l.b16 %v623
        %v1257 = vunpack.c.l.b16 %v624
        %v1258 = vunpack.c.h.b16 %v624
        %v1259 = vunpack.c.l.b16 %v625
        %v1260 = vunpack.c.l.b16 %v626
        %v1261 = vunpack.c.h.b16 %v626
        %v1262 = vunpack.c.l.b16 %v627
        %v1263 = vunpack.c.l.b16 %v628
        %v1264 = vunpack.c.h.b16 %v628
        %v1265 = vunpack.c.l.b16 %v629
        %v1266 = vunpack.c.l.b16 %v630
        %v1267 = vunpack.c.h.b16 %v630
        %v1268 = vunpack.c.l.b16 %v631
        %v1269 = vunpack.c.l.b16 %v632
        %v1270 = vunpack.c.h.b16 %v632
        %v1271 = vunpack.c.l.b16 %v633
        %v1272 = vunpack.c.l.b16 %v634
        %v1273 = vunpack.c.h.b16 %v634
        %v1274 = vunpack.c.l.b16 %v635
        %v1275 = vunpack.c.l.b16 %v636
        %v1276 = vunpack.c.h.b16 %v636
        %v1277 = vunpack.c.l.b16 %v637
        %v1278 = vunpack.c.l.b16 %v638
        %v1279 = vunpack.c.h.b16 %v638
        %v1280 = vunpack.c.l.b16 %v639
        %v1281 = vunpack.c.l.b16 %v640
        %v1282 = vunpack.c.h.b16 %v640
        %v1283 = vunpack.c.l.b16 %v641
        %v1284 = vunpack.c.l.b16 %v642
        %v1285 = vunpack.c.h.b16 %v642
        %v1286 = vunpack.c.l.b16 %v643
        %v1287 = vunpack.c.l.b16 %v644
        %v1288 = vunpack.c.h.b16 %v644
        %v1289 = vunpack.c.l.b16 %v645
        %v1290 = vunpack.c.l.b16 %v646
        %v1291 = vunpack.c.h.b16 %v646
        %v1292 = vunpack.c.l.b16 %v647
        %v1293 = vunpack.c.l.b16 %v648
        %v1294 = vunpack.c.h.b16 %v648
        %v1295 = vunpack.c.l.b16 %v649
        %v1296 = vunpack.c.l.b16 %v650
        %v1297 = vunpack.c.h.b16 %v650
        %v1298 = vunpack.c.l.b16 %v651
        %v1299 = vunpack.c.l.b16 %v652
        %v1300 = vunpack.c.h.b16 %v652
        %v1301 = vunpack.c.l.b16 %v653
        %v1302 = vunpack.c.l.b16 %v654
        %v1303 = vunpack.c.h.b16 %v654
        %v1304 = vunpack.c.l.b16 %v655
        %v1305 = vunpack.c.l.b16 %v656
        %v1306 = vunpack.c.h.b16 %v656
        %v1307 = vunpack.c.l.b16 %v657
        %v1308 = vunpack.c.l.b16 %v658
        %v1309 = vunpack.c.h.b16 %v658
        %v1310 = vunpack.c.l.b16 %v659
        %v1311 = vunpack.c.l.b16 %v660
        %v1312 = vunpack.c.h.b16 %v660
        %v1313 = vunpack.c.l.b16 %v661
        %v1314 = vunpack.c.l.b16 %v662
        %v1315 = vunpack.c.h.b16 %v662
        %v1316 = vunpack.c.l.b16 %v663
        %v1317 = vunpack.c.l.b16 %v664
        %v1318 = vunpack.c.h.b16 %v664
        %v1319 = vunpack.c.l.b16 %v665
        %v1320 = vunpack.c.l.b16 %v666
        %v1321 = vunpack.c.h.b16 %v666
        %v1322 = vunpack.c.l.b16 %v667
        %v1323 = vunpack.c.l.b16 %v668
        %v1324 = vunpack.c.h.b16 %v668
        %v1325 = vunpack.c.l.b16 %v669
        %v1326 = vunpack.c.l.b16 %v670
        %v1327 = vunpack.c.h.b16 %v670
        %v1328 = vunpack.c.l.b16 %v671
        %v1329 = vunpack.c.l.b16 %v672
        %v1330 = vunpack.c.h.b16 %v672
        %v1331 = vunpack.c.l.b16 %v673
        %v1332 = vunpack.c.l.b16 %v674
        %v1333 = vunpack.c.h.b16 %v674
        %v1334 = vunpack.c.l.b16 %v675
        %v1335 = vunpack.c.l.b16 %v676
        %v1336 = vunpack.c.h.b16 %v676
        %v1337 = vunpack.c.l.b16 %v677
        %v1338 = vunpack.c.l.b16 %v678
        %v1339 = vunpack.c.h.b16 %v678
        %v1340 = vunpack.c.l.b16 %v679
        %v1341 = vunpack.c.l.b16 %v680
        %v1342 = vunpack.c.h.b16 %v680
        %v1343 = vunpack.c.l.b16 %v681
        %v1344 = vunpack.c.l.b16 %v682
        %v1345 = vunpack.c.h.b16 %v682
        %v1346 = vunpack.c.l.b16 %v683
        %v1347 = vunpack.c.l.b16 %v684
        %v1348 = vunpack.c.h.b16 %v684
        %v1349 = vunpack.c.l.b16 %v685
        %v1350 = vunpack.c.l.b16 %v686
        %v1351 = vunpack.c.h.b16 %v686
        %v1352 = vunpack.c.l.b16 %v687
        %v1353 = vunpack.c.l.b16 %v688
        %v1354 = vunpack.c.h.b16 %v688
        %v1355 = vunpack.c.l.b16 %v689
        %v1356 = vunpack.c.l.b16 %v690
        %v1357 = vunpack.c.h.b16 %v690
        %v1358 = vunpack.c.l.b16 %v691
        %v1359 = vunpack.c.l.b16 %v692
        %v1360 = vunpack.c.h.b16 %v692
        %v1361 = vunpack.c.l.b16 %v693
        %v1362 = vunpack.c.l.b16 %v694
        %v1363 = vunpack.c.h.b16 %v694
        %v1364 = vunpack.c.l.b16 %v695
        %v1365 = vunpack.c.l.b16 %v696
        %v1366 = vunpack.c.h.b16 %v696
        %v1367 = vunpack.c.l.b16 %v697
        %v1368 = vunpack.c.l.b16 %v698
        %v1369 = vunpack.c.h.b16 %v698
        %v1370 = vunpack.c.l.b16 %v699
        %v1371 = vunpack.c.l.b16 %v700
        %v1372 = vunpack.c.h.b16 %v700
        %v1373 = vunpack.c.l.b16 %v701
        %v1374 = vunpack.c.l.b16 %v702
        %v1375 = vunpack.c.h.b16 %v702
        %v1376 = vunpack.c.l.b16 %v703
        %v1377 = vunpack.c.l.b16 %v704
        %v1378 = vunpack.c.h.b16 %v704
        %v1379 = vunpack.c.l.b16 %v705
        %v1380 = vunpack.c.l.b16 %v706
        %v1381 = vunpack.c.h.b16 %v706
        %v1382 = vunpack.c.l.b16 %v707
        %v1383 = vunpack.c.l.b16 %v708
        %v1384 = vunpack.c.h.b16 %v708
        %v1385 = vunpack.c.l.b16 %v709
        %v1386 = vunpack.c.l.b16 %v710
        %v1387 = vunpack.c.h.b16 %v710
        %v1388 = vunpack.c.l.b16 %v711
        %v1389 = vunpack.c.l.b16 %v712
        %v1390 = vunpack.c.h.b16 %v712
        %v1391 = vunpack.c.l.b16 %v713
        %v1392 = vunpack.c.l.b16 %v714
        %v1393 = vunpack.c.h.b16 %v714
        %v1394 = vunpack.c.l.b16 %v715
        %v1395 = vunpack.c.l.b16 %v716
        %v1396 = vunpack.c.h.b16 %v716
        %v1397 = vunpack.c.l.b16 %v717
        %v1398 = vunpack.c.l.b16 %v718
        %v1399 = vunpack.c.h.b16 %v718
        %v1400 = vunpack.c.l.b16 %v719
        %v1401 = vunpack.c.l.b16 %v720
        %v1402 = vunpack.c.h.b16 %v720
        %v1403 = vunpack.c.l.b16 %v721
        %v1404 = vunpack.c.l.b16 %v722
        %v1405 = vunpack.c.h.b16 %v722
        %v1406 = vunpack.c.l.b16 %v723
        %v1407 = vunpack.c.l.b16 %v724
        %v1408 = vunpack.c.h.b16 %v724
        %v1409 = vunpack.c.l.b16 %v725
        %v1410 = vunpack.c.l.b16 %v726
        %v1411 = vunpack.c.h.b16 %v726
        %v1412 = vunpack.c.l.b16 %v727
        %v1413 = vunpack.c.l.b16 %v728
        %v1414 = vunpack.c.h.b16 %v728
        %v1415 = vunpack.c.l.b16 %v729
        %v1416 = vunpack.c.l.b16 %v730
        %v1417 = vunpack.c.h.b16 %v730
        %v1418 = vunpack.c.l.b16 %v731
        %v1419 = vpack.c.b16 %v1038, %v1035
        %v1420 = vpack.c.b16 %v1039, %v1036
        %v1421 = vpack.c.b16 %v1040, %v1037
        %v1422 = vpack.c.b16 %v1044, %v1041
        %v1423 = vpack.c.b16 %v1045, %v1042
        %v1424 = vpack.c.b16 %v1046, %v1043
        %v1425 = vpack.c.b16 %v1050, %v1047
        %v1426 = vpack.c.b16 %v1051, %v1048
        %v1427 = vpack.c.b16 %v1052, %v1049
        %v1428 = vpack.c.b16 %v1056, %v1053
        %v1429 = vpack.c.b16 %v1057, %v1054
        %v1430 = vpack.c.b16 %v1058, %v1055
        %v1431 = vpack.c.b16 %v1062, %v1059
        %v1432 = vpack.c.b16 %v1063, %v1060
        %v1433 = vpack.c.b16 %v1064, %v1061
        %v1434 = vpack.c.b16 %v1068, %v1065
        %v1435 = vpack.c.b16 %v1069, %v1066
        %v1436 = vpack.c.b16 %v1070, %v1067
        %v1437 = vpack.c.b16 %v1074, %v1071
        %v1438 = vpack.c.b16 %v1075, %v1072
        %v1439 = vpack.c.b16 %v1076, %v1073
        %v1440 = vpack.c.b16 %v1080, %v1077
        %v1441 = vpack.c.b16 %v1081, %v1078
        %v1442 = vpack.c.b16 %v1082, %v1079
        %v1443 = vpack.c.b16 %v1086, %v1083
        %v1444 = vpack.c.b16 %v1087, %v1084
        %v1445 = vpack.c.b16 %v1088, %v1085
        %v1446 = vpack.c.b16 %v1092, %v1089
        %v1447 = vpack.c.b16 %v1093, %v1090
        %v1448 = vpack.c.b16 %v1094, %v1091
        %v1449 = vpack.c.b16 %v1098, %v1095
        %v1450 = vpack.c.b16 %v1099, %v1096
        %v1451 = vpack.c.b16 %v1100, %v1097
        %v1452 = vpack.c.b16 %v1104, %v1101
        %v1453 = vpack.c.b16 %v1105, %v1102
        %v1454 = vpack.c.b16 %v1106, %v1103
        %v1455 = vpack.c.b16 %v1110, %v1107
        %v1456 = vpack.c.b16 %v1111, %v1108
        %v1457 = vpack.c.b16 %v1112, %v1109
        %v1458 = vpack.c.b16 %v1116, %v1113
        %v1459 = vpack.c.b16 %v1117, %v1114
        %v1460 = vpack.c.b16 %v1118, %v1115
        %v1461 = vpack.c.b16 %v1122, %v1119
        %v1462 = vpack.c.b16 %v1123, %v1120
        %v1463 = vpack.c.b16 %v1124, %v1121
        %v1464 = vpack.c.b16 %v1128, %v1125
        %v1465 = vpack.c.b16 %v1129, %v1126
        %v1466 = vpack.c.b16 %v1130, %v1127
        %v1467 = vpack.c.b16 %v1134, %v1131
        %v1468 = vpack.c.b16 %v1135, %v1132
        %v1469 = vpack.c.b16 %v1136, %v1133
        %v1470 = vpack.c.b16 %v1140, %v1137
        %v1471 = vpack.c.b16 %v1141, %v1138
        %v1472 = vpack.c.b16 %v1142, %v1139
        %v1473 = vpack.c.b16 %v1146, %v1143
        %v1474 = vpack.c.b16 %v1147, %v1144
        %v1475 = vpack.c.b16 %v1148, %v1145
        %v1476 = vpack.c.b16 %v1152, %v1149
        %v1477 = vpack.c.b16 %v1153, %v1150
        %v1478 = vpack.c.b16 %v1154, %v1151
        %v1479 = vpack.c.b16 %v1158, %v1155
        %v1480 = vpack.c.b16 %v1159, %v1156
        %v1481 = vpack.c.b16 %v1160, %v1157
        %v1482 = vpack.c.b16 %v1164, %v1161
        %v1483 = vpack.c.b16 %v1165, %v1162
        %v1484 = vpack.c.b16 %v1166, %v1163
        %v1485 = vpack.c.b16 %v1170, %v1167
        %v1486 = vpack.c.b16 %v1171, %v1168
        %v1487 = vpack.c.b16 %v1172, %v1169
        %v1488 = vpack.c.b16 %v1176, %v1173
        %v1489 = vpack.c.b16 %v1177, %v1174
        %v1490 = vpack.c.b16 %v1178, %v1175
        %v1491 = vpack.c.b16 %v1182, %v1179
        %v1492 = vpack.c.b16 %v1183, %v1180
        %v1493 = vpack.c.b16 %v1184, %v1181
        %v1494 = vpack.c.b16 %v1188, %v1185
        %v1495 = vpack.c.b16 %v1189, %v1186
        %v1496 = vpack.c.b16 %v1190, %v1187
        %v1497 = vpack.c.b16 %v1194, %v1191
        %v1498 = vpack.c.b16 %v1195, %v1192
        %v1499 = vpack.c.b16 %v1196, %v1193
        %v1500 = vpack.c.b16 %v1200, %v1197
        %v1501 = vpack.c.b16 %v1201, %v1198
        %v1502 = vpack.c.b16 %v1202, %v1199
        %v1503 = vpack.c.b16 %v1206, %v1203
        %v1504 = vpack.c.b16 %v1207, %v1204
        %v1505 = vpack.c.b16 %v1208, %v1205
        %v1506 = vpack.c.b16 %v1212, %v1209
        %v1507 = vpack.c.b16 %v1213, %v1210
        %v1508 = vpack.c.b16 %v1214, %v1211
        %v1509 = vpack.c.b16 %v1218, %v1215
        %v1510 = vpack.c.b16 %v1219, %v1216
        %v1511 = vpack.c.b16 %v1220, %v1217
        %v1512 = vpack.c.b16 %v1224, %v1221
        %v1513 = vpack.c.b16 %v1225, %v1222
        %v1514 = vpack.c.b16 %v1226, %v1223
        %v1515 = vpack.c.b16 %v1230, %v1227
        %v1516 = vpack.c.b16 %v1231, %v1228
        %v1517 = vpack.c.b16 %v1232, %v1229
        %v1518 = vpack.c.b16 %v1236, %v1233
        %v1519 = vpack.c.b16 %v1237, %v1234
        %v1520 = vpack.c.b16 %v1238, %v1235
        %v1521 = vpack.c.b16 %v1242, %v1239
        %v1522 = vpack.c.b16 %v1243, %v1240
        %v1523 = vpack.c.b16 %v1244, %v1241
        %v1524 = vpack.c.b16 %v1248, %v1245
        %v1525 = vpack.c.b16 %v1249, %v1246
        %v1526 = vpack.c.b16 %v1250, %v1247
        %v1527 = vpack.c.b16 %v1254, %v1251
        %v1528 = vpack.c.b16 %v1255, %v1252
        %v1529 = vpack.c.b16 %v1256, %v1253
        %v1530 = vpack.c.b16 %v1260, %v1257
        %v1531 = vpack.c.b16 %v1261, %v1258
        %v1532 = vpack.c.b16 %v1262, %v1259
        %v1533 = vpack.c.b16 %v1266, %v1263
        %v1534 = vpack.c.b16 %v1267, %v1264
        %v1535 = vpack.c.b16 %v1268, %v1265
        %v1536 = vpack.c.b16 %v1272, %v1269
        %v1537 = vpack.c.b16 %v1273, %v1270
        %v1538 = vpack.c.b16 %v1274, %v1271
        %v1539 = vpack.c.b16 %v1278, %v1275
        %v1540 = vpack.c.b16 %v1279, %v1276
        %v1541 = vpack.c.b16 %v1280, %v1277
        %v1542 = vpack.c.b16 %v1284, %v1281
        %v1543 = vpack.c.b16 %v1285, %v1282
        %v1544 = vpack.c.b16 %v1286, %v1283
        %v1545 = vpack.c.b16 %v1290, %v1287
        %v1546 = vpack.c.b16 %v1291, %v1288
        %v1547 = vpack.c.b16 %v1292, %v1289
        %v1548 = vpack.c.b16 %v1296, %v1293
        %v1549 = vpack.c.b16 %v1297, %v1294
        %v1550 = vpack.c.b16 %v1298, %v1295
        %v1551 = vpack.c.b16 %v1302, %v1299
        %v1552 = vpack.c.b16 %v1303, %v1300
        %v1553 = vpack.c.b16 %v1304, %v1301
        %v1554 = vpack.c.b16 %v1308, %v1305
        %v1555 = vpack.c.b16 %v1309, %v1306
        %v1556 = vpack.c.b16 %v1310, %v1307
        %v1557 = vpack.c.b16 %v1314, %v1311
        %v1558 = vpack.c.b16 %v1315, %v1312
        %v1559 = vpack.c.b16 %v1316, %v1313
        %v1560 = vpack.c.b16 %v1320, %v1317
        %v1561 = vpack.c.b16 %v1321, %v1318
        %v1562 = vpack.c.b16 %v1322, %v1319
        %v1563 = vpack.c.b16 %v1326, %v1323
        %v1564 = vpack.c.b16 %v1327, %v1324
        %v1565 = vpack.c.b16 %v1328, %v1325
        %v1566 = vpack.c.b16 %v1332, %v1329
        %v1567 = vpack.c.b16 %v1333, %v1330
        %v1568 = vpack.c.b16 %v1334, %v1331
        %v1569 = vpack.c.b16 %v1338, %v1335
        %v1570 = vpack.c.b16 %v1339, %v1336
        %v1571 = vpack.c.b16 %v1340, %v1337
        %v1572 = vpack.c.b16 %v1344, %v1341
        %v1573 = vpack.c.b16 %v1345, %v1342
        %v1574 = vpack.c.b16 %v1346, %v1343
        %v1575 = vpack.c.b16 %v1350, %v1347
        %v1576 = vpack.c.b16 %v1351, %v1348
        %v1577 = vpack.c.b16 %v1352, %v1349
        %v1578 = vpack.c.b16 %v1356, %v1353
        %v1579 = vpack.c.b16 %v1357, %v1354
        %v1580 = vpack.c.b16 %v1358, %v1355
        %v1581 = vpack.c.b16 %v1362, %v1359
        %v1582 = vpack.c.b16 %v1363, %v1360
        %v1583 = vpack.c.b16 %v1364, %v1361
        %v1584 = vpack.c.b16 %v1368, %v1365
        %v1585 = vpack.c.b16 %v1369, %v1366
        %v1586 = vpack.c.b16 %v1370, %v1367
        %v1587 = vpack.c.b16 %v1374, %v1371
        %v1588 = vpack.c.b16 %v1375, %v1372
        %v1589 = vpack.c.b16 %v1376, %v1373
        %v1590 = vpack.c.b16 %v1380, %v1377
        %v1591 = vpack.c.b16 %v1381, %v1378
        %v1592 = vpack.c.b16 %v1382, %v1379
        %v1593 = vpack.c.b16 %v1386, %v1383
        %v1594 = vpack.c.b16 %v1387, %v1384
        %v1595 = vpack.c.b16 %v1388, %v1385
        %v1596 = vpack.c.b16 %v1392, %v1389
        %v1597 = vpack.c.b16 %v1393, %v1390
        %v1598 = vpack.c.b16 %v1394, %v1391
        %v1599 = vpack.c.b16 %v1398, %v1395
        %v1600 = vpack.c.b16 %v1399, %v1396
        %v1601 = vpack.c.b16 %v1400, %v1397
        %v1602 = vpack.c.b16 %v1404, %v1401
        %v1603 = vpack.c.b16 %v1405, %v1402
        %v1604 = vpack.c.b16 %v1406, %v1403
        %v1605 = vpack.c.b16 %v1410, %v1407
        %v1606 = vpack.c.b16 %v1411, %v1408
        %v1607 = vpack.c.b16 %v1412, %v1409
        %v1608 = vpack.c.b16 %v1416, %v1413
        %v1609 = vpack.c.b16 %v1417, %v1414
        %v1610 = vpack.c.b16 %v1418, %v1415
        %v1779 = vunpack.c.l.b16 %v732
        %v1780 = vunpack.c.l.b16 %v733
        %v1781 = vunpack.c.l.b16 %v734
        %v1782 = vunpack.c.l.b16 %v735
        %v1783 = vunpack.c.l.b16 %v736
        %v1784 = vunpack.c.l.b16 %v737
        %v1785 = vunpack.c.l.b16 %v738
        %v1786 = vunpack.c.l.b16 %v739
        %v1787 = vunpack.c.l.b16 %v740
        %v1788 = vunpack.c.l.b16 %v741
        %v1789 = vunpack.c.l.b16 %v742
        %v1790 = vunpack.c.l.b16 %v743
        %v1791 = vunpack.c.l.b16 %v744
        %v1792 = vunpack.c.l.b16 %v745
        %v1793 = vunpack.c.l.b16 %v746
        %v1794 = vunpack.c.l.b16 %v747
        %v1795 = vunpack.c.l.b16 %v748
        %v1796 = vunpack.c.l.b16 %v749
        %v1797 = vunpack.c.l.b16 %v750
        %v1798 = vunpack.c.l.b16 %v751
        %v1799 = vunpack.c.l.b16 %v752
        %v1800 = vunpack.c.l.b16 %v753
        %v1801 = vunpack.c.l.b16 %v754
        %v1802 = vunpack.c.l.b16 %v755
        %v1803 = vunpack.c.l.b16 %v756
        %v1804 = vunpack.c.l.b16 %v757
        %v1805 = vunpack.c.l.b16 %v758
        %v1806 = vunpack.c.l.b16 %v759
        %v1807 = vunpack.c.l.b16 %v760
        %v1808 = vunpack.c.l.b16 %v761
        %v1809 = vunpack.c.l.b16 %v762
        %v1810 = vunpack.c.l.b16 %v763
        %v1811 = vunpack.c.l.b16 %v764
        %v1812 = vunpack.c.l.b16 %v765
        %v1813 = vunpack.c.l.b16 %v766
        %v1814 = vunpack.c.l.b16 %v767
        %v1815 = vunpack.c.l.b16 %v768
        %v1816 = vunpack.c.l.b16 %v769
        %v1817 = vunpack.c.l.b16 %v770
        %v1818 = vunpack.c.l.b16 %v771
        %v1819 = vpack.c.b16 %v1780, %v1779
        %v1820 = vpack.c.b16 %v1782, %v1781
        %v1821 = vpack.c.b16 %v1784, %v1783
        %v1822 = vpack.c.b16 %v1786, %v1785
        %v1823 = vpack.c.b16 %v1788, %v1787
        %v1824 = vpack.c.b16 %v1790, %v1789
        %v1825 = vpack.c.b16 %v1792, %v1791
        %v1826 = vpack.c.b16 %v1794, %v1793
        %v1827 = vpack.c.b16 %v1796, %v1795
        %v1828 = vpack.c.b16 %v1798, %v1797
        %v1829 = vpack.c.b16 %v1800, %v1799
        %v1830 = vpack.c.b16 %v1802, %v1801
        %v1831 = vpack.c.b16 %v1804, %v1803
        %v1832 = vpack.c.b16 %v1806, %v1805
        %v1833 = vpack.c.b16 %v1808, %v1807
        %v1834 = vpack.c.b16 %v1810, %v1809
        %v1835 = vpack.c.b16 %v1812, %v1811
        %v1836 = vpack.c.b16 %v1814, %v1813
        %v1837 = vpack.c.b16 %v1816, %v1815
        %v1838 = vpack.c.b16 %v1818, %v1817
        %vm1859 = vcmask 523264
        %v1861 = vsel %vm1859, %v1421, 0
        %v1864 = vsel %vm1859, %v1424, 0
        %v1867 = vsel %vm1859, %v1427, 0
        %v1870 = vsel %vm1859, %v1430, 0
        %v1873 = vsel %vm1859, %v1433, 0
        %v1876 = vsel %vm1859, %v1436, 0
        %v1879 = vsel %vm1859, %v1439, 0
        %v1882 = vsel %vm1859, %v1442, 0
        %v1885 = vsel %vm1859, %v1445, 0
        %v1888 = vsel %vm1859, %v1448, 0
        %v1891 = vsel %vm1859, %v1451, 0
        %v1894 = vsel %vm1859, %v1454, 0
        %v1897 = vsel %vm1859, %v1457, 0
        %v1900 = vsel %vm1859, %v1460, 0
        %v1903 = vsel %vm1859, %v1463, 0
        %v1906 = vsel %vm1859, %v1466, 0
        %v1909 = vsel %vm1859, %v1469, 0
        %v1912 = vsel %vm1859, %v1472, 0
        %v1915 = vsel %vm1859, %v1475, 0
        %v1918 = vsel %vm1859, %v1478, 0
        %v1921 = vsel %vm1859, %v1481, 0
        %v1924 = vsel %vm1859, %v1484, 0
        %v1927 = vsel %vm1859, %v1487, 0
        %v1930 = vsel %vm1859, %v1490, 0
        %v1933 = vsel %vm1859, %v1493, 0
        %v1936 = vsel %vm1859, %v1496, 0
        %v1939 = vsel %vm1859, %v1499, 0
        %v1942 = vsel %vm1859, %v1502, 0
        %v1945 = vsel %vm1859, %v1505, 0
        %v1948 = vsel %vm1859, %v1508, 0
        %v1951 = vsel %vm1859, %v1511, 0
        %v1954 = vsel %vm1859, %v1514, 0
        %v1957 = vsel %vm1859, %v1517, 0
        %v1960 = vsel %vm1859, %v1520, 0
        %v1963 = vsel %vm1859, %v1523, 0
        %v1966 = vsel %vm1859, %v1526, 0
        %v1969 = vsel %vm1859, %v1529, 0
        %v1972 = vsel %vm1859, %v1532, 0
        %v1975 = vsel %vm1859, %v1535, 0
        %v1978 = vsel %vm1859, %v1538, 0
        %v1981 = vsel %vm1859, %v1541, 0
        %v1984 = vsel %vm1859, %v1544, 0
        %v1987 = vsel %vm1859, %v1547, 0
        %v1990 = vsel %vm1859, %v1550, 0
        %v1993 = vsel %vm1859, %v1553, 0
        %v1996 = vsel %vm1859, %v1556, 0
        %v1999 = vsel %vm1859, %v1559, 0
        %v2002 = vsel %vm1859, %v1562, 0
        %v2005 = vsel %vm1859, %v1565, 0
        %v2008 = vsel %vm1859, %v1568, 0
        %v2011 = vsel %vm1859, %v1571, 0
        %v2014 = vsel %vm1859, %v1574, 0
        %v2017 = vsel %vm1859, %v1577, 0
        %v2020 = vsel %vm1859, %v1580, 0
        %v2023 = vsel %vm1859, %v1583, 0
        %v2026 = vsel %vm1859, %v1586, 0
        %v2029 = vsel %vm1859, %v1589, 0
        %v2032 = vsel %vm1859, %v1592, 0
        %v2035 = vsel %vm1859, %v1595, 0
        %v2038 = vsel %vm1859, %v1598, 0
        %v2041 = vsel %vm1859, %v1601, 0
        %v2044 = vsel %vm1859, %v1604, 0
        %v2047 = vsel %vm1859, %v1607, 0
        %v2050 = vsel %vm1859, %v1610, 0
        %2052 = vmatprep.subr.bf16.mxu0 0
        %2053 = vmatpush1.bf16.msra.mxu0 %v1819
        %2054 = vmatprep.subr.bf16.mxu0 0
        %2055 = vmatpush1.bf16.msra.mxu0 %v1820
        %2056 = vmatprep.subr.bf16.mxu0 0
        %2057 = vmatpush1.bf16.msra.mxu0 %v1821
        %2058 = vmatprep.subr.bf16.mxu0 0
        %2059 = vmatpush1.bf16.msra.mxu0 %v1822
        %2060 = vmatprep.subr.bf16.mxu0 0
        %2061 = vmatpush1.bf16.msra.mxu0 %v1823
        %2062 = vmatprep.subr.bf16.mxu0 0
        %2063 = vmatpush1.bf16.msra.mxu0 %v1824
        %2064 = vmatprep.subr.bf16.mxu0 0
        %2065 = vmatpush1.bf16.msra.mxu0 %v1825
        %2066 = vmatprep.subr.bf16.mxu0 0
        %2067 = vmatpush1.bf16.msra.mxu0 %v1826
        %2068 = vmatprep.subr.bf16.mxu0 0
        %2069 = vmatpush1.bf16.msra.mxu0 %v1827
        %2070 = vmatprep.subr.bf16.mxu0 0
        %2071 = vmatpush1.bf16.msra.mxu0 %v1828
        %2072 = vmatprep.subr.bf16.mxu0 0
        %2073 = vmatpush1.bf16.msra.mxu0 %v1829
        %2074 = vmatprep.subr.bf16.mxu0 0
        %2075 = vmatpush1.bf16.msra.mxu0 %v1830
        %2076 = vmatprep.subr.bf16.mxu0 0
        %2077 = vmatpush1.bf16.msra.mxu0 %v1831
        %2078 = vmatprep.subr.bf16.mxu0 0
        %2079 = vmatpush1.bf16.msra.mxu0 %v1832
        %2080 = vmatprep.subr.bf16.mxu0 0
        %2081 = vmatpush1.bf16.msra.mxu0 %v1833
        %2082 = vmatprep.subr.bf16.mxu0 0
        %2083 = vmatpush1.bf16.msra.mxu0 %v1834
        %2084 = vmatprep.mubr.bf16.mxu0 %v1420
        %2085 = vmatmul.mubr.bf16.gmra.mrb[0].mxu0 %v1419
        %v2086 = vpop.f32.mrb[0].mxu0
        %v2087 = vadd.f32 %v777, %v2086
        %v2088 = vpop.f32.mrb[0].mxu0
        %v2089 = vpop.f32.mrb[0].mxu0
        %v2090 = vadd.f32 %v777, %v2089
        %v2091 = vpop.f32.mrb[0].mxu0
        %2092 = vmatprep.mubr.bf16.mxu0 %v1423
        %2093 = vmatmul.mubr.bf16.gmra.mrb[0].mxu0 %v1422
        %v2094 = vpop.f32.mrb[0].mxu0
        %v2095 = vadd.f32 %v777, %v2094
        %v2096 = vpop.f32.mrb[0].mxu0
        %v2097 = vpop.f32.mrb[0].mxu0
        %v2098 = vadd.f32 %v777, %v2097
        %v2099 = vpop.f32.mrb[0].mxu0
        %2100 = vmatprep.mubr.bf16.mxu0 %v1426
        %2101 = vmatmul.mubr.bf16.gmra.mrb[0].mxu0 %v1425
        %v2102 = vpop.f32.mrb[0].mxu0
        %v2103 = vadd.f32 %v777, %v2102
        %v2104 = vpop.f32.mrb[0].mxu0
        %v2105 = vpop.f32.mrb[0].mxu0
        %v2106 = vadd.f32 %v777, %v2105
        %v2107 = vpop.f32.mrb[0].mxu0
        %2108 = vmatprep.mubr.bf16.mxu0 %v1429
        %2109 = vmatmul.mubr.bf16.gmra.mrb[0].mxu0 %v1428
        %v2110 = vpop.f32.mrb[0].mxu0
        %v2111 = vadd.f32 %v777, %v2110
        %v2112 = vpop.f32.mrb[0].mxu0
        %v2113 = vpop.f32.mrb[0].mxu0
        %v2114 = vadd.f32 %v777, %v2113
        %v2115 = vpop.f32.mrb[0].mxu0
        %2116 = vmatprep.mubr.bf16.mxu0 %v1432
        %2117 = vmatmul.mubr.bf16.gmra.mrb[0].mxu0 %v1431
        %v2118 = vpop.f32.mrb[0].mxu0
        %v2119 = vadd.f32 %v777, %v2118
        %v2120 = vpop.f32.mrb[0].mxu0
        %v2121 = vpop.f32.mrb[0].mxu0
        %v2122 = vadd.f32 %v777, %v2121
        %v2123 = vpop.f32.mrb[0].mxu0
        %2124 = vmatprep.mubr.bf16.mxu0 %v1435
        %2125 = vmatmul.mubr.bf16.gmra.mrb[0].mxu0 %v1434
        %v2126 = vpop.f32.mrb[0].mxu0
        %v2127 = vadd.f32 %v777, %v2126
        %v2128 = vpop.f32.mrb[0].mxu0
        %v2129 = vpop.f32.mrb[0].mxu0
        %v2130 = vadd.f32 %v777, %v2129
        %v2131 = vpop.f32.mrb[0].mxu0
        %2132 = vmatprep.mubr.bf16.mxu0 %v1438
        %2133 = vmatmul.mubr.bf16.gmra.mrb[0].mxu0 %v1437
        %v2134 = vpop.f32.mrb[0].mxu0
        %v2135 = vadd.f32 %v777, %v2134
        %v2136 = vpop.f32.mrb[0].mxu0
        %v2137 = vpop.f32.mrb[0].mxu0
        %v2138 = vadd.f32 %v777, %v2137
        %v2139 = vpop.f32.mrb[0].mxu0
        %2140 = vmatprep.mubr.bf16.mxu0 %v1441
        %2141 = vmatmul.mubr.bf16.gmra.mrb[0].mxu0 %v1440
        %v2142 = vpop.f32.mrb[0].mxu0
        %v2143 = vadd.f32 %v777, %v2142
        %v2144 = vpop.f32.mrb[0].mxu0
        %v2145 = vpop.f32.mrb[0].mxu0
        %v2146 = vadd.f32 %v777, %v2145
        %v2147 = vpop.f32.mrb[0].mxu0
        %2148 = vmatprep.mubr.bf16.mxu0 %v1444
        %2149 = vmatmul.mubr.bf16.gmra.mrb[0].mxu0 %v1443
        %v2150 = vpop.f32.mrb[0].mxu0
        %v2151 = vadd.f32 %v777, %v2150
        %v2152 = vpop.f32.mrb[0].mxu0
        %v2153 = vpop.f32.mrb[0].mxu0
        %v2154 = vadd.f32 %v777, %v2153
        %v2155 = vpop.f32.mrb[0].mxu0
        %2156 = vmatprep.mubr.bf16.mxu0 %v1447
        %2157 = vmatmul.mubr.bf16.gmra.mrb[0].mxu0 %v1446
        %v2158 = vpop.f32.mrb[0].mxu0
        %v2159 = vadd.f32 %v777, %v2158
        %v2160 = vpop.f32.mrb[0].mxu0
        %v2161 = vpop.f32.mrb[0].mxu0
        %v2162 = vadd.f32 %v777, %v2161
        %v2163 = vpop.f32.mrb[0].mxu0
        %2164 = vmatprep.mubr.bf16.mxu0 %v1450
        %2165 = vmatmul.mubr.bf16.gmra.mrb[0].mxu0 %v1449
        %v2166 = vpop.f32.mrb[0].mxu0
        %v2167 = vadd.f32 %v777, %v2166
        %v2168 = vpop.f32.mrb[0].mxu0
        %v2169 = vpop.f32.mrb[0].mxu0
        %v2170 = vadd.f32 %v777, %v2169
        %v2171 = vpop.f32.mrb[0].mxu0
        %2172 = vmatprep.mubr.bf16.mxu0 %v1453
        %2173 = vmatmul.mubr.bf16.gmra.mrb[0].mxu0 %v1452
        %v2174 = vpop.f32.mrb[0].mxu0
        %v2175 = vadd.f32 %v777, %v2174
        %v2176 = vpop.f32.mrb[0].mxu0
        %v2177 = vpop.f32.mrb[0].mxu0
        %v2178 = vadd.f32 %v777, %v2177
        %v2179 = vpop.f32.mrb[0].mxu0
        %2180 = vmatprep.mubr.bf16.mxu0 %v1456
        %2181 = vmatmul.mubr.bf16.gmra.mrb[0].mxu0 %v1455
        %v2182 = vpop.f32.mrb[0].mxu0
        %v2183 = vadd.f32 %v777, %v2182
        %v2184 = vpop.f32.mrb[0].mxu0
        %v2185 = vpop.f32.mrb[0].mxu0
        %v2186 = vadd.f32 %v777, %v2185
        %v2187 = vpop.f32.mrb[0].mxu0
        %2188 = vmatprep.mubr.bf16.mxu0 %v1459
        %2189 = vmatmul.mubr.bf16.gmra.mrb[0].mxu0 %v1458
        %v2190 = vpop.f32.mrb[0].mxu0
        %v2191 = vadd.f32 %v777, %v2190
        %v2192 = vpop.f32.mrb[0].mxu0
        %v2193 = vpop.f32.mrb[0].mxu0
        %v2194 = vadd.f32 %v777, %v2193
        %v2195 = vpop.f32.mrb[0].mxu0
        %2196 = vmatprep.mubr.bf16.mxu0 %v1462
        %2197 = vmatmul.mubr.bf16.gmra.mrb[0].mxu0 %v1461
        %v2198 = vpop.f32.mrb[0].mxu0
        %v2199 = vadd.f32 %v777, %v2198
        %v2200 = vpop.f32.mrb[0].mxu0
        %v2201 = vpop.f32.mrb[0].mxu0
        %v2202 = vadd.f32 %v777, %v2201
        %v2203 = vpop.f32.mrb[0].mxu0
        %2204 = vmatprep.mubr.bf16.mxu0 %v1465
        %2205 = vmatmul.mubr.bf16.gmra.mrb[0].mxu0 %v1464
        %v2206 = vpop.f32.mrb[0].mxu0
        %v2207 = vadd.f32 %v777, %v2206
        %v2208 = vpop.f32.mrb[0].mxu0
        %v2209 = vpop.f32.mrb[0].mxu0
        %v2210 = vadd.f32 %v777, %v2209
        %v2211 = vpop.f32.mrb[0].mxu0
        %2212 = vmatprep.mubr.bf16.mxu0 %v1468
        %2213 = vmatmul.mubr.bf16.gmra.mrb[0].mxu0 %v1467
        %v2214 = vpop.f32.mrb[0].mxu0
        %v2215 = vadd.f32 %v777, %v2214
        %v2216 = vpop.f32.mrb[0].mxu0
        %v2217 = vpop.f32.mrb[0].mxu0
        %v2218 = vadd.f32 %v777, %v2217
        %v2219 = vpop.f32.mrb[0].mxu0
        %2220 = vmatprep.mubr.bf16.mxu0 %v1471
        %2221 = vmatmul.mubr.bf16.gmra.mrb[0].mxu0 %v1470
        %v2222 = vpop.f32.mrb[0].mxu0
        %v2223 = vadd.f32 %v777, %v2222
        %v2224 = vpop.f32.mrb[0].mxu0
        %v2225 = vpop.f32.mrb[0].mxu0
        %v2226 = vadd.f32 %v777, %v2225
        %v2227 = vpop.f32.mrb[0].mxu0
        %2228 = vmatprep.mubr.bf16.mxu0 %v1474
        %2229 = vmatmul.mubr.bf16.gmra.mrb[0].mxu0 %v1473
        %v2230 = vpop.f32.mrb[0].mxu0
        %v2231 = vadd.f32 %v777, %v2230
        %v2232 = vpop.f32.mrb[0].mxu0
        %v2233 = vpop.f32.mrb[0].mxu0
        %v2234 = vadd.f32 %v777, %v2233
        %v2235 = vpop.f32.mrb[0].mxu0
        %2236 = vmatprep.mubr.bf16.mxu0 %v1477
        %2237 = vmatmul.mubr.bf16.gmra.mrb[0].mxu0 %v1476
        %v2238 = vpop.f32.mrb[0].mxu0
        %v2239 = vadd.f32 %v777, %v2238
        %v2240 = vpop.f32.mrb[0].mxu0
        %v2241 = vpop.f32.mrb[0].mxu0
        %v2242 = vadd.f32 %v777, %v2241
        %v2243 = vpop.f32.mrb[0].mxu0
        %2244 = vmatprep.mubr.bf16.mxu0 %v1480
        %2245 = vmatmul.mubr.bf16.gmra.mrb[0].mxu0 %v1479
        %v2246 = vpop.f32.mrb[0].mxu0
        %v2247 = vadd.f32 %v777, %v2246
        %v2248 = vpop.f32.mrb[0].mxu0
        %v2249 = vpop.f32.mrb[0].mxu0
        %v2250 = vadd.f32 %v777, %v2249
        %v2251 = vpop.f32.mrb[0].mxu0
        %2252 = vmatprep.mubr.bf16.mxu0 %v1483
        %2253 = vmatmul.mubr.bf16.gmra.mrb[0].mxu0 %v1482
        %v2254 = vpop.f32.mrb[0].mxu0
        %v2255 = vadd.f32 %v777, %v2254
        %v2256 = vpop.f32.mrb[0].mxu0
        %v2257 = vpop.f32.mrb[0].mxu0
        %v2258 = vadd.f32 %v777, %v2257
        %v2259 = vpop.f32.mrb[0].mxu0
        %2260 = vmatprep.mubr.bf16.mxu0 %v1486
        %2261 = vmatmul.mubr.bf16.gmra.mrb[0].mxu0 %v1485
        %v2262 = vpop.f32.mrb[0].mxu0
        %v2263 = vadd.f32 %v777, %v2262
        %v2264 = vpop.f32.mrb[0].mxu0
        %v2265 = vpop.f32.mrb[0].mxu0
        %v2266 = vadd.f32 %v777, %v2265
        %v2267 = vpop.f32.mrb[0].mxu0
        %2268 = vmatprep.mubr.bf16.mxu0 %v1489
        %2269 = vmatmul.mubr.bf16.gmra.mrb[0].mxu0 %v1488
        %v2270 = vpop.f32.mrb[0].mxu0
        %v2271 = vadd.f32 %v777, %v2270
        %v2272 = vpop.f32.mrb[0].mxu0
        %v2273 = vpop.f32.mrb[0].mxu0
        %v2274 = vadd.f32 %v777, %v2273
        %v2275 = vpop.f32.mrb[0].mxu0
        %2276 = vmatprep.mubr.bf16.mxu0 %v1492
        %2277 = vmatmul.mubr.bf16.gmra.mrb[0].mxu0 %v1491
        %v2278 = vpop.f32.mrb[0].mxu0
        %v2279 = vadd.f32 %v777, %v2278
        %v2280 = vpop.f32.mrb[0].mxu0
        %v2281 = vpop.f32.mrb[0].mxu0
        %v2282 = vadd.f32 %v777, %v2281
        %v2283 = vpop.f32.mrb[0].mxu0
        %2284 = vmatprep.mubr.bf16.mxu0 %v1495
        %2285 = vmatmul.mubr.bf16.gmra.mrb[0].mxu0 %v1494
        %v2286 = vpop.f32.mrb[0].mxu0
        %v2287 = vadd.f32 %v777, %v2286
        %v2288 = vpop.f32.mrb[0].mxu0
        %v2289 = vpop.f32.mrb[0].mxu0
        %v2290 = vadd.f32 %v777, %v2289
        %v2291 = vpop.f32.mrb[0].mxu0
        %2292 = vmatprep.mubr.bf16.mxu0 %v1498
        %2293 = vmatmul.mubr.bf16.gmra.mrb[0].mxu0 %v1497
        %v2294 = vpop.f32.mrb[0].mxu0
        %v2295 = vadd.f32 %v777, %v2294
        %v2296 = vpop.f32.mrb[0].mxu0
        %v2297 = vpop.f32.mrb[0].mxu0
        %v2298 = vadd.f32 %v777, %v2297
        %v2299 = vpop.f32.mrb[0].mxu0
        %2300 = vmatprep.mubr.bf16.mxu0 %v1501
        %2301 = vmatmul.mubr.bf16.gmra.mrb[0].mxu0 %v1500
        %v2302 = vpop.f32.mrb[0].mxu0
        %v2303 = vadd.f32 %v777, %v2302
        %v2304 = vpop.f32.mrb[0].mxu0
        %v2305 = vpop.f32.mrb[0].mxu0
        %v2306 = vadd.f32 %v777, %v2305
        %v2307 = vpop.f32.mrb[0].mxu0
        %2308 = vmatprep.mubr.bf16.mxu0 %v1504
        %2309 = vmatmul.mubr.bf16.gmra.mrb[0].mxu0 %v1503
        %v2310 = vpop.f32.mrb[0].mxu0
        %v2311 = vadd.f32 %v777, %v2310
        %v2312 = vpop.f32.mrb[0].mxu0
        %v2313 = vpop.f32.mrb[0].mxu0
        %v2314 = vadd.f32 %v777, %v2313
        %v2315 = vpop.f32.mrb[0].mxu0
        %2316 = vmatprep.mubr.bf16.mxu0 %v1507
        %2317 = vmatmul.mubr.bf16.gmra.mrb[0].mxu0 %v1506
        %v2318 = vpop.f32.mrb[0].mxu0
        %v2319 = vadd.f32 %v777, %v2318
        %v2320 = vpop.f32.mrb[0].mxu0
        %v2321 = vpop.f32.mrb[0].mxu0
        %v2322 = vadd.f32 %v777, %v2321
        %v2323 = vpop.f32.mrb[0].mxu0
        %2324 = vmatprep.mubr.bf16.mxu0 %v1510
        %2325 = vmatmul.mubr.bf16.gmra.mrb[0].mxu0 %v1509
        %v2326 = vpop.f32.mrb[0].mxu0
        %v2327 = vadd.f32 %v777, %v2326
        %v2328 = vpop.f32.mrb[0].mxu0
        %v2329 = vpop.f32.mrb[0].mxu0
        %v2330 = vadd.f32 %v777, %v2329
        %v2331 = vpop.f32.mrb[0].mxu0
        %2332 = vmatprep.mubr.bf16.mxu0 %v1513
        %2333 = vmatmul.mubr.bf16.gmra.mrb[0].mxu0 %v1512
        %v2334 = vpop.f32.mrb[0].mxu0
        %v2335 = vadd.f32 %v777, %v2334
        %v2336 = vpop.f32.mrb[0].mxu0
        %v2337 = vpop.f32.mrb[0].mxu0
        %v2338 = vadd.f32 %v777, %v2337
        %v2339 = vpop.f32.mrb[0].mxu0
        %2340 = vmatprep.mubr.bf16.mxu0 %v1516
        %2341 = vmatmul.mubr.bf16.gmra.mrb[0].mxu0 %v1515
        %v2342 = vpop.f32.mrb[0].mxu0
        %v2343 = vadd.f32 %v777, %v2342
        %v2344 = vpop.f32.mrb[0].mxu0
        %v2345 = vpop.f32.mrb[0].mxu0
        %v2346 = vadd.f32 %v777, %v2345
        %v2347 = vpop.f32.mrb[0].mxu0
        %2348 = vmatprep.mubr.bf16.mxu0 %v1519
        %2349 = vmatmul.mubr.bf16.gmra.mrb[0].mxu0 %v1518
        %v2350 = vpop.f32.mrb[0].mxu0
        %v2351 = vadd.f32 %v777, %v2350
        %v2352 = vpop.f32.mrb[0].mxu0
        %v2353 = vpop.f32.mrb[0].mxu0
        %v2354 = vadd.f32 %v777, %v2353
        %v2355 = vpop.f32.mrb[0].mxu0
        %2356 = vmatprep.mubr.bf16.mxu0 %v1522
        %2357 = vmatmul.mubr.bf16.gmra.mrb[0].mxu0 %v1521
        %v2358 = vpop.f32.mrb[0].mxu0
        %v2359 = vadd.f32 %v777, %v2358
        %v2360 = vpop.f32.mrb[0].mxu0
        %v2361 = vpop.f32.mrb[0].mxu0
        %v2362 = vadd.f32 %v777, %v2361
        %v2363 = vpop.f32.mrb[0].mxu0
        %2364 = vmatprep.mubr.bf16.mxu0 %v1525
        %2365 = vmatmul.mubr.bf16.gmra.mrb[0].mxu0 %v1524
        %v2366 = vpop.f32.mrb[0].mxu0
        %v2367 = vadd.f32 %v777, %v2366
        %v2368 = vpop.f32.mrb[0].mxu0
        %v2369 = vpop.f32.mrb[0].mxu0
        %v2370 = vadd.f32 %v777, %v2369
        %v2371 = vpop.f32.mrb[0].mxu0
        %2372 = vmatprep.mubr.bf16.mxu0 %v1528
        %2373 = vmatmul.mubr.bf16.gmra.mrb[0].mxu0 %v1527
        %v2374 = vpop.f32.mrb[0].mxu0
        %v2375 = vadd.f32 %v777, %v2374
        %v2376 = vpop.f32.mrb[0].mxu0
        %v2377 = vpop.f32.mrb[0].mxu0
        %v2378 = vadd.f32 %v777, %v2377
        %v2379 = vpop.f32.mrb[0].mxu0
        %2380 = vmatprep.mubr.bf16.mxu0 %v1531
        %2381 = vmatmul.mubr.bf16.gmra.mrb[0].mxu0 %v1530
        %v2382 = vpop.f32.mrb[0].mxu0
        %v2383 = vadd.f32 %v777, %v2382
        %v2384 = vpop.f32.mrb[0].mxu0
        %v2385 = vpop.f32.mrb[0].mxu0
        %v2386 = vadd.f32 %v777, %v2385
        %v2387 = vpop.f32.mrb[0].mxu0
        %2388 = vmatprep.mubr.bf16.mxu0 %v1534
        %2389 = vmatmul.mubr.bf16.gmra.mrb[0].mxu0 %v1533
        %v2390 = vpop.f32.mrb[0].mxu0
        %v2391 = vadd.f32 %v777, %v2390
        %v2392 = vpop.f32.mrb[0].mxu0
        %v2393 = vpop.f32.mrb[0].mxu0
        %v2394 = vadd.f32 %v777, %v2393
        %v2395 = vpop.f32.mrb[0].mxu0
        %2396 = vmatprep.mubr.bf16.mxu0 %v1537
        %2397 = vmatmul.mubr.bf16.gmra.mrb[0].mxu0 %v1536
        %v2398 = vpop.f32.mrb[0].mxu0
        %v2399 = vadd.f32 %v777, %v2398
        %v2400 = vpop.f32.mrb[0].mxu0
        %v2401 = vpop.f32.mrb[0].mxu0
        %v2402 = vadd.f32 %v777, %v2401
        %v2403 = vpop.f32.mrb[0].mxu0
        %2404 = vmatprep.mubr.bf16.mxu0 %v1540
        %2405 = vmatmul.mubr.bf16.gmra.mrb[0].mxu0 %v1539
        %v2406 = vpop.f32.mrb[0].mxu0
        %v2407 = vadd.f32 %v777, %v2406
        %v2408 = vpop.f32.mrb[0].mxu0
        %v2409 = vpop.f32.mrb[0].mxu0
        %v2410 = vadd.f32 %v777, %v2409
        %v2411 = vpop.f32.mrb[0].mxu0
        %2412 = vmatprep.mubr.bf16.mxu0 %v1543
        %2413 = vmatmul.mubr.bf16.gmra.mrb[0].mxu0 %v1542
        %v2414 = vpop.f32.mrb[0].mxu0
        %v2415 = vadd.f32 %v777, %v2414
        %v2416 = vpop.f32.mrb[0].mxu0
        %v2417 = vpop.f32.mrb[0].mxu0
        %v2418 = vadd.f32 %v777, %v2417
        %v2419 = vpop.f32.mrb[0].mxu0
        %2420 = vmatprep.mubr.bf16.mxu0 %v1546
        %2421 = vmatmul.mubr.bf16.gmra.mrb[0].mxu0 %v1545
        %v2422 = vpop.f32.mrb[0].mxu0
        %v2423 = vadd.f32 %v777, %v2422
        %v2424 = vpop.f32.mrb[0].mxu0
        %v2425 = vpop.f32.mrb[0].mxu0
        %v2426 = vadd.f32 %v777, %v2425
        %v2427 = vpop.f32.mrb[0].mxu0
        %2428 = vmatprep.mubr.bf16.mxu0 %v1549
        %2429 = vmatmul.mubr.bf16.gmra.mrb[0].mxu0 %v1548
        %v2430 = vpop.f32.mrb[0].mxu0
        %v2431 = vadd.f32 %v777, %v2430
        %v2432 = vpop.f32.mrb[0].mxu0
        %v2433 = vpop.f32.mrb[0].mxu0
        %v2434 = vadd.f32 %v777, %v2433
        %v2435 = vpop.f32.mrb[0].mxu0
        %2436 = vmatprep.mubr.bf16.mxu0 %v1552
        %2437 = vmatmul.mubr.bf16.gmra.mrb[0].mxu0 %v1551
        %v2438 = vpop.f32.mrb[0].mxu0
        %v2439 = vadd.f32 %v777, %v2438
        %v2440 = vpop.f32.mrb[0].mxu0
        %v2441 = vpop.f32.mrb[0].mxu0
        %v2442 = vadd.f32 %v777, %v2441
        %v2443 = vpop.f32.mrb[0].mxu0
        %2444 = vmatprep.mubr.bf16.mxu0 %v1555
        %2445 = vmatmul.mubr.bf16.gmra.mrb[0].mxu0 %v1554
        %v2446 = vpop.f32.mrb[0].mxu0
        %v2447 = vadd.f32 %v777, %v2446
        %v2448 = vpop.f32.mrb[0].mxu0
        %v2449 = vpop.f32.mrb[0].mxu0
        %v2450 = vadd.f32 %v777, %v2449
        %v2451 = vpop.f32.mrb[0].mxu0
        %2452 = vmatprep.mubr.bf16.mxu0 %v1558
        %2453 = vmatmul.mubr.bf16.gmra.mrb[0].mxu0 %v1557
        %v2454 = vpop.f32.mrb[0].mxu0
        %v2455 = vadd.f32 %v777, %v2454
        %v2456 = vpop.f32.mrb[0].mxu0
        %v2457 = vpop.f32.mrb[0].mxu0
        %v2458 = vadd.f32 %v777, %v2457
        %v2459 = vpop.f32.mrb[0].mxu0
        %2460 = vmatprep.mubr.bf16.mxu0 %v1561
        %2461 = vmatmul.mubr.bf16.gmra.mrb[0].mxu0 %v1560
        %v2462 = vpop.f32.mrb[0].mxu0
        %v2463 = vadd.f32 %v777, %v2462
        %v2464 = vpop.f32.mrb[0].mxu0
        %v2465 = vpop.f32.mrb[0].mxu0
        %v2466 = vadd.f32 %v777, %v2465
        %v2467 = vpop.f32.mrb[0].mxu0
        %2468 = vmatprep.mubr.bf16.mxu0 %v1564
        %2469 = vmatmul.mubr.bf16.gmra.mrb[0].mxu0 %v1563
        %v2470 = vpop.f32.mrb[0].mxu0
        %v2471 = vadd.f32 %v777, %v2470
        %v2472 = vpop.f32.mrb[0].mxu0
        %v2473 = vpop.f32.mrb[0].mxu0
        %v2474 = vadd.f32 %v777, %v2473
        %v2475 = vpop.f32.mrb[0].mxu0
        %2476 = vmatprep.mubr.bf16.mxu0 %v1567
        %2477 = vmatmul.mubr.bf16.gmra.mrb[0].mxu0 %v1566
        %v2478 = vpop.f32.mrb[0].mxu0
        %v2479 = vadd.f32 %v777, %v2478
        %v2480 = vpop.f32.mrb[0].mxu0
        %v2481 = vpop.f32.mrb[0].mxu0
        %v2482 = vadd.f32 %v777, %v2481
        %v2483 = vpop.f32.mrb[0].mxu0
        %2484 = vmatprep.mubr.bf16.mxu0 %v1570
        %2485 = vmatmul.mubr.bf16.gmra.mrb[0].mxu0 %v1569
        %v2486 = vpop.f32.mrb[0].mxu0
        %v2487 = vadd.f32 %v777, %v2486
        %v2488 = vpop.f32.mrb[0].mxu0
        %v2489 = vpop.f32.mrb[0].mxu0
        %v2490 = vadd.f32 %v777, %v2489
        %v2491 = vpop.f32.mrb[0].mxu0
        %2492 = vmatprep.mubr.bf16.mxu0 %v1573
        %2493 = vmatmul.mubr.bf16.gmra.mrb[0].mxu0 %v1572
        %v2494 = vpop.f32.mrb[0].mxu0
        %v2495 = vadd.f32 %v777, %v2494
        %v2496 = vpop.f32.mrb[0].mxu0
        %v2497 = vpop.f32.mrb[0].mxu0
        %v2498 = vadd.f32 %v777, %v2497
        %v2499 = vpop.f32.mrb[0].mxu0
        %2500 = vmatprep.mubr.bf16.mxu0 %v1576
        %2501 = vmatmul.mubr.bf16.gmra.mrb[0].mxu0 %v1575
        %v2502 = vpop.f32.mrb[0].mxu0
        %v2503 = vadd.f32 %v777, %v2502
        %v2504 = vpop.f32.mrb[0].mxu0
        %v2505 = vpop.f32.mrb[0].mxu0
        %v2506 = vadd.f32 %v777, %v2505
        %v2507 = vpop.f32.mrb[0].mxu0
        %2508 = vmatprep.mubr.bf16.mxu0 %v1579
        %2509 = vmatmul.mubr.bf16.gmra.mrb[0].mxu0 %v1578
        %v2510 = vpop.f32.mrb[0].mxu0
        %v2511 = vadd.f32 %v777, %v2510
        %v2512 = vpop.f32.mrb[0].mxu0
        %v2513 = vpop.f32.mrb[0].mxu0
        %v2514 = vadd.f32 %v777, %v2513
        %v2515 = vpop.f32.mrb[0].mxu0
        %2516 = vmatprep.mubr.bf16.mxu0 %v1582
        %2517 = vmatmul.mubr.bf16.gmra.mrb[0].mxu0 %v1581
        %v2518 = vpop.f32.mrb[0].mxu0
        %v2519 = vadd.f32 %v777, %v2518
        %v2520 = vpop.f32.mrb[0].mxu0
        %v2521 = vpop.f32.mrb[0].mxu0
        %v2522 = vadd.f32 %v777, %v2521
        %v2523 = vpop.f32.mrb[0].mxu0
        %2524 = vmatprep.mubr.bf16.mxu0 %v1585
        %2525 = vmatmul.mubr.bf16.gmra.mrb[0].mxu0 %v1584
        %v2526 = vpop.f32.mrb[0].mxu0
        %v2527 = vadd.f32 %v777, %v2526
        %v2528 = vpop.f32.mrb[0].mxu0
        %v2529 = vpop.f32.mrb[0].mxu0
        %v2530 = vadd.f32 %v777, %v2529
        %v2531 = vpop.f32.mrb[0].mxu0
        %2532 = vmatprep.mubr.bf16.mxu0 %v1588
        %2533 = vmatmul.mubr.bf16.gmra.mrb[0].mxu0 %v1587
        %v2534 = vpop.f32.mrb[0].mxu0
        %v2535 = vadd.f32 %v777, %v2534
        %v2536 = vpop.f32.mrb[0].mxu0
        %v2537 = vpop.f32.mrb[0].mxu0
        %v2538 = vadd.f32 %v777, %v2537
        %v2539 = vpop.f32.mrb[0].mxu0
        %2540 = vmatprep.mubr.bf16.mxu0 %v1591
        %2541 = vmatmul.mubr.bf16.gmra.mrb[0].mxu0 %v1590
        %v2542 = vpop.f32.mrb[0].mxu0
        %v2543 = vadd.f32 %v777, %v2542
        %v2544 = vpop.f32.mrb[0].mxu0
        %v2545 = vpop.f32.mrb[0].mxu0
        %v2546 = vadd.f32 %v777, %v2545
        %v2547 = vpop.f32.mrb[0].mxu0
        %2548 = vmatprep.mubr.bf16.mxu0 %v1594
        %2549 = vmatmul.mubr.bf16.gmra.mrb[0].mxu0 %v1593
        %v2550 = vpop.f32.mrb[0].mxu0
        %v2551 = vadd.f32 %v777, %v2550
        %v2552 = vpop.f32.mrb[0].mxu0
        %v2553 = vpop.f32.mrb[0].mxu0
        %v2554 = vadd.f32 %v777, %v2553
        %v2555 = vpop.f32.mrb[0].mxu0
        %2556 = vmatprep.mubr.bf16.mxu0 %v1597
        %2557 = vmatmul.mubr.bf16.gmra.mrb[0].mxu0 %v1596
        %v2558 = vpop.f32.mrb[0].mxu0
        %v2559 = vadd.f32 %v777, %v2558
        %v2560 = vpop.f32.mrb[0].mxu0
        %v2561 = vpop.f32.mrb[0].mxu0
        %v2562 = vadd.f32 %v777, %v2561
        %v2563 = vpop.f32.mrb[0].mxu0
        %2564 = vmatprep.mubr.bf16.mxu0 %v1600
        %2565 = vmatmul.mubr.bf16.gmra.mrb[0].mxu0 %v1599
        %v2566 = vpop.f32.mrb[0].mxu0
        %v2567 = vadd.f32 %v777, %v2566
        %v2568 = vpop.f32.mrb[0].mxu0
        %v2569 = vpop.f32.mrb[0].mxu0
        %v2570 = vadd.f32 %v777, %v2569
        %v2571 = vpop.f32.mrb[0].mxu0
        %2572 = vmatprep.mubr.bf16.mxu0 %v1603
        %2573 = vmatmul.mubr.bf16.gmra.mrb[0].mxu0 %v1602
        %v2574 = vpop.f32.mrb[0].mxu0
        %v2575 = vadd.f32 %v777, %v2574
        %v2576 = vpop.f32.mrb[0].mxu0
        %v2577 = vpop.f32.mrb[0].mxu0
        %v2578 = vadd.f32 %v777, %v2577
        %v2579 = vpop.f32.mrb[0].mxu0
        %2580 = vmatprep.mubr.bf16.mxu0 %v1606
        %2581 = vmatmul.mubr.bf16.gmra.mrb[0].mxu0 %v1605
        %v2582 = vpop.f32.mrb[0].mxu0
        %v2583 = vadd.f32 %v777, %v2582
        %v2584 = vpop.f32.mrb[0].mxu0
        %v2585 = vpop.f32.mrb[0].mxu0
        %v2586 = vadd.f32 %v777, %v2585
        %v2587 = vpop.f32.mrb[0].mxu0
        %2588 = vmatprep.mubr.bf16.mxu0 %v1609
        %2589 = vmatmul.mubr.bf16.gmra.mrb[0].mxu0 %v1608
        %v2590 = vpop.f32.mrb[0].mxu0
        %v2591 = vadd.f32 %v777, %v2590
        %v2592 = vpop.f32.mrb[0].mxu0
        %v2593 = vpop.f32.mrb[0].mxu0
        %v2594 = vadd.f32 %v777, %v2593
        %v2595 = vpop.f32.mrb[0].mxu0
        %2596 = vdwg.mxu0
        %2597 = vmatprep.subr.bf16.mxu0 0
        %2598 = vmatpush1.bf16.msra.mxu0 %v1835
        %2599 = vmatprep.subr.bf16.mxu0 0
        %2600 = vmatpush1.bf16.msra.mxu0 %v1836
        %2601 = vmatprep.subr.bf16.mxu0 0
        %2602 = vmatpush1.bf16.msra.mxu0 %v1837
        %2603 = vmatprep.subr.bf16.mxu0 0
        %2604 = vmatpush1.bf16.msra.mxu0 %v1838
        %2605 = vmatprep.subr.bf16.mxu0 0
        %2606 = vmatpush1.bf16.msra.mxu0 0
        %2607 = vmatprep.subr.bf16.mxu0 0
        %2608 = vmatpush1.bf16.msra.mxu0 0
        %2609 = vmatprep.subr.bf16.mxu0 0
        %2610 = vmatpush1.bf16.msra.mxu0 0
        %2611 = vmatprep.subr.bf16.mxu0 0
        %2612 = vmatpush1.bf16.msra.mxu0 0
        %2613 = vmatprep.subr.bf16.mxu0 0
        %2614 = vmatpush1.bf16.msra.mxu0 0
        %2615 = vmatprep.subr.bf16.mxu0 0
        %2616 = vmatpush1.bf16.msra.mxu0 0
        %2617 = vmatprep.subr.bf16.mxu0 0
        %2618 = vmatpush1.bf16.msra.mxu0 0
        %2619 = vmatprep.subr.bf16.mxu0 0
        %2620 = vmatpush1.bf16.msra.mxu0 0
        %2621 = vmatprep.subr.bf16.mxu0 0
        %2622 = vmatpush1.bf16.msra.mxu0 0
        %2623 = vmatprep.subr.bf16.mxu0 0
        %2624 = vmatpush1.bf16.msra.mxu0 0
        %2625 = vmatprep.subr.bf16.mxu0 0
        %2626 = vmatpush1.bf16.msra.mxu0 0
        %2627 = vmatprep.subr.bf16.mxu0 0
        %2628 = vmatpush1.bf16.msra.mxu0 0
        %2629 = vmatprep.mubr.bf16.mxu0 0
        %2630 = vmatmul.mubr.bf16.gmra.mrb[0].mxu0 %v1861
        %v2631 = vpop.f32.mrb[0].mxu0
        %v2632 = vadd.f32 %v2087, %v2631
        %v2633 = vpop.f32.mrb[0].mxu0
        %v2634 = vpop.f32.mrb[0].mxu0
        %v2635 = vadd.f32 %v2090, %v2634
        %v2636 = vpop.f32.mrb[0].mxu0
        %2637 = vmatprep.mubr.bf16.mxu0 0
        %2638 = vmatmul.mubr.bf16.gmra.mrb[0].mxu0 %v1864
        %v2639 = vpop.f32.mrb[0].mxu0
        %v2640 = vadd.f32 %v2095, %v2639
        %v2641 = vpop.f32.mrb[0].mxu0
        %v2642 = vpop.f32.mrb[0].mxu0
        %v2643 = vadd.f32 %v2098, %v2642
        %v2644 = vpop.f32.mrb[0].mxu0
        %2645 = vmatprep.mubr.bf16.mxu0 0
        %2646 = vmatmul.mubr.bf16.gmra.mrb[0].mxu0 %v1867
        %v2647 = vpop.f32.mrb[0].mxu0
        %v2648 = vadd.f32 %v2103, %v2647
        %v2649 = vpop.f32.mrb[0].mxu0
        %v2650 = vpop.f32.mrb[0].mxu0
        %v2651 = vadd.f32 %v2106, %v2650
        %v2652 = vpop.f32.mrb[0].mxu0
        %2653 = vmatprep.mubr.bf16.mxu0 0
        %2654 = vmatmul.mubr.bf16.gmra.mrb[0].mxu0 %v1870
        %v2655 = vpop.f32.mrb[0].mxu0
        %v2656 = vadd.f32 %v2111, %v2655
        %v2657 = vpop.f32.mrb[0].mxu0
        %v2658 = vpop.f32.mrb[0].mxu0
        %v2659 = vadd.f32 %v2114, %v2658
        %v2660 = vpop.f32.mrb[0].mxu0
        %2661 = vmatprep.mubr.bf16.mxu0 0
        %2662 = vmatmul.mubr.bf16.gmra.mrb[0].mxu0 %v1873
        %v2663 = vpop.f32.mrb[0].mxu0
        %v2664 = vadd.f32 %v2119, %v2663
        %v2665 = vpop.f32.mrb[0].mxu0
        %v2666 = vpop.f32.mrb[0].mxu0
        %v2667 = vadd.f32 %v2122, %v2666
        %v2668 = vpop.f32.mrb[0].mxu0
        %2669 = vmatprep.mubr.bf16.mxu0 0
        %2670 = vmatmul.mubr.bf16.gmra.mrb[0].mxu0 %v1876
        %v2671 = vpop.f32.mrb[0].mxu0
        %v2672 = vadd.f32 %v2127, %v2671
        %v2673 = vpop.f32.mrb[0].mxu0
        %v2674 = vpop.f32.mrb[0].mxu0
        %v2675 = vadd.f32 %v2130, %v2674
        %v2676 = vpop.f32.mrb[0].mxu0
        %2677 = vmatprep.mubr.bf16.mxu0 0
        %2678 = vmatmul.mubr.bf16.gmra.mrb[0].mxu0 %v1879
        %v2679 = vpop.f32.mrb[0].mxu0
        %v2680 = vadd.f32 %v2135, %v2679
        %v2681 = vpop.f32.mrb[0].mxu0
        %v2682 = vpop.f32.mrb[0].mxu0
        %v2683 = vadd.f32 %v2138, %v2682
        %v2684 = vpop.f32.mrb[0].mxu0
        %2685 = vmatprep.mubr.bf16.mxu0 0
        %2686 = vmatmul.mubr.bf16.gmra.mrb[0].mxu0 %v1882
        %v2687 = vpop.f32.mrb[0].mxu0
        %v2688 = vadd.f32 %v2143, %v2687
        %v2689 = vpop.f32.mrb[0].mxu0
        %v2690 = vpop.f32.mrb[0].mxu0
        %v2691 = vadd.f32 %v2146, %v2690
        %v2692 = vpop.f32.mrb[0].mxu0
        %2693 = vmatprep.mubr.bf16.mxu0 0
        %2694 = vmatmul.mubr.bf16.gmra.mrb[0].mxu0 %v1885
        %v2695 = vpop.f32.mrb[0].mxu0
        %v2696 = vadd.f32 %v2151, %v2695
        %v2697 = vpop.f32.mrb[0].mxu0
        %v2698 = vpop.f32.mrb[0].mxu0
        %v2699 = vadd.f32 %v2154, %v2698
        %v2700 = vpop.f32.mrb[0].mxu0
        %2701 = vmatprep.mubr.bf16.mxu0 0
        %2702 = vmatmul.mubr.bf16.gmra.mrb[0].mxu0 %v1888
        %v2703 = vpop.f32.mrb[0].mxu0
        %v2704 = vadd.f32 %v2159, %v2703
        %v2705 = vpop.f32.mrb[0].mxu0
        %v2706 = vpop.f32.mrb[0].mxu0
        %v2707 = vadd.f32 %v2162, %v2706
        %v2708 = vpop.f32.mrb[0].mxu0
        %2709 = vmatprep.mubr.bf16.mxu0 0
        %2710 = vmatmul.mubr.bf16.gmra.mrb[0].mxu0 %v1891
        %v2711 = vpop.f32.mrb[0].mxu0
        %v2712 = vadd.f32 %v2167, %v2711
        %v2713 = vpop.f32.mrb[0].mxu0
        %v2714 = vpop.f32.mrb[0].mxu0
        %v2715 = vadd.f32 %v2170, %v2714
        %v2716 = vpop.f32.mrb[0].mxu0
        %2717 = vmatprep.mubr.bf16.mxu0 0
        %2718 = vmatmul.mubr.bf16.gmra.mrb[0].mxu0 %v1894
        %v2719 = vpop.f32.mrb[0].mxu0
        %v2720 = vadd.f32 %v2175, %v2719
        %v2721 = vpop.f32.mrb[0].mxu0
        %v2722 = vpop.f32.mrb[0].mxu0
        %v2723 = vadd.f32 %v2178, %v2722
        %v2724 = vpop.f32.mrb[0].mxu0
        %2725 = vmatprep.mubr.bf16.mxu0 0
        %2726 = vmatmul.mubr.bf16.gmra.mrb[0].mxu0 %v1897
        %v2727 = vpop.f32.mrb[0].mxu0
        %v2728 = vadd.f32 %v2183, %v2727
        %v2729 = vpop.f32.mrb[0].mxu0
        %v2730 = vpop.f32.mrb[0].mxu0
        %v2731 = vadd.f32 %v2186, %v2730
        %v2732 = vpop.f32.mrb[0].mxu0
        %2733 = vmatprep.mubr.bf16.mxu0 0
        %2734 = vmatmul.mubr.bf16.gmra.mrb[0].mxu0 %v1900
        %v2735 = vpop.f32.mrb[0].mxu0
        %v2736 = vadd.f32 %v2191, %v2735
        %v2737 = vpop.f32.mrb[0].mxu0
        %v2738 = vpop.f32.mrb[0].mxu0
        %v2739 = vadd.f32 %v2194, %v2738
        %v2740 = vpop.f32.mrb[0].mxu0
        %2741 = vmatprep.mubr.bf16.mxu0 0
        %2742 = vmatmul.mubr.bf16.gmra.mrb[0].mxu0 %v1903
        %v2743 = vpop.f32.mrb[0].mxu0
        %v2744 = vadd.f32 %v2199, %v2743
        %v2745 = vpop.f32.mrb[0].mxu0
        %v2746 = vpop.f32.mrb[0].mxu0
        %v2747 = vadd.f32 %v2202, %v2746
        %v2748 = vpop.f32.mrb[0].mxu0
        %2749 = vmatprep.mubr.bf16.mxu0 0
        %2750 = vmatmul.mubr.bf16.gmra.mrb[0].mxu0 %v1906
        %v2751 = vpop.f32.mrb[0].mxu0
        %v2752 = vadd.f32 %v2207, %v2751
        %v2753 = vpop.f32.mrb[0].mxu0
        %v2754 = vpop.f32.mrb[0].mxu0
        %v2755 = vadd.f32 %v2210, %v2754
        %v2756 = vpop.f32.mrb[0].mxu0
        %2757 = vmatprep.mubr.bf16.mxu0 0
        %2758 = vmatmul.mubr.bf16.gmra.mrb[0].mxu0 %v1909
        %v2759 = vpop.f32.mrb[0].mxu0
        %v2760 = vadd.f32 %v2215, %v2759
        %v2761 = vpop.f32.mrb[0].mxu0
        %v2762 = vpop.f32.mrb[0].mxu0
        %v2763 = vadd.f32 %v2218, %v2762
        %v2764 = vpop.f32.mrb[0].mxu0
        %2765 = vmatprep.mubr.bf16.mxu0 0
        %2766 = vmatmul.mubr.bf16.gmra.mrb[0].mxu0 %v1912
        %v2767 = vpop.f32.mrb[0].mxu0
        %v2768 = vadd.f32 %v2223, %v2767
        %v2769 = vpop.f32.mrb[0].mxu0
        %v2770 = vpop.f32.mrb[0].mxu0
        %v2771 = vadd.f32 %v2226, %v2770
        %v2772 = vpop.f32.mrb[0].mxu0
        %2773 = vmatprep.mubr.bf16.mxu0 0
        %2774 = vmatmul.mubr.bf16.gmra.mrb[0].mxu0 %v1915
        %v2775 = vpop.f32.mrb[0].mxu0
        %v2776 = vadd.f32 %v2231, %v2775
        %v2777 = vpop.f32.mrb[0].mxu0
        %v2778 = vpop.f32.mrb[0].mxu0
        %v2779 = vadd.f32 %v2234, %v2778
        %v2780 = vpop.f32.mrb[0].mxu0
        %2781 = vmatprep.mubr.bf16.mxu0 0
        %2782 = vmatmul.mubr.bf16.gmra.mrb[0].mxu0 %v1918
        %v2783 = vpop.f32.mrb[0].mxu0
        %v2784 = vadd.f32 %v2239, %v2783
        %v2785 = vpop.f32.mrb[0].mxu0
        %v2786 = vpop.f32.mrb[0].mxu0
        %v2787 = vadd.f32 %v2242, %v2786
        %v2788 = vpop.f32.mrb[0].mxu0
        %2789 = vmatprep.mubr.bf16.mxu0 0
        %2790 = vmatmul.mubr.bf16.gmra.mrb[0].mxu0 %v1921
        %v2791 = vpop.f32.mrb[0].mxu0
        %v2792 = vadd.f32 %v2247, %v2791
        %v2793 = vpop.f32.mrb[0].mxu0
        %v2794 = vpop.f32.mrb[0].mxu0
        %v2795 = vadd.f32 %v2250, %v2794
        %v2796 = vpop.f32.mrb[0].mxu0
        %2797 = vmatprep.mubr.bf16.mxu0 0
        %2798 = vmatmul.mubr.bf16.gmra.mrb[0].mxu0 %v1924
        %v2799 = vpop.f32.mrb[0].mxu0
        %v2800 = vadd.f32 %v2255, %v2799
        %v2801 = vpop.f32.mrb[0].mxu0
        %v2802 = vpop.f32.mrb[0].mxu0
        %v2803 = vadd.f32 %v2258, %v2802
        %v2804 = vpop.f32.mrb[0].mxu0
        %2805 = vmatprep.mubr.bf16.mxu0 0
        %2806 = vmatmul.mubr.bf16.gmra.mrb[0].mxu0 %v1927
        %v2807 = vpop.f32.mrb[0].mxu0
        %v2808 = vadd.f32 %v2263, %v2807
        %v2809 = vpop.f32.mrb[0].mxu0
        %v2810 = vpop.f32.mrb[0].mxu0
        %v2811 = vadd.f32 %v2266, %v2810
        %v2812 = vpop.f32.mrb[0].mxu0
        %2813 = vmatprep.mubr.bf16.mxu0 0
        %2814 = vmatmul.mubr.bf16.gmra.mrb[0].mxu0 %v1930
        %v2815 = vpop.f32.mrb[0].mxu0
        %v2816 = vadd.f32 %v2271, %v2815
        %v2817 = vpop.f32.mrb[0].mxu0
        %v2818 = vpop.f32.mrb[0].mxu0
        %v2819 = vadd.f32 %v2274, %v2818
        %v2820 = vpop.f32.mrb[0].mxu0
        %2821 = vmatprep.mubr.bf16.mxu0 0
        %2822 = vmatmul.mubr.bf16.gmra.mrb[0].mxu0 %v1933
        %v2823 = vpop.f32.mrb[0].mxu0
        %v2824 = vadd.f32 %v2279, %v2823
        %v2825 = vpop.f32.mrb[0].mxu0
        %v2826 = vpop.f32.mrb[0].mxu0
        %v2827 = vadd.f32 %v2282, %v2826
        %v2828 = vpop.f32.mrb[0].mxu0
        %2829 = vmatprep.mubr.bf16.mxu0 0
        %2830 = vmatmul.mubr.bf16.gmra.mrb[0].mxu0 %v1936
        %v2831 = vpop.f32.mrb[0].mxu0
        %v2832 = vadd.f32 %v2287, %v2831
        %v2833 = vpop.f32.mrb[0].mxu0
        %v2834 = vpop.f32.mrb[0].mxu0
        %v2835 = vadd.f32 %v2290, %v2834
        %v2836 = vpop.f32.mrb[0].mxu0
        %2837 = vmatprep.mubr.bf16.mxu0 0
        %2838 = vmatmul.mubr.bf16.gmra.mrb[0].mxu0 %v1939
        %v2839 = vpop.f32.mrb[0].mxu0
        %v2840 = vadd.f32 %v2295, %v2839
        %v2841 = vpop.f32.mrb[0].mxu0
        %v2842 = vpop.f32.mrb[0].mxu0
        %v2843 = vadd.f32 %v2298, %v2842
        %v2844 = vpop.f32.mrb[0].mxu0
        %2845 = vmatprep.mubr.bf16.mxu0 0
        %2846 = vmatmul.mubr.bf16.gmra.mrb[0].mxu0 %v1942
        %v2847 = vpop.f32.mrb[0].mxu0
        %v2848 = vadd.f32 %v2303, %v2847
        %v2849 = vpop.f32.mrb[0].mxu0
        %v2850 = vpop.f32.mrb[0].mxu0
        %v2851 = vadd.f32 %v2306, %v2850
        %v2852 = vpop.f32.mrb[0].mxu0
        %2853 = vmatprep.mubr.bf16.mxu0 0
        %2854 = vmatmul.mubr.bf16.gmra.mrb[0].mxu0 %v1945
        %v2855 = vpop.f32.mrb[0].mxu0
        %v2856 = vadd.f32 %v2311, %v2855
        %v2857 = vpop.f32.mrb[0].mxu0
        %v2858 = vpop.f32.mrb[0].mxu0
        %v2859 = vadd.f32 %v2314, %v2858
        %v2860 = vpop.f32.mrb[0].mxu0
        %2861 = vmatprep.mubr.bf16.mxu0 0
        %2862 = vmatmul.mubr.bf16.gmra.mrb[0].mxu0 %v1948
        %v2863 = vpop.f32.mrb[0].mxu0
        %v2864 = vadd.f32 %v2319, %v2863
        %v2865 = vpop.f32.mrb[0].mxu0
        %v2866 = vpop.f32.mrb[0].mxu0
        %v2867 = vadd.f32 %v2322, %v2866
        %v2868 = vpop.f32.mrb[0].mxu0
        %2869 = vmatprep.mubr.bf16.mxu0 0
        %2870 = vmatmul.mubr.bf16.gmra.mrb[0].mxu0 %v1951
        %v2871 = vpop.f32.mrb[0].mxu0
        %v2872 = vadd.f32 %v2327, %v2871
        %v2873 = vpop.f32.mrb[0].mxu0
        %v2874 = vpop.f32.mrb[0].mxu0
        %v2875 = vadd.f32 %v2330, %v2874
        %v2876 = vpop.f32.mrb[0].mxu0
        %2877 = vmatprep.mubr.bf16.mxu0 0
        %2878 = vmatmul.mubr.bf16.gmra.mrb[0].mxu0 %v1954
        %v2879 = vpop.f32.mrb[0].mxu0
        %v2880 = vadd.f32 %v2335, %v2879
        %v2881 = vpop.f32.mrb[0].mxu0
        %v2882 = vpop.f32.mrb[0].mxu0
        %v2883 = vadd.f32 %v2338, %v2882
        %v2884 = vpop.f32.mrb[0].mxu0
        %2885 = vmatprep.mubr.bf16.mxu0 0
        %2886 = vmatmul.mubr.bf16.gmra.mrb[0].mxu0 %v1957
        %v2887 = vpop.f32.mrb[0].mxu0
        %v2888 = vadd.f32 %v2343, %v2887
        %v2889 = vpop.f32.mrb[0].mxu0
        %v2890 = vpop.f32.mrb[0].mxu0
        %v2891 = vadd.f32 %v2346, %v2890
        %v2892 = vpop.f32.mrb[0].mxu0
        %2893 = vmatprep.mubr.bf16.mxu0 0
        %2894 = vmatmul.mubr.bf16.gmra.mrb[0].mxu0 %v1960
        %v2895 = vpop.f32.mrb[0].mxu0
        %v2896 = vadd.f32 %v2351, %v2895
        %v2897 = vpop.f32.mrb[0].mxu0
        %v2898 = vpop.f32.mrb[0].mxu0
        %v2899 = vadd.f32 %v2354, %v2898
        %v2900 = vpop.f32.mrb[0].mxu0
        %2901 = vmatprep.mubr.bf16.mxu0 0
        %2902 = vmatmul.mubr.bf16.gmra.mrb[0].mxu0 %v1963
        %v2903 = vpop.f32.mrb[0].mxu0
        %v2904 = vadd.f32 %v2359, %v2903
        %v2905 = vpop.f32.mrb[0].mxu0
        %v2906 = vpop.f32.mrb[0].mxu0
        %v2907 = vadd.f32 %v2362, %v2906
        %v2908 = vpop.f32.mrb[0].mxu0
        %2909 = vmatprep.mubr.bf16.mxu0 0
        %2910 = vmatmul.mubr.bf16.gmra.mrb[0].mxu0 %v1966
        %v2911 = vpop.f32.mrb[0].mxu0
        %v2912 = vadd.f32 %v2367, %v2911
        %v2913 = vpop.f32.mrb[0].mxu0
        %v2914 = vpop.f32.mrb[0].mxu0
        %v2915 = vadd.f32 %v2370, %v2914
        %v2916 = vpop.f32.mrb[0].mxu0
        %2917 = vmatprep.mubr.bf16.mxu0 0
        %2918 = vmatmul.mubr.bf16.gmra.mrb[0].mxu0 %v1969
        %v2919 = vpop.f32.mrb[0].mxu0
        %v2920 = vadd.f32 %v2375, %v2919
        %v2921 = vpop.f32.mrb[0].mxu0
        %v2922 = vpop.f32.mrb[0].mxu0
        %v2923 = vadd.f32 %v2378, %v2922
        %v2924 = vpop.f32.mrb[0].mxu0
        %2925 = vmatprep.mubr.bf16.mxu0 0
        %2926 = vmatmul.mubr.bf16.gmra.mrb[0].mxu0 %v1972
        %v2927 = vpop.f32.mrb[0].mxu0
        %v2928 = vadd.f32 %v2383, %v2927
        %v2929 = vpop.f32.mrb[0].mxu0
        %v2930 = vpop.f32.mrb[0].mxu0
        %v2931 = vadd.f32 %v2386, %v2930
        %v2932 = vpop.f32.mrb[0].mxu0
        %2933 = vmatprep.mubr.bf16.mxu0 0
        %2934 = vmatmul.mubr.bf16.gmra.mrb[0].mxu0 %v1975
        %v2935 = vpop.f32.mrb[0].mxu0
        %v2936 = vadd.f32 %v2391, %v2935
        %v2937 = vpop.f32.mrb[0].mxu0
        %v2938 = vpop.f32.mrb[0].mxu0
        %v2939 = vadd.f32 %v2394, %v2938
        %v2940 = vpop.f32.mrb[0].mxu0
        %2941 = vmatprep.mubr.bf16.mxu0 0
        %2942 = vmatmul.mubr.bf16.gmra.mrb[0].mxu0 %v1978
        %v2943 = vpop.f32.mrb[0].mxu0
        %v2944 = vadd.f32 %v2399, %v2943
        %v2945 = vpop.f32.mrb[0].mxu0
        %v2946 = vpop.f32.mrb[0].mxu0
        %v2947 = vadd.f32 %v2402, %v2946
        %v2948 = vpop.f32.mrb[0].mxu0
        %2949 = vmatprep.mubr.bf16.mxu0 0
        %2950 = vmatmul.mubr.bf16.gmra.mrb[0].mxu0 %v1981
        %v2951 = vpop.f32.mrb[0].mxu0
        %v2952 = vadd.f32 %v2407, %v2951
        %v2953 = vpop.f32.mrb[0].mxu0
        %v2954 = vpop.f32.mrb[0].mxu0
        %v2955 = vadd.f32 %v2410, %v2954
        %v2956 = vpop.f32.mrb[0].mxu0
        %2957 = vmatprep.mubr.bf16.mxu0 0
        %2958 = vmatmul.mubr.bf16.gmra.mrb[0].mxu0 %v1984
        %v2959 = vpop.f32.mrb[0].mxu0
        %v2960 = vadd.f32 %v2415, %v2959
        %v2961 = vpop.f32.mrb[0].mxu0
        %v2962 = vpop.f32.mrb[0].mxu0
        %v2963 = vadd.f32 %v2418, %v2962
        %v2964 = vpop.f32.mrb[0].mxu0
        %2965 = vmatprep.mubr.bf16.mxu0 0
        %2966 = vmatmul.mubr.bf16.gmra.mrb[0].mxu0 %v1987
        %v2967 = vpop.f32.mrb[0].mxu0
        %v2968 = vadd.f32 %v2423, %v2967
        %v2969 = vpop.f32.mrb[0].mxu0
        %v2970 = vpop.f32.mrb[0].mxu0
        %v2971 = vadd.f32 %v2426, %v2970
        %v2972 = vpop.f32.mrb[0].mxu0
        %2973 = vmatprep.mubr.bf16.mxu0 0
        %2974 = vmatmul.mubr.bf16.gmra.mrb[0].mxu0 %v1990
        %v2975 = vpop.f32.mrb[0].mxu0
        %v2976 = vadd.f32 %v2431, %v2975
        %v2977 = vpop.f32.mrb[0].mxu0
        %v2978 = vpop.f32.mrb[0].mxu0
        %v2979 = vadd.f32 %v2434, %v2978
        %v2980 = vpop.f32.mrb[0].mxu0
        %2981 = vmatprep.mubr.bf16.mxu0 0
        %2982 = vmatmul.mubr.bf16.gmra.mrb[0].mxu0 %v1993
        %v2983 = vpop.f32.mrb[0].mxu0
        %v2984 = vadd.f32 %v2439, %v2983
        %v2985 = vpop.f32.mrb[0].mxu0
        %v2986 = vpop.f32.mrb[0].mxu0
        %v2987 = vadd.f32 %v2442, %v2986
        %v2988 = vpop.f32.mrb[0].mxu0
        %2989 = vmatprep.mubr.bf16.mxu0 0
        %2990 = vmatmul.mubr.bf16.gmra.mrb[0].mxu0 %v1996
        %v2991 = vpop.f32.mrb[0].mxu0
        %v2992 = vadd.f32 %v2447, %v2991
        %v2993 = vpop.f32.mrb[0].mxu0
        %v2994 = vpop.f32.mrb[0].mxu0
        %v2995 = vadd.f32 %v2450, %v2994
        %v2996 = vpop.f32.mrb[0].mxu0
        %2997 = vmatprep.mubr.bf16.mxu0 0
        %2998 = vmatmul.mubr.bf16.gmra.mrb[0].mxu0 %v1999
        %v2999 = vpop.f32.mrb[0].mxu0
        %v3000 = vadd.f32 %v2455, %v2999
        %v3001 = vpop.f32.mrb[0].mxu0
        %v3002 = vpop.f32.mrb[0].mxu0
        %v3003 = vadd.f32 %v2458, %v3002
        %v3004 = vpop.f32.mrb[0].mxu0
        %3005 = vmatprep.mubr.bf16.mxu0 0
        %3006 = vmatmul.mubr.bf16.gmra.mrb[0].mxu0 %v2002
        %v3007 = vpop.f32.mrb[0].mxu0
        %v3008 = vadd.f32 %v2463, %v3007
        %v3009 = vpop.f32.mrb[0].mxu0
        %v3010 = vpop.f32.mrb[0].mxu0
        %v3011 = vadd.f32 %v2466, %v3010
        %v3012 = vpop.f32.mrb[0].mxu0
        %3013 = vmatprep.mubr.bf16.mxu0 0
        %3014 = vmatmul.mubr.bf16.gmra.mrb[0].mxu0 %v2005
        %v3015 = vpop.f32.mrb[0].mxu0
        %v3016 = vadd.f32 %v2471, %v3015
        %v3017 = vpop.f32.mrb[0].mxu0
        %v3018 = vpop.f32.mrb[0].mxu0
        %v3019 = vadd.f32 %v2474, %v3018
        %v3020 = vpop.f32.mrb[0].mxu0
        %3021 = vmatprep.mubr.bf16.mxu0 0
        %3022 = vmatmul.mubr.bf16.gmra.mrb[0].mxu0 %v2008
        %v3023 = vpop.f32.mrb[0].mxu0
        %v3024 = vadd.f32 %v2479, %v3023
        %v3025 = vpop.f32.mrb[0].mxu0
        %v3026 = vpop.f32.mrb[0].mxu0
        %v3027 = vadd.f32 %v2482, %v3026
        %v3028 = vpop.f32.mrb[0].mxu0
        %3029 = vmatprep.mubr.bf16.mxu0 0
        %3030 = vmatmul.mubr.bf16.gmra.mrb[0].mxu0 %v2011
        %v3031 = vpop.f32.mrb[0].mxu0
        %v3032 = vadd.f32 %v2487, %v3031
        %v3033 = vpop.f32.mrb[0].mxu0
        %v3034 = vpop.f32.mrb[0].mxu0
        %v3035 = vadd.f32 %v2490, %v3034
        %v3036 = vpop.f32.mrb[0].mxu0
        %3037 = vmatprep.mubr.bf16.mxu0 0
        %3038 = vmatmul.mubr.bf16.gmra.mrb[0].mxu0 %v2014
        %v3039 = vpop.f32.mrb[0].mxu0
        %v3040 = vadd.f32 %v2495, %v3039
        %v3041 = vpop.f32.mrb[0].mxu0
        %v3042 = vpop.f32.mrb[0].mxu0
        %v3043 = vadd.f32 %v2498, %v3042
        %v3044 = vpop.f32.mrb[0].mxu0
        %3045 = vmatprep.mubr.bf16.mxu0 0
        %3046 = vmatmul.mubr.bf16.gmra.mrb[0].mxu0 %v2017
        %v3047 = vpop.f32.mrb[0].mxu0
        %v3048 = vadd.f32 %v2503, %v3047
        %v3049 = vpop.f32.mrb[0].mxu0
        %v3050 = vpop.f32.mrb[0].mxu0
        %v3051 = vadd.f32 %v2506, %v3050
        %v3052 = vpop.f32.mrb[0].mxu0
        %3053 = vmatprep.mubr.bf16.mxu0 0
        %3054 = vmatmul.mubr.bf16.gmra.mrb[0].mxu0 %v2020
        %v3055 = vpop.f32.mrb[0].mxu0
        %v3056 = vadd.f32 %v2511, %v3055
        %v3057 = vpop.f32.mrb[0].mxu0
        %v3058 = vpop.f32.mrb[0].mxu0
        %v3059 = vadd.f32 %v2514, %v3058
        %v3060 = vpop.f32.mrb[0].mxu0
        %3061 = vmatprep.mubr.bf16.mxu0 0
        %3062 = vmatmul.mubr.bf16.gmra.mrb[0].mxu0 %v2023
        %v3063 = vpop.f32.mrb[0].mxu0
        %v3064 = vadd.f32 %v2519, %v3063
        %v3065 = vpop.f32.mrb[0].mxu0
        %v3066 = vpop.f32.mrb[0].mxu0
        %v3067 = vadd.f32 %v2522, %v3066
        %v3068 = vpop.f32.mrb[0].mxu0
        %3069 = vmatprep.mubr.bf16.mxu0 0
        %3070 = vmatmul.mubr.bf16.gmra.mrb[0].mxu0 %v2026
        %v3071 = vpop.f32.mrb[0].mxu0
        %v3072 = vadd.f32 %v2527, %v3071
        %v3073 = vpop.f32.mrb[0].mxu0
        %v3074 = vpop.f32.mrb[0].mxu0
        %v3075 = vadd.f32 %v2530, %v3074
        %v3076 = vpop.f32.mrb[0].mxu0
        %3077 = vmatprep.mubr.bf16.mxu0 0
        %3078 = vmatmul.mubr.bf16.gmra.mrb[0].mxu0 %v2029
        %v3079 = vpop.f32.mrb[0].mxu0
        %v3080 = vadd.f32 %v2535, %v3079
        %v3081 = vpop.f32.mrb[0].mxu0
        %v3082 = vpop.f32.mrb[0].mxu0
        %v3083 = vadd.f32 %v2538, %v3082
        %v3084 = vpop.f32.mrb[0].mxu0
        %3085 = vmatprep.mubr.bf16.mxu0 0
        %3086 = vmatmul.mubr.bf16.gmra.mrb[0].mxu0 %v2032
        %v3087 = vpop.f32.mrb[0].mxu0
        %v3088 = vadd.f32 %v2543, %v3087
        %v3089 = vpop.f32.mrb[0].mxu0
        %v3090 = vpop.f32.mrb[0].mxu0
        %v3091 = vadd.f32 %v2546, %v3090
        %v3092 = vpop.f32.mrb[0].mxu0
        %3093 = vmatprep.mubr.bf16.mxu0 0
        %3094 = vmatmul.mubr.bf16.gmra.mrb[0].mxu0 %v2035
        %v3095 = vpop.f32.mrb[0].mxu0
        %v3096 = vadd.f32 %v2551, %v3095
        %v3097 = vpop.f32.mrb[0].mxu0
        %v3098 = vpop.f32.mrb[0].mxu0
        %v3099 = vadd.f32 %v2554, %v3098
        %v3100 = vpop.f32.mrb[0].mxu0
        %3101 = vmatprep.mubr.bf16.mxu0 0
        %3102 = vmatmul.mubr.bf16.gmra.mrb[0].mxu0 %v2038
        %v3103 = vpop.f32.mrb[0].mxu0
        %v3104 = vadd.f32 %v2559, %v3103
        %v3105 = vpop.f32.mrb[0].mxu0
        %v3106 = vpop.f32.mrb[0].mxu0
        %v3107 = vadd.f32 %v2562, %v3106
        %v3108 = vpop.f32.mrb[0].mxu0
        %3109 = vmatprep.mubr.bf16.mxu0 0
        %3110 = vmatmul.mubr.bf16.gmra.mrb[0].mxu0 %v2041
        %v3111 = vpop.f32.mrb[0].mxu0
        %v3112 = vadd.f32 %v2567, %v3111
        %v3113 = vpop.f32.mrb[0].mxu0
        %v3114 = vpop.f32.mrb[0].mxu0
        %v3115 = vadd.f32 %v2570, %v3114
        %v3116 = vpop.f32.mrb[0].mxu0
        %3117 = vmatprep.mubr.bf16.mxu0 0
        %3118 = vmatmul.mubr.bf16.gmra.mrb[0].mxu0 %v2044
        %v3119 = vpop.f32.mrb[0].mxu0
        %v3120 = vadd.f32 %v2575, %v3119
        %v3121 = vpop.f32.mrb[0].mxu0
        %v3122 = vpop.f32.mrb[0].mxu0
        %v3123 = vadd.f32 %v2578, %v3122
        %v3124 = vpop.f32.mrb[0].mxu0
        %3125 = vmatprep.mubr.bf16.mxu0 0
        %3126 = vmatmul.mubr.bf16.gmra.mrb[0].mxu0 %v2047
        %v3127 = vpop.f32.mrb[0].mxu0
        %v3128 = vadd.f32 %v2583, %v3127
        %v3129 = vpop.f32.mrb[0].mxu0
        %v3130 = vpop.f32.mrb[0].mxu0
        %v3131 = vadd.f32 %v2586, %v3130
        %v3132 = vpop.f32.mrb[0].mxu0
        %3133 = vmatprep.mubr.bf16.mxu0 0
        %3134 = vmatmul.mubr.bf16.gmra.mrb[0].mxu0 %v2050
        %v3135 = vpop.f32.mrb[0].mxu0
        %v3136 = vadd.f32 %v2591, %v3135
        %v3137 = vpop.f32.mrb[0].mxu0
        %v3138 = vpop.f32.mrb[0].mxu0
        %v3139 = vadd.f32 %v2594, %v3138
        %v3140 = vpop.f32.mrb[0].mxu0
        %3141 = vdwg.mxu0
        %v3142 = vmax.f32 %v2632, 0.0
        %v3143 = vmax.f32 %v2635, 0.0
        %v3144 = vmax.f32 %v2640, 0.0
        %v3145 = vmax.f32 %v2643, 0.0
        %v3146 = vmax.f32 %v2648, 0.0
        %v3147 = vmax.f32 %v2651, 0.0
        %v3148 = vmax.f32 %v2656, 0.0
        %v3149 = vmax.f32 %v2659, 0.0
        %v3150 = vmax.f32 %v2664, 0.0
        %v3151 = vmax.f32 %v2667, 0.0
        %v3152 = vmax.f32 %v2672, 0.0
        %v3153 = vmax.f32 %v2675, 0.0
        %v3154 = vmax.f32 %v2680, 0.0
        %v3155 = vmax.f32 %v2683, 0.0
        %v3156 = vmax.f32 %v2688, 0.0
        %v3157 = vmax.f32 %v2691, 0.0
        %v3158 = vmax.f32 %v2696, 0.0
        %v3159 = vmax.f32 %v2699, 0.0
        %v3160 = vmax.f32 %v2704, 0.0
        %v3161 = vmax.f32 %v2707, 0.0
        %v3162 = vmax.f32 %v2712, 0.0
        %v3163 = vmax.f32 %v2715, 0.0
        %v3164 = vmax.f32 %v2720, 0.0
        %v3165 = vmax.f32 %v2723, 0.0
        %v3166 = vmax.f32 %v2728, 0.0
        %v3167 = vmax.f32 %v2731, 0.0
        %v3168 = vmax.f32 %v2736, 0.0
        %v3169 = vmax.f32 %v2739, 0.0
        %v3170 = vmax.f32 %v2744, 0.0
        %v3171 = vmax.f32 %v2747, 0.0
        %v3172 = vmax.f32 %v2752, 0.0
        %v3173 = vmax.f32 %v2755, 0.0
        %v3174 = vmax.f32 %v2760, 0.0
        %v3175 = vmax.f32 %v2763, 0.0
        %v3176 = vmax.f32 %v2768, 0.0
        %v3177 = vmax.f32 %v2771, 0.0
        %v3178 = vmax.f32 %v2776, 0.0
        %v3179 = vmax.f32 %v2779, 0.0
        %v3180 = vmax.f32 %v2784, 0.0
        %v3181 = vmax.f32 %v2787, 0.0
        %v3182 = vmax.f32 %v2792, 0.0
        %v3183 = vmax.f32 %v2795, 0.0
        %v3184 = vmax.f32 %v2800, 0.0
        %v3185 = vmax.f32 %v2803, 0.0
        %v3186 = vmax.f32 %v2808, 0.0
        %v3187 = vmax.f32 %v2811, 0.0
        %v3188 = vmax.f32 %v2816, 0.0
        %v3189 = vmax.f32 %v2819, 0.0
        %v3190 = vmax.f32 %v2824, 0.0
        %v3191 = vmax.f32 %v2827, 0.0
        %v3192 = vmax.f32 %v2832, 0.0
        %v3193 = vmax.f32 %v2835, 0.0
        %v3194 = vmax.f32 %v2840, 0.0
        %v3195 = vmax.f32 %v2843, 0.0
        %v3196 = vmax.f32 %v2848, 0.0
        %v3197 = vmax.f32 %v2851, 0.0
        %v3198 = vmax.f32 %v2856, 0.0
        %v3199 = vmax.f32 %v2859, 0.0
        %v3200 = vmax.f32 %v2864, 0.0
        %v3201 = vmax.f32 %v2867, 0.0
        %v3202 = vmax.f32 %v2872, 0.0
        %v3203 = vmax.f32 %v2875, 0.0
        %v3204 = vmax.f32 %v2880, 0.0
        %v3205 = vmax.f32 %v2883, 0.0
        %v3206 = vmax.f32 %v2888, 0.0
        %v3207 = vmax.f32 %v2891, 0.0
        %v3208 = vmax.f32 %v2896, 0.0
        %v3209 = vmax.f32 %v2899, 0.0
        %v3210 = vmax.f32 %v2904, 0.0
        %v3211 = vmax.f32 %v2907, 0.0
        %v3212 = vmax.f32 %v2912, 0.0
        %v3213 = vmax.f32 %v2915, 0.0
        %v3214 = vmax.f32 %v2920, 0.0
        %v3215 = vmax.f32 %v2923, 0.0
        %v3216 = vmax.f32 %v2928, 0.0
        %v3217 = vmax.f32 %v2931, 0.0
        %v3218 = vmax.f32 %v2936, 0.0
        %v3219 = vmax.f32 %v2939, 0.0
        %v3220 = vmax.f32 %v2944, 0.0
        %v3221 = vmax.f32 %v2947, 0.0
        %v3222 = vmax.f32 %v2952, 0.0
        %v3223 = vmax.f32 %v2955, 0.0
        %v3224 = vmax.f32 %v2960, 0.0
        %v3225 = vmax.f32 %v2963, 0.0
        %v3226 = vmax.f32 %v2968, 0.0
        %v3227 = vmax.f32 %v2971, 0.0
        %v3228 = vmax.f32 %v2976, 0.0
        %v3229 = vmax.f32 %v2979, 0.0
        %v3230 = vmax.f32 %v2984, 0.0
        %v3231 = vmax.f32 %v2987, 0.0
        %v3232 = vmax.f32 %v2992, 0.0
        %v3233 = vmax.f32 %v2995, 0.0
        %v3234 = vmax.f32 %v3000, 0.0
        %v3235 = vmax.f32 %v3003, 0.0
        %v3236 = vmax.f32 %v3008, 0.0
        %v3237 = vmax.f32 %v3011, 0.0
        %v3238 = vmax.f32 %v3016, 0.0
        %v3239 = vmax.f32 %v3019, 0.0
        %v3240 = vmax.f32 %v3024, 0.0
        %v3241 = vmax.f32 %v3027, 0.0
        %v3242 = vmax.f32 %v3032, 0.0
        %v3243 = vmax.f32 %v3035, 0.0
        %v3244 = vmax.f32 %v3040, 0.0
        %v3245 = vmax.f32 %v3043, 0.0
        %v3246 = vmax.f32 %v3048, 0.0
        %v3247 = vmax.f32 %v3051, 0.0
        %v3248 = vmax.f32 %v3056, 0.0
        %v3249 = vmax.f32 %v3059, 0.0
        %v3250 = vmax.f32 %v3064, 0.0
        %v3251 = vmax.f32 %v3067, 0.0
        %v3252 = vmax.f32 %v3072, 0.0
        %v3253 = vmax.f32 %v3075, 0.0
        %v3254 = vmax.f32 %v3080, 0.0
        %v3255 = vmax.f32 %v3083, 0.0
        %v3256 = vmax.f32 %v3088, 0.0
        %v3257 = vmax.f32 %v3091, 0.0
        %v3258 = vmax.f32 %v3096, 0.0
        %v3259 = vmax.f32 %v3099, 0.0
        %v3260 = vmax.f32 %v3104, 0.0
        %v3261 = vmax.f32 %v3107, 0.0
        %v3262 = vmax.f32 %v3112, 0.0
        %v3263 = vmax.f32 %v3115, 0.0
        %v3264 = vmax.f32 %v3120, 0.0
        %v3265 = vmax.f32 %v3123, 0.0
        %v3266 = vmax.f32 %v3128, 0.0
        %v3267 = vmax.f32 %v3131, 0.0
        %v3268 = vmax.f32 %v3136, 0.0
        %v3269 = vmax.f32 %v3139, 0.0
        %v3270 = vpack.c.bf16 %v3143, %v3142
        %v3271 = vpack.c.bf16 %v3145, %v3144
        %v3272 = vpack.c.bf16 %v3147, %v3146
        %v3273 = vpack.c.bf16 %v3149, %v3148
        %v3274 = vpack.c.bf16 %v3151, %v3150
        %v3275 = vpack.c.bf16 %v3153, %v3152
        %v3276 = vpack.c.bf16 %v3155, %v3154
        %v3277 = vpack.c.bf16 %v3157, %v3156
        %v3278 = vpack.c.bf16 %v3159, %v3158
        %v3279 = vpack.c.bf16 %v3161, %v3160
        %v3280 = vpack.c.bf16 %v3163, %v3162
        %v3281 = vpack.c.bf16 %v3165, %v3164
        %v3282 = vpack.c.bf16 %v3167, %v3166
        %v3283 = vpack.c.bf16 %v3169, %v3168
        %v3284 = vpack.c.bf16 %v3171, %v3170
        %v3285 = vpack.c.bf16 %v3173, %v3172
        %v3286 = vpack.c.bf16 %v3175, %v3174
        %v3287 = vpack.c.bf16 %v3177, %v3176
        %v3288 = vpack.c.bf16 %v3179, %v3178
        %v3289 = vpack.c.bf16 %v3181, %v3180
        %v3290 = vpack.c.bf16 %v3183, %v3182
        %v3291 = vpack.c.bf16 %v3185, %v3184
        %v3292 = vpack.c.bf16 %v3187, %v3186
        %v3293 = vpack.c.bf16 %v3189, %v3188
        %v3294 = vpack.c.bf16 %v3191, %v3190
        %v3295 = vpack.c.bf16 %v3193, %v3192
        %v3296 = vpack.c.bf16 %v3195, %v3194
        %v3297 = vpack.c.bf16 %v3197, %v3196
        %v3298 = vpack.c.bf16 %v3199, %v3198
        %v3299 = vpack.c.bf16 %v3201, %v3200
        %v3300 = vpack.c.bf16 %v3203, %v3202
        %v3301 = vpack.c.bf16 %v3205, %v3204
        %v3302 = vpack.c.bf16 %v3207, %v3206
        %v3303 = vpack.c.bf16 %v3209, %v3208
        %v3304 = vpack.c.bf16 %v3211, %v3210
        %v3305 = vpack.c.bf16 %v3213, %v3212
        %v3306 = vpack.c.bf16 %v3215, %v3214
        %v3307 = vpack.c.bf16 %v3217, %v3216
        %v3308 = vpack.c.bf16 %v3219, %v3218
        %v3309 = vpack.c.bf16 %v3221, %v3220
        %v3310 = vpack.c.bf16 %v3223, %v3222
        %v3311 = vpack.c.bf16 %v3225, %v3224
        %v3312 = vpack.c.bf16 %v3227, %v3226
        %v3313 = vpack.c.bf16 %v3229, %v3228
        %v3314 = vpack.c.bf16 %v3231, %v3230
        %v3315 = vpack.c.bf16 %v3233, %v3232
        %v3316 = vpack.c.bf16 %v3235, %v3234
        %v3317 = vpack.c.bf16 %v3237, %v3236
        %v3318 = vpack.c.bf16 %v3239, %v3238
        %v3319 = vpack.c.bf16 %v3241, %v3240
        %v3320 = vpack.c.bf16 %v3243, %v3242
        %v3321 = vpack.c.bf16 %v3245, %v3244
        %v3322 = vpack.c.bf16 %v3247, %v3246
        %v3323 = vpack.c.bf16 %v3249, %v3248
        %v3324 = vpack.c.bf16 %v3251, %v3250
        %v3325 = vpack.c.bf16 %v3253, %v3252
        %v3326 = vpack.c.bf16 %v3255, %v3254
        %v3327 = vpack.c.bf16 %v3257, %v3256
        %v3328 = vpack.c.bf16 %v3259, %v3258
        %v3329 = vpack.c.bf16 %v3261, %v3260
        %v3330 = vpack.c.bf16 %v3263, %v3262
        %v3331 = vpack.c.bf16 %v3265, %v3264
        %v3332 = vpack.c.bf16 %v3267, %v3266
        %v3333 = vpack.c.bf16 %v3269, %v3268
        %v3334 = vld [vmem:[%s4] sm:$0xf]
        %v3335 = vld [vmem:[%s4 + $0x4] sm:$0xf]
        %v3336 = vld [vmem:[%s4 + $0x8] sm:$0xf]
        %v3337 = vld [vmem:[%s4 + $0xc] sm:$0xf]
        %v3338 = vld [vmem:[%s4 + $0x10] sm:$0xf]
        %v3339 = vld [vmem:[%s4 + $0x14] sm:$0xf]
        %v3340 = vld [vmem:[%s4 + $0x18] sm:$0xf]
        %v3341 = vld [vmem:[%s4 + $0x1c] sm:$0xf]
        %v3342 = vld [vmem:[%s4 + $0x20] sm:$0xf]
        %v3343 = vld [vmem:[%s4 + $0x24] sm:$0xf]
        %v3344 = vld [vmem:[%s4 + $0x28] sm:$0xf]
        %v3345 = vld [vmem:[%s4 + $0x2c] sm:$0xf]
        %v3346 = vld [vmem:[%s4 + $0x30] sm:$0xf]
        %v3347 = vld [vmem:[%s4 + $0x34] sm:$0xf]
        %v3348 = vld [vmem:[%s4 + $0x38] sm:$0xf]
        %v3349 = vld [vmem:[%s4 + $0x3c] sm:$0xf]
        %v3350 = vld [vmem:[%s5] sm:$0x1]
        %v3352 = vlaneseq
        %v3353 = vshrl.u32 %v3352, 7
        %v3354 = vsub.s32 0, %v3353
        %v3355 = vrot.slane %v3350, %v3354
        %v3373 = vunpack.c.l.b16 %v3334
        %v3374 = vunpack.c.l.b16 %v3335
        %v3375 = vunpack.c.l.b16 %v3336
        %v3376 = vunpack.c.l.b16 %v3337
        %v3377 = vunpack.c.l.b16 %v3338
        %v3378 = vunpack.c.l.b16 %v3339
        %v3379 = vunpack.c.l.b16 %v3340
        %v3380 = vunpack.c.l.b16 %v3341
        %v3381 = vunpack.c.l.b16 %v3342
        %v3382 = vunpack.c.l.b16 %v3343
        %v3383 = vunpack.c.l.b16 %v3344
        %v3384 = vunpack.c.l.b16 %v3345
        %v3385 = vunpack.c.l.b16 %v3346
        %v3386 = vunpack.c.l.b16 %v3347
        %v3387 = vunpack.c.l.b16 %v3348
        %v3388 = vunpack.c.l.b16 %v3349
        %v3389 = vpack.c.b16 %v3374, %v3373
        %v3390 = vpack.c.b16 %v3376, %v3375
        %v3391 = vpack.c.b16 %v3378, %v3377
        %v3392 = vpack.c.b16 %v3380, %v3379
        %v3393 = vpack.c.b16 %v3382, %v3381
        %v3394 = vpack.c.b16 %v3384, %v3383
        %v3395 = vpack.c.b16 %v3386, %v3385
        %v3396 = vpack.c.b16 %v3388, %v3387
        %3405 = vmatprep.subr.bf16.mxu0 0
        %3406 = vmatpush1.bf16.msra.mxu0 %v3389
        %3407 = vmatprep.subr.bf16.mxu0 0
        %3408 = vmatpush1.bf16.msra.mxu0 %v3390
        %3409 = vmatprep.subr.bf16.mxu0 0
        %3410 = vmatpush1.bf16.msra.mxu0 %v3391
        %3411 = vmatprep.subr.bf16.mxu0 0
        %3412 = vmatpush1.bf16.msra.mxu0 %v3392
        %3413 = vmatprep.subr.bf16.mxu0 0
        %3414 = vmatpush1.bf16.msra.mxu0 %v3393
        %3415 = vmatprep.subr.bf16.mxu0 0
        %3416 = vmatpush1.bf16.msra.mxu0 %v3394
        %3417 = vmatprep.subr.bf16.mxu0 0
        %3418 = vmatpush1.bf16.msra.mxu0 %v3395
        %3419 = vmatprep.subr.bf16.mxu0 0
        %3420 = vmatpush1.bf16.msra.mxu0 %v3396
        %3421 = vmatprep.subr.bf16.mxu0 0
        %3422 = vmatpush1.bf16.msra.mxu0 0
        %3423 = vmatprep.subr.bf16.mxu0 0
        %3424 = vmatpush1.bf16.msra.mxu0 0
        %3425 = vmatprep.subr.bf16.mxu0 0
        %3426 = vmatpush1.bf16.msra.mxu0 0
        %3427 = vmatprep.subr.bf16.mxu0 0
        %3428 = vmatpush1.bf16.msra.mxu0 0
        %3429 = vmatprep.subr.bf16.mxu0 0
        %3430 = vmatpush1.bf16.msra.mxu0 0
        %3431 = vmatprep.subr.bf16.mxu0 0
        %3432 = vmatpush1.bf16.msra.mxu0 0
        %3433 = vmatprep.subr.bf16.mxu0 0
        %3434 = vmatpush1.bf16.msra.mxu0 0
        %3435 = vmatprep.subr.bf16.mxu0 0
        %3436 = vmatpush1.bf16.msra.mxu0 0
        %3437 = vmatprep.mubr.bf16.mxu0 0
        %3438 = vmatmul.mubr.bf16.gmra.mrb[0].mxu0 %v3270
        %v3439 = vpop.f32.mrb[0].mxu0
        %v3440 = vadd.f32 %v3355, %v3439
        %v3441 = vpop.f32.mrb[0].mxu0
        %v3442 = vpop.f32.mrb[0].mxu0
        %v3443 = vadd.f32 %v3355, %v3442
        %v3444 = vpop.f32.mrb[0].mxu0
        %3445 = vmatprep.mubr.bf16.mxu0 0
        %3446 = vmatmul.mubr.bf16.gmra.mrb[0].mxu0 %v3271
        %v3447 = vpop.f32.mrb[0].mxu0
        %v3448 = vadd.f32 %v3355, %v3447
        %v3449 = vpop.f32.mrb[0].mxu0
        %v3450 = vpop.f32.mrb[0].mxu0
        %v3451 = vadd.f32 %v3355, %v3450
        %v3452 = vpop.f32.mrb[0].mxu0
        %3453 = vmatprep.mubr.bf16.mxu0 0
        %3454 = vmatmul.mubr.bf16.gmra.mrb[0].mxu0 %v3272
        %v3455 = vpop.f32.mrb[0].mxu0
        %v3456 = vadd.f32 %v3355, %v3455
        %v3457 = vpop.f32.mrb[0].mxu0
        %v3458 = vpop.f32.mrb[0].mxu0
        %v3459 = vadd.f32 %v3355, %v3458
        %v3460 = vpop.f32.mrb[0].mxu0
        %3461 = vmatprep.mubr.bf16.mxu0 0
        %3462 = vmatmul.mubr.bf16.gmra.mrb[0].mxu0 %v3273
        %v3463 = vpop.f32.mrb[0].mxu0
        %v3464 = vadd.f32 %v3355, %v3463
        %v3465 = vpop.f32.mrb[0].mxu0
        %v3466 = vpop.f32.mrb[0].mxu0
        %v3467 = vadd.f32 %v3355, %v3466
        %v3468 = vpop.f32.mrb[0].mxu0
        %3469 = vmatprep.mubr.bf16.mxu0 0
        %3470 = vmatmul.mubr.bf16.gmra.mrb[0].mxu0 %v3274
        %v3471 = vpop.f32.mrb[0].mxu0
        %v3472 = vadd.f32 %v3355, %v3471
        %v3473 = vpop.f32.mrb[0].mxu0
        %v3474 = vpop.f32.mrb[0].mxu0
        %v3475 = vadd.f32 %v3355, %v3474
        %v3476 = vpop.f32.mrb[0].mxu0
        %3477 = vmatprep.mubr.bf16.mxu0 0
        %3478 = vmatmul.mubr.bf16.gmra.mrb[0].mxu0 %v3275
        %v3479 = vpop.f32.mrb[0].mxu0
        %v3480 = vadd.f32 %v3355, %v3479
        %v3481 = vpop.f32.mrb[0].mxu0
        %v3482 = vpop.f32.mrb[0].mxu0
        %v3483 = vadd.f32 %v3355, %v3482
        %v3484 = vpop.f32.mrb[0].mxu0
        %3485 = vmatprep.mubr.bf16.mxu0 0
        %3486 = vmatmul.mubr.bf16.gmra.mrb[0].mxu0 %v3276
        %v3487 = vpop.f32.mrb[0].mxu0
        %v3488 = vadd.f32 %v3355, %v3487
        %v3489 = vpop.f32.mrb[0].mxu0
        %v3490 = vpop.f32.mrb[0].mxu0
        %v3491 = vadd.f32 %v3355, %v3490
        %v3492 = vpop.f32.mrb[0].mxu0
        %3493 = vmatprep.mubr.bf16.mxu0 0
        %3494 = vmatmul.mubr.bf16.gmra.mrb[0].mxu0 %v3277
        %v3495 = vpop.f32.mrb[0].mxu0
        %v3496 = vadd.f32 %v3355, %v3495
        %v3497 = vpop.f32.mrb[0].mxu0
        %v3498 = vpop.f32.mrb[0].mxu0
        %v3499 = vadd.f32 %v3355, %v3498
        %v3500 = vpop.f32.mrb[0].mxu0
        %3501 = vmatprep.mubr.bf16.mxu0 0
        %3502 = vmatmul.mubr.bf16.gmra.mrb[0].mxu0 %v3278
        %v3503 = vpop.f32.mrb[0].mxu0
        %v3504 = vadd.f32 %v3355, %v3503
        %v3505 = vpop.f32.mrb[0].mxu0
        %v3506 = vpop.f32.mrb[0].mxu0
        %v3507 = vadd.f32 %v3355, %v3506
        %v3508 = vpop.f32.mrb[0].mxu0
        %3509 = vmatprep.mubr.bf16.mxu0 0
        %3510 = vmatmul.mubr.bf16.gmra.mrb[0].mxu0 %v3279
        %v3511 = vpop.f32.mrb[0].mxu0
        %v3512 = vadd.f32 %v3355, %v3511
        %v3513 = vpop.f32.mrb[0].mxu0
        %v3514 = vpop.f32.mrb[0].mxu0
        %v3515 = vadd.f32 %v3355, %v3514
        %v3516 = vpop.f32.mrb[0].mxu0
        %3517 = vmatprep.mubr.bf16.mxu0 0
        %3518 = vmatmul.mubr.bf16.gmra.mrb[0].mxu0 %v3280
        %v3519 = vpop.f32.mrb[0].mxu0
        %v3520 = vadd.f32 %v3355, %v3519
        %v3521 = vpop.f32.mrb[0].mxu0
        %v3522 = vpop.f32.mrb[0].mxu0
        %v3523 = vadd.f32 %v3355, %v3522
        %v3524 = vpop.f32.mrb[0].mxu0
        %3525 = vmatprep.mubr.bf16.mxu0 0
        %3526 = vmatmul.mubr.bf16.gmra.mrb[0].mxu0 %v3281
        %v3527 = vpop.f32.mrb[0].mxu0
        %v3528 = vadd.f32 %v3355, %v3527
        %v3529 = vpop.f32.mrb[0].mxu0
        %v3530 = vpop.f32.mrb[0].mxu0
        %v3531 = vadd.f32 %v3355, %v3530
        %v3532 = vpop.f32.mrb[0].mxu0
        %3533 = vmatprep.mubr.bf16.mxu0 0
        %3534 = vmatmul.mubr.bf16.gmra.mrb[0].mxu0 %v3282
        %v3535 = vpop.f32.mrb[0].mxu0
        %v3536 = vadd.f32 %v3355, %v3535
        %v3537 = vpop.f32.mrb[0].mxu0
        %v3538 = vpop.f32.mrb[0].mxu0
        %v3539 = vadd.f32 %v3355, %v3538
        %v3540 = vpop.f32.mrb[0].mxu0
        %3541 = vmatprep.mubr.bf16.mxu0 0
        %3542 = vmatmul.mubr.bf16.gmra.mrb[0].mxu0 %v3283
        %v3543 = vpop.f32.mrb[0].mxu0
        %v3544 = vadd.f32 %v3355, %v3543
        %v3545 = vpop.f32.mrb[0].mxu0
        %v3546 = vpop.f32.mrb[0].mxu0
        %v3547 = vadd.f32 %v3355, %v3546
        %v3548 = vpop.f32.mrb[0].mxu0
        %3549 = vmatprep.mubr.bf16.mxu0 0
        %3550 = vmatmul.mubr.bf16.gmra.mrb[0].mxu0 %v3284
        %v3551 = vpop.f32.mrb[0].mxu0
        %v3552 = vadd.f32 %v3355, %v3551
        %v3553 = vpop.f32.mrb[0].mxu0
        %v3554 = vpop.f32.mrb[0].mxu0
        %v3555 = vadd.f32 %v3355, %v3554
        %v3556 = vpop.f32.mrb[0].mxu0
        %3557 = vmatprep.mubr.bf16.mxu0 0
        %3558 = vmatmul.mubr.bf16.gmra.mrb[0].mxu0 %v3285
        %v3559 = vpop.f32.mrb[0].mxu0
        %v3560 = vadd.f32 %v3355, %v3559
        %v3561 = vpop.f32.mrb[0].mxu0
        %v3562 = vpop.f32.mrb[0].mxu0
        %v3563 = vadd.f32 %v3355, %v3562
        %v3564 = vpop.f32.mrb[0].mxu0
        %3565 = vmatprep.mubr.bf16.mxu0 0
        %3566 = vmatmul.mubr.bf16.gmra.mrb[0].mxu0 %v3286
        %v3567 = vpop.f32.mrb[0].mxu0
        %v3568 = vadd.f32 %v3355, %v3567
        %v3569 = vpop.f32.mrb[0].mxu0
        %v3570 = vpop.f32.mrb[0].mxu0
        %v3571 = vadd.f32 %v3355, %v3570
        %v3572 = vpop.f32.mrb[0].mxu0
        %3573 = vmatprep.mubr.bf16.mxu0 0
        %3574 = vmatmul.mubr.bf16.gmra.mrb[0].mxu0 %v3287
        %v3575 = vpop.f32.mrb[0].mxu0
        %v3576 = vadd.f32 %v3355, %v3575
        %v3577 = vpop.f32.mrb[0].mxu0
        %v3578 = vpop.f32.mrb[0].mxu0
        %v3579 = vadd.f32 %v3355, %v3578
        %v3580 = vpop.f32.mrb[0].mxu0
        %3581 = vmatprep.mubr.bf16.mxu0 0
        %3582 = vmatmul.mubr.bf16.gmra.mrb[0].mxu0 %v3288
        %v3583 = vpop.f32.mrb[0].mxu0
        %v3584 = vadd.f32 %v3355, %v3583
        %v3585 = vpop.f32.mrb[0].mxu0
        %v3586 = vpop.f32.mrb[0].mxu0
        %v3587 = vadd.f32 %v3355, %v3586
        %v3588 = vpop.f32.mrb[0].mxu0
        %3589 = vmatprep.mubr.bf16.mxu0 0
        %3590 = vmatmul.mubr.bf16.gmra.mrb[0].mxu0 %v3289
        %v3591 = vpop.f32.mrb[0].mxu0
        %v3592 = vadd.f32 %v3355, %v3591
        %v3593 = vpop.f32.mrb[0].mxu0
        %v3594 = vpop.f32.mrb[0].mxu0
        %v3595 = vadd.f32 %v3355, %v3594
        %v3596 = vpop.f32.mrb[0].mxu0
        %3597 = vmatprep.mubr.bf16.mxu0 0
        %3598 = vmatmul.mubr.bf16.gmra.mrb[0].mxu0 %v3290
        %v3599 = vpop.f32.mrb[0].mxu0
        %v3600 = vadd.f32 %v3355, %v3599
        %v3601 = vpop.f32.mrb[0].mxu0
        %v3602 = vpop.f32.mrb[0].mxu0
        %v3603 = vadd.f32 %v3355, %v3602
        %v3604 = vpop.f32.mrb[0].mxu0
        %3605 = vmatprep.mubr.bf16.mxu0 0
        %3606 = vmatmul.mubr.bf16.gmra.mrb[0].mxu0 %v3291
        %v3607 = vpop.f32.mrb[0].mxu0
        %v3608 = vadd.f32 %v3355, %v3607
        %v3609 = vpop.f32.mrb[0].mxu0
        %v3610 = vpop.f32.mrb[0].mxu0
        %v3611 = vadd.f32 %v3355, %v3610
        %v3612 = vpop.f32.mrb[0].mxu0
        %3613 = vmatprep.mubr.bf16.mxu0 0
        %3614 = vmatmul.mubr.bf16.gmra.mrb[0].mxu0 %v3292
        %v3615 = vpop.f32.mrb[0].mxu0
        %v3616 = vadd.f32 %v3355, %v3615
        %v3617 = vpop.f32.mrb[0].mxu0
        %v3618 = vpop.f32.mrb[0].mxu0
        %v3619 = vadd.f32 %v3355, %v3618
        %v3620 = vpop.f32.mrb[0].mxu0
        %3621 = vmatprep.mubr.bf16.mxu0 0
        %3622 = vmatmul.mubr.bf16.gmra.mrb[0].mxu0 %v3293
        %v3623 = vpop.f32.mrb[0].mxu0
        %v3624 = vadd.f32 %v3355, %v3623
        %v3625 = vpop.f32.mrb[0].mxu0
        %v3626 = vpop.f32.mrb[0].mxu0
        %v3627 = vadd.f32 %v3355, %v3626
        %v3628 = vpop.f32.mrb[0].mxu0
        %3629 = vmatprep.mubr.bf16.mxu0 0
        %3630 = vmatmul.mubr.bf16.gmra.mrb[0].mxu0 %v3294
        %v3631 = vpop.f32.mrb[0].mxu0
        %v3632 = vadd.f32 %v3355, %v3631
        %v3633 = vpop.f32.mrb[0].mxu0
        %v3634 = vpop.f32.mrb[0].mxu0
        %v3635 = vadd.f32 %v3355, %v3634
        %v3636 = vpop.f32.mrb[0].mxu0
        %3637 = vmatprep.mubr.bf16.mxu0 0
        %3638 = vmatmul.mubr.bf16.gmra.mrb[0].mxu0 %v3295
        %v3639 = vpop.f32.mrb[0].mxu0
        %v3640 = vadd.f32 %v3355, %v3639
        %v3641 = vpop.f32.mrb[0].mxu0
        %v3642 = vpop.f32.mrb[0].mxu0
        %v3643 = vadd.f32 %v3355, %v3642
        %v3644 = vpop.f32.mrb[0].mxu0
        %3645 = vmatprep.mubr.bf16.mxu0 0
        %3646 = vmatmul.mubr.bf16.gmra.mrb[0].mxu0 %v3296
        %v3647 = vpop.f32.mrb[0].mxu0
        %v3648 = vadd.f32 %v3355, %v3647
        %v3649 = vpop.f32.mrb[0].mxu0
        %v3650 = vpop.f32.mrb[0].mxu0
        %v3651 = vadd.f32 %v3355, %v3650
        %v3652 = vpop.f32.mrb[0].mxu0
        %3653 = vmatprep.mubr.bf16.mxu0 0
        %3654 = vmatmul.mubr.bf16.gmra.mrb[0].mxu0 %v3297
        %v3655 = vpop.f32.mrb[0].mxu0
        %v3656 = vadd.f32 %v3355, %v3655
        %v3657 = vpop.f32.mrb[0].mxu0
        %v3658 = vpop.f32.mrb[0].mxu0
        %v3659 = vadd.f32 %v3355, %v3658
        %v3660 = vpop.f32.mrb[0].mxu0
        %3661 = vmatprep.mubr.bf16.mxu0 0
        %3662 = vmatmul.mubr.bf16.gmra.mrb[0].mxu0 %v3298
        %v3663 = vpop.f32.mrb[0].mxu0
        %v3664 = vadd.f32 %v3355, %v3663
        %v3665 = vpop.f32.mrb[0].mxu0
        %v3666 = vpop.f32.mrb[0].mxu0
        %v3667 = vadd.f32 %v3355, %v3666
        %v3668 = vpop.f32.mrb[0].mxu0
        %3669 = vmatprep.mubr.bf16.mxu0 0
        %3670 = vmatmul.mubr.bf16.gmra.mrb[0].mxu0 %v3299
        %v3671 = vpop.f32.mrb[0].mxu0
        %v3672 = vadd.f32 %v3355, %v3671
        %v3673 = vpop.f32.mrb[0].mxu0
        %v3674 = vpop.f32.mrb[0].mxu0
        %v3675 = vadd.f32 %v3355, %v3674
        %v3676 = vpop.f32.mrb[0].mxu0
        %3677 = vmatprep.mubr.bf16.mxu0 0
        %3678 = vmatmul.mubr.bf16.gmra.mrb[0].mxu0 %v3300
        %v3679 = vpop.f32.mrb[0].mxu0
        %v3680 = vadd.f32 %v3355, %v3679
        %v3681 = vpop.f32.mrb[0].mxu0
        %v3682 = vpop.f32.mrb[0].mxu0
        %v3683 = vadd.f32 %v3355, %v3682
        %v3684 = vpop.f32.mrb[0].mxu0
        %3685 = vmatprep.mubr.bf16.mxu0 0
        %3686 = vmatmul.mubr.bf16.gmra.mrb[0].mxu0 %v3301
        %v3687 = vpop.f32.mrb[0].mxu0
        %v3688 = vadd.f32 %v3355, %v3687
        %v3689 = vpop.f32.mrb[0].mxu0
        %v3690 = vpop.f32.mrb[0].mxu0
        %v3691 = vadd.f32 %v3355, %v3690
        %v3692 = vpop.f32.mrb[0].mxu0
        %3693 = vmatprep.mubr.bf16.mxu0 0
        %3694 = vmatmul.mubr.bf16.gmra.mrb[0].mxu0 %v3302
        %v3695 = vpop.f32.mrb[0].mxu0
        %v3696 = vadd.f32 %v3355, %v3695
        %v3697 = vpop.f32.mrb[0].mxu0
        %v3698 = vpop.f32.mrb[0].mxu0
        %v3699 = vadd.f32 %v3355, %v3698
        %v3700 = vpop.f32.mrb[0].mxu0
        %3701 = vmatprep.mubr.bf16.mxu0 0
        %3702 = vmatmul.mubr.bf16.gmra.mrb[0].mxu0 %v3303
        %v3703 = vpop.f32.mrb[0].mxu0
        %v3704 = vadd.f32 %v3355, %v3703
        %v3705 = vpop.f32.mrb[0].mxu0
        %v3706 = vpop.f32.mrb[0].mxu0
        %v3707 = vadd.f32 %v3355, %v3706
        %v3708 = vpop.f32.mrb[0].mxu0
        %3709 = vmatprep.mubr.bf16.mxu0 0
        %3710 = vmatmul.mubr.bf16.gmra.mrb[0].mxu0 %v3304
        %v3711 = vpop.f32.mrb[0].mxu0
        %v3712 = vadd.f32 %v3355, %v3711
        %v3713 = vpop.f32.mrb[0].mxu0
        %v3714 = vpop.f32.mrb[0].mxu0
        %v3715 = vadd.f32 %v3355, %v3714
        %v3716 = vpop.f32.mrb[0].mxu0
        %3717 = vmatprep.mubr.bf16.mxu0 0
        %3718 = vmatmul.mubr.bf16.gmra.mrb[0].mxu0 %v3305
        %v3719 = vpop.f32.mrb[0].mxu0
        %v3720 = vadd.f32 %v3355, %v3719
        %v3721 = vpop.f32.mrb[0].mxu0
        %v3722 = vpop.f32.mrb[0].mxu0
        %v3723 = vadd.f32 %v3355, %v3722
        %v3724 = vpop.f32.mrb[0].mxu0
        %3725 = vmatprep.mubr.bf16.mxu0 0
        %3726 = vmatmul.mubr.bf16.gmra.mrb[0].mxu0 %v3306
        %v3727 = vpop.f32.mrb[0].mxu0
        %v3728 = vadd.f32 %v3355, %v3727
        %v3729 = vpop.f32.mrb[0].mxu0
        %v3730 = vpop.f32.mrb[0].mxu0
        %v3731 = vadd.f32 %v3355, %v3730
        %v3732 = vpop.f32.mrb[0].mxu0
        %3733 = vmatprep.mubr.bf16.mxu0 0
        %3734 = vmatmul.mubr.bf16.gmra.mrb[0].mxu0 %v3307
        %v3735 = vpop.f32.mrb[0].mxu0
        %v3736 = vadd.f32 %v3355, %v3735
        %v3737 = vpop.f32.mrb[0].mxu0
        %v3738 = vpop.f32.mrb[0].mxu0
        %v3739 = vadd.f32 %v3355, %v3738
        %v3740 = vpop.f32.mrb[0].mxu0
        %3741 = vmatprep.mubr.bf16.mxu0 0
        %3742 = vmatmul.mubr.bf16.gmra.mrb[0].mxu0 %v3308
        %v3743 = vpop.f32.mrb[0].mxu0
        %v3744 = vadd.f32 %v3355, %v3743
        %v3745 = vpop.f32.mrb[0].mxu0
        %v3746 = vpop.f32.mrb[0].mxu0
        %v3747 = vadd.f32 %v3355, %v3746
        %v3748 = vpop.f32.mrb[0].mxu0
        %3749 = vmatprep.mubr.bf16.mxu0 0
        %3750 = vmatmul.mubr.bf16.gmra.mrb[0].mxu0 %v3309
        %v3751 = vpop.f32.mrb[0].mxu0
        %v3752 = vadd.f32 %v3355, %v3751
        %v3753 = vpop.f32.mrb[0].mxu0
        %v3754 = vpop.f32.mrb[0].mxu0
        %v3755 = vadd.f32 %v3355, %v3754
        %v3756 = vpop.f32.mrb[0].mxu0
        %3757 = vmatprep.mubr.bf16.mxu0 0
        %3758 = vmatmul.mubr.bf16.gmra.mrb[0].mxu0 %v3310
        %v3759 = vpop.f32.mrb[0].mxu0
        %v3760 = vadd.f32 %v3355, %v3759
        %v3761 = vpop.f32.mrb[0].mxu0
        %v3762 = vpop.f32.mrb[0].mxu0
        %v3763 = vadd.f32 %v3355, %v3762
        %v3764 = vpop.f32.mrb[0].mxu0
        %3765 = vmatprep.mubr.bf16.mxu0 0
        %3766 = vmatmul.mubr.bf16.gmra.mrb[0].mxu0 %v3311
        %v3767 = vpop.f32.mrb[0].mxu0
        %v3768 = vadd.f32 %v3355, %v3767
        %v3769 = vpop.f32.mrb[0].mxu0
        %v3770 = vpop.f32.mrb[0].mxu0
        %v3771 = vadd.f32 %v3355, %v3770
        %v3772 = vpop.f32.mrb[0].mxu0
        %3773 = vmatprep.mubr.bf16.mxu0 0
        %3774 = vmatmul.mubr.bf16.gmra.mrb[0].mxu0 %v3312
        %v3775 = vpop.f32.mrb[0].mxu0
        %v3776 = vadd.f32 %v3355, %v3775
        %v3777 = vpop.f32.mrb[0].mxu0
        %v3778 = vpop.f32.mrb[0].mxu0
        %v3779 = vadd.f32 %v3355, %v3778
        %v3780 = vpop.f32.mrb[0].mxu0
        %3781 = vmatprep.mubr.bf16.mxu0 0
        %3782 = vmatmul.mubr.bf16.gmra.mrb[0].mxu0 %v3313
        %v3783 = vpop.f32.mrb[0].mxu0
        %v3784 = vadd.f32 %v3355, %v3783
        %v3785 = vpop.f32.mrb[0].mxu0
        %v3786 = vpop.f32.mrb[0].mxu0
        %v3787 = vadd.f32 %v3355, %v3786
        %v3788 = vpop.f32.mrb[0].mxu0
        %3789 = vmatprep.mubr.bf16.mxu0 0
        %3790 = vmatmul.mubr.bf16.gmra.mrb[0].mxu0 %v3314
        %v3791 = vpop.f32.mrb[0].mxu0
        %v3792 = vadd.f32 %v3355, %v3791
        %v3793 = vpop.f32.mrb[0].mxu0
        %v3794 = vpop.f32.mrb[0].mxu0
        %v3795 = vadd.f32 %v3355, %v3794
        %v3796 = vpop.f32.mrb[0].mxu0
        %3797 = vmatprep.mubr.bf16.mxu0 0
        %3798 = vmatmul.mubr.bf16.gmra.mrb[0].mxu0 %v3315
        %v3799 = vpop.f32.mrb[0].mxu0
        %v3800 = vadd.f32 %v3355, %v3799
        %v3801 = vpop.f32.mrb[0].mxu0
        %v3802 = vpop.f32.mrb[0].mxu0
        %v3803 = vadd.f32 %v3355, %v3802
        %v3804 = vpop.f32.mrb[0].mxu0
        %3805 = vmatprep.mubr.bf16.mxu0 0
        %3806 = vmatmul.mubr.bf16.gmra.mrb[0].mxu0 %v3316
        %v3807 = vpop.f32.mrb[0].mxu0
        %v3808 = vadd.f32 %v3355, %v3807
        %v3809 = vpop.f32.mrb[0].mxu0
        %v3810 = vpop.f32.mrb[0].mxu0
        %v3811 = vadd.f32 %v3355, %v3810
        %v3812 = vpop.f32.mrb[0].mxu0
        %3813 = vmatprep.mubr.bf16.mxu0 0
        %3814 = vmatmul.mubr.bf16.gmra.mrb[0].mxu0 %v3317
        %v3815 = vpop.f32.mrb[0].mxu0
        %v3816 = vadd.f32 %v3355, %v3815
        %v3817 = vpop.f32.mrb[0].mxu0
        %v3818 = vpop.f32.mrb[0].mxu0
        %v3819 = vadd.f32 %v3355, %v3818
        %v3820 = vpop.f32.mrb[0].mxu0
        %3821 = vmatprep.mubr.bf16.mxu0 0
        %3822 = vmatmul.mubr.bf16.gmra.mrb[0].mxu0 %v3318
        %v3823 = vpop.f32.mrb[0].mxu0
        %v3824 = vadd.f32 %v3355, %v3823
        %v3825 = vpop.f32.mrb[0].mxu0
        %v3826 = vpop.f32.mrb[0].mxu0
        %v3827 = vadd.f32 %v3355, %v3826
        %v3828 = vpop.f32.mrb[0].mxu0
        %3829 = vmatprep.mubr.bf16.mxu0 0
        %3830 = vmatmul.mubr.bf16.gmra.mrb[0].mxu0 %v3319
        %v3831 = vpop.f32.mrb[0].mxu0
        %v3832 = vadd.f32 %v3355, %v3831
        %v3833 = vpop.f32.mrb[0].mxu0
        %v3834 = vpop.f32.mrb[0].mxu0
        %v3835 = vadd.f32 %v3355, %v3834
        %v3836 = vpop.f32.mrb[0].mxu0
        %3837 = vmatprep.mubr.bf16.mxu0 0
        %3838 = vmatmul.mubr.bf16.gmra.mrb[0].mxu0 %v3320
        %v3839 = vpop.f32.mrb[0].mxu0
        %v3840 = vadd.f32 %v3355, %v3839
        %v3841 = vpop.f32.mrb[0].mxu0
        %v3842 = vpop.f32.mrb[0].mxu0
        %v3843 = vadd.f32 %v3355, %v3842
        %v3844 = vpop.f32.mrb[0].mxu0
        %3845 = vmatprep.mubr.bf16.mxu0 0
        %3846 = vmatmul.mubr.bf16.gmra.mrb[0].mxu0 %v3321
        %v3847 = vpop.f32.mrb[0].mxu0
        %v3848 = vadd.f32 %v3355, %v3847
        %v3849 = vpop.f32.mrb[0].mxu0
        %v3850 = vpop.f32.mrb[0].mxu0
        %v3851 = vadd.f32 %v3355, %v3850
        %v3852 = vpop.f32.mrb[0].mxu0
        %3853 = vmatprep.mubr.bf16.mxu0 0
        %3854 = vmatmul.mubr.bf16.gmra.mrb[0].mxu0 %v3322
        %v3855 = vpop.f32.mrb[0].mxu0
        %v3856 = vadd.f32 %v3355, %v3855
        %v3857 = vpop.f32.mrb[0].mxu0
        %v3858 = vpop.f32.mrb[0].mxu0
        %v3859 = vadd.f32 %v3355, %v3858
        %v3860 = vpop.f32.mrb[0].mxu0
        %3861 = vmatprep.mubr.bf16.mxu0 0
        %3862 = vmatmul.mubr.bf16.gmra.mrb[0].mxu0 %v3323
        %v3863 = vpop.f32.mrb[0].mxu0
        %v3864 = vadd.f32 %v3355, %v3863
        %v3865 = vpop.f32.mrb[0].mxu0
        %v3866 = vpop.f32.mrb[0].mxu0
        %v3867 = vadd.f32 %v3355, %v3866
        %v3868 = vpop.f32.mrb[0].mxu0
        %3869 = vmatprep.mubr.bf16.mxu0 0
        %3870 = vmatmul.mubr.bf16.gmra.mrb[0].mxu0 %v3324
        %v3871 = vpop.f32.mrb[0].mxu0
        %v3872 = vadd.f32 %v3355, %v3871
        %v3873 = vpop.f32.mrb[0].mxu0
        %v3874 = vpop.f32.mrb[0].mxu0
        %v3875 = vadd.f32 %v3355, %v3874
        %v3876 = vpop.f32.mrb[0].mxu0
        %3877 = vmatprep.mubr.bf16.mxu0 0
        %3878 = vmatmul.mubr.bf16.gmra.mrb[0].mxu0 %v3325
        %v3879 = vpop.f32.mrb[0].mxu0
        %v3880 = vadd.f32 %v3355, %v3879
        %v3881 = vpop.f32.mrb[0].mxu0
        %v3882 = vpop.f32.mrb[0].mxu0
        %v3883 = vadd.f32 %v3355, %v3882
        %v3884 = vpop.f32.mrb[0].mxu0
        %3885 = vmatprep.mubr.bf16.mxu0 0
        %3886 = vmatmul.mubr.bf16.gmra.mrb[0].mxu0 %v3326
        %v3887 = vpop.f32.mrb[0].mxu0
        %v3888 = vadd.f32 %v3355, %v3887
        %v3889 = vpop.f32.mrb[0].mxu0
        %v3890 = vpop.f32.mrb[0].mxu0
        %v3891 = vadd.f32 %v3355, %v3890
        %v3892 = vpop.f32.mrb[0].mxu0
        %3893 = vmatprep.mubr.bf16.mxu0 0
        %3894 = vmatmul.mubr.bf16.gmra.mrb[0].mxu0 %v3327
        %v3895 = vpop.f32.mrb[0].mxu0
        %v3896 = vadd.f32 %v3355, %v3895
        %v3897 = vpop.f32.mrb[0].mxu0
        %v3898 = vpop.f32.mrb[0].mxu0
        %v3899 = vadd.f32 %v3355, %v3898
        %v3900 = vpop.f32.mrb[0].mxu0
        %3901 = vmatprep.mubr.bf16.mxu0 0
        %3902 = vmatmul.mubr.bf16.gmra.mrb[0].mxu0 %v3328
        %v3903 = vpop.f32.mrb[0].mxu0
        %v3904 = vadd.f32 %v3355, %v3903
        %v3905 = vpop.f32.mrb[0].mxu0
        %v3906 = vpop.f32.mrb[0].mxu0
        %v3907 = vadd.f32 %v3355, %v3906
        %v3908 = vpop.f32.mrb[0].mxu0
        %3909 = vmatprep.mubr.bf16.mxu0 0
        %3910 = vmatmul.mubr.bf16.gmra.mrb[0].mxu0 %v3329
        %v3911 = vpop.f32.mrb[0].mxu0
        %v3912 = vadd.f32 %v3355, %v3911
        %v3913 = vpop.f32.mrb[0].mxu0
        %v3914 = vpop.f32.mrb[0].mxu0
        %v3915 = vadd.f32 %v3355, %v3914
        %v3916 = vpop.f32.mrb[0].mxu0
        %3917 = vmatprep.mubr.bf16.mxu0 0
        %3918 = vmatmul.mubr.bf16.gmra.mrb[0].mxu0 %v3330
        %v3919 = vpop.f32.mrb[0].mxu0
        %v3920 = vadd.f32 %v3355, %v3919
        %v3921 = vpop.f32.mrb[0].mxu0
        %v3922 = vpop.f32.mrb[0].mxu0
        %v3923 = vadd.f32 %v3355, %v3922
        %v3924 = vpop.f32.mrb[0].mxu0
        %3925 = vmatprep.mubr.bf16.mxu0 0
        %3926 = vmatmul.mubr.bf16.gmra.mrb[0].mxu0 %v3331
        %v3927 = vpop.f32.mrb[0].mxu0
        %v3928 = vadd.f32 %v3355, %v3927
        %v3929 = vpop.f32.mrb[0].mxu0
        %v3930 = vpop.f32.mrb[0].mxu0
        %v3931 = vadd.f32 %v3355, %v3930
        %v3932 = vpop.f32.mrb[0].mxu0
        %3933 = vmatprep.mubr.bf16.mxu0 0
        %3934 = vmatmul.mubr.bf16.gmra.mrb[0].mxu0 %v3332
        %v3935 = vpop.f32.mrb[0].mxu0
        %v3936 = vadd.f32 %v3355, %v3935
        %v3937 = vpop.f32.mrb[0].mxu0
        %v3938 = vpop.f32.mrb[0].mxu0
        %v3939 = vadd.f32 %v3355, %v3938
        %v3940 = vpop.f32.mrb[0].mxu0
        %3941 = vmatprep.mubr.bf16.mxu0 0
        %3942 = vmatmul.mubr.bf16.gmra.mrb[0].mxu0 %v3333
        %v3943 = vpop.f32.mrb[0].mxu0
        %v3944 = vadd.f32 %v3355, %v3943
        %v3945 = vpop.f32.mrb[0].mxu0
        %v3946 = vpop.f32.mrb[0].mxu0
        %v3947 = vadd.f32 %v3355, %v3946
        %v3948 = vpop.f32.mrb[0].mxu0
        %3949 = vdwg.mxu0
        %v3950 = vld [vmem:[%s458] sm:$0xf]
        %v3951 = vld [vmem:[%s458 + $0x4] sm:$0xf]
        %v3952 = vld [vmem:[%s458 + $0x8] sm:$0xf]
        %v3953 = vld [vmem:[%s458 + $0xc] sm:$0xf]
        %v3954 = vld [vmem:[%s458 + $0x10] sm:$0xf]
        %v3955 = vld [vmem:[%s458 + $0x14] sm:$0xf]
        %v3956 = vld [vmem:[%s458 + $0x18] sm:$0xf]
        %v3957 = vld [vmem:[%s458 + $0x1c] sm:$0xf]
        %v3958 = vld [vmem:[%s458 + $0x20] sm:$0xf]
        %v3959 = vld [vmem:[%s458 + $0x24] sm:$0xf]
        %v3960 = vld [vmem:[%s458 + $0x28] sm:$0xf]
        %v3961 = vld [vmem:[%s458 + $0x2c] sm:$0xf]
        %v3962 = vld [vmem:[%s458 + $0x30] sm:$0xf]
        %v3963 = vld [vmem:[%s458 + $0x34] sm:$0xf]
        %v3964 = vld [vmem:[%s458 + $0x38] sm:$0xf]
        %v3965 = vld [vmem:[%s458 + $0x3c] sm:$0xf]
        %v3966 = vld [vmem:[%s458 + $0x40] sm:$0xf]
        %v3967 = vld [vmem:[%s458 + $0x44] sm:$0xf]
        %v3968 = vld [vmem:[%s458 + $0x48] sm:$0xf]
        %v3969 = vld [vmem:[%s458 + $0x4c] sm:$0xf]
        %v3970 = vld [vmem:[%s458 + $0x50] sm:$0xf]
        %v3971 = vld [vmem:[%s458 + $0x54] sm:$0xf]
        %v3972 = vld [vmem:[%s458 + $0x58] sm:$0xf]
        %v3973 = vld [vmem:[%s458 + $0x5c] sm:$0xf]
        %v3974 = vld [vmem:[%s458 + $0x60] sm:$0xf]
        %v3975 = vld [vmem:[%s458 + $0x64] sm:$0xf]
        %v3976 = vld [vmem:[%s458 + $0x68] sm:$0xf]
        %v3977 = vld [vmem:[%s458 + $0x6c] sm:$0xf]
        %v3978 = vld [vmem:[%s458 + $0x70] sm:$0xf]
        %v3979 = vld [vmem:[%s458 + $0x74] sm:$0xf]
        %v3980 = vld [vmem:[%s458 + $0x78] sm:$0xf]
        %v3981 = vld [vmem:[%s458 + $0x7c] sm:$0xf]
        %v3982 = vld [vmem:[%s458 + $0x80] sm:$0xf]
        %v3983 = vld [vmem:[%s458 + $0x84] sm:$0xf]
        %v3984 = vld [vmem:[%s458 + $0x88] sm:$0xf]
        %v3985 = vld [vmem:[%s458 + $0x8c] sm:$0xf]
        %v3986 = vld [vmem:[%s458 + $0x90] sm:$0xf]
        %v3987 = vld [vmem:[%s458 + $0x94] sm:$0xf]
        %v3988 = vld [vmem:[%s458 + $0x98] sm:$0xf]
        %v3989 = vld [vmem:[%s458 + $0x9c] sm:$0xf]
        %v3990 = vld [vmem:[%s458 + $0xa0] sm:$0xf]
        %v3991 = vld [vmem:[%s458 + $0xa4] sm:$0xf]
        %v3992 = vld [vmem:[%s458 + $0xa8] sm:$0xf]
        %v3993 = vld [vmem:[%s458 + $0xac] sm:$0xf]
        %v3994 = vld [vmem:[%s458 + $0xb0] sm:$0xf]
        %v3995 = vld [vmem:[%s458 + $0xb4] sm:$0xf]
        %v3996 = vld [vmem:[%s458 + $0xb8] sm:$0xf]
        %v3997 = vld [vmem:[%s458 + $0xbc] sm:$0xf]
        %v3998 = vld [vmem:[%s458 + $0xc0] sm:$0xf]
        %v3999 = vld [vmem:[%s458 + $0xc4] sm:$0xf]
        %v4000 = vld [vmem:[%s458 + $0xc8] sm:$0xf]
        %v4001 = vld [vmem:[%s458 + $0xcc] sm:$0xf]
        %v4002 = vld [vmem:[%s458 + $0xd0] sm:$0xf]
        %v4003 = vld [vmem:[%s458 + $0xd4] sm:$0xf]
        %v4004 = vld [vmem:[%s458 + $0xd8] sm:$0xf]
        %v4005 = vld [vmem:[%s458 + $0xdc] sm:$0xf]
        %v4006 = vld [vmem:[%s458 + $0xe0] sm:$0xf]
        %v4007 = vld [vmem:[%s458 + $0xe4] sm:$0xf]
        %v4008 = vld [vmem:[%s458 + $0xe8] sm:$0xf]
        %v4009 = vld [vmem:[%s458 + $0xec] sm:$0xf]
        %v4010 = vld [vmem:[%s458 + $0xf0] sm:$0xf]
        %v4011 = vld [vmem:[%s458 + $0xf4] sm:$0xf]
        %v4012 = vld [vmem:[%s458 + $0xf8] sm:$0xf]
        %v4013 = vld [vmem:[%s458 + $0xfc] sm:$0xf]
        %v4014 = vld [vmem:[%s458 + $0x100] sm:$0xf]
        %v4015 = vld [vmem:[%s458 + $0x104] sm:$0xf]
        %v4016 = vld [vmem:[%s458 + $0x108] sm:$0xf]
        %v4017 = vld [vmem:[%s458 + $0x10c] sm:$0xf]
        %v4018 = vld [vmem:[%s458 + $0x110] sm:$0xf]
        %v4019 = vld [vmem:[%s458 + $0x114] sm:$0xf]
        %v4020 = vld [vmem:[%s458 + $0x118] sm:$0xf]
        %v4021 = vld [vmem:[%s458 + $0x11c] sm:$0xf]
        %v4022 = vld [vmem:[%s458 + $0x120] sm:$0xf]
        %v4023 = vld [vmem:[%s458 + $0x124] sm:$0xf]
        %v4024 = vld [vmem:[%s458 + $0x128] sm:$0xf]
        %v4025 = vld [vmem:[%s458 + $0x12c] sm:$0xf]
        %v4026 = vld [vmem:[%s458 + $0x130] sm:$0xf]
        %v4027 = vld [vmem:[%s458 + $0x134] sm:$0xf]
        %v4028 = vld [vmem:[%s458 + $0x138] sm:$0xf]
        %v4029 = vld [vmem:[%s458 + $0x13c] sm:$0xf]
        %v4030 = vld [vmem:[%s458 + $0x140] sm:$0xf]
        %v4031 = vld [vmem:[%s458 + $0x144] sm:$0xf]
        %v4032 = vld [vmem:[%s458 + $0x148] sm:$0xf]
        %v4033 = vld [vmem:[%s458 + $0x14c] sm:$0xf]
        %v4034 = vld [vmem:[%s458 + $0x150] sm:$0xf]
        %v4035 = vld [vmem:[%s458 + $0x154] sm:$0xf]
        %v4036 = vld [vmem:[%s458 + $0x158] sm:$0xf]
        %v4037 = vld [vmem:[%s458 + $0x15c] sm:$0xf]
        %v4038 = vld [vmem:[%s458 + $0x160] sm:$0xf]
        %v4039 = vld [vmem:[%s458 + $0x164] sm:$0xf]
        %v4040 = vld [vmem:[%s458 + $0x168] sm:$0xf]
        %v4041 = vld [vmem:[%s458 + $0x16c] sm:$0xf]
        %v4042 = vld [vmem:[%s458 + $0x170] sm:$0xf]
        %v4043 = vld [vmem:[%s458 + $0x174] sm:$0xf]
        %v4044 = vld [vmem:[%s458 + $0x178] sm:$0xf]
        %v4045 = vld [vmem:[%s458 + $0x17c] sm:$0xf]
        %v4046 = vld [vmem:[%s458 + $0x180] sm:$0xf]
        %v4047 = vld [vmem:[%s458 + $0x184] sm:$0xf]
        %v4048 = vld [vmem:[%s458 + $0x188] sm:$0xf]
        %v4049 = vld [vmem:[%s458 + $0x18c] sm:$0xf]
        %v4050 = vld [vmem:[%s458 + $0x190] sm:$0xf]
        %v4051 = vld [vmem:[%s458 + $0x194] sm:$0xf]
        %v4052 = vld [vmem:[%s458 + $0x198] sm:$0xf]
        %v4053 = vld [vmem:[%s458 + $0x19c] sm:$0xf]
        %v4054 = vld [vmem:[%s458 + $0x1a0] sm:$0xf]
        %v4055 = vld [vmem:[%s458 + $0x1a4] sm:$0xf]
        %v4056 = vld [vmem:[%s458 + $0x1a8] sm:$0xf]
        %v4057 = vld [vmem:[%s458 + $0x1ac] sm:$0xf]
        %v4058 = vld [vmem:[%s458 + $0x1b0] sm:$0xf]
        %v4059 = vld [vmem:[%s458 + $0x1b4] sm:$0xf]
        %v4060 = vld [vmem:[%s458 + $0x1b8] sm:$0xf]
        %v4061 = vld [vmem:[%s458 + $0x1bc] sm:$0xf]
        %v4062 = vld [vmem:[%s458 + $0x1c0] sm:$0xf]
        %v4063 = vld [vmem:[%s458 + $0x1c4] sm:$0xf]
        %v4064 = vld [vmem:[%s458 + $0x1c8] sm:$0xf]
        %v4065 = vld [vmem:[%s458 + $0x1cc] sm:$0xf]
        %v4066 = vld [vmem:[%s458 + $0x1d0] sm:$0xf]
        %v4067 = vld [vmem:[%s458 + $0x1d4] sm:$0xf]
        %v4068 = vld [vmem:[%s458 + $0x1d8] sm:$0xf]
        %v4069 = vld [vmem:[%s458 + $0x1dc] sm:$0xf]
        %v4070 = vld [vmem:[%s458 + $0x1e0] sm:$0xf]
        %v4071 = vld [vmem:[%s458 + $0x1e4] sm:$0xf]
        %v4072 = vld [vmem:[%s458 + $0x1e8] sm:$0xf]
        %v4073 = vld [vmem:[%s458 + $0x1ec] sm:$0xf]
        %v4074 = vld [vmem:[%s458 + $0x1f0] sm:$0xf]
        %v4075 = vld [vmem:[%s458 + $0x1f4] sm:$0xf]
        %v4076 = vld [vmem:[%s458 + $0x1f8] sm:$0xf]
        %v4077 = vld [vmem:[%s458 + $0x1fc] sm:$0xf]
        %v4078 = vunpack.c.l.bf16 %v3950
        %v4079 = vunpack.c.l.bf16 %v3951
        %v4080 = vunpack.c.l.bf16 %v3952
        %v4081 = vunpack.c.l.bf16 %v3953
        %v4082 = vunpack.c.l.bf16 %v3954
        %v4083 = vunpack.c.l.bf16 %v3955
        %v4084 = vunpack.c.l.bf16 %v3956
        %v4085 = vunpack.c.l.bf16 %v3957
        %v4086 = vunpack.c.l.bf16 %v3958
        %v4087 = vunpack.c.l.bf16 %v3959
        %v4088 = vunpack.c.l.bf16 %v3960
        %v4089 = vunpack.c.l.bf16 %v3961
        %v4090 = vunpack.c.l.bf16 %v3962
        %v4091 = vunpack.c.l.bf16 %v3963
        %v4092 = vunpack.c.l.bf16 %v3964
        %v4093 = vunpack.c.l.bf16 %v3965
        %v4094 = vunpack.c.l.bf16 %v3966
        %v4095 = vunpack.c.l.bf16 %v3967
        %v4096 = vunpack.c.l.bf16 %v3968
        %v4097 = vunpack.c.l.bf16 %v3969
        %v4098 = vunpack.c.l.bf16 %v3970
        %v4099 = vunpack.c.l.bf16 %v3971
        %v4100 = vunpack.c.l.bf16 %v3972
        %v4101 = vunpack.c.l.bf16 %v3973
        %v4102 = vunpack.c.l.bf16 %v3974
        %v4103 = vunpack.c.l.bf16 %v3975
        %v4104 = vunpack.c.l.bf16 %v3976
        %v4105 = vunpack.c.l.bf16 %v3977
        %v4106 = vunpack.c.l.bf16 %v3978
        %v4107 = vunpack.c.l.bf16 %v3979
        %v4108 = vunpack.c.l.bf16 %v3980
        %v4109 = vunpack.c.l.bf16 %v3981
        %v4110 = vunpack.c.l.bf16 %v3982
        %v4111 = vunpack.c.l.bf16 %v3983
        %v4112 = vunpack.c.l.bf16 %v3984
        %v4113 = vunpack.c.l.bf16 %v3985
        %v4114 = vunpack.c.l.bf16 %v3986
        %v4115 = vunpack.c.l.bf16 %v3987
        %v4116 = vunpack.c.l.bf16 %v3988
        %v4117 = vunpack.c.l.bf16 %v3989
        %v4118 = vunpack.c.l.bf16 %v3990
        %v4119 = vunpack.c.l.bf16 %v3991
        %v4120 = vunpack.c.l.bf16 %v3992
        %v4121 = vunpack.c.l.bf16 %v3993
        %v4122 = vunpack.c.l.bf16 %v3994
        %v4123 = vunpack.c.l.bf16 %v3995
        %v4124 = vunpack.c.l.bf16 %v3996
        %v4125 = vunpack.c.l.bf16 %v3997
        %v4126 = vunpack.c.l.bf16 %v3998
        %v4127 = vunpack.c.l.bf16 %v3999
        %v4128 = vunpack.c.l.bf16 %v4000
        %v4129 = vunpack.c.l.bf16 %v4001
        %v4130 = vunpack.c.l.bf16 %v4002
        %v4131 = vunpack.c.l.bf16 %v4003
        %v4132 = vunpack.c.l.bf16 %v4004
        %v4133 = vunpack.c.l.bf16 %v4005
        %v4134 = vunpack.c.l.bf16 %v4006
        %v4135 = vunpack.c.l.bf16 %v4007
        %v4136 = vunpack.c.l.bf16 %v4008
        %v4137 = vunpack.c.l.bf16 %v4009
        %v4138 = vunpack.c.l.bf16 %v4010
        %v4139 = vunpack.c.l.bf16 %v4011
        %v4140 = vunpack.c.l.bf16 %v4012
        %v4141 = vunpack.c.l.bf16 %v4013
        %v4142 = vunpack.c.l.bf16 %v4014
        %v4143 = vunpack.c.l.bf16 %v4015
        %v4144 = vunpack.c.l.bf16 %v4016
        %v4145 = vunpack.c.l.bf16 %v4017
        %v4146 = vunpack.c.l.bf16 %v4018
        %v4147 = vunpack.c.l.bf16 %v4019
        %v4148 = vunpack.c.l.bf16 %v4020
        %v4149 = vunpack.c.l.bf16 %v4021
        %v4150 = vunpack.c.l.bf16 %v4022
        %v4151 = vunpack.c.l.bf16 %v4023
        %v4152 = vunpack.c.l.bf16 %v4024
        %v4153 = vunpack.c.l.bf16 %v4025
        %v4154 = vunpack.c.l.bf16 %v4026
        %v4155 = vunpack.c.l.bf16 %v4027
        %v4156 = vunpack.c.l.bf16 %v4028
        %v4157 = vunpack.c.l.bf16 %v4029
        %v4158 = vunpack.c.l.bf16 %v4030
        %v4159 = vunpack.c.l.bf16 %v4031
        %v4160 = vunpack.c.l.bf16 %v4032
        %v4161 = vunpack.c.l.bf16 %v4033
        %v4162 = vunpack.c.l.bf16 %v4034
        %v4163 = vunpack.c.l.bf16 %v4035
        %v4164 = vunpack.c.l.bf16 %v4036
        %v4165 = vunpack.c.l.bf16 %v4037
        %v4166 = vunpack.c.l.bf16 %v4038
        %v4167 = vunpack.c.l.bf16 %v4039
        %v4168 = vunpack.c.l.bf16 %v4040
        %v4169 = vunpack.c.l.bf16 %v4041
        %v4170 = vunpack.c.l.bf16 %v4042
        %v4171 = vunpack.c.l.bf16 %v4043
        %v4172 = vunpack.c.l.bf16 %v4044
        %v4173 = vunpack.c.l.bf16 %v4045
        %v4174 = vunpack.c.l.bf16 %v4046
        %v4175 = vunpack.c.l.bf16 %v4047
        %v4176 = vunpack.c.l.bf16 %v4048
        %v4177 = vunpack.c.l.bf16 %v4049
        %v4178 = vunpack.c.l.bf16 %v4050
        %v4179 = vunpack.c.l.bf16 %v4051
        %v4180 = vunpack.c.l.bf16 %v4052
        %v4181 = vunpack.c.l.bf16 %v4053
        %v4182 = vunpack.c.l.bf16 %v4054
        %v4183 = vunpack.c.l.bf16 %v4055
        %v4184 = vunpack.c.l.bf16 %v4056
        %v4185 = vunpack.c.l.bf16 %v4057
        %v4186 = vunpack.c.l.bf16 %v4058
        %v4187 = vunpack.c.l.bf16 %v4059
        %v4188 = vunpack.c.l.bf16 %v4060
        %v4189 = vunpack.c.l.bf16 %v4061
        %v4190 = vunpack.c.l.bf16 %v4062
        %v4191 = vunpack.c.l.bf16 %v4063
        %v4192 = vunpack.c.l.bf16 %v4064
        %v4193 = vunpack.c.l.bf16 %v4065
        %v4194 = vunpack.c.l.bf16 %v4066
        %v4195 = vunpack.c.l.bf16 %v4067
        %v4196 = vunpack.c.l.bf16 %v4068
        %v4197 = vunpack.c.l.bf16 %v4069
        %v4198 = vunpack.c.l.bf16 %v4070
        %v4199 = vunpack.c.l.bf16 %v4071
        %v4200 = vunpack.c.l.bf16 %v4072
        %v4201 = vunpack.c.l.bf16 %v4073
        %v4202 = vunpack.c.l.bf16 %v4074
        %v4203 = vunpack.c.l.bf16 %v4075
        %v4204 = vunpack.c.l.bf16 %v4076
        %v4205 = vunpack.c.l.bf16 %v4077
        %v4206 = vmul.f32 %v3440, 0.5
        %v4207 = vmul.f32 %v3443, 0.5
        %v4208 = vmul.f32 %v3448, 0.5
        %v4209 = vmul.f32 %v3451, 0.5
        %v4210 = vmul.f32 %v3456, 0.5
        %v4211 = vmul.f32 %v3459, 0.5
        %v4212 = vmul.f32 %v3464, 0.5
        %v4213 = vmul.f32 %v3467, 0.5
        %v4214 = vmul.f32 %v3472, 0.5
        %v4215 = vmul.f32 %v3475, 0.5
        %v4216 = vmul.f32 %v3480, 0.5
        %v4217 = vmul.f32 %v3483, 0.5
        %v4218 = vmul.f32 %v3488, 0.5
        %v4219 = vmul.f32 %v3491, 0.5
        %v4220 = vmul.f32 %v3496, 0.5
        %v4221 = vmul.f32 %v3499, 0.5
        %v4222 = vmul.f32 %v3504, 0.5
        %v4223 = vmul.f32 %v3507, 0.5
        %v4224 = vmul.f32 %v3512, 0.5
        %v4225 = vmul.f32 %v3515, 0.5
        %v4226 = vmul.f32 %v3520, 0.5
        %v4227 = vmul.f32 %v3523, 0.5
        %v4228 = vmul.f32 %v3528, 0.5
        %v4229 = vmul.f32 %v3531, 0.5
        %v4230 = vmul.f32 %v3536, 0.5
        %v4231 = vmul.f32 %v3539, 0.5
        %v4232 = vmul.f32 %v3544, 0.5
        %v4233 = vmul.f32 %v3547, 0.5
        %v4234 = vmul.f32 %v3552, 0.5
        %v4235 = vmul.f32 %v3555, 0.5
        %v4236 = vmul.f32 %v3560, 0.5
        %v4237 = vmul.f32 %v3563, 0.5
        %v4238 = vmul.f32 %v3568, 0.5
        %v4239 = vmul.f32 %v3571, 0.5
        %v4240 = vmul.f32 %v3576, 0.5
        %v4241 = vmul.f32 %v3579, 0.5
        %v4242 = vmul.f32 %v3584, 0.5
        %v4243 = vmul.f32 %v3587, 0.5
        %v4244 = vmul.f32 %v3592, 0.5
        %v4245 = vmul.f32 %v3595, 0.5
        %v4246 = vmul.f32 %v3600, 0.5
        %v4247 = vmul.f32 %v3603, 0.5
        %v4248 = vmul.f32 %v3608, 0.5
        %v4249 = vmul.f32 %v3611, 0.5
        %v4250 = vmul.f32 %v3616, 0.5
        %v4251 = vmul.f32 %v3619, 0.5
        %v4252 = vmul.f32 %v3624, 0.5
        %v4253 = vmul.f32 %v3627, 0.5
        %v4254 = vmul.f32 %v3632, 0.5
        %v4255 = vmul.f32 %v3635, 0.5
        %v4256 = vmul.f32 %v3640, 0.5
        %v4257 = vmul.f32 %v3643, 0.5
        %v4258 = vmul.f32 %v3648, 0.5
        %v4259 = vmul.f32 %v3651, 0.5
        %v4260 = vmul.f32 %v3656, 0.5
        %v4261 = vmul.f32 %v3659, 0.5
        %v4262 = vmul.f32 %v3664, 0.5
        %v4263 = vmul.f32 %v3667, 0.5
        %v4264 = vmul.f32 %v3672, 0.5
        %v4265 = vmul.f32 %v3675, 0.5
        %v4266 = vmul.f32 %v3680, 0.5
        %v4267 = vmul.f32 %v3683, 0.5
        %v4268 = vmul.f32 %v3688, 0.5
        %v4269 = vmul.f32 %v3691, 0.5
        %v4270 = vmul.f32 %v3696, 0.5
        %v4271 = vmul.f32 %v3699, 0.5
        %v4272 = vmul.f32 %v3704, 0.5
        %v4273 = vmul.f32 %v3707, 0.5
        %v4274 = vmul.f32 %v3712, 0.5
        %v4275 = vmul.f32 %v3715, 0.5
        %v4276 = vmul.f32 %v3720, 0.5
        %v4277 = vmul.f32 %v3723, 0.5
        %v4278 = vmul.f32 %v3728, 0.5
        %v4279 = vmul.f32 %v3731, 0.5
        %v4280 = vmul.f32 %v3736, 0.5
        %v4281 = vmul.f32 %v3739, 0.5
        %v4282 = vmul.f32 %v3744, 0.5
        %v4283 = vmul.f32 %v3747, 0.5
        %v4284 = vmul.f32 %v3752, 0.5
        %v4285 = vmul.f32 %v3755, 0.5
        %v4286 = vmul.f32 %v3760, 0.5
        %v4287 = vmul.f32 %v3763, 0.5
        %v4288 = vmul.f32 %v3768, 0.5
        %v4289 = vmul.f32 %v3771, 0.5
        %v4290 = vmul.f32 %v3776, 0.5
        %v4291 = vmul.f32 %v3779, 0.5
        %v4292 = vmul.f32 %v3784, 0.5
        %v4293 = vmul.f32 %v3787, 0.5
        %v4294 = vmul.f32 %v3792, 0.5
        %v4295 = vmul.f32 %v3795, 0.5
        %v4296 = vmul.f32 %v3800, 0.5
        %v4297 = vmul.f32 %v3803, 0.5
        %v4298 = vmul.f32 %v3808, 0.5
        %v4299 = vmul.f32 %v3811, 0.5
        %v4300 = vmul.f32 %v3816, 0.5
        %v4301 = vmul.f32 %v3819, 0.5
        %v4302 = vmul.f32 %v3824, 0.5
        %v4303 = vmul.f32 %v3827, 0.5
        %v4304 = vmul.f32 %v3832, 0.5
        %v4305 = vmul.f32 %v3835, 0.5
        %v4306 = vmul.f32 %v3840, 0.5
        %v4307 = vmul.f32 %v3843, 0.5
        %v4308 = vmul.f32 %v3848, 0.5
        %v4309 = vmul.f32 %v3851, 0.5
        %v4310 = vmul.f32 %v3856, 0.5
        %v4311 = vmul.f32 %v3859, 0.5
        %v4312 = vmul.f32 %v3864, 0.5
        %v4313 = vmul.f32 %v3867, 0.5
        %v4314 = vmul.f32 %v3872, 0.5
        %v4315 = vmul.f32 %v3875, 0.5
        %v4316 = vmul.f32 %v3880, 0.5
        %v4317 = vmul.f32 %v3883, 0.5
        %v4318 = vmul.f32 %v3888, 0.5
        %v4319 = vmul.f32 %v3891, 0.5
        %v4320 = vmul.f32 %v3896, 0.5
        %v4321 = vmul.f32 %v3899, 0.5
        %v4322 = vmul.f32 %v3904, 0.5
        %v4323 = vmul.f32 %v3907, 0.5
        %v4324 = vmul.f32 %v3912, 0.5
        %v4325 = vmul.f32 %v3915, 0.5
        %v4326 = vmul.f32 %v3920, 0.5
        %v4327 = vmul.f32 %v3923, 0.5
        %v4328 = vmul.f32 %v3928, 0.5
        %v4329 = vmul.f32 %v3931, 0.5
        %v4330 = vmul.f32 %v3936, 0.5
        %v4331 = vmul.f32 %v3939, 0.5
        %v4332 = vmul.f32 %v3944, 0.5
        %v4333 = vmul.f32 %v3947, 0.5
        %v4334 = vmul.f32 %v4206, 1.442695
        %v4335 = vpow.pop %v4334
        %v4336 = vmul.f32 %v4207, 1.442695
        %v4337 = vpow.pop %v4336
        %v4338 = vmul.f32 %v4208, 1.442695
        %v4339 = vpow.pop %v4338
        %v4340 = vmul.f32 %v4209, 1.442695
        %v4341 = vpow.pop %v4340
        %v4342 = vmul.f32 %v4210, 1.442695
        %v4343 = vpow.pop %v4342
        %v4344 = vmul.f32 %v4211, 1.442695
        %v4345 = vpow.pop %v4344
        %v4346 = vmul.f32 %v4212, 1.442695
        %v4347 = vpow.pop %v4346
        %v4348 = vmul.f32 %v4213, 1.442695
        %v4349 = vpow.pop %v4348
        %v4350 = vmul.f32 %v4214, 1.442695
        %v4351 = vpow.pop %v4350
        %v4352 = vmul.f32 %v4215, 1.442695
        %v4353 = vpow.pop %v4352
        %v4354 = vmul.f32 %v4216, 1.442695
        %v4355 = vpow.pop %v4354
        %v4356 = vmul.f32 %v4217, 1.442695
        %v4357 = vpow.pop %v4356
        %v4358 = vmul.f32 %v4218, 1.442695
        %v4359 = vpow.pop %v4358
        %v4360 = vmul.f32 %v4219, 1.442695
        %v4361 = vpow.pop %v4360
        %v4362 = vmul.f32 %v4220, 1.442695
        %v4363 = vpow.pop %v4362
        %v4364 = vmul.f32 %v4221, 1.442695
        %v4365 = vpow.pop %v4364
        %v4366 = vmul.f32 %v4222, 1.442695
        %v4367 = vpow.pop %v4366
        %v4368 = vmul.f32 %v4223, 1.442695
        %v4369 = vpow.pop %v4368
        %v4370 = vmul.f32 %v4224, 1.442695
        %v4371 = vpow.pop %v4370
        %v4372 = vmul.f32 %v4225, 1.442695
        %v4373 = vpow.pop %v4372
        %v4374 = vmul.f32 %v4226, 1.442695
        %v4375 = vpow.pop %v4374
        %v4376 = vmul.f32 %v4227, 1.442695
        %v4377 = vpow.pop %v4376
        %v4378 = vmul.f32 %v4228, 1.442695
        %v4379 = vpow.pop %v4378
        %v4380 = vmul.f32 %v4229, 1.442695
        %v4381 = vpow.pop %v4380
        %v4382 = vmul.f32 %v4230, 1.442695
        %v4383 = vpow.pop %v4382
        %v4384 = vmul.f32 %v4231, 1.442695
        %v4385 = vpow.pop %v4384
        %v4386 = vmul.f32 %v4232, 1.442695
        %v4387 = vpow.pop %v4386
        %v4388 = vmul.f32 %v4233, 1.442695
        %v4389 = vpow.pop %v4388
        %v4390 = vmul.f32 %v4234, 1.442695
        %v4391 = vpow.pop %v4390
        %v4392 = vmul.f32 %v4235, 1.442695
        %v4393 = vpow.pop %v4392
        %v4394 = vmul.f32 %v4236, 1.442695
        %v4395 = vpow.pop %v4394
        %v4396 = vmul.f32 %v4237, 1.442695
        %v4397 = vpow.pop %v4396
        %v4398 = vmul.f32 %v4238, 1.442695
        %v4399 = vpow.pop %v4398
        %v4400 = vmul.f32 %v4239, 1.442695
        %v4401 = vpow.pop %v4400
        %v4402 = vmul.f32 %v4240, 1.442695
        %v4403 = vpow.pop %v4402
        %v4404 = vmul.f32 %v4241, 1.442695
        %v4405 = vpow.pop %v4404
        %v4406 = vmul.f32 %v4242, 1.442695
        %v4407 = vpow.pop %v4406
        %v4408 = vmul.f32 %v4243, 1.442695
        %v4409 = vpow.pop %v4408
        %v4410 = vmul.f32 %v4244, 1.442695
        %v4411 = vpow.pop %v4410
        %v4412 = vmul.f32 %v4245, 1.442695
        %v4413 = vpow.pop %v4412
        %v4414 = vmul.f32 %v4246, 1.442695
        %v4415 = vpow.pop %v4414
        %v4416 = vmul.f32 %v4247, 1.442695
        %v4417 = vpow.pop %v4416
        %v4418 = vmul.f32 %v4248, 1.442695
        %v4419 = vpow.pop %v4418
        %v4420 = vmul.f32 %v4249, 1.442695
        %v4421 = vpow.pop %v4420
        %v4422 = vmul.f32 %v4250, 1.442695
        %v4423 = vpow.pop %v4422
        %v4424 = vmul.f32 %v4251, 1.442695
        %v4425 = vpow.pop %v4424
        %v4426 = vmul.f32 %v4252, 1.442695
        %v4427 = vpow.pop %v4426
        %v4428 = vmul.f32 %v4253, 1.442695
        %v4429 = vpow.pop %v4428
        %v4430 = vmul.f32 %v4254, 1.442695
        %v4431 = vpow.pop %v4430
        %v4432 = vmul.f32 %v4255, 1.442695
        %v4433 = vpow.pop %v4432
        %v4434 = vmul.f32 %v4256, 1.442695
        %v4435 = vpow.pop %v4434
        %v4436 = vmul.f32 %v4257, 1.442695
        %v4437 = vpow.pop %v4436
        %v4438 = vmul.f32 %v4258, 1.442695
        %v4439 = vpow.pop %v4438
        %v4440 = vmul.f32 %v4259, 1.442695
        %v4441 = vpow.pop %v4440
        %v4442 = vmul.f32 %v4260, 1.442695
        %v4443 = vpow.pop %v4442
        %v4444 = vmul.f32 %v4261, 1.442695
        %v4445 = vpow.pop %v4444
        %v4446 = vmul.f32 %v4262, 1.442695
        %v4447 = vpow.pop %v4446
        %v4448 = vmul.f32 %v4263, 1.442695
        %v4449 = vpow.pop %v4448
        %v4450 = vmul.f32 %v4264, 1.442695
        %v4451 = vpow.pop %v4450
        %v4452 = vmul.f32 %v4265, 1.442695
        %v4453 = vpow.pop %v4452
        %v4454 = vmul.f32 %v4266, 1.442695
        %v4455 = vpow.pop %v4454
        %v4456 = vmul.f32 %v4267, 1.442695
        %v4457 = vpow.pop %v4456
        %v4458 = vmul.f32 %v4268, 1.442695
        %v4459 = vpow.pop %v4458
        %v4460 = vmul.f32 %v4269, 1.442695
        %v4461 = vpow.pop %v4460
        %v4462 = vmul.f32 %v4270, 1.442695
        %v4463 = vpow.pop %v4462
        %v4464 = vmul.f32 %v4271, 1.442695
        %v4465 = vpow.pop %v4464
        %v4466 = vmul.f32 %v4272, 1.442695
        %v4467 = vpow.pop %v4466
        %v4468 = vmul.f32 %v4273, 1.442695
        %v4469 = vpow.pop %v4468
        %v4470 = vmul.f32 %v4274, 1.442695
        %v4471 = vpow.pop %v4470
        %v4472 = vmul.f32 %v4275, 1.442695
        %v4473 = vpow.pop %v4472
        %v4474 = vmul.f32 %v4276, 1.442695
        %v4475 = vpow.pop %v4474
        %v4476 = vmul.f32 %v4277, 1.442695
        %v4477 = vpow.pop %v4476
        %v4478 = vmul.f32 %v4278, 1.442695
        %v4479 = vpow.pop %v4478
        %v4480 = vmul.f32 %v4279, 1.442695
        %v4481 = vpow.pop %v4480
        %v4482 = vmul.f32 %v4280, 1.442695
        %v4483 = vpow.pop %v4482
        %v4484 = vmul.f32 %v4281, 1.442695
        %v4485 = vpow.pop %v4484
        %v4486 = vmul.f32 %v4282, 1.442695
        %v4487 = vpow.pop %v4486
        %v4488 = vmul.f32 %v4283, 1.442695
        %v4489 = vpow.pop %v4488
        %v4490 = vmul.f32 %v4284, 1.442695
        %v4491 = vpow.pop %v4490
        %v4492 = vmul.f32 %v4285, 1.442695
        %v4493 = vpow.pop %v4492
        %v4494 = vmul.f32 %v4286, 1.442695
        %v4495 = vpow.pop %v4494
        %v4496 = vmul.f32 %v4287, 1.442695
        %v4497 = vpow.pop %v4496
        %v4498 = vmul.f32 %v4288, 1.442695
        %v4499 = vpow.pop %v4498
        %v4500 = vmul.f32 %v4289, 1.442695
        %v4501 = vpow.pop %v4500
        %v4502 = vmul.f32 %v4290, 1.442695
        %v4503 = vpow.pop %v4502
        %v4504 = vmul.f32 %v4291, 1.442695
        %v4505 = vpow.pop %v4504
        %v4506 = vmul.f32 %v4292, 1.442695
        %v4507 = vpow.pop %v4506
        %v4508 = vmul.f32 %v4293, 1.442695
        %v4509 = vpow.pop %v4508
        %v4510 = vmul.f32 %v4294, 1.442695
        %v4511 = vpow.pop %v4510
        %v4512 = vmul.f32 %v4295, 1.442695
        %v4513 = vpow.pop %v4512
        %v4514 = vmul.f32 %v4296, 1.442695
        %v4515 = vpow.pop %v4514
        %v4516 = vmul.f32 %v4297, 1.442695
        %v4517 = vpow.pop %v4516
        %v4518 = vmul.f32 %v4298, 1.442695
        %v4519 = vpow.pop %v4518
        %v4520 = vmul.f32 %v4299, 1.442695
        %v4521 = vpow.pop %v4520
        %v4522 = vmul.f32 %v4300, 1.442695
        %v4523 = vpow.pop %v4522
        %v4524 = vmul.f32 %v4301, 1.442695
        %v4525 = vpow.pop %v4524
        %v4526 = vmul.f32 %v4302, 1.442695
        %v4527 = vpow.pop %v4526
        %v4528 = vmul.f32 %v4303, 1.442695
        %v4529 = vpow.pop %v4528
        %v4530 = vmul.f32 %v4304, 1.442695
        %v4531 = vpow.pop %v4530
        %v4532 = vmul.f32 %v4305, 1.442695
        %v4533 = vpow.pop %v4532
        %v4534 = vmul.f32 %v4306, 1.442695
        %v4535 = vpow.pop %v4534
        %v4536 = vmul.f32 %v4307, 1.442695
        %v4537 = vpow.pop %v4536
        %v4538 = vmul.f32 %v4308, 1.442695
        %v4539 = vpow.pop %v4538
        %v4540 = vmul.f32 %v4309, 1.442695
        %v4541 = vpow.pop %v4540
        %v4542 = vmul.f32 %v4310, 1.442695
        %v4543 = vpow.pop %v4542
        %v4544 = vmul.f32 %v4311, 1.442695
        %v4545 = vpow.pop %v4544
        %v4546 = vmul.f32 %v4312, 1.442695
        %v4547 = vpow.pop %v4546
        %v4548 = vmul.f32 %v4313, 1.442695
        %v4549 = vpow.pop %v4548
        %v4550 = vmul.f32 %v4314, 1.442695
        %v4551 = vpow.pop %v4550
        %v4552 = vmul.f32 %v4315, 1.442695
        %v4553 = vpow.pop %v4552
        %v4554 = vmul.f32 %v4316, 1.442695
        %v4555 = vpow.pop %v4554
        %v4556 = vmul.f32 %v4317, 1.442695
        %v4557 = vpow.pop %v4556
        %v4558 = vmul.f32 %v4318, 1.442695
        %v4559 = vpow.pop %v4558
        %v4560 = vmul.f32 %v4319, 1.442695
        %v4561 = vpow.pop %v4560
        %v4562 = vmul.f32 %v4320, 1.442695
        %v4563 = vpow.pop %v4562
        %v4564 = vmul.f32 %v4321, 1.442695
        %v4565 = vpow.pop %v4564
        %v4566 = vmul.f32 %v4322, 1.442695
        %v4567 = vpow.pop %v4566
        %v4568 = vmul.f32 %v4323, 1.442695
        %v4569 = vpow.pop %v4568
        %v4570 = vmul.f32 %v4324, 1.442695
        %v4571 = vpow.pop %v4570
        %v4572 = vmul.f32 %v4325, 1.442695
        %v4573 = vpow.pop %v4572
        %v4574 = vmul.f32 %v4326, 1.442695
        %v4575 = vpow.pop %v4574
        %v4576 = vmul.f32 %v4327, 1.442695
        %v4577 = vpow.pop %v4576
        %v4578 = vmul.f32 %v4328, 1.442695
        %v4579 = vpow.pop %v4578
        %v4580 = vmul.f32 %v4329, 1.442695
        %v4581 = vpow.pop %v4580
        %v4582 = vmul.f32 %v4330, 1.442695
        %v4583 = vpow.pop %v4582
        %v4584 = vmul.f32 %v4331, 1.442695
        %v4585 = vpow.pop %v4584
        %v4586 = vmul.f32 %v4332, 1.442695
        %v4587 = vpow.pop %v4586
        %v4588 = vmul.f32 %v4333, 1.442695
        %v4589 = vpow.pop %v4588
        %4718 = vrot.lane.b32.xlu0 %v4335, 64
        %v4719 = vpop.permute.xlu0 %4718
        %4720 = vrot.lane.b32.xlu0 %v4337, 64
        %v4721 = vpop.permute.xlu0 %4720
        %4722 = vrot.lane.b32.xlu0 %v4339, 64
        %v4723 = vpop.permute.xlu0 %4722
        %4724 = vrot.lane.b32.xlu0 %v4341, 64
        %v4725 = vpop.permute.xlu0 %4724
        %4726 = vrot.lane.b32.xlu0 %v4343, 64
        %v4727 = vpop.permute.xlu0 %4726
        %4728 = vrot.lane.b32.xlu0 %v4345, 64
        %v4729 = vpop.permute.xlu0 %4728
        %4730 = vrot.lane.b32.xlu0 %v4347, 64
        %v4731 = vpop.permute.xlu0 %4730
        %4732 = vrot.lane.b32.xlu0 %v4349, 64
        %v4733 = vpop.permute.xlu0 %4732
        %4734 = vrot.lane.b32.xlu0 %v4351, 64
        %v4735 = vpop.permute.xlu0 %4734
        %4736 = vrot.lane.b32.xlu0 %v4353, 64
        %v4737 = vpop.permute.xlu0 %4736
        %4738 = vrot.lane.b32.xlu0 %v4355, 64
        %v4739 = vpop.permute.xlu0 %4738
        %4740 = vrot.lane.b32.xlu0 %v4357, 64
        %v4741 = vpop.permute.xlu0 %4740
        %4742 = vrot.lane.b32.xlu0 %v4359, 64
        %v4743 = vpop.permute.xlu0 %4742
        %4744 = vrot.lane.b32.xlu0 %v4361, 64
        %v4745 = vpop.permute.xlu0 %4744
        %4746 = vrot.lane.b32.xlu0 %v4363, 64
        %v4747 = vpop.permute.xlu0 %4746
        %4748 = vrot.lane.b32.xlu0 %v4365, 64
        %v4749 = vpop.permute.xlu0 %4748
        %4750 = vrot.lane.b32.xlu0 %v4367, 64
        %v4751 = vpop.permute.xlu0 %4750
        %4752 = vrot.lane.b32.xlu0 %v4369, 64
        %v4753 = vpop.permute.xlu0 %4752
        %4754 = vrot.lane.b32.xlu0 %v4371, 64
        %v4755 = vpop.permute.xlu0 %4754
        %4756 = vrot.lane.b32.xlu0 %v4373, 64
        %v4757 = vpop.permute.xlu0 %4756
        %4758 = vrot.lane.b32.xlu0 %v4375, 64
        %v4759 = vpop.permute.xlu0 %4758
        %4760 = vrot.lane.b32.xlu0 %v4377, 64
        %v4761 = vpop.permute.xlu0 %4760
        %4762 = vrot.lane.b32.xlu0 %v4379, 64
        %v4763 = vpop.permute.xlu0 %4762
        %4764 = vrot.lane.b32.xlu0 %v4381, 64
        %v4765 = vpop.permute.xlu0 %4764
        %4766 = vrot.lane.b32.xlu0 %v4383, 64
        %v4767 = vpop.permute.xlu0 %4766
        %4768 = vrot.lane.b32.xlu0 %v4385, 64
        %v4769 = vpop.permute.xlu0 %4768
        %4770 = vrot.lane.b32.xlu0 %v4387, 64
        %v4771 = vpop.permute.xlu0 %4770
        %4772 = vrot.lane.b32.xlu0 %v4389, 64
        %v4773 = vpop.permute.xlu0 %4772
        %4774 = vrot.lane.b32.xlu0 %v4391, 64
        %v4775 = vpop.permute.xlu0 %4774
        %4776 = vrot.lane.b32.xlu0 %v4393, 64
        %v4777 = vpop.permute.xlu0 %4776
        %4778 = vrot.lane.b32.xlu0 %v4395, 64
        %v4779 = vpop.permute.xlu0 %4778
        %4780 = vrot.lane.b32.xlu0 %v4397, 64
        %v4781 = vpop.permute.xlu0 %4780
        %4782 = vrot.lane.b32.xlu0 %v4399, 64
        %v4783 = vpop.permute.xlu0 %4782
        %4784 = vrot.lane.b32.xlu0 %v4401, 64
        %v4785 = vpop.permute.xlu0 %4784
        %4786 = vrot.lane.b32.xlu0 %v4403, 64
        %v4787 = vpop.permute.xlu0 %4786
        %4788 = vrot.lane.b32.xlu0 %v4405, 64
        %v4789 = vpop.permute.xlu0 %4788
        %4790 = vrot.lane.b32.xlu0 %v4407, 64
        %v4791 = vpop.permute.xlu0 %4790
        %4792 = vrot.lane.b32.xlu0 %v4409, 64
        %v4793 = vpop.permute.xlu0 %4792
        %4794 = vrot.lane.b32.xlu0 %v4411, 64
        %v4795 = vpop.permute.xlu0 %4794
        %4796 = vrot.lane.b32.xlu0 %v4413, 64
        %v4797 = vpop.permute.xlu0 %4796
        %4798 = vrot.lane.b32.xlu0 %v4415, 64
        %v4799 = vpop.permute.xlu0 %4798
        %4800 = vrot.lane.b32.xlu0 %v4417, 64
        %v4801 = vpop.permute.xlu0 %4800
        %4802 = vrot.lane.b32.xlu0 %v4419, 64
        %v4803 = vpop.permute.xlu0 %4802
        %4804 = vrot.lane.b32.xlu0 %v4421, 64
        %v4805 = vpop.permute.xlu0 %4804
        %4806 = vrot.lane.b32.xlu0 %v4423, 64
        %v4807 = vpop.permute.xlu0 %4806
        %4808 = vrot.lane.b32.xlu0 %v4425, 64
        %v4809 = vpop.permute.xlu0 %4808
        %4810 = vrot.lane.b32.xlu0 %v4427, 64
        %v4811 = vpop.permute.xlu0 %4810
        %4812 = vrot.lane.b32.xlu0 %v4429, 64
        %v4813 = vpop.permute.xlu0 %4812
        %4814 = vrot.lane.b32.xlu0 %v4431, 64
        %v4815 = vpop.permute.xlu0 %4814
        %4816 = vrot.lane.b32.xlu0 %v4433, 64
        %v4817 = vpop.permute.xlu0 %4816
        %4818 = vrot.lane.b32.xlu0 %v4435, 64
        %v4819 = vpop.permute.xlu0 %4818
        %4820 = vrot.lane.b32.xlu0 %v4437, 64
        %v4821 = vpop.permute.xlu0 %4820
        %4822 = vrot.lane.b32.xlu0 %v4439, 64
        %v4823 = vpop.permute.xlu0 %4822
        %4824 = vrot.lane.b32.xlu0 %v4441, 64
        %v4825 = vpop.permute.xlu0 %4824
        %4826 = vrot.lane.b32.xlu0 %v4443, 64
        %v4827 = vpop.permute.xlu0 %4826
        %4828 = vrot.lane.b32.xlu0 %v4445, 64
        %v4829 = vpop.permute.xlu0 %4828
        %4830 = vrot.lane.b32.xlu0 %v4447, 64
        %v4831 = vpop.permute.xlu0 %4830
        %4832 = vrot.lane.b32.xlu0 %v4449, 64
        %v4833 = vpop.permute.xlu0 %4832
        %4834 = vrot.lane.b32.xlu0 %v4451, 64
        %v4835 = vpop.permute.xlu0 %4834
        %4836 = vrot.lane.b32.xlu0 %v4453, 64
        %v4837 = vpop.permute.xlu0 %4836
        %4838 = vrot.lane.b32.xlu0 %v4455, 64
        %v4839 = vpop.permute.xlu0 %4838
        %4840 = vrot.lane.b32.xlu0 %v4457, 64
        %v4841 = vpop.permute.xlu0 %4840
        %4842 = vrot.lane.b32.xlu0 %v4459, 64
        %v4843 = vpop.permute.xlu0 %4842
        %4844 = vrot.lane.b32.xlu0 %v4461, 64
        %v4845 = vpop.permute.xlu0 %4844
        %4846 = vrot.lane.b32.xlu0 %v4463, 64
        %v4847 = vpop.permute.xlu0 %4846
        %4848 = vrot.lane.b32.xlu0 %v4465, 64
        %v4849 = vpop.permute.xlu0 %4848
        %4850 = vrot.lane.b32.xlu0 %v4467, 64
        %v4851 = vpop.permute.xlu0 %4850
        %4852 = vrot.lane.b32.xlu0 %v4469, 64
        %v4853 = vpop.permute.xlu0 %4852
        %4854 = vrot.lane.b32.xlu0 %v4471, 64
        %v4855 = vpop.permute.xlu0 %4854
        %4856 = vrot.lane.b32.xlu0 %v4473, 64
        %v4857 = vpop.permute.xlu0 %4856
        %4858 = vrot.lane.b32.xlu0 %v4475, 64
        %v4859 = vpop.permute.xlu0 %4858
        %4860 = vrot.lane.b32.xlu0 %v4477, 64
        %v4861 = vpop.permute.xlu0 %4860
        %4862 = vrot.lane.b32.xlu0 %v4479, 64
        %v4863 = vpop.permute.xlu0 %4862
        %4864 = vrot.lane.b32.xlu0 %v4481, 64
        %v4865 = vpop.permute.xlu0 %4864
        %4866 = vrot.lane.b32.xlu0 %v4483, 64
        %v4867 = vpop.permute.xlu0 %4866
        %4868 = vrot.lane.b32.xlu0 %v4485, 64
        %v4869 = vpop.permute.xlu0 %4868
        %4870 = vrot.lane.b32.xlu0 %v4487, 64
        %v4871 = vpop.permute.xlu0 %4870
        %4872 = vrot.lane.b32.xlu0 %v4489, 64
        %v4873 = vpop.permute.xlu0 %4872
        %4874 = vrot.lane.b32.xlu0 %v4491, 64
        %v4875 = vpop.permute.xlu0 %4874
        %4876 = vrot.lane.b32.xlu0 %v4493, 64
        %v4877 = vpop.permute.xlu0 %4876
        %4878 = vrot.lane.b32.xlu0 %v4495, 64
        %v4879 = vpop.permute.xlu0 %4878
        %4880 = vrot.lane.b32.xlu0 %v4497, 64
        %v4881 = vpop.permute.xlu0 %4880
        %4882 = vrot.lane.b32.xlu0 %v4499, 64
        %v4883 = vpop.permute.xlu0 %4882
        %4884 = vrot.lane.b32.xlu0 %v4501, 64
        %v4885 = vpop.permute.xlu0 %4884
        %4886 = vrot.lane.b32.xlu0 %v4503, 64
        %v4887 = vpop.permute.xlu0 %4886
        %4888 = vrot.lane.b32.xlu0 %v4505, 64
        %v4889 = vpop.permute.xlu0 %4888
        %4890 = vrot.lane.b32.xlu0 %v4507, 64
        %v4891 = vpop.permute.xlu0 %4890
        %4892 = vrot.lane.b32.xlu0 %v4509, 64
        %v4893 = vpop.permute.xlu0 %4892
        %4894 = vrot.lane.b32.xlu0 %v4511, 64
        %v4895 = vpop.permute.xlu0 %4894
        %4896 = vrot.lane.b32.xlu0 %v4513, 64
        %v4897 = vpop.permute.xlu0 %4896
        %4898 = vrot.lane.b32.xlu0 %v4515, 64
        %v4899 = vpop.permute.xlu0 %4898
        %4900 = vrot.lane.b32.xlu0 %v4517, 64
        %v4901 = vpop.permute.xlu0 %4900
        %4902 = vrot.lane.b32.xlu0 %v4519, 64
        %v4903 = vpop.permute.xlu0 %4902
        %4904 = vrot.lane.b32.xlu0 %v4521, 64
        %v4905 = vpop.permute.xlu0 %4904
        %4906 = vrot.lane.b32.xlu0 %v4523, 64
        %v4907 = vpop.permute.xlu0 %4906
        %4908 = vrot.lane.b32.xlu0 %v4525, 64
        %v4909 = vpop.permute.xlu0 %4908
        %4910 = vrot.lane.b32.xlu0 %v4527, 64
        %v4911 = vpop.permute.xlu0 %4910
        %4912 = vrot.lane.b32.xlu0 %v4529, 64
        %v4913 = vpop.permute.xlu0 %4912
        %4914 = vrot.lane.b32.xlu0 %v4531, 64
        %v4915 = vpop.permute.xlu0 %4914
        %4916 = vrot.lane.b32.xlu0 %v4533, 64
        %v4917 = vpop.permute.xlu0 %4916
        %4918 = vrot.lane.b32.xlu0 %v4535, 64
        %v4919 = vpop.permute.xlu0 %4918
        %4920 = vrot.lane.b32.xlu0 %v4537, 64
        %v4921 = vpop.permute.xlu0 %4920
        %4922 = vrot.lane.b32.xlu0 %v4539, 64
        %v4923 = vpop.permute.xlu0 %4922
        %4924 = vrot.lane.b32.xlu0 %v4541, 64
        %v4925 = vpop.permute.xlu0 %4924
        %4926 = vrot.lane.b32.xlu0 %v4543, 64
        %v4927 = vpop.permute.xlu0 %4926
        %4928 = vrot.lane.b32.xlu0 %v4545, 64
        %v4929 = vpop.permute.xlu0 %4928
        %4930 = vrot.lane.b32.xlu0 %v4547, 64
        %v4931 = vpop.permute.xlu0 %4930
        %4932 = vrot.lane.b32.xlu0 %v4549, 64
        %v4933 = vpop.permute.xlu0 %4932
        %4934 = vrot.lane.b32.xlu0 %v4551, 64
        %v4935 = vpop.permute.xlu0 %4934
        %4936 = vrot.lane.b32.xlu0 %v4553, 64
        %v4937 = vpop.permute.xlu0 %4936
        %4938 = vrot.lane.b32.xlu0 %v4555, 64
        %v4939 = vpop.permute.xlu0 %4938
        %4940 = vrot.lane.b32.xlu0 %v4557, 64
        %v4941 = vpop.permute.xlu0 %4940
        %4942 = vrot.lane.b32.xlu0 %v4559, 64
        %v4943 = vpop.permute.xlu0 %4942
        %4944 = vrot.lane.b32.xlu0 %v4561, 64
        %v4945 = vpop.permute.xlu0 %4944
        %4946 = vrot.lane.b32.xlu0 %v4563, 64
        %v4947 = vpop.permute.xlu0 %4946
        %4948 = vrot.lane.b32.xlu0 %v4565, 64
        %v4949 = vpop.permute.xlu0 %4948
        %4950 = vrot.lane.b32.xlu0 %v4567, 64
        %v4951 = vpop.permute.xlu0 %4950
        %4952 = vrot.lane.b32.xlu0 %v4569, 64
        %v4953 = vpop.permute.xlu0 %4952
        %4954 = vrot.lane.b32.xlu0 %v4571, 64
        %v4955 = vpop.permute.xlu0 %4954
        %4956 = vrot.lane.b32.xlu0 %v4573, 64
        %v4957 = vpop.permute.xlu0 %4956
        %4958 = vrot.lane.b32.xlu0 %v4575, 64
        %v4959 = vpop.permute.xlu0 %4958
        %4960 = vrot.lane.b32.xlu0 %v4577, 64
        %v4961 = vpop.permute.xlu0 %4960
        %4962 = vrot.lane.b32.xlu0 %v4579, 64
        %v4963 = vpop.permute.xlu0 %4962
        %4964 = vrot.lane.b32.xlu0 %v4581, 64
        %v4965 = vpop.permute.xlu0 %4964
        %4966 = vrot.lane.b32.xlu0 %v4583, 64
        %v4967 = vpop.permute.xlu0 %4966
        %4968 = vrot.lane.b32.xlu0 %v4585, 64
        %v4969 = vpop.permute.xlu0 %4968
        %4970 = vrot.lane.b32.xlu0 %v4587, 64
        %v4971 = vpop.permute.xlu0 %4970
        %4972 = vrot.lane.b32.xlu0 %v4589, 64
        %v4973 = vpop.permute.xlu0 %4972
        %v5102 = vmul.f32 %v4078, %v4719
        %v5103 = vmul.f32 %v4079, %v4721
        %v5104 = vmul.f32 %v4080, %v4723
        %v5105 = vmul.f32 %v4081, %v4725
        %v5106 = vmul.f32 %v4082, %v4727
        %v5107 = vmul.f32 %v4083, %v4729
        %v5108 = vmul.f32 %v4084, %v4731
        %v5109 = vmul.f32 %v4085, %v4733
        %v5110 = vmul.f32 %v4086, %v4735
        %v5111 = vmul.f32 %v4087, %v4737
        %v5112 = vmul.f32 %v4088, %v4739
        %v5113 = vmul.f32 %v4089, %v4741
        %v5114 = vmul.f32 %v4090, %v4743
        %v5115 = vmul.f32 %v4091, %v4745
        %v5116 = vmul.f32 %v4092, %v4747
        %v5117 = vmul.f32 %v4093, %v4749
        %v5118 = vmul.f32 %v4094, %v4751
        %v5119 = vmul.f32 %v4095, %v4753
        %v5120 = vmul.f32 %v4096, %v4755
        %v5121 = vmul.f32 %v4097, %v4757
        %v5122 = vmul.f32 %v4098, %v4759
        %v5123 = vmul.f32 %v4099, %v4761
        %v5124 = vmul.f32 %v4100, %v4763
        %v5125 = vmul.f32 %v4101, %v4765
        %v5126 = vmul.f32 %v4102, %v4767
        %v5127 = vmul.f32 %v4103, %v4769
        %v5128 = vmul.f32 %v4104, %v4771
        %v5129 = vmul.f32 %v4105, %v4773
        %v5130 = vmul.f32 %v4106, %v4775
        %v5131 = vmul.f32 %v4107, %v4777
        %v5132 = vmul.f32 %v4108, %v4779
        %v5133 = vmul.f32 %v4109, %v4781
        %v5134 = vmul.f32 %v4110, %v4783
        %v5135 = vmul.f32 %v4111, %v4785
        %v5136 = vmul.f32 %v4112, %v4787
        %v5137 = vmul.f32 %v4113, %v4789
        %v5138 = vmul.f32 %v4114, %v4791
        %v5139 = vmul.f32 %v4115, %v4793
        %v5140 = vmul.f32 %v4116, %v4795
        %v5141 = vmul.f32 %v4117, %v4797
        %v5142 = vmul.f32 %v4118, %v4799
        %v5143 = vmul.f32 %v4119, %v4801
        %v5144 = vmul.f32 %v4120, %v4803
        %v5145 = vmul.f32 %v4121, %v4805
        %v5146 = vmul.f32 %v4122, %v4807
        %v5147 = vmul.f32 %v4123, %v4809
        %v5148 = vmul.f32 %v4124, %v4811
        %v5149 = vmul.f32 %v4125, %v4813
        %v5150 = vmul.f32 %v4126, %v4815
        %v5151 = vmul.f32 %v4127, %v4817
        %v5152 = vmul.f32 %v4128, %v4819
        %v5153 = vmul.f32 %v4129, %v4821
        %v5154 = vmul.f32 %v4130, %v4823
        %v5155 = vmul.f32 %v4131, %v4825
        %v5156 = vmul.f32 %v4132, %v4827
        %v5157 = vmul.f32 %v4133, %v4829
        %v5158 = vmul.f32 %v4134, %v4831
        %v5159 = vmul.f32 %v4135, %v4833
        %v5160 = vmul.f32 %v4136, %v4835
        %v5161 = vmul.f32 %v4137, %v4837
        %v5162 = vmul.f32 %v4138, %v4839
        %v5163 = vmul.f32 %v4139, %v4841
        %v5164 = vmul.f32 %v4140, %v4843
        %v5165 = vmul.f32 %v4141, %v4845
        %v5166 = vmul.f32 %v4142, %v4847
        %v5167 = vmul.f32 %v4143, %v4849
        %v5168 = vmul.f32 %v4144, %v4851
        %v5169 = vmul.f32 %v4145, %v4853
        %v5170 = vmul.f32 %v4146, %v4855
        %v5171 = vmul.f32 %v4147, %v4857
        %v5172 = vmul.f32 %v4148, %v4859
        %v5173 = vmul.f32 %v4149, %v4861
        %v5174 = vmul.f32 %v4150, %v4863
        %v5175 = vmul.f32 %v4151, %v4865
        %v5176 = vmul.f32 %v4152, %v4867
        %v5177 = vmul.f32 %v4153, %v4869
        %v5178 = vmul.f32 %v4154, %v4871
        %v5179 = vmul.f32 %v4155, %v4873
        %v5180 = vmul.f32 %v4156, %v4875
        %v5181 = vmul.f32 %v4157, %v4877
        %v5182 = vmul.f32 %v4158, %v4879
        %v5183 = vmul.f32 %v4159, %v4881
        %v5184 = vmul.f32 %v4160, %v4883
        %v5185 = vmul.f32 %v4161, %v4885
        %v5186 = vmul.f32 %v4162, %v4887
        %v5187 = vmul.f32 %v4163, %v4889
        %v5188 = vmul.f32 %v4164, %v4891
        %v5189 = vmul.f32 %v4165, %v4893
        %v5190 = vmul.f32 %v4166, %v4895
        %v5191 = vmul.f32 %v4167, %v4897
        %v5192 = vmul.f32 %v4168, %v4899
        %v5193 = vmul.f32 %v4169, %v4901
        %v5194 = vmul.f32 %v4170, %v4903
        %v5195 = vmul.f32 %v4171, %v4905
        %v5196 = vmul.f32 %v4172, %v4907
        %v5197 = vmul.f32 %v4173, %v4909
        %v5198 = vmul.f32 %v4174, %v4911
        %v5199 = vmul.f32 %v4175, %v4913
        %v5200 = vmul.f32 %v4176, %v4915
        %v5201 = vmul.f32 %v4177, %v4917
        %v5202 = vmul.f32 %v4178, %v4919
        %v5203 = vmul.f32 %v4179, %v4921
        %v5204 = vmul.f32 %v4180, %v4923
        %v5205 = vmul.f32 %v4181, %v4925
        %v5206 = vmul.f32 %v4182, %v4927
        %v5207 = vmul.f32 %v4183, %v4929
        %v5208 = vmul.f32 %v4184, %v4931
        %v5209 = vmul.f32 %v4185, %v4933
        %v5210 = vmul.f32 %v4186, %v4935
        %v5211 = vmul.f32 %v4187, %v4937
        %v5212 = vmul.f32 %v4188, %v4939
        %v5213 = vmul.f32 %v4189, %v4941
        %v5214 = vmul.f32 %v4190, %v4943
        %v5215 = vmul.f32 %v4191, %v4945
        %v5216 = vmul.f32 %v4192, %v4947
        %v5217 = vmul.f32 %v4193, %v4949
        %v5218 = vmul.f32 %v4194, %v4951
        %v5219 = vmul.f32 %v4195, %v4953
        %v5220 = vmul.f32 %v4196, %v4955
        %v5221 = vmul.f32 %v4197, %v4957
        %v5222 = vmul.f32 %v4198, %v4959
        %v5223 = vmul.f32 %v4199, %v4961
        %v5224 = vmul.f32 %v4200, %v4963
        %v5225 = vmul.f32 %v4201, %v4965
        %v5226 = vmul.f32 %v4202, %v4967
        %v5227 = vmul.f32 %v4203, %v4969
        %v5228 = vmul.f32 %v4204, %v4971
        %v5229 = vmul.f32 %v4205, %v4973
        %v5230 = vadd.f32 %v3440, %v5102
        %v5231 = vadd.f32 %v3443, %v5103
        %v5232 = vadd.f32 %v3448, %v5104
        %v5233 = vadd.f32 %v3451, %v5105
        %v5234 = vadd.f32 %v3456, %v5106
        %v5235 = vadd.f32 %v3459, %v5107
        %v5236 = vadd.f32 %v3464, %v5108
        %v5237 = vadd.f32 %v3467, %v5109
        %v5238 = vadd.f32 %v3472, %v5110
        %v5239 = vadd.f32 %v3475, %v5111
        %v5240 = vadd.f32 %v3480, %v5112
        %v5241 = vadd.f32 %v3483, %v5113
        %v5242 = vadd.f32 %v3488, %v5114
        %v5243 = vadd.f32 %v3491, %v5115
        %v5244 = vadd.f32 %v3496, %v5116
        %v5245 = vadd.f32 %v3499, %v5117
        %v5246 = vadd.f32 %v3504, %v5118
        %v5247 = vadd.f32 %v3507, %v5119
        %v5248 = vadd.f32 %v3512, %v5120
        %v5249 = vadd.f32 %v3515, %v5121
        %v5250 = vadd.f32 %v3520, %v5122
        %v5251 = vadd.f32 %v3523, %v5123
        %v5252 = vadd.f32 %v3528, %v5124
        %v5253 = vadd.f32 %v3531, %v5125
        %v5254 = vadd.f32 %v3536, %v5126
        %v5255 = vadd.f32 %v3539, %v5127
        %v5256 = vadd.f32 %v3544, %v5128
        %v5257 = vadd.f32 %v3547, %v5129
        %v5258 = vadd.f32 %v3552, %v5130
        %v5259 = vadd.f32 %v3555, %v5131
        %v5260 = vadd.f32 %v3560, %v5132
        %v5261 = vadd.f32 %v3563, %v5133
        %v5262 = vadd.f32 %v3568, %v5134
        %v5263 = vadd.f32 %v3571, %v5135
        %v5264 = vadd.f32 %v3576, %v5136
        %v5265 = vadd.f32 %v3579, %v5137
        %v5266 = vadd.f32 %v3584, %v5138
        %v5267 = vadd.f32 %v3587, %v5139
        %v5268 = vadd.f32 %v3592, %v5140
        %v5269 = vadd.f32 %v3595, %v5141
        %v5270 = vadd.f32 %v3600, %v5142
        %v5271 = vadd.f32 %v3603, %v5143
        %v5272 = vadd.f32 %v3608, %v5144
        %v5273 = vadd.f32 %v3611, %v5145
        %v5274 = vadd.f32 %v3616, %v5146
        %v5275 = vadd.f32 %v3619, %v5147
        %v5276 = vadd.f32 %v3624, %v5148
        %v5277 = vadd.f32 %v3627, %v5149
        %v5278 = vadd.f32 %v3632, %v5150
        %v5279 = vadd.f32 %v3635, %v5151
        %v5280 = vadd.f32 %v3640, %v5152
        %v5281 = vadd.f32 %v3643, %v5153
        %v5282 = vadd.f32 %v3648, %v5154
        %v5283 = vadd.f32 %v3651, %v5155
        %v5284 = vadd.f32 %v3656, %v5156
        %v5285 = vadd.f32 %v3659, %v5157
        %v5286 = vadd.f32 %v3664, %v5158
        %v5287 = vadd.f32 %v3667, %v5159
        %v5288 = vadd.f32 %v3672, %v5160
        %v5289 = vadd.f32 %v3675, %v5161
        %v5290 = vadd.f32 %v3680, %v5162
        %v5291 = vadd.f32 %v3683, %v5163
        %v5292 = vadd.f32 %v3688, %v5164
        %v5293 = vadd.f32 %v3691, %v5165
        %v5294 = vadd.f32 %v3696, %v5166
        %v5295 = vadd.f32 %v3699, %v5167
        %v5296 = vadd.f32 %v3704, %v5168
        %v5297 = vadd.f32 %v3707, %v5169
        %v5298 = vadd.f32 %v3712, %v5170
        %v5299 = vadd.f32 %v3715, %v5171
        %v5300 = vadd.f32 %v3720, %v5172
        %v5301 = vadd.f32 %v3723, %v5173
        %v5302 = vadd.f32 %v3728, %v5174
        %v5303 = vadd.f32 %v3731, %v5175
        %v5304 = vadd.f32 %v3736, %v5176
        %v5305 = vadd.f32 %v3739, %v5177
        %v5306 = vadd.f32 %v3744, %v5178
        %v5307 = vadd.f32 %v3747, %v5179
        %v5308 = vadd.f32 %v3752, %v5180
        %v5309 = vadd.f32 %v3755, %v5181
        %v5310 = vadd.f32 %v3760, %v5182
        %v5311 = vadd.f32 %v3763, %v5183
        %v5312 = vadd.f32 %v3768, %v5184
        %v5313 = vadd.f32 %v3771, %v5185
        %v5314 = vadd.f32 %v3776, %v5186
        %v5315 = vadd.f32 %v3779, %v5187
        %v5316 = vadd.f32 %v3784, %v5188
        %v5317 = vadd.f32 %v3787, %v5189
        %v5318 = vadd.f32 %v3792, %v5190
        %v5319 = vadd.f32 %v3795, %v5191
        %v5320 = vadd.f32 %v3800, %v5192
        %v5321 = vadd.f32 %v3803, %v5193
        %v5322 = vadd.f32 %v3808, %v5194
        %v5323 = vadd.f32 %v3811, %v5195
        %v5324 = vadd.f32 %v3816, %v5196
        %v5325 = vadd.f32 %v3819, %v5197
        %v5326 = vadd.f32 %v3824, %v5198
        %v5327 = vadd.f32 %v3827, %v5199
        %v5328 = vadd.f32 %v3832, %v5200
        %v5329 = vadd.f32 %v3835, %v5201
        %v5330 = vadd.f32 %v3840, %v5202
        %v5331 = vadd.f32 %v3843, %v5203
        %v5332 = vadd.f32 %v3848, %v5204
        %v5333 = vadd.f32 %v3851, %v5205
        %v5334 = vadd.f32 %v3856, %v5206
        %v5335 = vadd.f32 %v3859, %v5207
        %v5336 = vadd.f32 %v3864, %v5208
        %v5337 = vadd.f32 %v3867, %v5209
        %v5338 = vadd.f32 %v3872, %v5210
        %v5339 = vadd.f32 %v3875, %v5211
        %v5340 = vadd.f32 %v3880, %v5212
        %v5341 = vadd.f32 %v3883, %v5213
        %v5342 = vadd.f32 %v3888, %v5214
        %v5343 = vadd.f32 %v3891, %v5215
        %v5344 = vadd.f32 %v3896, %v5216
        %v5345 = vadd.f32 %v3899, %v5217
        %v5346 = vadd.f32 %v3904, %v5218
        %v5347 = vadd.f32 %v3907, %v5219
        %v5348 = vadd.f32 %v3912, %v5220
        %v5349 = vadd.f32 %v3915, %v5221
        %v5350 = vadd.f32 %v3920, %v5222
        %v5351 = vadd.f32 %v3923, %v5223
        %v5352 = vadd.f32 %v3928, %v5224
        %v5353 = vadd.f32 %v3931, %v5225
        %v5354 = vadd.f32 %v3936, %v5226
        %v5355 = vadd.f32 %v3939, %v5227
        %v5356 = vadd.f32 %v3944, %v5228
        %v5357 = vadd.f32 %v3947, %v5229
        %v5358 = vpack.c.bf16 %v5231, %v5230
        %v5359 = vpack.c.bf16 %v5233, %v5232
        %v5360 = vpack.c.bf16 %v5235, %v5234
        %v5361 = vpack.c.bf16 %v5237, %v5236
        %v5362 = vpack.c.bf16 %v5239, %v5238
        %v5363 = vpack.c.bf16 %v5241, %v5240
        %v5364 = vpack.c.bf16 %v5243, %v5242
        %v5365 = vpack.c.bf16 %v5245, %v5244
        %v5366 = vpack.c.bf16 %v5247, %v5246
        %v5367 = vpack.c.bf16 %v5249, %v5248
        %v5368 = vpack.c.bf16 %v5251, %v5250
        %v5369 = vpack.c.bf16 %v5253, %v5252
        %v5370 = vpack.c.bf16 %v5255, %v5254
        %v5371 = vpack.c.bf16 %v5257, %v5256
        %v5372 = vpack.c.bf16 %v5259, %v5258
        %v5373 = vpack.c.bf16 %v5261, %v5260
        %v5374 = vpack.c.bf16 %v5263, %v5262
        %v5375 = vpack.c.bf16 %v5265, %v5264
        %v5376 = vpack.c.bf16 %v5267, %v5266
        %v5377 = vpack.c.bf16 %v5269, %v5268
        %v5378 = vpack.c.bf16 %v5271, %v5270
        %v5379 = vpack.c.bf16 %v5273, %v5272
        %v5380 = vpack.c.bf16 %v5275, %v5274
        %v5381 = vpack.c.bf16 %v5277, %v5276
        %v5382 = vpack.c.bf16 %v5279, %v5278
        %v5383 = vpack.c.bf16 %v5281, %v5280
        %v5384 = vpack.c.bf16 %v5283, %v5282
        %v5385 = vpack.c.bf16 %v5285, %v5284
        %v5386 = vpack.c.bf16 %v5287, %v5286
        %v5387 = vpack.c.bf16 %v5289, %v5288
        %v5388 = vpack.c.bf16 %v5291, %v5290
        %v5389 = vpack.c.bf16 %v5293, %v5292
        %v5390 = vpack.c.bf16 %v5295, %v5294
        %v5391 = vpack.c.bf16 %v5297, %v5296
        %v5392 = vpack.c.bf16 %v5299, %v5298
        %v5393 = vpack.c.bf16 %v5301, %v5300
        %v5394 = vpack.c.bf16 %v5303, %v5302
        %v5395 = vpack.c.bf16 %v5305, %v5304
        %v5396 = vpack.c.bf16 %v5307, %v5306
        %v5397 = vpack.c.bf16 %v5309, %v5308
        %v5398 = vpack.c.bf16 %v5311, %v5310
        %v5399 = vpack.c.bf16 %v5313, %v5312
        %v5400 = vpack.c.bf16 %v5315, %v5314
        %v5401 = vpack.c.bf16 %v5317, %v5316
        %v5402 = vpack.c.bf16 %v5319, %v5318
        %v5403 = vpack.c.bf16 %v5321, %v5320
        %v5404 = vpack.c.bf16 %v5323, %v5322
        %v5405 = vpack.c.bf16 %v5325, %v5324
        %v5406 = vpack.c.bf16 %v5327, %v5326
        %v5407 = vpack.c.bf16 %v5329, %v5328
        %v5408 = vpack.c.bf16 %v5331, %v5330
        %v5409 = vpack.c.bf16 %v5333, %v5332
        %v5410 = vpack.c.bf16 %v5335, %v5334
        %v5411 = vpack.c.bf16 %v5337, %v5336
        %v5412 = vpack.c.bf16 %v5339, %v5338
        %v5413 = vpack.c.bf16 %v5341, %v5340
        %v5414 = vpack.c.bf16 %v5343, %v5342
        %v5415 = vpack.c.bf16 %v5345, %v5344
        %v5416 = vpack.c.bf16 %v5347, %v5346
        %v5417 = vpack.c.bf16 %v5349, %v5348
        %v5418 = vpack.c.bf16 %v5351, %v5350
        %v5419 = vpack.c.bf16 %v5353, %v5352
        %v5420 = vpack.c.bf16 %v5355, %v5354
        %v5421 = vpack.c.bf16 %v5357, %v5356
        %v5422 = vld [vmem:[%s6] sm:$0xf]
        %v5423 = vld [vmem:[%s6 + $0x4] sm:$0xf]
        %v5424 = vld [vmem:[%s6 + $0x8] sm:$0xf]
        %v5425 = vld [vmem:[%s6 + $0xc] sm:$0xf]
        %v5426 = vld [vmem:[%s6 + $0x10] sm:$0xf]
        %v5427 = vld [vmem:[%s6 + $0x14] sm:$0xf]
        %v5428 = vld [vmem:[%s6 + $0x18] sm:$0xf]
        %v5429 = vld [vmem:[%s6 + $0x1c] sm:$0xf]
        %v5430 = vld [vmem:[%s7] sm:$0x1]
        %v5432 = vlaneseq
        %v5433 = vshrl.u32 %v5432, 7
        %v5434 = vsub.s32 0, %v5433
        %v5435 = vrot.slane %v5430, %v5434
        %v5445 = vunpack.c.l.b16 %v5422
        %v5446 = vunpack.c.l.b16 %v5423
        %v5447 = vunpack.c.l.b16 %v5424
        %v5448 = vunpack.c.l.b16 %v5425
        %v5449 = vunpack.c.l.b16 %v5426
        %v5450 = vunpack.c.l.b16 %v5427
        %v5451 = vunpack.c.l.b16 %v5428
        %v5452 = vunpack.c.l.b16 %v5429
        %v5453 = vpack.c.b16 %v5446, %v5445
        %v5454 = vpack.c.b16 %v5448, %v5447
        %v5455 = vpack.c.b16 %v5450, %v5449
        %v5456 = vpack.c.b16 %v5452, %v5451
        %v5462 = vsel %vm1859, %v5358, 0
        %v5465 = vsel %vm1859, %v5359, 0
        %v5468 = vsel %vm1859, %v5360, 0
        %v5471 = vsel %vm1859, %v5361, 0
        %v5474 = vsel %vm1859, %v5362, 0
        %v5477 = vsel %vm1859, %v5363, 0
        %v5480 = vsel %vm1859, %v5364, 0
        %v5483 = vsel %vm1859, %v5365, 0
        %v5486 = vsel %vm1859, %v5366, 0
        %v5489 = vsel %vm1859, %v5367, 0
        %v5492 = vsel %vm1859, %v5368, 0
        %v5495 = vsel %vm1859, %v5369, 0
        %v5498 = vsel %vm1859, %v5370, 0
        %v5501 = vsel %vm1859, %v5371, 0
        %v5504 = vsel %vm1859, %v5372, 0
        %v5507 = vsel %vm1859, %v5373, 0
        %v5510 = vsel %vm1859, %v5374, 0
        %v5513 = vsel %vm1859, %v5375, 0
        %v5516 = vsel %vm1859, %v5376, 0
        %v5519 = vsel %vm1859, %v5377, 0
        %v5522 = vsel %vm1859, %v5378, 0
        %v5525 = vsel %vm1859, %v5379, 0
        %v5528 = vsel %vm1859, %v5380, 0
        %v5531 = vsel %vm1859, %v5381, 0
        %v5534 = vsel %vm1859, %v5382, 0
        %v5537 = vsel %vm1859, %v5383, 0
        %v5540 = vsel %vm1859, %v5384, 0
        %v5543 = vsel %vm1859, %v5385, 0
        %v5546 = vsel %vm1859, %v5386, 0
        %v5549 = vsel %vm1859, %v5387, 0
        %v5552 = vsel %vm1859, %v5388, 0
        %v5555 = vsel %vm1859, %v5389, 0
        %v5558 = vsel %vm1859, %v5390, 0
        %v5561 = vsel %vm1859, %v5391, 0
        %v5564 = vsel %vm1859, %v5392, 0
        %v5567 = vsel %vm1859, %v5393, 0
        %v5570 = vsel %vm1859, %v5394, 0
        %v5573 = vsel %vm1859, %v5395, 0
        %v5576 = vsel %vm1859, %v5396, 0
        %v5579 = vsel %vm1859, %v5397, 0
        %v5582 = vsel %vm1859, %v5398, 0
        %v5585 = vsel %vm1859, %v5399, 0
        %v5588 = vsel %vm1859, %v5400, 0
        %v5591 = vsel %vm1859, %v5401, 0
        %v5594 = vsel %vm1859, %v5402, 0
        %v5597 = vsel %vm1859, %v5403, 0
        %v5600 = vsel %vm1859, %v5404, 0
        %v5603 = vsel %vm1859, %v5405, 0
        %v5606 = vsel %vm1859, %v5406, 0
        %v5609 = vsel %vm1859, %v5407, 0
        %v5612 = vsel %vm1859, %v5408, 0
        %v5615 = vsel %vm1859, %v5409, 0
        %v5618 = vsel %vm1859, %v5410, 0
        %v5621 = vsel %vm1859, %v5411, 0
        %v5624 = vsel %vm1859, %v5412, 0
        %v5627 = vsel %vm1859, %v5413, 0
        %v5630 = vsel %vm1859, %v5414, 0
        %v5633 = vsel %vm1859, %v5415, 0
        %v5636 = vsel %vm1859, %v5416, 0
        %v5639 = vsel %vm1859, %v5417, 0
        %v5642 = vsel %vm1859, %v5418, 0
        %v5645 = vsel %vm1859, %v5419, 0
        %v5648 = vsel %vm1859, %v5420, 0
        %v5651 = vsel %vm1859, %v5421, 0
        %5653 = vmatprep.subr.bf16.mxu0 0
        %5654 = vmatpush1.bf16.msra.mxu0 %v5453
        %5655 = vmatprep.subr.bf16.mxu0 0
        %5656 = vmatpush1.bf16.msra.mxu0 %v5454
        %5657 = vmatprep.subr.bf16.mxu0 0
        %5658 = vmatpush1.bf16.msra.mxu0 %v5455
        %5659 = vmatprep.subr.bf16.mxu0 0
        %5660 = vmatpush1.bf16.msra.mxu0 %v5456
        %5661 = vmatprep.subr.bf16.mxu0 0
        %5662 = vmatpush1.bf16.msra.mxu0 0
        %5663 = vmatprep.subr.bf16.mxu0 0
        %5664 = vmatpush1.bf16.msra.mxu0 0
        %5665 = vmatprep.subr.bf16.mxu0 0
        %5666 = vmatpush1.bf16.msra.mxu0 0
        %5667 = vmatprep.subr.bf16.mxu0 0
        %5668 = vmatpush1.bf16.msra.mxu0 0
        %5669 = vmatprep.subr.bf16.mxu0 0
        %5670 = vmatpush1.bf16.msra.mxu0 0
        %5671 = vmatprep.subr.bf16.mxu0 0
        %5672 = vmatpush1.bf16.msra.mxu0 0
        %5673 = vmatprep.subr.bf16.mxu0 0
        %5674 = vmatpush1.bf16.msra.mxu0 0
        %5675 = vmatprep.subr.bf16.mxu0 0
        %5676 = vmatpush1.bf16.msra.mxu0 0
        %5677 = vmatprep.subr.bf16.mxu0 0
        %5678 = vmatpush1.bf16.msra.mxu0 0
        %5679 = vmatprep.subr.bf16.mxu0 0
        %5680 = vmatpush1.bf16.msra.mxu0 0
        %5681 = vmatprep.subr.bf16.mxu0 0
        %5682 = vmatpush1.bf16.msra.mxu0 0
        %5683 = vmatprep.subr.bf16.mxu0 0
        %5684 = vmatpush1.bf16.msra.mxu0 0
        %5685 = vmatprep.mubr.bf16.mxu0 0
        %5686 = vmatmul.mubr.bf16.gmra.mrb[0].mxu0 %v5462
        %v5687 = vpop.f32.mrb[0].mxu0
        %v5688 = vadd.f32 %v5435, %v5687
        %v5689 = vpop.f32.mrb[0].mxu0
        %v5690 = vpop.f32.mrb[0].mxu0
        %v5691 = vadd.f32 %v5435, %v5690
        %v5692 = vpop.f32.mrb[0].mxu0
        %5693 = vmatprep.mubr.bf16.mxu0 0
        %5694 = vmatmul.mubr.bf16.gmra.mrb[0].mxu0 %v5465
        %v5695 = vpop.f32.mrb[0].mxu0
        %v5696 = vadd.f32 %v5435, %v5695
        %v5697 = vpop.f32.mrb[0].mxu0
        %v5698 = vpop.f32.mrb[0].mxu0
        %v5699 = vadd.f32 %v5435, %v5698
        %v5700 = vpop.f32.mrb[0].mxu0
        %5701 = vmatprep.mubr.bf16.mxu0 0
        %5702 = vmatmul.mubr.bf16.gmra.mrb[0].mxu0 %v5468
        %v5703 = vpop.f32.mrb[0].mxu0
        %v5704 = vadd.f32 %v5435, %v5703
        %v5705 = vpop.f32.mrb[0].mxu0
        %v5706 = vpop.f32.mrb[0].mxu0
        %v5707 = vadd.f32 %v5435, %v5706
        %v5708 = vpop.f32.mrb[0].mxu0
        %5709 = vmatprep.mubr.bf16.mxu0 0
        %5710 = vmatmul.mubr.bf16.gmra.mrb[0].mxu0 %v5471
        %v5711 = vpop.f32.mrb[0].mxu0
        %v5712 = vadd.f32 %v5435, %v5711
        %v5713 = vpop.f32.mrb[0].mxu0
        %v5714 = vpop.f32.mrb[0].mxu0
        %v5715 = vadd.f32 %v5435, %v5714
        %v5716 = vpop.f32.mrb[0].mxu0
        %5717 = vmatprep.mubr.bf16.mxu0 0
        %5718 = vmatmul.mubr.bf16.gmra.mrb[0].mxu0 %v5474
        %v5719 = vpop.f32.mrb[0].mxu0
        %v5720 = vadd.f32 %v5435, %v5719
        %v5721 = vpop.f32.mrb[0].mxu0
        %v5722 = vpop.f32.mrb[0].mxu0
        %v5723 = vadd.f32 %v5435, %v5722
        %v5724 = vpop.f32.mrb[0].mxu0
        %5725 = vmatprep.mubr.bf16.mxu0 0
        %5726 = vmatmul.mubr.bf16.gmra.mrb[0].mxu0 %v5477
        %v5727 = vpop.f32.mrb[0].mxu0
        %v5728 = vadd.f32 %v5435, %v5727
        %v5729 = vpop.f32.mrb[0].mxu0
        %v5730 = vpop.f32.mrb[0].mxu0
        %v5731 = vadd.f32 %v5435, %v5730
        %v5732 = vpop.f32.mrb[0].mxu0
        %5733 = vmatprep.mubr.bf16.mxu0 0
        %5734 = vmatmul.mubr.bf16.gmra.mrb[0].mxu0 %v5480
        %v5735 = vpop.f32.mrb[0].mxu0
        %v5736 = vadd.f32 %v5435, %v5735
        %v5737 = vpop.f32.mrb[0].mxu0
        %v5738 = vpop.f32.mrb[0].mxu0
        %v5739 = vadd.f32 %v5435, %v5738
        %v5740 = vpop.f32.mrb[0].mxu0
        %5741 = vmatprep.mubr.bf16.mxu0 0
        %5742 = vmatmul.mubr.bf16.gmra.mrb[0].mxu0 %v5483
        %v5743 = vpop.f32.mrb[0].mxu0
        %v5744 = vadd.f32 %v5435, %v5743
        %v5745 = vpop.f32.mrb[0].mxu0
        %v5746 = vpop.f32.mrb[0].mxu0
        %v5747 = vadd.f32 %v5435, %v5746
        %v5748 = vpop.f32.mrb[0].mxu0
        %5749 = vmatprep.mubr.bf16.mxu0 0
        %5750 = vmatmul.mubr.bf16.gmra.mrb[0].mxu0 %v5486
        %v5751 = vpop.f32.mrb[0].mxu0
        %v5752 = vadd.f32 %v5435, %v5751
        %v5753 = vpop.f32.mrb[0].mxu0
        %v5754 = vpop.f32.mrb[0].mxu0
        %v5755 = vadd.f32 %v5435, %v5754
        %v5756 = vpop.f32.mrb[0].mxu0
        %5757 = vmatprep.mubr.bf16.mxu0 0
        %5758 = vmatmul.mubr.bf16.gmra.mrb[0].mxu0 %v5489
        %v5759 = vpop.f32.mrb[0].mxu0
        %v5760 = vadd.f32 %v5435, %v5759
        %v5761 = vpop.f32.mrb[0].mxu0
        %v5762 = vpop.f32.mrb[0].mxu0
        %v5763 = vadd.f32 %v5435, %v5762
        %v5764 = vpop.f32.mrb[0].mxu0
        %5765 = vmatprep.mubr.bf16.mxu0 0
        %5766 = vmatmul.mubr.bf16.gmra.mrb[0].mxu0 %v5492
        %v5767 = vpop.f32.mrb[0].mxu0
        %v5768 = vadd.f32 %v5435, %v5767
        %v5769 = vpop.f32.mrb[0].mxu0
        %v5770 = vpop.f32.mrb[0].mxu0
        %v5771 = vadd.f32 %v5435, %v5770
        %v5772 = vpop.f32.mrb[0].mxu0
        %5773 = vmatprep.mubr.bf16.mxu0 0
        %5774 = vmatmul.mubr.bf16.gmra.mrb[0].mxu0 %v5495
        %v5775 = vpop.f32.mrb[0].mxu0
        %v5776 = vadd.f32 %v5435, %v5775
        %v5777 = vpop.f32.mrb[0].mxu0
        %v5778 = vpop.f32.mrb[0].mxu0
        %v5779 = vadd.f32 %v5435, %v5778
        %v5780 = vpop.f32.mrb[0].mxu0
        %5781 = vmatprep.mubr.bf16.mxu0 0
        %5782 = vmatmul.mubr.bf16.gmra.mrb[0].mxu0 %v5498
        %v5783 = vpop.f32.mrb[0].mxu0
        %v5784 = vadd.f32 %v5435, %v5783
        %v5785 = vpop.f32.mrb[0].mxu0
        %v5786 = vpop.f32.mrb[0].mxu0
        %v5787 = vadd.f32 %v5435, %v5786
        %v5788 = vpop.f32.mrb[0].mxu0
        %5789 = vmatprep.mubr.bf16.mxu0 0
        %5790 = vmatmul.mubr.bf16.gmra.mrb[0].mxu0 %v5501
        %v5791 = vpop.f32.mrb[0].mxu0
        %v5792 = vadd.f32 %v5435, %v5791
        %v5793 = vpop.f32.mrb[0].mxu0
        %v5794 = vpop.f32.mrb[0].mxu0
        %v5795 = vadd.f32 %v5435, %v5794
        %v5796 = vpop.f32.mrb[0].mxu0
        %5797 = vmatprep.mubr.bf16.mxu0 0
        %5798 = vmatmul.mubr.bf16.gmra.mrb[0].mxu0 %v5504
        %v5799 = vpop.f32.mrb[0].mxu0
        %v5800 = vadd.f32 %v5435, %v5799
        %v5801 = vpop.f32.mrb[0].mxu0
        %v5802 = vpop.f32.mrb[0].mxu0
        %v5803 = vadd.f32 %v5435, %v5802
        %v5804 = vpop.f32.mrb[0].mxu0
        %5805 = vmatprep.mubr.bf16.mxu0 0
        %5806 = vmatmul.mubr.bf16.gmra.mrb[0].mxu0 %v5507
        %v5807 = vpop.f32.mrb[0].mxu0
        %v5808 = vadd.f32 %v5435, %v5807
        %v5809 = vpop.f32.mrb[0].mxu0
        %v5810 = vpop.f32.mrb[0].mxu0
        %v5811 = vadd.f32 %v5435, %v5810
        %v5812 = vpop.f32.mrb[0].mxu0
        %5813 = vmatprep.mubr.bf16.mxu0 0
        %5814 = vmatmul.mubr.bf16.gmra.mrb[0].mxu0 %v5510
        %v5815 = vpop.f32.mrb[0].mxu0
        %v5816 = vadd.f32 %v5435, %v5815
        %v5817 = vpop.f32.mrb[0].mxu0
        %v5818 = vpop.f32.mrb[0].mxu0
        %v5819 = vadd.f32 %v5435, %v5818
        %v5820 = vpop.f32.mrb[0].mxu0
        %5821 = vmatprep.mubr.bf16.mxu0 0
        %5822 = vmatmul.mubr.bf16.gmra.mrb[0].mxu0 %v5513
        %v5823 = vpop.f32.mrb[0].mxu0
        %v5824 = vadd.f32 %v5435, %v5823
        %v5825 = vpop.f32.mrb[0].mxu0
        %v5826 = vpop.f32.mrb[0].mxu0
        %v5827 = vadd.f32 %v5435, %v5826
        %v5828 = vpop.f32.mrb[0].mxu0
        %5829 = vmatprep.mubr.bf16.mxu0 0
        %5830 = vmatmul.mubr.bf16.gmra.mrb[0].mxu0 %v5516
        %v5831 = vpop.f32.mrb[0].mxu0
        %v5832 = vadd.f32 %v5435, %v5831
        %v5833 = vpop.f32.mrb[0].mxu0
        %v5834 = vpop.f32.mrb[0].mxu0
        %v5835 = vadd.f32 %v5435, %v5834
        %v5836 = vpop.f32.mrb[0].mxu0
        %5837 = vmatprep.mubr.bf16.mxu0 0
        %5838 = vmatmul.mubr.bf16.gmra.mrb[0].mxu0 %v5519
        %v5839 = vpop.f32.mrb[0].mxu0
        %v5840 = vadd.f32 %v5435, %v5839
        %v5841 = vpop.f32.mrb[0].mxu0
        %v5842 = vpop.f32.mrb[0].mxu0
        %v5843 = vadd.f32 %v5435, %v5842
        %v5844 = vpop.f32.mrb[0].mxu0
        %5845 = vmatprep.mubr.bf16.mxu0 0
        %5846 = vmatmul.mubr.bf16.gmra.mrb[0].mxu0 %v5522
        %v5847 = vpop.f32.mrb[0].mxu0
        %v5848 = vadd.f32 %v5435, %v5847
        %v5849 = vpop.f32.mrb[0].mxu0
        %v5850 = vpop.f32.mrb[0].mxu0
        %v5851 = vadd.f32 %v5435, %v5850
        %v5852 = vpop.f32.mrb[0].mxu0
        %5853 = vmatprep.mubr.bf16.mxu0 0
        %5854 = vmatmul.mubr.bf16.gmra.mrb[0].mxu0 %v5525
        %v5855 = vpop.f32.mrb[0].mxu0
        %v5856 = vadd.f32 %v5435, %v5855
        %v5857 = vpop.f32.mrb[0].mxu0
        %v5858 = vpop.f32.mrb[0].mxu0
        %v5859 = vadd.f32 %v5435, %v5858
        %v5860 = vpop.f32.mrb[0].mxu0
        %5861 = vmatprep.mubr.bf16.mxu0 0
        %5862 = vmatmul.mubr.bf16.gmra.mrb[0].mxu0 %v5528
        %v5863 = vpop.f32.mrb[0].mxu0
        %v5864 = vadd.f32 %v5435, %v5863
        %v5865 = vpop.f32.mrb[0].mxu0
        %v5866 = vpop.f32.mrb[0].mxu0
        %v5867 = vadd.f32 %v5435, %v5866
        %v5868 = vpop.f32.mrb[0].mxu0
        %5869 = vmatprep.mubr.bf16.mxu0 0
        %5870 = vmatmul.mubr.bf16.gmra.mrb[0].mxu0 %v5531
        %v5871 = vpop.f32.mrb[0].mxu0
        %v5872 = vadd.f32 %v5435, %v5871
        %v5873 = vpop.f32.mrb[0].mxu0
        %v5874 = vpop.f32.mrb[0].mxu0
        %v5875 = vadd.f32 %v5435, %v5874
        %v5876 = vpop.f32.mrb[0].mxu0
        %5877 = vmatprep.mubr.bf16.mxu0 0
        %5878 = vmatmul.mubr.bf16.gmra.mrb[0].mxu0 %v5534
        %v5879 = vpop.f32.mrb[0].mxu0
        %v5880 = vadd.f32 %v5435, %v5879
        %v5881 = vpop.f32.mrb[0].mxu0
        %v5882 = vpop.f32.mrb[0].mxu0
        %v5883 = vadd.f32 %v5435, %v5882
        %v5884 = vpop.f32.mrb[0].mxu0
        %5885 = vmatprep.mubr.bf16.mxu0 0
        %5886 = vmatmul.mubr.bf16.gmra.mrb[0].mxu0 %v5537
        %v5887 = vpop.f32.mrb[0].mxu0
        %v5888 = vadd.f32 %v5435, %v5887
        %v5889 = vpop.f32.mrb[0].mxu0
        %v5890 = vpop.f32.mrb[0].mxu0
        %v5891 = vadd.f32 %v5435, %v5890
        %v5892 = vpop.f32.mrb[0].mxu0
        %5893 = vmatprep.mubr.bf16.mxu0 0
        %5894 = vmatmul.mubr.bf16.gmra.mrb[0].mxu0 %v5540
        %v5895 = vpop.f32.mrb[0].mxu0
        %v5896 = vadd.f32 %v5435, %v5895
        %v5897 = vpop.f32.mrb[0].mxu0
        %v5898 = vpop.f32.mrb[0].mxu0
        %v5899 = vadd.f32 %v5435, %v5898
        %v5900 = vpop.f32.mrb[0].mxu0
        %5901 = vmatprep.mubr.bf16.mxu0 0
        %5902 = vmatmul.mubr.bf16.gmra.mrb[0].mxu0 %v5543
        %v5903 = vpop.f32.mrb[0].mxu0
        %v5904 = vadd.f32 %v5435, %v5903
        %v5905 = vpop.f32.mrb[0].mxu0
        %v5906 = vpop.f32.mrb[0].mxu0
        %v5907 = vadd.f32 %v5435, %v5906
        %v5908 = vpop.f32.mrb[0].mxu0
        %5909 = vmatprep.mubr.bf16.mxu0 0
        %5910 = vmatmul.mubr.bf16.gmra.mrb[0].mxu0 %v5546
        %v5911 = vpop.f32.mrb[0].mxu0
        %v5912 = vadd.f32 %v5435, %v5911
        %v5913 = vpop.f32.mrb[0].mxu0
        %v5914 = vpop.f32.mrb[0].mxu0
        %v5915 = vadd.f32 %v5435, %v5914
        %v5916 = vpop.f32.mrb[0].mxu0
        %5917 = vmatprep.mubr.bf16.mxu0 0
        %5918 = vmatmul.mubr.bf16.gmra.mrb[0].mxu0 %v5549
        %v5919 = vpop.f32.mrb[0].mxu0
        %v5920 = vadd.f32 %v5435, %v5919
        %v5921 = vpop.f32.mrb[0].mxu0
        %v5922 = vpop.f32.mrb[0].mxu0
        %v5923 = vadd.f32 %v5435, %v5922
        %v5924 = vpop.f32.mrb[0].mxu0
        %5925 = vmatprep.mubr.bf16.mxu0 0
        %5926 = vmatmul.mubr.bf16.gmra.mrb[0].mxu0 %v5552
        %v5927 = vpop.f32.mrb[0].mxu0
        %v5928 = vadd.f32 %v5435, %v5927
        %v5929 = vpop.f32.mrb[0].mxu0
        %v5930 = vpop.f32.mrb[0].mxu0
        %v5931 = vadd.f32 %v5435, %v5930
        %v5932 = vpop.f32.mrb[0].mxu0
        %5933 = vmatprep.mubr.bf16.mxu0 0
        %5934 = vmatmul.mubr.bf16.gmra.mrb[0].mxu0 %v5555
        %v5935 = vpop.f32.mrb[0].mxu0
        %v5936 = vadd.f32 %v5435, %v5935
        %v5937 = vpop.f32.mrb[0].mxu0
        %v5938 = vpop.f32.mrb[0].mxu0
        %v5939 = vadd.f32 %v5435, %v5938
        %v5940 = vpop.f32.mrb[0].mxu0
        %5941 = vmatprep.mubr.bf16.mxu0 0
        %5942 = vmatmul.mubr.bf16.gmra.mrb[0].mxu0 %v5558
        %v5943 = vpop.f32.mrb[0].mxu0
        %v5944 = vadd.f32 %v5435, %v5943
        %v5945 = vpop.f32.mrb[0].mxu0
        %v5946 = vpop.f32.mrb[0].mxu0
        %v5947 = vadd.f32 %v5435, %v5946
        %v5948 = vpop.f32.mrb[0].mxu0
        %5949 = vmatprep.mubr.bf16.mxu0 0
        %5950 = vmatmul.mubr.bf16.gmra.mrb[0].mxu0 %v5561
        %v5951 = vpop.f32.mrb[0].mxu0
        %v5952 = vadd.f32 %v5435, %v5951
        %v5953 = vpop.f32.mrb[0].mxu0
        %v5954 = vpop.f32.mrb[0].mxu0
        %v5955 = vadd.f32 %v5435, %v5954
        %v5956 = vpop.f32.mrb[0].mxu0
        %5957 = vmatprep.mubr.bf16.mxu0 0
        %5958 = vmatmul.mubr.bf16.gmra.mrb[0].mxu0 %v5564
        %v5959 = vpop.f32.mrb[0].mxu0
        %v5960 = vadd.f32 %v5435, %v5959
        %v5961 = vpop.f32.mrb[0].mxu0
        %v5962 = vpop.f32.mrb[0].mxu0
        %v5963 = vadd.f32 %v5435, %v5962
        %v5964 = vpop.f32.mrb[0].mxu0
        %5965 = vmatprep.mubr.bf16.mxu0 0
        %5966 = vmatmul.mubr.bf16.gmra.mrb[0].mxu0 %v5567
        %v5967 = vpop.f32.mrb[0].mxu0
        %v5968 = vadd.f32 %v5435, %v5967
        %v5969 = vpop.f32.mrb[0].mxu0
        %v5970 = vpop.f32.mrb[0].mxu0
        %v5971 = vadd.f32 %v5435, %v5970
        %v5972 = vpop.f32.mrb[0].mxu0
        %5973 = vmatprep.mubr.bf16.mxu0 0
        %5974 = vmatmul.mubr.bf16.gmra.mrb[0].mxu0 %v5570
        %v5975 = vpop.f32.mrb[0].mxu0
        %v5976 = vadd.f32 %v5435, %v5975
        %v5977 = vpop.f32.mrb[0].mxu0
        %v5978 = vpop.f32.mrb[0].mxu0
        %v5979 = vadd.f32 %v5435, %v5978
        %v5980 = vpop.f32.mrb[0].mxu0
        %5981 = vmatprep.mubr.bf16.mxu0 0
        %5982 = vmatmul.mubr.bf16.gmra.mrb[0].mxu0 %v5573
        %v5983 = vpop.f32.mrb[0].mxu0
        %v5984 = vadd.f32 %v5435, %v5983
        %v5985 = vpop.f32.mrb[0].mxu0
        %v5986 = vpop.f32.mrb[0].mxu0
        %v5987 = vadd.f32 %v5435, %v5986
        %v5988 = vpop.f32.mrb[0].mxu0
        %5989 = vmatprep.mubr.bf16.mxu0 0
        %5990 = vmatmul.mubr.bf16.gmra.mrb[0].mxu0 %v5576
        %v5991 = vpop.f32.mrb[0].mxu0
        %v5992 = vadd.f32 %v5435, %v5991
        %v5993 = vpop.f32.mrb[0].mxu0
        %v5994 = vpop.f32.mrb[0].mxu0
        %v5995 = vadd.f32 %v5435, %v5994
        %v5996 = vpop.f32.mrb[0].mxu0
        %5997 = vmatprep.mubr.bf16.mxu0 0
        %5998 = vmatmul.mubr.bf16.gmra.mrb[0].mxu0 %v5579
        %v5999 = vpop.f32.mrb[0].mxu0
        %v6000 = vadd.f32 %v5435, %v5999
        %v6001 = vpop.f32.mrb[0].mxu0
        %v6002 = vpop.f32.mrb[0].mxu0
        %v6003 = vadd.f32 %v5435, %v6002
        %v6004 = vpop.f32.mrb[0].mxu0
        %6005 = vmatprep.mubr.bf16.mxu0 0
        %6006 = vmatmul.mubr.bf16.gmra.mrb[0].mxu0 %v5582
        %v6007 = vpop.f32.mrb[0].mxu0
        %v6008 = vadd.f32 %v5435, %v6007
        %v6009 = vpop.f32.mrb[0].mxu0
        %v6010 = vpop.f32.mrb[0].mxu0
        %v6011 = vadd.f32 %v5435, %v6010
        %v6012 = vpop.f32.mrb[0].mxu0
        %6013 = vmatprep.mubr.bf16.mxu0 0
        %6014 = vmatmul.mubr.bf16.gmra.mrb[0].mxu0 %v5585
        %v6015 = vpop.f32.mrb[0].mxu0
        %v6016 = vadd.f32 %v5435, %v6015
        %v6017 = vpop.f32.mrb[0].mxu0
        %v6018 = vpop.f32.mrb[0].mxu0
        %v6019 = vadd.f32 %v5435, %v6018
        %v6020 = vpop.f32.mrb[0].mxu0
        %6021 = vmatprep.mubr.bf16.mxu0 0
        %6022 = vmatmul.mubr.bf16.gmra.mrb[0].mxu0 %v5588
        %v6023 = vpop.f32.mrb[0].mxu0
        %v6024 = vadd.f32 %v5435, %v6023
        %v6025 = vpop.f32.mrb[0].mxu0
        %v6026 = vpop.f32.mrb[0].mxu0
        %v6027 = vadd.f32 %v5435, %v6026
        %v6028 = vpop.f32.mrb[0].mxu0
        %6029 = vmatprep.mubr.bf16.mxu0 0
        %6030 = vmatmul.mubr.bf16.gmra.mrb[0].mxu0 %v5591
        %v6031 = vpop.f32.mrb[0].mxu0
        %v6032 = vadd.f32 %v5435, %v6031
        %v6033 = vpop.f32.mrb[0].mxu0
        %v6034 = vpop.f32.mrb[0].mxu0
        %v6035 = vadd.f32 %v5435, %v6034
        %v6036 = vpop.f32.mrb[0].mxu0
        %6037 = vmatprep.mubr.bf16.mxu0 0
        %6038 = vmatmul.mubr.bf16.gmra.mrb[0].mxu0 %v5594
        %v6039 = vpop.f32.mrb[0].mxu0
        %v6040 = vadd.f32 %v5435, %v6039
        %v6041 = vpop.f32.mrb[0].mxu0
        %v6042 = vpop.f32.mrb[0].mxu0
        %v6043 = vadd.f32 %v5435, %v6042
        %v6044 = vpop.f32.mrb[0].mxu0
        %6045 = vmatprep.mubr.bf16.mxu0 0
        %6046 = vmatmul.mubr.bf16.gmra.mrb[0].mxu0 %v5597
        %v6047 = vpop.f32.mrb[0].mxu0
        %v6048 = vadd.f32 %v5435, %v6047
        %v6049 = vpop.f32.mrb[0].mxu0
        %v6050 = vpop.f32.mrb[0].mxu0
        %v6051 = vadd.f32 %v5435, %v6050
        %v6052 = vpop.f32.mrb[0].mxu0
        %6053 = vmatprep.mubr.bf16.mxu0 0
        %6054 = vmatmul.mubr.bf16.gmra.mrb[0].mxu0 %v5600
        %v6055 = vpop.f32.mrb[0].mxu0
        %v6056 = vadd.f32 %v5435, %v6055
        %v6057 = vpop.f32.mrb[0].mxu0
        %v6058 = vpop.f32.mrb[0].mxu0
        %v6059 = vadd.f32 %v5435, %v6058
        %v6060 = vpop.f32.mrb[0].mxu0
        %6061 = vmatprep.mubr.bf16.mxu0 0
        %6062 = vmatmul.mubr.bf16.gmra.mrb[0].mxu0 %v5603
        %v6063 = vpop.f32.mrb[0].mxu0
        %v6064 = vadd.f32 %v5435, %v6063
        %v6065 = vpop.f32.mrb[0].mxu0
        %v6066 = vpop.f32.mrb[0].mxu0
        %v6067 = vadd.f32 %v5435, %v6066
        %v6068 = vpop.f32.mrb[0].mxu0
        %6069 = vmatprep.mubr.bf16.mxu0 0
        %6070 = vmatmul.mubr.bf16.gmra.mrb[0].mxu0 %v5606
        %v6071 = vpop.f32.mrb[0].mxu0
        %v6072 = vadd.f32 %v5435, %v6071
        %v6073 = vpop.f32.mrb[0].mxu0
        %v6074 = vpop.f32.mrb[0].mxu0
        %v6075 = vadd.f32 %v5435, %v6074
        %v6076 = vpop.f32.mrb[0].mxu0
        %6077 = vmatprep.mubr.bf16.mxu0 0
        %6078 = vmatmul.mubr.bf16.gmra.mrb[0].mxu0 %v5609
        %v6079 = vpop.f32.mrb[0].mxu0
        %v6080 = vadd.f32 %v5435, %v6079
        %v6081 = vpop.f32.mrb[0].mxu0
        %v6082 = vpop.f32.mrb[0].mxu0
        %v6083 = vadd.f32 %v5435, %v6082
        %v6084 = vpop.f32.mrb[0].mxu0
        %6085 = vmatprep.mubr.bf16.mxu0 0
        %6086 = vmatmul.mubr.bf16.gmra.mrb[0].mxu0 %v5612
        %v6087 = vpop.f32.mrb[0].mxu0
        %v6088 = vadd.f32 %v5435, %v6087
        %v6089 = vpop.f32.mrb[0].mxu0
        %v6090 = vpop.f32.mrb[0].mxu0
        %v6091 = vadd.f32 %v5435, %v6090
        %v6092 = vpop.f32.mrb[0].mxu0
        %6093 = vmatprep.mubr.bf16.mxu0 0
        %6094 = vmatmul.mubr.bf16.gmra.mrb[0].mxu0 %v5615
        %v6095 = vpop.f32.mrb[0].mxu0
        %v6096 = vadd.f32 %v5435, %v6095
        %v6097 = vpop.f32.mrb[0].mxu0
        %v6098 = vpop.f32.mrb[0].mxu0
        %v6099 = vadd.f32 %v5435, %v6098
        %v6100 = vpop.f32.mrb[0].mxu0
        %6101 = vmatprep.mubr.bf16.mxu0 0
        %6102 = vmatmul.mubr.bf16.gmra.mrb[0].mxu0 %v5618
        %v6103 = vpop.f32.mrb[0].mxu0
        %v6104 = vadd.f32 %v5435, %v6103
        %v6105 = vpop.f32.mrb[0].mxu0
        %v6106 = vpop.f32.mrb[0].mxu0
        %v6107 = vadd.f32 %v5435, %v6106
        %v6108 = vpop.f32.mrb[0].mxu0
        %6109 = vmatprep.mubr.bf16.mxu0 0
        %6110 = vmatmul.mubr.bf16.gmra.mrb[0].mxu0 %v5621
        %v6111 = vpop.f32.mrb[0].mxu0
        %v6112 = vadd.f32 %v5435, %v6111
        %v6113 = vpop.f32.mrb[0].mxu0
        %v6114 = vpop.f32.mrb[0].mxu0
        %v6115 = vadd.f32 %v5435, %v6114
        %v6116 = vpop.f32.mrb[0].mxu0
        %6117 = vmatprep.mubr.bf16.mxu0 0
        %6118 = vmatmul.mubr.bf16.gmra.mrb[0].mxu0 %v5624
        %v6119 = vpop.f32.mrb[0].mxu0
        %v6120 = vadd.f32 %v5435, %v6119
        %v6121 = vpop.f32.mrb[0].mxu0
        %v6122 = vpop.f32.mrb[0].mxu0
        %v6123 = vadd.f32 %v5435, %v6122
        %v6124 = vpop.f32.mrb[0].mxu0
        %6125 = vmatprep.mubr.bf16.mxu0 0
        %6126 = vmatmul.mubr.bf16.gmra.mrb[0].mxu0 %v5627
        %v6127 = vpop.f32.mrb[0].mxu0
        %v6128 = vadd.f32 %v5435, %v6127
        %v6129 = vpop.f32.mrb[0].mxu0
        %v6130 = vpop.f32.mrb[0].mxu0
        %v6131 = vadd.f32 %v5435, %v6130
        %v6132 = vpop.f32.mrb[0].mxu0
        %6133 = vmatprep.mubr.bf16.mxu0 0
        %6134 = vmatmul.mubr.bf16.gmra.mrb[0].mxu0 %v5630
        %v6135 = vpop.f32.mrb[0].mxu0
        %v6136 = vadd.f32 %v5435, %v6135
        %v6137 = vpop.f32.mrb[0].mxu0
        %v6138 = vpop.f32.mrb[0].mxu0
        %v6139 = vadd.f32 %v5435, %v6138
        %v6140 = vpop.f32.mrb[0].mxu0
        %6141 = vmatprep.mubr.bf16.mxu0 0
        %6142 = vmatmul.mubr.bf16.gmra.mrb[0].mxu0 %v5633
        %v6143 = vpop.f32.mrb[0].mxu0
        %v6144 = vadd.f32 %v5435, %v6143
        %v6145 = vpop.f32.mrb[0].mxu0
        %v6146 = vpop.f32.mrb[0].mxu0
        %v6147 = vadd.f32 %v5435, %v6146
        %v6148 = vpop.f32.mrb[0].mxu0
        %6149 = vmatprep.mubr.bf16.mxu0 0
        %6150 = vmatmul.mubr.bf16.gmra.mrb[0].mxu0 %v5636
        %v6151 = vpop.f32.mrb[0].mxu0
        %v6152 = vadd.f32 %v5435, %v6151
        %v6153 = vpop.f32.mrb[0].mxu0
        %v6154 = vpop.f32.mrb[0].mxu0
        %v6155 = vadd.f32 %v5435, %v6154
        %v6156 = vpop.f32.mrb[0].mxu0
        %6157 = vmatprep.mubr.bf16.mxu0 0
        %6158 = vmatmul.mubr.bf16.gmra.mrb[0].mxu0 %v5639
        %v6159 = vpop.f32.mrb[0].mxu0
        %v6160 = vadd.f32 %v5435, %v6159
        %v6161 = vpop.f32.mrb[0].mxu0
        %v6162 = vpop.f32.mrb[0].mxu0
        %v6163 = vadd.f32 %v5435, %v6162
        %v6164 = vpop.f32.mrb[0].mxu0
        %6165 = vmatprep.mubr.bf16.mxu0 0
        %6166 = vmatmul.mubr.bf16.gmra.mrb[0].mxu0 %v5642
        %v6167 = vpop.f32.mrb[0].mxu0
        %v6168 = vadd.f32 %v5435, %v6167
        %v6169 = vpop.f32.mrb[0].mxu0
        %v6170 = vpop.f32.mrb[0].mxu0
        %v6171 = vadd.f32 %v5435, %v6170
        %v6172 = vpop.f32.mrb[0].mxu0
        %6173 = vmatprep.mubr.bf16.mxu0 0
        %6174 = vmatmul.mubr.bf16.gmra.mrb[0].mxu0 %v5645
        %v6175 = vpop.f32.mrb[0].mxu0
        %v6176 = vadd.f32 %v5435, %v6175
        %v6177 = vpop.f32.mrb[0].mxu0
        %v6178 = vpop.f32.mrb[0].mxu0
        %v6179 = vadd.f32 %v5435, %v6178
        %v6180 = vpop.f32.mrb[0].mxu0
        %6181 = vmatprep.mubr.bf16.mxu0 0
        %6182 = vmatmul.mubr.bf16.gmra.mrb[0].mxu0 %v5648
        %v6183 = vpop.f32.mrb[0].mxu0
        %v6184 = vadd.f32 %v5435, %v6183
        %v6185 = vpop.f32.mrb[0].mxu0
        %v6186 = vpop.f32.mrb[0].mxu0
        %v6187 = vadd.f32 %v5435, %v6186
        %v6188 = vpop.f32.mrb[0].mxu0
        %6189 = vmatprep.mubr.bf16.mxu0 0
        %6190 = vmatmul.mubr.bf16.gmra.mrb[0].mxu0 %v5651
        %v6191 = vpop.f32.mrb[0].mxu0
        %v6192 = vadd.f32 %v5435, %v6191
        %v6193 = vpop.f32.mrb[0].mxu0
        %v6194 = vpop.f32.mrb[0].mxu0
        %v6195 = vadd.f32 %v5435, %v6194
        %v6196 = vpop.f32.mrb[0].mxu0
        %6197 = vdwg.mxu0
        %v6198 = vmax.f32 %v5688, 0.0
        %v6199 = vmax.f32 %v5691, 0.0
        %v6200 = vmax.f32 %v5696, 0.0
        %v6201 = vmax.f32 %v5699, 0.0
        %v6202 = vmax.f32 %v5704, 0.0
        %v6203 = vmax.f32 %v5707, 0.0
        %v6204 = vmax.f32 %v5712, 0.0
        %v6205 = vmax.f32 %v5715, 0.0
        %v6206 = vmax.f32 %v5720, 0.0
        %v6207 = vmax.f32 %v5723, 0.0
        %v6208 = vmax.f32 %v5728, 0.0
        %v6209 = vmax.f32 %v5731, 0.0
        %v6210 = vmax.f32 %v5736, 0.0
        %v6211 = vmax.f32 %v5739, 0.0
        %v6212 = vmax.f32 %v5744, 0.0
        %v6213 = vmax.f32 %v5747, 0.0
        %v6214 = vmax.f32 %v5752, 0.0
        %v6215 = vmax.f32 %v5755, 0.0
        %v6216 = vmax.f32 %v5760, 0.0
        %v6217 = vmax.f32 %v5763, 0.0
        %v6218 = vmax.f32 %v5768, 0.0
        %v6219 = vmax.f32 %v5771, 0.0
        %v6220 = vmax.f32 %v5776, 0.0
        %v6221 = vmax.f32 %v5779, 0.0
        %v6222 = vmax.f32 %v5784, 0.0
        %v6223 = vmax.f32 %v5787, 0.0
        %v6224 = vmax.f32 %v5792, 0.0
        %v6225 = vmax.f32 %v5795, 0.0
        %v6226 = vmax.f32 %v5800, 0.0
        %v6227 = vmax.f32 %v5803, 0.0
        %v6228 = vmax.f32 %v5808, 0.0
        %v6229 = vmax.f32 %v5811, 0.0
        %v6230 = vmax.f32 %v5816, 0.0
        %v6231 = vmax.f32 %v5819, 0.0
        %v6232 = vmax.f32 %v5824, 0.0
        %v6233 = vmax.f32 %v5827, 0.0
        %v6234 = vmax.f32 %v5832, 0.0
        %v6235 = vmax.f32 %v5835, 0.0
        %v6236 = vmax.f32 %v5840, 0.0
        %v6237 = vmax.f32 %v5843, 0.0
        %v6238 = vmax.f32 %v5848, 0.0
        %v6239 = vmax.f32 %v5851, 0.0
        %v6240 = vmax.f32 %v5856, 0.0
        %v6241 = vmax.f32 %v5859, 0.0
        %v6242 = vmax.f32 %v5864, 0.0
        %v6243 = vmax.f32 %v5867, 0.0
        %v6244 = vmax.f32 %v5872, 0.0
        %v6245 = vmax.f32 %v5875, 0.0
        %v6246 = vmax.f32 %v5880, 0.0
        %v6247 = vmax.f32 %v5883, 0.0
        %v6248 = vmax.f32 %v5888, 0.0
        %v6249 = vmax.f32 %v5891, 0.0
        %v6250 = vmax.f32 %v5896, 0.0
        %v6251 = vmax.f32 %v5899, 0.0
        %v6252 = vmax.f32 %v5904, 0.0
        %v6253 = vmax.f32 %v5907, 0.0
        %v6254 = vmax.f32 %v5912, 0.0
        %v6255 = vmax.f32 %v5915, 0.0
        %v6256 = vmax.f32 %v5920, 0.0
        %v6257 = vmax.f32 %v5923, 0.0
        %v6258 = vmax.f32 %v5928, 0.0
        %v6259 = vmax.f32 %v5931, 0.0
        %v6260 = vmax.f32 %v5936, 0.0
        %v6261 = vmax.f32 %v5939, 0.0
        %v6262 = vmax.f32 %v5944, 0.0
        %v6263 = vmax.f32 %v5947, 0.0
        %v6264 = vmax.f32 %v5952, 0.0
        %v6265 = vmax.f32 %v5955, 0.0
        %v6266 = vmax.f32 %v5960, 0.0
        %v6267 = vmax.f32 %v5963, 0.0
        %v6268 = vmax.f32 %v5968, 0.0
        %v6269 = vmax.f32 %v5971, 0.0
        %v6270 = vmax.f32 %v5976, 0.0
        %v6271 = vmax.f32 %v5979, 0.0
        %v6272 = vmax.f32 %v5984, 0.0
        %v6273 = vmax.f32 %v5987, 0.0
        %v6274 = vmax.f32 %v5992, 0.0
        %v6275 = vmax.f32 %v5995, 0.0
        %v6276 = vmax.f32 %v6000, 0.0
        %v6277 = vmax.f32 %v6003, 0.0
        %v6278 = vmax.f32 %v6008, 0.0
        %v6279 = vmax.f32 %v6011, 0.0
        %v6280 = vmax.f32 %v6016, 0.0
        %v6281 = vmax.f32 %v6019, 0.0
        %v6282 = vmax.f32 %v6024, 0.0
        %v6283 = vmax.f32 %v6027, 0.0
        %v6284 = vmax.f32 %v6032, 0.0
        %v6285 = vmax.f32 %v6035, 0.0
        %v6286 = vmax.f32 %v6040, 0.0
        %v6287 = vmax.f32 %v6043, 0.0
        %v6288 = vmax.f32 %v6048, 0.0
        %v6289 = vmax.f32 %v6051, 0.0
        %v6290 = vmax.f32 %v6056, 0.0
        %v6291 = vmax.f32 %v6059, 0.0
        %v6292 = vmax.f32 %v6064, 0.0
        %v6293 = vmax.f32 %v6067, 0.0
        %v6294 = vmax.f32 %v6072, 0.0
        %v6295 = vmax.f32 %v6075, 0.0
        %v6296 = vmax.f32 %v6080, 0.0
        %v6297 = vmax.f32 %v6083, 0.0
        %v6298 = vmax.f32 %v6088, 0.0
        %v6299 = vmax.f32 %v6091, 0.0
        %v6300 = vmax.f32 %v6096, 0.0
        %v6301 = vmax.f32 %v6099, 0.0
        %v6302 = vmax.f32 %v6104, 0.0
        %v6303 = vmax.f32 %v6107, 0.0
        %v6304 = vmax.f32 %v6112, 0.0
        %v6305 = vmax.f32 %v6115, 0.0
        %v6306 = vmax.f32 %v6120, 0.0
        %v6307 = vmax.f32 %v6123, 0.0
        %v6308 = vmax.f32 %v6128, 0.0
        %v6309 = vmax.f32 %v6131, 0.0
        %v6310 = vmax.f32 %v6136, 0.0
        %v6311 = vmax.f32 %v6139, 0.0
        %v6312 = vmax.f32 %v6144, 0.0
        %v6313 = vmax.f32 %v6147, 0.0
        %v6314 = vmax.f32 %v6152, 0.0
        %v6315 = vmax.f32 %v6155, 0.0
        %v6316 = vmax.f32 %v6160, 0.0
        %v6317 = vmax.f32 %v6163, 0.0
        %v6318 = vmax.f32 %v6168, 0.0
        %v6319 = vmax.f32 %v6171, 0.0
        %v6320 = vmax.f32 %v6176, 0.0
        %v6321 = vmax.f32 %v6179, 0.0
        %v6322 = vmax.f32 %v6184, 0.0
        %v6323 = vmax.f32 %v6187, 0.0
        %v6324 = vmax.f32 %v6192, 0.0
        %v6325 = vmax.f32 %v6195, 0.0
        %v6326 = vpack.c.bf16 %v6199, %v6198
        %v6327 = vpack.c.bf16 %v6201, %v6200
        %v6328 = vpack.c.bf16 %v6203, %v6202
        %v6329 = vpack.c.bf16 %v6205, %v6204
        %v6330 = vpack.c.bf16 %v6207, %v6206
        %v6331 = vpack.c.bf16 %v6209, %v6208
        %v6332 = vpack.c.bf16 %v6211, %v6210
        %v6333 = vpack.c.bf16 %v6213, %v6212
        %v6334 = vpack.c.bf16 %v6215, %v6214
        %v6335 = vpack.c.bf16 %v6217, %v6216
        %v6336 = vpack.c.bf16 %v6219, %v6218
        %v6337 = vpack.c.bf16 %v6221, %v6220
        %v6338 = vpack.c.bf16 %v6223, %v6222
        %v6339 = vpack.c.bf16 %v6225, %v6224
        %v6340 = vpack.c.bf16 %v6227, %v6226
        %v6341 = vpack.c.bf16 %v6229, %v6228
        %v6342 = vpack.c.bf16 %v6231, %v6230
        %v6343 = vpack.c.bf16 %v6233, %v6232
        %v6344 = vpack.c.bf16 %v6235, %v6234
        %v6345 = vpack.c.bf16 %v6237, %v6236
        %v6346 = vpack.c.bf16 %v6239, %v6238
        %v6347 = vpack.c.bf16 %v6241, %v6240
        %v6348 = vpack.c.bf16 %v6243, %v6242
        %v6349 = vpack.c.bf16 %v6245, %v6244
        %v6350 = vpack.c.bf16 %v6247, %v6246
        %v6351 = vpack.c.bf16 %v6249, %v6248
        %v6352 = vpack.c.bf16 %v6251, %v6250
        %v6353 = vpack.c.bf16 %v6253, %v6252
        %v6354 = vpack.c.bf16 %v6255, %v6254
        %v6355 = vpack.c.bf16 %v6257, %v6256
        %v6356 = vpack.c.bf16 %v6259, %v6258
        %v6357 = vpack.c.bf16 %v6261, %v6260
        %v6358 = vpack.c.bf16 %v6263, %v6262
        %v6359 = vpack.c.bf16 %v6265, %v6264
        %v6360 = vpack.c.bf16 %v6267, %v6266
        %v6361 = vpack.c.bf16 %v6269, %v6268
        %v6362 = vpack.c.bf16 %v6271, %v6270
        %v6363 = vpack.c.bf16 %v6273, %v6272
        %v6364 = vpack.c.bf16 %v6275, %v6274
        %v6365 = vpack.c.bf16 %v6277, %v6276
        %v6366 = vpack.c.bf16 %v6279, %v6278
        %v6367 = vpack.c.bf16 %v6281, %v6280
        %v6368 = vpack.c.bf16 %v6283, %v6282
        %v6369 = vpack.c.bf16 %v6285, %v6284
        %v6370 = vpack.c.bf16 %v6287, %v6286
        %v6371 = vpack.c.bf16 %v6289, %v6288
        %v6372 = vpack.c.bf16 %v6291, %v6290
        %v6373 = vpack.c.bf16 %v6293, %v6292
        %v6374 = vpack.c.bf16 %v6295, %v6294
        %v6375 = vpack.c.bf16 %v6297, %v6296
        %v6376 = vpack.c.bf16 %v6299, %v6298
        %v6377 = vpack.c.bf16 %v6301, %v6300
        %v6378 = vpack.c.bf16 %v6303, %v6302
        %v6379 = vpack.c.bf16 %v6305, %v6304
        %v6380 = vpack.c.bf16 %v6307, %v6306
        %v6381 = vpack.c.bf16 %v6309, %v6308
        %v6382 = vpack.c.bf16 %v6311, %v6310
        %v6383 = vpack.c.bf16 %v6313, %v6312
        %v6384 = vpack.c.bf16 %v6315, %v6314
        %v6385 = vpack.c.bf16 %v6317, %v6316
        %v6386 = vpack.c.bf16 %v6319, %v6318
        %v6387 = vpack.c.bf16 %v6321, %v6320
        %v6388 = vpack.c.bf16 %v6323, %v6322
        %v6389 = vpack.c.bf16 %v6325, %v6324
        %v6390 = vld [vmem:[%s8] sm:$0xff]
        %v6391 = vld [vmem:[%s8 + $0x8] sm:$0xf]
        %v6392 = vld [vmem:[%s8 + $0xc] sm:$0xff]
        %v6393 = vld [vmem:[%s8 + $0x14] sm:$0xf]
        %v6394 = vld [vmem:[%s8 + $0x18] sm:$0xff]
        %v6395 = vld [vmem:[%s8 + $0x20] sm:$0xf]
        %v6396 = vld [vmem:[%s8 + $0x24] sm:$0xff]
        %v6397 = vld [vmem:[%s8 + $0x2c] sm:$0xf]
        %v6398 = vld [vmem:[%s8 + $0x30] sm:$0xff]
        %v6399 = vld [vmem:[%s8 + $0x38] sm:$0xf]
        %v6400 = vld [vmem:[%s8 + $0x3c] sm:$0xff]
        %v6401 = vld [vmem:[%s8 + $0x44] sm:$0xf]
        %v6402 = vld [vmem:[%s8 + $0x48] sm:$0xff]
        %v6403 = vld [vmem:[%s8 + $0x50] sm:$0xf]
        %v6404 = vld [vmem:[%s8 + $0x54] sm:$0xff]
        %v6405 = vld [vmem:[%s8 + $0x5c] sm:$0xf]
        %v6406 = vld [vmem:[%s8 + $0x60] sm:$0xff]
        %v6407 = vld [vmem:[%s8 + $0x68] sm:$0xf]
        %v6408 = vld [vmem:[%s8 + $0x6c] sm:$0xff]
        %v6409 = vld [vmem:[%s8 + $0x74] sm:$0xf]
        %v6410 = vld [vmem:[%s8 + $0x78] sm:$0xff]
        %v6411 = vld [vmem:[%s8 + $0x80] sm:$0xf]
        %v6412 = vld [vmem:[%s8 + $0x84] sm:$0xff]
        %v6413 = vld [vmem:[%s8 + $0x8c] sm:$0xf]
        %v6414 = vld [vmem:[%s8 + $0x90] sm:$0xff]
        %v6415 = vld [vmem:[%s8 + $0x98] sm:$0xf]
        %v6416 = vld [vmem:[%s8 + $0x9c] sm:$0xff]
        %v6417 = vld [vmem:[%s8 + $0xa4] sm:$0xf]
        %v6418 = vld [vmem:[%s8 + $0xa8] sm:$0xff]
        %v6419 = vld [vmem:[%s8 + $0xb0] sm:$0xf]
        %v6420 = vld [vmem:[%s8 + $0xb4] sm:$0xff]
        %v6421 = vld [vmem:[%s8 + $0xbc] sm:$0xf]
        %v6422 = vld [vmem:[%s9] sm:$0x7]
        %v6424 = vlaneseq
        %v6425 = vshrl.u32 %v6424, 7
        %v6426 = vsub.s32 0, %v6425
        %v6427 = vrot.slane %v6422, %v6426
        %v6428 = vlaneseq
        %v6429 = vshrl.u32 %v6428, 7
        %v6430 = vsub.s32 1, %v6429
        %v6431 = vrot.slane %v6422, %v6430
        %v6432 = vlaneseq
        %v6433 = vshrl.u32 %v6432, 7
        %v6434 = vsub.s32 2, %v6433
        %v6435 = vrot.slane %v6422, %v6434
        %v6471 = vunpack.c.l.b16 %v6390
        %v6472 = vunpack.c.h.b16 %v6390
        %v6473 = vunpack.c.l.b16 %v6391
        %v6474 = vunpack.c.l.b16 %v6392
        %v6475 = vunpack.c.h.b16 %v6392
        %v6476 = vunpack.c.l.b16 %v6393
        %v6477 = vunpack.c.l.b16 %v6394
        %v6478 = vunpack.c.h.b16 %v6394
        %v6479 = vunpack.c.l.b16 %v6395
        %v6480 = vunpack.c.l.b16 %v6396
        %v6481 = vunpack.c.h.b16 %v6396
        %v6482 = vunpack.c.l.b16 %v6397
        %v6483 = vunpack.c.l.b16 %v6398
        %v6484 = vunpack.c.h.b16 %v6398
        %v6485 = vunpack.c.l.b16 %v6399
        %v6486 = vunpack.c.l.b16 %v6400
        %v6487 = vunpack.c.h.b16 %v6400
        %v6488 = vunpack.c.l.b16 %v6401
        %v6489 = vunpack.c.l.b16 %v6402
        %v6490 = vunpack.c.h.b16 %v6402
        %v6491 = vunpack.c.l.b16 %v6403
        %v6492 = vunpack.c.l.b16 %v6404
        %v6493 = vunpack.c.h.b16 %v6404
        %v6494 = vunpack.c.l.b16 %v6405
        %v6495 = vunpack.c.l.b16 %v6406
        %v6496 = vunpack.c.h.b16 %v6406
        %v6497 = vunpack.c.l.b16 %v6407
        %v6498 = vunpack.c.l.b16 %v6408
        %v6499 = vunpack.c.h.b16 %v6408
        %v6500 = vunpack.c.l.b16 %v6409
        %v6501 = vunpack.c.l.b16 %v6410
        %v6502 = vunpack.c.h.b16 %v6410
        %v6503 = vunpack.c.l.b16 %v6411
        %v6504 = vunpack.c.l.b16 %v6412
        %v6505 = vunpack.c.h.b16 %v6412
        %v6506 = vunpack.c.l.b16 %v6413
        %v6507 = vunpack.c.l.b16 %v6414
        %v6508 = vunpack.c.h.b16 %v6414
        %v6509 = vunpack.c.l.b16 %v6415
        %v6510 = vunpack.c.l.b16 %v6416
        %v6511 = vunpack.c.h.b16 %v6416
        %v6512 = vunpack.c.l.b16 %v6417
        %v6513 = vunpack.c.l.b16 %v6418
        %v6514 = vunpack.c.h.b16 %v6418
        %v6515 = vunpack.c.l.b16 %v6419
        %v6516 = vunpack.c.l.b16 %v6420
        %v6517 = vunpack.c.h.b16 %v6420
        %v6518 = vunpack.c.l.b16 %v6421
        %v6519 = vpack.c.b16 %v6474, %v6471
        %v6520 = vpack.c.b16 %v6475, %v6472
        %v6521 = vpack.c.b16 %v6476, %v6473
        %v6522 = vpack.c.b16 %v6480, %v6477
        %v6523 = vpack.c.b16 %v6481, %v6478
        %v6524 = vpack.c.b16 %v6482, %v6479
        %v6525 = vpack.c.b16 %v6486, %v6483
        %v6526 = vpack.c.b16 %v6487, %v6484
        %v6527 = vpack.c.b16 %v6488, %v6485
        %v6528 = vpack.c.b16 %v6492, %v6489
        %v6529 = vpack.c.b16 %v6493, %v6490
        %v6530 = vpack.c.b16 %v6494, %v6491
        %v6531 = vpack.c.b16 %v6498, %v6495
        %v6532 = vpack.c.b16 %v6499, %v6496
        %v6533 = vpack.c.b16 %v6500, %v6497
        %v6534 = vpack.c.b16 %v6504, %v6501
        %v6535 = vpack.c.b16 %v6505, %v6502
        %v6536 = vpack.c.b16 %v6506, %v6503
        %v6537 = vpack.c.b16 %v6510, %v6507
        %v6538 = vpack.c.b16 %v6511, %v6508
        %v6539 = vpack.c.b16 %v6512, %v6509
        %v6540 = vpack.c.b16 %v6516, %v6513
        %v6541 = vpack.c.b16 %v6517, %v6514
        %v6542 = vpack.c.b16 %v6518, %v6515
        %6567 = vmatprep.subr.bf16.mxu0 %v6520
        %6568 = vmatpush1.bf16.msra.mxu0 %v6519
        %6569 = vmatprep.subr.bf16.mxu0 %v6523
        %6570 = vmatpush1.bf16.msra.mxu0 %v6522
        %6571 = vmatprep.subr.bf16.mxu0 %v6526
        %6572 = vmatpush1.bf16.msra.mxu0 %v6525
        %6573 = vmatprep.subr.bf16.mxu0 %v6529
        %6574 = vmatpush1.bf16.msra.mxu0 %v6528
        %6575 = vmatprep.subr.bf16.mxu0 %v6532
        %6576 = vmatpush1.bf16.msra.mxu0 %v6531
        %6577 = vmatprep.subr.bf16.mxu0 %v6535
        %6578 = vmatpush1.bf16.msra.mxu0 %v6534
        %6579 = vmatprep.subr.bf16.mxu0 %v6538
        %6580 = vmatpush1.bf16.msra.mxu0 %v6537
        %6581 = vmatprep.subr.bf16.mxu0 %v6541
        %6582 = vmatpush1.bf16.msra.mxu0 %v6540
        %6583 = vmatprep.subr.bf16.mxu0 0
        %6584 = vmatpush1.bf16.msra.mxu0 0
        %6585 = vmatprep.subr.bf16.mxu0 0
        %6586 = vmatpush1.bf16.msra.mxu0 0
        %6587 = vmatprep.subr.bf16.mxu0 0
        %6588 = vmatpush1.bf16.msra.mxu0 0
        %6589 = vmatprep.subr.bf16.mxu0 0
        %6590 = vmatpush1.bf16.msra.mxu0 0
        %6591 = vmatprep.subr.bf16.mxu0 0
        %6592 = vmatpush1.bf16.msra.mxu0 0
        %6593 = vmatprep.subr.bf16.mxu0 0
        %6594 = vmatpush1.bf16.msra.mxu0 0
        %6595 = vmatprep.subr.bf16.mxu0 0
        %6596 = vmatpush1.bf16.msra.mxu0 0
        %6597 = vmatprep.subr.bf16.mxu0 0
        %6598 = vmatpush1.bf16.msra.mxu0 0
        %6599 = vmatprep.mubr.bf16.mxu0 0
        %6600 = vmatmul.mubr.bf16.gmra.mrb[0].mxu0 %v6326
        %v6601 = vpop.f32.mrb[0].mxu0
        %v6602 = vadd.f32 %v6427, %v6601
        %v6603 = vpop.f32.mrb[0].mxu0
        %v6604 = vadd.f32 %v6431, %v6603
        %v6605 = vpop.f32.mrb[0].mxu0
        %v6606 = vadd.f32 %v6427, %v6605
        %v6607 = vpop.f32.mrb[0].mxu0
        %v6608 = vadd.f32 %v6431, %v6607
        %6609 = vmatprep.mubr.bf16.mxu0 0
        %6610 = vmatmul.mubr.bf16.gmra.mrb[0].mxu0 %v6327
        %v6611 = vpop.f32.mrb[0].mxu0
        %v6612 = vadd.f32 %v6427, %v6611
        %v6613 = vpop.f32.mrb[0].mxu0
        %v6614 = vadd.f32 %v6431, %v6613
        %v6615 = vpop.f32.mrb[0].mxu0
        %v6616 = vadd.f32 %v6427, %v6615
        %v6617 = vpop.f32.mrb[0].mxu0
        %v6618 = vadd.f32 %v6431, %v6617
        %6619 = vmatprep.mubr.bf16.mxu0 0
        %6620 = vmatmul.mubr.bf16.gmra.mrb[0].mxu0 %v6328
        %v6621 = vpop.f32.mrb[0].mxu0
        %v6622 = vadd.f32 %v6427, %v6621
        %v6623 = vpop.f32.mrb[0].mxu0
        %v6624 = vadd.f32 %v6431, %v6623
        %v6625 = vpop.f32.mrb[0].mxu0
        %v6626 = vadd.f32 %v6427, %v6625
        %v6627 = vpop.f32.mrb[0].mxu0
        %v6628 = vadd.f32 %v6431, %v6627
        %6629 = vmatprep.mubr.bf16.mxu0 0
        %6630 = vmatmul.mubr.bf16.gmra.mrb[0].mxu0 %v6329
        %v6631 = vpop.f32.mrb[0].mxu0
        %v6632 = vadd.f32 %v6427, %v6631
        %v6633 = vpop.f32.mrb[0].mxu0
        %v6634 = vadd.f32 %v6431, %v6633
        %v6635 = vpop.f32.mrb[0].mxu0
        %v6636 = vadd.f32 %v6427, %v6635
        %v6637 = vpop.f32.mrb[0].mxu0
        %v6638 = vadd.f32 %v6431, %v6637
        %6639 = vmatprep.mubr.bf16.mxu0 0
        %6640 = vmatmul.mubr.bf16.gmra.mrb[0].mxu0 %v6330
        %v6641 = vpop.f32.mrb[0].mxu0
        %v6642 = vadd.f32 %v6427, %v6641
        %v6643 = vpop.f32.mrb[0].mxu0
        %v6644 = vadd.f32 %v6431, %v6643
        %v6645 = vpop.f32.mrb[0].mxu0
        %v6646 = vadd.f32 %v6427, %v6645
        %v6647 = vpop.f32.mrb[0].mxu0
        %v6648 = vadd.f32 %v6431, %v6647
        %6649 = vmatprep.mubr.bf16.mxu0 0
        %6650 = vmatmul.mubr.bf16.gmra.mrb[0].mxu0 %v6331
        %v6651 = vpop.f32.mrb[0].mxu0
        %v6652 = vadd.f32 %v6427, %v6651
        %v6653 = vpop.f32.mrb[0].mxu0
        %v6654 = vadd.f32 %v6431, %v6653
        %v6655 = vpop.f32.mrb[0].mxu0
        %v6656 = vadd.f32 %v6427, %v6655
        %v6657 = vpop.f32.mrb[0].mxu0
        %v6658 = vadd.f32 %v6431, %v6657
        %6659 = vmatprep.mubr.bf16.mxu0 0
        %6660 = vmatmul.mubr.bf16.gmra.mrb[0].mxu0 %v6332
        %v6661 = vpop.f32.mrb[0].mxu0
        %v6662 = vadd.f32 %v6427, %v6661
        %v6663 = vpop.f32.mrb[0].mxu0
        %v6664 = vadd.f32 %v6431, %v6663
        %v6665 = vpop.f32.mrb[0].mxu0
        %v6666 = vadd.f32 %v6427, %v6665
        %v6667 = vpop.f32.mrb[0].mxu0
        %v6668 = vadd.f32 %v6431, %v6667
        %6669 = vmatprep.mubr.bf16.mxu0 0
        %6670 = vmatmul.mubr.bf16.gmra.mrb[0].mxu0 %v6333
        %v6671 = vpop.f32.mrb[0].mxu0
        %v6672 = vadd.f32 %v6427, %v6671
        %v6673 = vpop.f32.mrb[0].mxu0
        %v6674 = vadd.f32 %v6431, %v6673
        %v6675 = vpop.f32.mrb[0].mxu0
        %v6676 = vadd.f32 %v6427, %v6675
        %v6677 = vpop.f32.mrb[0].mxu0
        %v6678 = vadd.f32 %v6431, %v6677
        %6679 = vmatprep.mubr.bf16.mxu0 0
        %6680 = vmatmul.mubr.bf16.gmra.mrb[0].mxu0 %v6334
        %v6681 = vpop.f32.mrb[0].mxu0
        %v6682 = vadd.f32 %v6427, %v6681
        %v6683 = vpop.f32.mrb[0].mxu0
        %v6684 = vadd.f32 %v6431, %v6683
        %v6685 = vpop.f32.mrb[0].mxu0
        %v6686 = vadd.f32 %v6427, %v6685
        %v6687 = vpop.f32.mrb[0].mxu0
        %v6688 = vadd.f32 %v6431, %v6687
        %6689 = vmatprep.mubr.bf16.mxu0 0
        %6690 = vmatmul.mubr.bf16.gmra.mrb[0].mxu0 %v6335
        %v6691 = vpop.f32.mrb[0].mxu0
        %v6692 = vadd.f32 %v6427, %v6691
        %v6693 = vpop.f32.mrb[0].mxu0
        %v6694 = vadd.f32 %v6431, %v6693
        %v6695 = vpop.f32.mrb[0].mxu0
        %v6696 = vadd.f32 %v6427, %v6695
        %v6697 = vpop.f32.mrb[0].mxu0
        %v6698 = vadd.f32 %v6431, %v6697
        %6699 = vmatprep.mubr.bf16.mxu0 0
        %6700 = vmatmul.mubr.bf16.gmra.mrb[0].mxu0 %v6336
        %v6701 = vpop.f32.mrb[0].mxu0
        %v6702 = vadd.f32 %v6427, %v6701
        %v6703 = vpop.f32.mrb[0].mxu0
        %v6704 = vadd.f32 %v6431, %v6703
        %v6705 = vpop.f32.mrb[0].mxu0
        %v6706 = vadd.f32 %v6427, %v6705
        %v6707 = vpop.f32.mrb[0].mxu0
        %v6708 = vadd.f32 %v6431, %v6707
        %6709 = vmatprep.mubr.bf16.mxu0 0
        %6710 = vmatmul.mubr.bf16.gmra.mrb[0].mxu0 %v6337
        %v6711 = vpop.f32.mrb[0].mxu0
        %v6712 = vadd.f32 %v6427, %v6711
        %v6713 = vpop.f32.mrb[0].mxu0
        %v6714 = vadd.f32 %v6431, %v6713
        %v6715 = vpop.f32.mrb[0].mxu0
        %v6716 = vadd.f32 %v6427, %v6715
        %v6717 = vpop.f32.mrb[0].mxu0
        %v6718 = vadd.f32 %v6431, %v6717
        %6719 = vmatprep.mubr.bf16.mxu0 0
        %6720 = vmatmul.mubr.bf16.gmra.mrb[0].mxu0 %v6338
        %v6721 = vpop.f32.mrb[0].mxu0
        %v6722 = vadd.f32 %v6427, %v6721
        %v6723 = vpop.f32.mrb[0].mxu0
        %v6724 = vadd.f32 %v6431, %v6723
        %v6725 = vpop.f32.mrb[0].mxu0
        %v6726 = vadd.f32 %v6427, %v6725
        %v6727 = vpop.f32.mrb[0].mxu0
        %v6728 = vadd.f32 %v6431, %v6727
        %6729 = vmatprep.mubr.bf16.mxu0 0
        %6730 = vmatmul.mubr.bf16.gmra.mrb[0].mxu0 %v6339
        %v6731 = vpop.f32.mrb[0].mxu0
        %v6732 = vadd.f32 %v6427, %v6731
        %v6733 = vpop.f32.mrb[0].mxu0
        %v6734 = vadd.f32 %v6431, %v6733
        %v6735 = vpop.f32.mrb[0].mxu0
        %v6736 = vadd.f32 %v6427, %v6735
        %v6737 = vpop.f32.mrb[0].mxu0
        %v6738 = vadd.f32 %v6431, %v6737
        %6739 = vmatprep.mubr.bf16.mxu0 0
        %6740 = vmatmul.mubr.bf16.gmra.mrb[0].mxu0 %v6340
        %v6741 = vpop.f32.mrb[0].mxu0
        %v6742 = vadd.f32 %v6427, %v6741
        %v6743 = vpop.f32.mrb[0].mxu0
        %v6744 = vadd.f32 %v6431, %v6743
        %v6745 = vpop.f32.mrb[0].mxu0
        %v6746 = vadd.f32 %v6427, %v6745
        %v6747 = vpop.f32.mrb[0].mxu0
        %v6748 = vadd.f32 %v6431, %v6747
        %6749 = vmatprep.mubr.bf16.mxu0 0
        %6750 = vmatmul.mubr.bf16.gmra.mrb[0].mxu0 %v6341
        %v6751 = vpop.f32.mrb[0].mxu0
        %v6752 = vadd.f32 %v6427, %v6751
        %v6753 = vpop.f32.mrb[0].mxu0
        %v6754 = vadd.f32 %v6431, %v6753
        %v6755 = vpop.f32.mrb[0].mxu0
        %v6756 = vadd.f32 %v6427, %v6755
        %v6757 = vpop.f32.mrb[0].mxu0
        %v6758 = vadd.f32 %v6431, %v6757
        %6759 = vmatprep.mubr.bf16.mxu0 0
        %6760 = vmatmul.mubr.bf16.gmra.mrb[0].mxu0 %v6342
        %v6761 = vpop.f32.mrb[0].mxu0
        %v6762 = vadd.f32 %v6427, %v6761
        %v6763 = vpop.f32.mrb[0].mxu0
        %v6764 = vadd.f32 %v6431, %v6763
        %v6765 = vpop.f32.mrb[0].mxu0
        %v6766 = vadd.f32 %v6427, %v6765
        %v6767 = vpop.f32.mrb[0].mxu0
        %v6768 = vadd.f32 %v6431, %v6767
        %6769 = vmatprep.mubr.bf16.mxu0 0
        %6770 = vmatmul.mubr.bf16.gmra.mrb[0].mxu0 %v6343
        %v6771 = vpop.f32.mrb[0].mxu0
        %v6772 = vadd.f32 %v6427, %v6771
        %v6773 = vpop.f32.mrb[0].mxu0
        %v6774 = vadd.f32 %v6431, %v6773
        %v6775 = vpop.f32.mrb[0].mxu0
        %v6776 = vadd.f32 %v6427, %v6775
        %v6777 = vpop.f32.mrb[0].mxu0
        %v6778 = vadd.f32 %v6431, %v6777
        %6779 = vmatprep.mubr.bf16.mxu0 0
        %6780 = vmatmul.mubr.bf16.gmra.mrb[0].mxu0 %v6344
        %v6781 = vpop.f32.mrb[0].mxu0
        %v6782 = vadd.f32 %v6427, %v6781
        %v6783 = vpop.f32.mrb[0].mxu0
        %v6784 = vadd.f32 %v6431, %v6783
        %v6785 = vpop.f32.mrb[0].mxu0
        %v6786 = vadd.f32 %v6427, %v6785
        %v6787 = vpop.f32.mrb[0].mxu0
        %v6788 = vadd.f32 %v6431, %v6787
        %6789 = vmatprep.mubr.bf16.mxu0 0
        %6790 = vmatmul.mubr.bf16.gmra.mrb[0].mxu0 %v6345
        %v6791 = vpop.f32.mrb[0].mxu0
        %v6792 = vadd.f32 %v6427, %v6791
        %v6793 = vpop.f32.mrb[0].mxu0
        %v6794 = vadd.f32 %v6431, %v6793
        %v6795 = vpop.f32.mrb[0].mxu0
        %v6796 = vadd.f32 %v6427, %v6795
        %v6797 = vpop.f32.mrb[0].mxu0
        %v6798 = vadd.f32 %v6431, %v6797
        %6799 = vmatprep.mubr.bf16.mxu0 0
        %6800 = vmatmul.mubr.bf16.gmra.mrb[0].mxu0 %v6346
        %v6801 = vpop.f32.mrb[0].mxu0
        %v6802 = vadd.f32 %v6427, %v6801
        %v6803 = vpop.f32.mrb[0].mxu0
        %v6804 = vadd.f32 %v6431, %v6803
        %v6805 = vpop.f32.mrb[0].mxu0
        %v6806 = vadd.f32 %v6427, %v6805
        %v6807 = vpop.f32.mrb[0].mxu0
        %v6808 = vadd.f32 %v6431, %v6807
        %6809 = vmatprep.mubr.bf16.mxu0 0
        %6810 = vmatmul.mubr.bf16.gmra.mrb[0].mxu0 %v6347
        %v6811 = vpop.f32.mrb[0].mxu0
        %v6812 = vadd.f32 %v6427, %v6811
        %v6813 = vpop.f32.mrb[0].mxu0
        %v6814 = vadd.f32 %v6431, %v6813
        %v6815 = vpop.f32.mrb[0].mxu0
        %v6816 = vadd.f32 %v6427, %v6815
        %v6817 = vpop.f32.mrb[0].mxu0
        %v6818 = vadd.f32 %v6431, %v6817
        %6819 = vmatprep.mubr.bf16.mxu0 0
        %6820 = vmatmul.mubr.bf16.gmra.mrb[0].mxu0 %v6348
        %v6821 = vpop.f32.mrb[0].mxu0
        %v6822 = vadd.f32 %v6427, %v6821
        %v6823 = vpop.f32.mrb[0].mxu0
        %v6824 = vadd.f32 %v6431, %v6823
        %v6825 = vpop.f32.mrb[0].mxu0
        %v6826 = vadd.f32 %v6427, %v6825
        %v6827 = vpop.f32.mrb[0].mxu0
        %v6828 = vadd.f32 %v6431, %v6827
        %6829 = vmatprep.mubr.bf16.mxu0 0
        %6830 = vmatmul.mubr.bf16.gmra.mrb[0].mxu0 %v6349
        %v6831 = vpop.f32.mrb[0].mxu0
        %v6832 = vadd.f32 %v6427, %v6831
        %v6833 = vpop.f32.mrb[0].mxu0
        %v6834 = vadd.f32 %v6431, %v6833
        %v6835 = vpop.f32.mrb[0].mxu0
        %v6836 = vadd.f32 %v6427, %v6835
        %v6837 = vpop.f32.mrb[0].mxu0
        %v6838 = vadd.f32 %v6431, %v6837
        %6839 = vmatprep.mubr.bf16.mxu0 0
        %6840 = vmatmul.mubr.bf16.gmra.mrb[0].mxu0 %v6350
        %v6841 = vpop.f32.mrb[0].mxu0
        %v6842 = vadd.f32 %v6427, %v6841
        %v6843 = vpop.f32.mrb[0].mxu0
        %v6844 = vadd.f32 %v6431, %v6843
        %v6845 = vpop.f32.mrb[0].mxu0
        %v6846 = vadd.f32 %v6427, %v6845
        %v6847 = vpop.f32.mrb[0].mxu0
        %v6848 = vadd.f32 %v6431, %v6847
        %6849 = vmatprep.mubr.bf16.mxu0 0
        %6850 = vmatmul.mubr.bf16.gmra.mrb[0].mxu0 %v6351
        %v6851 = vpop.f32.mrb[0].mxu0
        %v6852 = vadd.f32 %v6427, %v6851
        %v6853 = vpop.f32.mrb[0].mxu0
        %v6854 = vadd.f32 %v6431, %v6853
        %v6855 = vpop.f32.mrb[0].mxu0
        %v6856 = vadd.f32 %v6427, %v6855
        %v6857 = vpop.f32.mrb[0].mxu0
        %v6858 = vadd.f32 %v6431, %v6857
        %6859 = vmatprep.mubr.bf16.mxu0 0
        %6860 = vmatmul.mubr.bf16.gmra.mrb[0].mxu0 %v6352
        %v6861 = vpop.f32.mrb[0].mxu0
        %v6862 = vadd.f32 %v6427, %v6861
        %v6863 = vpop.f32.mrb[0].mxu0
        %v6864 = vadd.f32 %v6431, %v6863
        %v6865 = vpop.f32.mrb[0].mxu0
        %v6866 = vadd.f32 %v6427, %v6865
        %v6867 = vpop.f32.mrb[0].mxu0
        %v6868 = vadd.f32 %v6431, %v6867
        %6869 = vmatprep.mubr.bf16.mxu0 0
        %6870 = vmatmul.mubr.bf16.gmra.mrb[0].mxu0 %v6353
        %v6871 = vpop.f32.mrb[0].mxu0
        %v6872 = vadd.f32 %v6427, %v6871
        %v6873 = vpop.f32.mrb[0].mxu0
        %v6874 = vadd.f32 %v6431, %v6873
        %v6875 = vpop.f32.mrb[0].mxu0
        %v6876 = vadd.f32 %v6427, %v6875
        %v6877 = vpop.f32.mrb[0].mxu0
        %v6878 = vadd.f32 %v6431, %v6877
        %6879 = vmatprep.mubr.bf16.mxu0 0
        %6880 = vmatmul.mubr.bf16.gmra.mrb[0].mxu0 %v6354
        %v6881 = vpop.f32.mrb[0].mxu0
        %v6882 = vadd.f32 %v6427, %v6881
        %v6883 = vpop.f32.mrb[0].mxu0
        %v6884 = vadd.f32 %v6431, %v6883
        %v6885 = vpop.f32.mrb[0].mxu0
        %v6886 = vadd.f32 %v6427, %v6885
        %v6887 = vpop.f32.mrb[0].mxu0
        %v6888 = vadd.f32 %v6431, %v6887
        %6889 = vmatprep.mubr.bf16.mxu0 0
        %6890 = vmatmul.mubr.bf16.gmra.mrb[0].mxu0 %v6355
        %v6891 = vpop.f32.mrb[0].mxu0
        %v6892 = vadd.f32 %v6427, %v6891
        %v6893 = vpop.f32.mrb[0].mxu0
        %v6894 = vadd.f32 %v6431, %v6893
        %v6895 = vpop.f32.mrb[0].mxu0
        %v6896 = vadd.f32 %v6427, %v6895
        %v6897 = vpop.f32.mrb[0].mxu0
        %v6898 = vadd.f32 %v6431, %v6897
        %6899 = vmatprep.mubr.bf16.mxu0 0
        %6900 = vmatmul.mubr.bf16.gmra.mrb[0].mxu0 %v6356
        %v6901 = vpop.f32.mrb[0].mxu0
        %v6902 = vadd.f32 %v6427, %v6901
        %v6903 = vpop.f32.mrb[0].mxu0
        %v6904 = vadd.f32 %v6431, %v6903
        %v6905 = vpop.f32.mrb[0].mxu0
        %v6906 = vadd.f32 %v6427, %v6905
        %v6907 = vpop.f32.mrb[0].mxu0
        %v6908 = vadd.f32 %v6431, %v6907
        %6909 = vmatprep.mubr.bf16.mxu0 0
        %6910 = vmatmul.mubr.bf16.gmra.mrb[0].mxu0 %v6357
        %v6911 = vpop.f32.mrb[0].mxu0
        %v6912 = vadd.f32 %v6427, %v6911
        %v6913 = vpop.f32.mrb[0].mxu0
        %v6914 = vadd.f32 %v6431, %v6913
        %v6915 = vpop.f32.mrb[0].mxu0
        %v6916 = vadd.f32 %v6427, %v6915
        %v6917 = vpop.f32.mrb[0].mxu0
        %v6918 = vadd.f32 %v6431, %v6917
        %6919 = vmatprep.mubr.bf16.mxu0 0
        %6920 = vmatmul.mubr.bf16.gmra.mrb[0].mxu0 %v6358
        %v6921 = vpop.f32.mrb[0].mxu0
        %v6922 = vadd.f32 %v6427, %v6921
        %v6923 = vpop.f32.mrb[0].mxu0
        %v6924 = vadd.f32 %v6431, %v6923
        %v6925 = vpop.f32.mrb[0].mxu0
        %v6926 = vadd.f32 %v6427, %v6925
        %v6927 = vpop.f32.mrb[0].mxu0
        %v6928 = vadd.f32 %v6431, %v6927
        %6929 = vmatprep.mubr.bf16.mxu0 0
        %6930 = vmatmul.mubr.bf16.gmra.mrb[0].mxu0 %v6359
        %v6931 = vpop.f32.mrb[0].mxu0
        %v6932 = vadd.f32 %v6427, %v6931
        %v6933 = vpop.f32.mrb[0].mxu0
        %v6934 = vadd.f32 %v6431, %v6933
        %v6935 = vpop.f32.mrb[0].mxu0
        %v6936 = vadd.f32 %v6427, %v6935
        %v6937 = vpop.f32.mrb[0].mxu0
        %v6938 = vadd.f32 %v6431, %v6937
        %6939 = vmatprep.mubr.bf16.mxu0 0
        %6940 = vmatmul.mubr.bf16.gmra.mrb[0].mxu0 %v6360
        %v6941 = vpop.f32.mrb[0].mxu0
        %v6942 = vadd.f32 %v6427, %v6941
        %v6943 = vpop.f32.mrb[0].mxu0
        %v6944 = vadd.f32 %v6431, %v6943
        %v6945 = vpop.f32.mrb[0].mxu0
        %v6946 = vadd.f32 %v6427, %v6945
        %v6947 = vpop.f32.mrb[0].mxu0
        %v6948 = vadd.f32 %v6431, %v6947
        %6949 = vmatprep.mubr.bf16.mxu0 0
        %6950 = vmatmul.mubr.bf16.gmra.mrb[0].mxu0 %v6361
        %v6951 = vpop.f32.mrb[0].mxu0
        %v6952 = vadd.f32 %v6427, %v6951
        %v6953 = vpop.f32.mrb[0].mxu0
        %v6954 = vadd.f32 %v6431, %v6953
        %v6955 = vpop.f32.mrb[0].mxu0
        %v6956 = vadd.f32 %v6427, %v6955
        %v6957 = vpop.f32.mrb[0].mxu0
        %v6958 = vadd.f32 %v6431, %v6957
        %6959 = vmatprep.mubr.bf16.mxu0 0
        %6960 = vmatmul.mubr.bf16.gmra.mrb[0].mxu0 %v6362
        %v6961 = vpop.f32.mrb[0].mxu0
        %v6962 = vadd.f32 %v6427, %v6961
        %v6963 = vpop.f32.mrb[0].mxu0
        %v6964 = vadd.f32 %v6431, %v6963
        %v6965 = vpop.f32.mrb[0].mxu0
        %v6966 = vadd.f32 %v6427, %v6965
        %v6967 = vpop.f32.mrb[0].mxu0
        %v6968 = vadd.f32 %v6431, %v6967
        %6969 = vmatprep.mubr.bf16.mxu0 0
        %6970 = vmatmul.mubr.bf16.gmra.mrb[0].mxu0 %v6363
        %v6971 = vpop.f32.mrb[0].mxu0
        %v6972 = vadd.f32 %v6427, %v6971
        %v6973 = vpop.f32.mrb[0].mxu0
        %v6974 = vadd.f32 %v6431, %v6973
        %v6975 = vpop.f32.mrb[0].mxu0
        %v6976 = vadd.f32 %v6427, %v6975
        %v6977 = vpop.f32.mrb[0].mxu0
        %v6978 = vadd.f32 %v6431, %v6977
        %6979 = vmatprep.mubr.bf16.mxu0 0
        %6980 = vmatmul.mubr.bf16.gmra.mrb[0].mxu0 %v6364
        %v6981 = vpop.f32.mrb[0].mxu0
        %v6982 = vadd.f32 %v6427, %v6981
        %v6983 = vpop.f32.mrb[0].mxu0
        %v6984 = vadd.f32 %v6431, %v6983
        %v6985 = vpop.f32.mrb[0].mxu0
        %v6986 = vadd.f32 %v6427, %v6985
        %v6987 = vpop.f32.mrb[0].mxu0
        %v6988 = vadd.f32 %v6431, %v6987
        %6989 = vmatprep.mubr.bf16.mxu0 0
        %6990 = vmatmul.mubr.bf16.gmra.mrb[0].mxu0 %v6365
        %v6991 = vpop.f32.mrb[0].mxu0
        %v6992 = vadd.f32 %v6427, %v6991
        %v6993 = vpop.f32.mrb[0].mxu0
        %v6994 = vadd.f32 %v6431, %v6993
        %v6995 = vpop.f32.mrb[0].mxu0
        %v6996 = vadd.f32 %v6427, %v6995
        %v6997 = vpop.f32.mrb[0].mxu0
        %v6998 = vadd.f32 %v6431, %v6997
        %6999 = vmatprep.mubr.bf16.mxu0 0
        %7000 = vmatmul.mubr.bf16.gmra.mrb[0].mxu0 %v6366
        %v7001 = vpop.f32.mrb[0].mxu0
        %v7002 = vadd.f32 %v6427, %v7001
        %v7003 = vpop.f32.mrb[0].mxu0
        %v7004 = vadd.f32 %v6431, %v7003
        %v7005 = vpop.f32.mrb[0].mxu0
        %v7006 = vadd.f32 %v6427, %v7005
        %v7007 = vpop.f32.mrb[0].mxu0
        %v7008 = vadd.f32 %v6431, %v7007
        %7009 = vmatprep.mubr.bf16.mxu0 0
        %7010 = vmatmul.mubr.bf16.gmra.mrb[0].mxu0 %v6367
        %v7011 = vpop.f32.mrb[0].mxu0
        %v7012 = vadd.f32 %v6427, %v7011
        %v7013 = vpop.f32.mrb[0].mxu0
        %v7014 = vadd.f32 %v6431, %v7013
        %v7015 = vpop.f32.mrb[0].mxu0
        %v7016 = vadd.f32 %v6427, %v7015
        %v7017 = vpop.f32.mrb[0].mxu0
        %v7018 = vadd.f32 %v6431, %v7017
        %7019 = vmatprep.mubr.bf16.mxu0 0
        %7020 = vmatmul.mubr.bf16.gmra.mrb[0].mxu0 %v6368
        %v7021 = vpop.f32.mrb[0].mxu0
        %v7022 = vadd.f32 %v6427, %v7021
        %v7023 = vpop.f32.mrb[0].mxu0
        %v7024 = vadd.f32 %v6431, %v7023
        %v7025 = vpop.f32.mrb[0].mxu0
        %v7026 = vadd.f32 %v6427, %v7025
        %v7027 = vpop.f32.mrb[0].mxu0
        %v7028 = vadd.f32 %v6431, %v7027
        %7029 = vmatprep.mubr.bf16.mxu0 0
        %7030 = vmatmul.mubr.bf16.gmra.mrb[0].mxu0 %v6369
        %v7031 = vpop.f32.mrb[0].mxu0
        %v7032 = vadd.f32 %v6427, %v7031
        %v7033 = vpop.f32.mrb[0].mxu0
        %v7034 = vadd.f32 %v6431, %v7033
        %v7035 = vpop.f32.mrb[0].mxu0
        %v7036 = vadd.f32 %v6427, %v7035
        %v7037 = vpop.f32.mrb[0].mxu0
        %v7038 = vadd.f32 %v6431, %v7037
        %7039 = vmatprep.mubr.bf16.mxu0 0
        %7040 = vmatmul.mubr.bf16.gmra.mrb[0].mxu0 %v6370
        %v7041 = vpop.f32.mrb[0].mxu0
        %v7042 = vadd.f32 %v6427, %v7041
        %v7043 = vpop.f32.mrb[0].mxu0
        %v7044 = vadd.f32 %v6431, %v7043
        %v7045 = vpop.f32.mrb[0].mxu0
        %v7046 = vadd.f32 %v6427, %v7045
        %v7047 = vpop.f32.mrb[0].mxu0
        %v7048 = vadd.f32 %v6431, %v7047
        %7049 = vmatprep.mubr.bf16.mxu0 0
        %7050 = vmatmul.mubr.bf16.gmra.mrb[0].mxu0 %v6371
        %v7051 = vpop.f32.mrb[0].mxu0
        %v7052 = vadd.f32 %v6427, %v7051
        %v7053 = vpop.f32.mrb[0].mxu0
        %v7054 = vadd.f32 %v6431, %v7053
        %v7055 = vpop.f32.mrb[0].mxu0
        %v7056 = vadd.f32 %v6427, %v7055
        %v7057 = vpop.f32.mrb[0].mxu0
        %v7058 = vadd.f32 %v6431, %v7057
        %7059 = vmatprep.mubr.bf16.mxu0 0
        %7060 = vmatmul.mubr.bf16.gmra.mrb[0].mxu0 %v6372
        %v7061 = vpop.f32.mrb[0].mxu0
        %v7062 = vadd.f32 %v6427, %v7061
        %v7063 = vpop.f32.mrb[0].mxu0
        %v7064 = vadd.f32 %v6431, %v7063
        %v7065 = vpop.f32.mrb[0].mxu0
        %v7066 = vadd.f32 %v6427, %v7065
        %v7067 = vpop.f32.mrb[0].mxu0
        %v7068 = vadd.f32 %v6431, %v7067
        %7069 = vmatprep.mubr.bf16.mxu0 0
        %7070 = vmatmul.mubr.bf16.gmra.mrb[0].mxu0 %v6373
        %v7071 = vpop.f32.mrb[0].mxu0
        %v7072 = vadd.f32 %v6427, %v7071
        %v7073 = vpop.f32.mrb[0].mxu0
        %v7074 = vadd.f32 %v6431, %v7073
        %v7075 = vpop.f32.mrb[0].mxu0
        %v7076 = vadd.f32 %v6427, %v7075
        %v7077 = vpop.f32.mrb[0].mxu0
        %v7078 = vadd.f32 %v6431, %v7077
        %7079 = vmatprep.mubr.bf16.mxu0 0
        %7080 = vmatmul.mubr.bf16.gmra.mrb[0].mxu0 %v6374
        %v7081 = vpop.f32.mrb[0].mxu0
        %v7082 = vadd.f32 %v6427, %v7081
        %v7083 = vpop.f32.mrb[0].mxu0
        %v7084 = vadd.f32 %v6431, %v7083
        %v7085 = vpop.f32.mrb[0].mxu0
        %v7086 = vadd.f32 %v6427, %v7085
        %v7087 = vpop.f32.mrb[0].mxu0
        %v7088 = vadd.f32 %v6431, %v7087
        %7089 = vmatprep.mubr.bf16.mxu0 0
        %7090 = vmatmul.mubr.bf16.gmra.mrb[0].mxu0 %v6375
        %v7091 = vpop.f32.mrb[0].mxu0
        %v7092 = vadd.f32 %v6427, %v7091
        %v7093 = vpop.f32.mrb[0].mxu0
        %v7094 = vadd.f32 %v6431, %v7093
        %v7095 = vpop.f32.mrb[0].mxu0
        %v7096 = vadd.f32 %v6427, %v7095
        %v7097 = vpop.f32.mrb[0].mxu0
        %v7098 = vadd.f32 %v6431, %v7097
        %7099 = vmatprep.mubr.bf16.mxu0 0
        %7100 = vmatmul.mubr.bf16.gmra.mrb[0].mxu0 %v6376
        %v7101 = vpop.f32.mrb[0].mxu0
        %v7102 = vadd.f32 %v6427, %v7101
        %v7103 = vpop.f32.mrb[0].mxu0
        %v7104 = vadd.f32 %v6431, %v7103
        %v7105 = vpop.f32.mrb[0].mxu0
        %v7106 = vadd.f32 %v6427, %v7105
        %v7107 = vpop.f32.mrb[0].mxu0
        %v7108 = vadd.f32 %v6431, %v7107
        %7109 = vmatprep.mubr.bf16.mxu0 0
        %7110 = vmatmul.mubr.bf16.gmra.mrb[0].mxu0 %v6377
        %v7111 = vpop.f32.mrb[0].mxu0
        %v7112 = vadd.f32 %v6427, %v7111
        %v7113 = vpop.f32.mrb[0].mxu0
        %v7114 = vadd.f32 %v6431, %v7113
        %v7115 = vpop.f32.mrb[0].mxu0
        %v7116 = vadd.f32 %v6427, %v7115
        %v7117 = vpop.f32.mrb[0].mxu0
        %v7118 = vadd.f32 %v6431, %v7117
        %7119 = vmatprep.mubr.bf16.mxu0 0
        %7120 = vmatmul.mubr.bf16.gmra.mrb[0].mxu0 %v6378
        %v7121 = vpop.f32.mrb[0].mxu0
        %v7122 = vadd.f32 %v6427, %v7121
        %v7123 = vpop.f32.mrb[0].mxu0
        %v7124 = vadd.f32 %v6431, %v7123
        %v7125 = vpop.f32.mrb[0].mxu0
        %v7126 = vadd.f32 %v6427, %v7125
        %v7127 = vpop.f32.mrb[0].mxu0
        %v7128 = vadd.f32 %v6431, %v7127
        %7129 = vmatprep.mubr.bf16.mxu0 0
        %7130 = vmatmul.mubr.bf16.gmra.mrb[0].mxu0 %v6379
        %v7131 = vpop.f32.mrb[0].mxu0
        %v7132 = vadd.f32 %v6427, %v7131
        %v7133 = vpop.f32.mrb[0].mxu0
        %v7134 = vadd.f32 %v6431, %v7133
        %v7135 = vpop.f32.mrb[0].mxu0
        %v7136 = vadd.f32 %v6427, %v7135
        %v7137 = vpop.f32.mrb[0].mxu0
        %v7138 = vadd.f32 %v6431, %v7137
        %7139 = vmatprep.mubr.bf16.mxu0 0
        %7140 = vmatmul.mubr.bf16.gmra.mrb[0].mxu0 %v6380
        %v7141 = vpop.f32.mrb[0].mxu0
        %v7142 = vadd.f32 %v6427, %v7141
        %v7143 = vpop.f32.mrb[0].mxu0
        %v7144 = vadd.f32 %v6431, %v7143
        %v7145 = vpop.f32.mrb[0].mxu0
        %v7146 = vadd.f32 %v6427, %v7145
        %v7147 = vpop.f32.mrb[0].mxu0
        %v7148 = vadd.f32 %v6431, %v7147
        %7149 = vmatprep.mubr.bf16.mxu0 0
        %7150 = vmatmul.mubr.bf16.gmra.mrb[0].mxu0 %v6381
        %v7151 = vpop.f32.mrb[0].mxu0
        %v7152 = vadd.f32 %v6427, %v7151
        %v7153 = vpop.f32.mrb[0].mxu0
        %v7154 = vadd.f32 %v6431, %v7153
        %v7155 = vpop.f32.mrb[0].mxu0
        %v7156 = vadd.f32 %v6427, %v7155
        %v7157 = vpop.f32.mrb[0].mxu0
        %v7158 = vadd.f32 %v6431, %v7157
        %7159 = vmatprep.mubr.bf16.mxu0 0
        %7160 = vmatmul.mubr.bf16.gmra.mrb[0].mxu0 %v6382
        %v7161 = vpop.f32.mrb[0].mxu0
        %v7162 = vadd.f32 %v6427, %v7161
        %v7163 = vpop.f32.mrb[0].mxu0
        %v7164 = vadd.f32 %v6431, %v7163
        %v7165 = vpop.f32.mrb[0].mxu0
        %v7166 = vadd.f32 %v6427, %v7165
        %v7167 = vpop.f32.mrb[0].mxu0
        %v7168 = vadd.f32 %v6431, %v7167
        %7169 = vmatprep.mubr.bf16.mxu0 0
        %7170 = vmatmul.mubr.bf16.gmra.mrb[0].mxu0 %v6383
        %v7171 = vpop.f32.mrb[0].mxu0
        %v7172 = vadd.f32 %v6427, %v7171
        %v7173 = vpop.f32.mrb[0].mxu0
        %v7174 = vadd.f32 %v6431, %v7173
        %v7175 = vpop.f32.mrb[0].mxu0
        %v7176 = vadd.f32 %v6427, %v7175
        %v7177 = vpop.f32.mrb[0].mxu0
        %v7178 = vadd.f32 %v6431, %v7177
        %7179 = vmatprep.mubr.bf16.mxu0 0
        %7180 = vmatmul.mubr.bf16.gmra.mrb[0].mxu0 %v6384
        %v7181 = vpop.f32.mrb[0].mxu0
        %v7182 = vadd.f32 %v6427, %v7181
        %v7183 = vpop.f32.mrb[0].mxu0
        %v7184 = vadd.f32 %v6431, %v7183
        %v7185 = vpop.f32.mrb[0].mxu0
        %v7186 = vadd.f32 %v6427, %v7185
        %v7187 = vpop.f32.mrb[0].mxu0
        %v7188 = vadd.f32 %v6431, %v7187
        %7189 = vmatprep.mubr.bf16.mxu0 0
        %7190 = vmatmul.mubr.bf16.gmra.mrb[0].mxu0 %v6385
        %v7191 = vpop.f32.mrb[0].mxu0
        %v7192 = vadd.f32 %v6427, %v7191
        %v7193 = vpop.f32.mrb[0].mxu0
        %v7194 = vadd.f32 %v6431, %v7193
        %v7195 = vpop.f32.mrb[0].mxu0
        %v7196 = vadd.f32 %v6427, %v7195
        %v7197 = vpop.f32.mrb[0].mxu0
        %v7198 = vadd.f32 %v6431, %v7197
        %7199 = vmatprep.mubr.bf16.mxu0 0
        %7200 = vmatmul.mubr.bf16.gmra.mrb[0].mxu0 %v6386
        %v7201 = vpop.f32.mrb[0].mxu0
        %v7202 = vadd.f32 %v6427, %v7201
        %v7203 = vpop.f32.mrb[0].mxu0
        %v7204 = vadd.f32 %v6431, %v7203
        %v7205 = vpop.f32.mrb[0].mxu0
        %v7206 = vadd.f32 %v6427, %v7205
        %v7207 = vpop.f32.mrb[0].mxu0
        %v7208 = vadd.f32 %v6431, %v7207
        %7209 = vmatprep.mubr.bf16.mxu0 0
        %7210 = vmatmul.mubr.bf16.gmra.mrb[0].mxu0 %v6387
        %v7211 = vpop.f32.mrb[0].mxu0
        %v7212 = vadd.f32 %v6427, %v7211
        %v7213 = vpop.f32.mrb[0].mxu0
        %v7214 = vadd.f32 %v6431, %v7213
        %v7215 = vpop.f32.mrb[0].mxu0
        %v7216 = vadd.f32 %v6427, %v7215
        %v7217 = vpop.f32.mrb[0].mxu0
        %v7218 = vadd.f32 %v6431, %v7217
        %7219 = vmatprep.mubr.bf16.mxu0 0
        %7220 = vmatmul.mubr.bf16.gmra.mrb[0].mxu0 %v6388
        %v7221 = vpop.f32.mrb[0].mxu0
        %v7222 = vadd.f32 %v6427, %v7221
        %v7223 = vpop.f32.mrb[0].mxu0
        %v7224 = vadd.f32 %v6431, %v7223
        %v7225 = vpop.f32.mrb[0].mxu0
        %v7226 = vadd.f32 %v6427, %v7225
        %v7227 = vpop.f32.mrb[0].mxu0
        %v7228 = vadd.f32 %v6431, %v7227
        %7229 = vmatprep.mubr.bf16.mxu0 0
        %7230 = vmatmul.mubr.bf16.gmra.mrb[0].mxu0 %v6389
        %v7231 = vpop.f32.mrb[0].mxu0
        %v7232 = vadd.f32 %v6427, %v7231
        %v7233 = vpop.f32.mrb[0].mxu0
        %v7234 = vadd.f32 %v6431, %v7233
        %v7235 = vpop.f32.mrb[0].mxu0
        %v7236 = vadd.f32 %v6427, %v7235
        %v7237 = vpop.f32.mrb[0].mxu0
        %v7238 = vadd.f32 %v6431, %v7237
        %7239 = vdwg.mxu0
        %7240 = vmatprep.subr.bf16.mxu0 0
        %7241 = vmatpush1.bf16.msra.mxu0 %v6521
        %7242 = vmatprep.subr.bf16.mxu0 0
        %7243 = vmatpush1.bf16.msra.mxu0 %v6524
        %7244 = vmatprep.subr.bf16.mxu0 0
        %7245 = vmatpush1.bf16.msra.mxu0 %v6527
        %7246 = vmatprep.subr.bf16.mxu0 0
        %7247 = vmatpush1.bf16.msra.mxu0 %v6530
        %7248 = vmatprep.subr.bf16.mxu0 0
        %7249 = vmatpush1.bf16.msra.mxu0 %v6533
        %7250 = vmatprep.subr.bf16.mxu0 0
        %7251 = vmatpush1.bf16.msra.mxu0 %v6536
        %7252 = vmatprep.subr.bf16.mxu0 0
        %7253 = vmatpush1.bf16.msra.mxu0 %v6539
        %7254 = vmatprep.subr.bf16.mxu0 0
        %7255 = vmatpush1.bf16.msra.mxu0 %v6542
        %7256 = vmatprep.subr.bf16.mxu0 0
        %7257 = vmatpush1.bf16.msra.mxu0 0
        %7258 = vmatprep.subr.bf16.mxu0 0
        %7259 = vmatpush1.bf16.msra.mxu0 0
        %7260 = vmatprep.subr.bf16.mxu0 0
        %7261 = vmatpush1.bf16.msra.mxu0 0
        %7262 = vmatprep.subr.bf16.mxu0 0
        %7263 = vmatpush1.bf16.msra.mxu0 0
        %7264 = vmatprep.subr.bf16.mxu0 0
        %7265 = vmatpush1.bf16.msra.mxu0 0
        %7266 = vmatprep.subr.bf16.mxu0 0
        %7267 = vmatpush1.bf16.msra.mxu0 0
        %7268 = vmatprep.subr.bf16.mxu0 0
        %7269 = vmatpush1.bf16.msra.mxu0 0
        %7270 = vmatprep.subr.bf16.mxu0 0
        %7271 = vmatpush1.bf16.msra.mxu0 0
        %7272 = vmatprep.mubr.bf16.mxu0 0
        %7273 = vmatmul.mubr.bf16.gmra.mrb[0].mxu0 %v6326
        %v7274 = vpop.f32.mrb[0].mxu0
        %v7275 = vadd.f32 %v6435, %v7274
        %v7276 = vpop.f32.mrb[0].mxu0
        %v7277 = vpop.f32.mrb[0].mxu0
        %v7278 = vadd.f32 %v6435, %v7277
        %v7279 = vpop.f32.mrb[0].mxu0
        %7280 = vmatprep.mubr.bf16.mxu0 0
        %7281 = vmatmul.mubr.bf16.gmra.mrb[0].mxu0 %v6327
        %v7282 = vpop.f32.mrb[0].mxu0
        %v7283 = vadd.f32 %v6435, %v7282
        %v7284 = vpop.f32.mrb[0].mxu0
        %v7285 = vpop.f32.mrb[0].mxu0
        %v7286 = vadd.f32 %v6435, %v7285
        %v7287 = vpop.f32.mrb[0].mxu0
        %7288 = vmatprep.mubr.bf16.mxu0 0
        %7289 = vmatmul.mubr.bf16.gmra.mrb[0].mxu0 %v6328
        %v7290 = vpop.f32.mrb[0].mxu0
        %v7291 = vadd.f32 %v6435, %v7290
        %v7292 = vpop.f32.mrb[0].mxu0
        %v7293 = vpop.f32.mrb[0].mxu0
        %v7294 = vadd.f32 %v6435, %v7293
        %v7295 = vpop.f32.mrb[0].mxu0
        %7296 = vmatprep.mubr.bf16.mxu0 0
        %7297 = vmatmul.mubr.bf16.gmra.mrb[0].mxu0 %v6329
        %v7298 = vpop.f32.mrb[0].mxu0
        %v7299 = vadd.f32 %v6435, %v7298
        %v7300 = vpop.f32.mrb[0].mxu0
        %v7301 = vpop.f32.mrb[0].mxu0
        %v7302 = vadd.f32 %v6435, %v7301
        %v7303 = vpop.f32.mrb[0].mxu0
        %7304 = vmatprep.mubr.bf16.mxu0 0
        %7305 = vmatmul.mubr.bf16.gmra.mrb[0].mxu0 %v6330
        %v7306 = vpop.f32.mrb[0].mxu0
        %v7307 = vadd.f32 %v6435, %v7306
        %v7308 = vpop.f32.mrb[0].mxu0
        %v7309 = vpop.f32.mrb[0].mxu0
        %v7310 = vadd.f32 %v6435, %v7309
        %v7311 = vpop.f32.mrb[0].mxu0
        %7312 = vmatprep.mubr.bf16.mxu0 0
        %7313 = vmatmul.mubr.bf16.gmra.mrb[0].mxu0 %v6331
        %v7314 = vpop.f32.mrb[0].mxu0
        %v7315 = vadd.f32 %v6435, %v7314
        %v7316 = vpop.f32.mrb[0].mxu0
        %v7317 = vpop.f32.mrb[0].mxu0
        %v7318 = vadd.f32 %v6435, %v7317
        %v7319 = vpop.f32.mrb[0].mxu0
        %7320 = vmatprep.mubr.bf16.mxu0 0
        %7321 = vmatmul.mubr.bf16.gmra.mrb[0].mxu0 %v6332
        %v7322 = vpop.f32.mrb[0].mxu0
        %v7323 = vadd.f32 %v6435, %v7322
        %v7324 = vpop.f32.mrb[0].mxu0
        %v7325 = vpop.f32.mrb[0].mxu0
        %v7326 = vadd.f32 %v6435, %v7325
        %v7327 = vpop.f32.mrb[0].mxu0
        %7328 = vmatprep.mubr.bf16.mxu0 0
        %7329 = vmatmul.mubr.bf16.gmra.mrb[0].mxu0 %v6333
        %v7330 = vpop.f32.mrb[0].mxu0
        %v7331 = vadd.f32 %v6435, %v7330
        %v7332 = vpop.f32.mrb[0].mxu0
        %v7333 = vpop.f32.mrb[0].mxu0
        %v7334 = vadd.f32 %v6435, %v7333
        %v7335 = vpop.f32.mrb[0].mxu0
        %7336 = vmatprep.mubr.bf16.mxu0 0
        %7337 = vmatmul.mubr.bf16.gmra.mrb[0].mxu0 %v6334
        %v7338 = vpop.f32.mrb[0].mxu0
        %v7339 = vadd.f32 %v6435, %v7338
        %v7340 = vpop.f32.mrb[0].mxu0
        %v7341 = vpop.f32.mrb[0].mxu0
        %v7342 = vadd.f32 %v6435, %v7341
        %v7343 = vpop.f32.mrb[0].mxu0
        %7344 = vmatprep.mubr.bf16.mxu0 0
        %7345 = vmatmul.mubr.bf16.gmra.mrb[0].mxu0 %v6335
        %v7346 = vpop.f32.mrb[0].mxu0
        %v7347 = vadd.f32 %v6435, %v7346
        %v7348 = vpop.f32.mrb[0].mxu0
        %v7349 = vpop.f32.mrb[0].mxu0
        %v7350 = vadd.f32 %v6435, %v7349
        %v7351 = vpop.f32.mrb[0].mxu0
        %7352 = vmatprep.mubr.bf16.mxu0 0
        %7353 = vmatmul.mubr.bf16.gmra.mrb[0].mxu0 %v6336
        %v7354 = vpop.f32.mrb[0].mxu0
        %v7355 = vadd.f32 %v6435, %v7354
        %v7356 = vpop.f32.mrb[0].mxu0
        %v7357 = vpop.f32.mrb[0].mxu0
        %v7358 = vadd.f32 %v6435, %v7357
        %v7359 = vpop.f32.mrb[0].mxu0
        %7360 = vmatprep.mubr.bf16.mxu0 0
        %7361 = vmatmul.mubr.bf16.gmra.mrb[0].mxu0 %v6337
        %v7362 = vpop.f32.mrb[0].mxu0
        %v7363 = vadd.f32 %v6435, %v7362
        %v7364 = vpop.f32.mrb[0].mxu0
        %v7365 = vpop.f32.mrb[0].mxu0
        %v7366 = vadd.f32 %v6435, %v7365
        %v7367 = vpop.f32.mrb[0].mxu0
        %7368 = vmatprep.mubr.bf16.mxu0 0
        %7369 = vmatmul.mubr.bf16.gmra.mrb[0].mxu0 %v6338
        %v7370 = vpop.f32.mrb[0].mxu0
        %v7371 = vadd.f32 %v6435, %v7370
        %v7372 = vpop.f32.mrb[0].mxu0
        %v7373 = vpop.f32.mrb[0].mxu0
        %v7374 = vadd.f32 %v6435, %v7373
        %v7375 = vpop.f32.mrb[0].mxu0
        %7376 = vmatprep.mubr.bf16.mxu0 0
        %7377 = vmatmul.mubr.bf16.gmra.mrb[0].mxu0 %v6339
        %v7378 = vpop.f32.mrb[0].mxu0
        %v7379 = vadd.f32 %v6435, %v7378
        %v7380 = vpop.f32.mrb[0].mxu0
        %v7381 = vpop.f32.mrb[0].mxu0
        %v7382 = vadd.f32 %v6435, %v7381
        %v7383 = vpop.f32.mrb[0].mxu0
        %7384 = vmatprep.mubr.bf16.mxu0 0
        %7385 = vmatmul.mubr.bf16.gmra.mrb[0].mxu0 %v6340
        %v7386 = vpop.f32.mrb[0].mxu0
        %v7387 = vadd.f32 %v6435, %v7386
        %v7388 = vpop.f32.mrb[0].mxu0
        %v7389 = vpop.f32.mrb[0].mxu0
        %v7390 = vadd.f32 %v6435, %v7389
        %v7391 = vpop.f32.mrb[0].mxu0
        %7392 = vmatprep.mubr.bf16.mxu0 0
        %7393 = vmatmul.mubr.bf16.gmra.mrb[0].mxu0 %v6341
        %v7394 = vpop.f32.mrb[0].mxu0
        %v7395 = vadd.f32 %v6435, %v7394
        %v7396 = vpop.f32.mrb[0].mxu0
        %v7397 = vpop.f32.mrb[0].mxu0
        %v7398 = vadd.f32 %v6435, %v7397
        %v7399 = vpop.f32.mrb[0].mxu0
        %7400 = vmatprep.mubr.bf16.mxu0 0
        %7401 = vmatmul.mubr.bf16.gmra.mrb[0].mxu0 %v6342
        %v7402 = vpop.f32.mrb[0].mxu0
        %v7403 = vadd.f32 %v6435, %v7402
        %v7404 = vpop.f32.mrb[0].mxu0
        %v7405 = vpop.f32.mrb[0].mxu0
        %v7406 = vadd.f32 %v6435, %v7405
        %v7407 = vpop.f32.mrb[0].mxu0
        %7408 = vmatprep.mubr.bf16.mxu0 0
        %7409 = vmatmul.mubr.bf16.gmra.mrb[0].mxu0 %v6343
        %v7410 = vpop.f32.mrb[0].mxu0
        %v7411 = vadd.f32 %v6435, %v7410
        %v7412 = vpop.f32.mrb[0].mxu0
        %v7413 = vpop.f32.mrb[0].mxu0
        %v7414 = vadd.f32 %v6435, %v7413
        %v7415 = vpop.f32.mrb[0].mxu0
        %7416 = vmatprep.mubr.bf16.mxu0 0
        %7417 = vmatmul.mubr.bf16.gmra.mrb[0].mxu0 %v6344
        %v7418 = vpop.f32.mrb[0].mxu0
        %v7419 = vadd.f32 %v6435, %v7418
        %v7420 = vpop.f32.mrb[0].mxu0
        %v7421 = vpop.f32.mrb[0].mxu0
        %v7422 = vadd.f32 %v6435, %v7421
        %v7423 = vpop.f32.mrb[0].mxu0
        %7424 = vmatprep.mubr.bf16.mxu0 0
        %7425 = vmatmul.mubr.bf16.gmra.mrb[0].mxu0 %v6345
        %v7426 = vpop.f32.mrb[0].mxu0
        %v7427 = vadd.f32 %v6435, %v7426
        %v7428 = vpop.f32.mrb[0].mxu0
        %v7429 = vpop.f32.mrb[0].mxu0
        %v7430 = vadd.f32 %v6435, %v7429
        %v7431 = vpop.f32.mrb[0].mxu0
        %7432 = vmatprep.mubr.bf16.mxu0 0
        %7433 = vmatmul.mubr.bf16.gmra.mrb[0].mxu0 %v6346
        %v7434 = vpop.f32.mrb[0].mxu0
        %v7435 = vadd.f32 %v6435, %v7434
        %v7436 = vpop.f32.mrb[0].mxu0
        %v7437 = vpop.f32.mrb[0].mxu0
        %v7438 = vadd.f32 %v6435, %v7437
        %v7439 = vpop.f32.mrb[0].mxu0
        %7440 = vmatprep.mubr.bf16.mxu0 0
        %7441 = vmatmul.mubr.bf16.gmra.mrb[0].mxu0 %v6347
        %v7442 = vpop.f32.mrb[0].mxu0
        %v7443 = vadd.f32 %v6435, %v7442
        %v7444 = vpop.f32.mrb[0].mxu0
        %v7445 = vpop.f32.mrb[0].mxu0
        %v7446 = vadd.f32 %v6435, %v7445
        %v7447 = vpop.f32.mrb[0].mxu0
        %7448 = vmatprep.mubr.bf16.mxu0 0
        %7449 = vmatmul.mubr.bf16.gmra.mrb[0].mxu0 %v6348
        %v7450 = vpop.f32.mrb[0].mxu0
        %v7451 = vadd.f32 %v6435, %v7450
        %v7452 = vpop.f32.mrb[0].mxu0
        %v7453 = vpop.f32.mrb[0].mxu0
        %v7454 = vadd.f32 %v6435, %v7453
        %v7455 = vpop.f32.mrb[0].mxu0
        %7456 = vmatprep.mubr.bf16.mxu0 0
        %7457 = vmatmul.mubr.bf16.gmra.mrb[0].mxu0 %v6349
        %v7458 = vpop.f32.mrb[0].mxu0
        %v7459 = vadd.f32 %v6435, %v7458
        %v7460 = vpop.f32.mrb[0].mxu0
        %v7461 = vpop.f32.mrb[0].mxu0
        %v7462 = vadd.f32 %v6435, %v7461
        %v7463 = vpop.f32.mrb[0].mxu0
        %7464 = vmatprep.mubr.bf16.mxu0 0
        %7465 = vmatmul.mubr.bf16.gmra.mrb[0].mxu0 %v6350
        %v7466 = vpop.f32.mrb[0].mxu0
        %v7467 = vadd.f32 %v6435, %v7466
        %v7468 = vpop.f32.mrb[0].mxu0
        %v7469 = vpop.f32.mrb[0].mxu0
        %v7470 = vadd.f32 %v6435, %v7469
        %v7471 = vpop.f32.mrb[0].mxu0
        %7472 = vmatprep.mubr.bf16.mxu0 0
        %7473 = vmatmul.mubr.bf16.gmra.mrb[0].mxu0 %v6351
        %v7474 = vpop.f32.mrb[0].mxu0
        %v7475 = vadd.f32 %v6435, %v7474
        %v7476 = vpop.f32.mrb[0].mxu0
        %v7477 = vpop.f32.mrb[0].mxu0
        %v7478 = vadd.f32 %v6435, %v7477
        %v7479 = vpop.f32.mrb[0].mxu0
        %7480 = vmatprep.mubr.bf16.mxu0 0
        %7481 = vmatmul.mubr.bf16.gmra.mrb[0].mxu0 %v6352
        %v7482 = vpop.f32.mrb[0].mxu0
        %v7483 = vadd.f32 %v6435, %v7482
        %v7484 = vpop.f32.mrb[0].mxu0
        %v7485 = vpop.f32.mrb[0].mxu0
        %v7486 = vadd.f32 %v6435, %v7485
        %v7487 = vpop.f32.mrb[0].mxu0
        %7488 = vmatprep.mubr.bf16.mxu0 0
        %7489 = vmatmul.mubr.bf16.gmra.mrb[0].mxu0 %v6353
        %v7490 = vpop.f32.mrb[0].mxu0
        %v7491 = vadd.f32 %v6435, %v7490
        %v7492 = vpop.f32.mrb[0].mxu0
        %v7493 = vpop.f32.mrb[0].mxu0
        %v7494 = vadd.f32 %v6435, %v7493
        %v7495 = vpop.f32.mrb[0].mxu0
        %7496 = vmatprep.mubr.bf16.mxu0 0
        %7497 = vmatmul.mubr.bf16.gmra.mrb[0].mxu0 %v6354
        %v7498 = vpop.f32.mrb[0].mxu0
        %v7499 = vadd.f32 %v6435, %v7498
        %v7500 = vpop.f32.mrb[0].mxu0
        %v7501 = vpop.f32.mrb[0].mxu0
        %v7502 = vadd.f32 %v6435, %v7501
        %v7503 = vpop.f32.mrb[0].mxu0
        %7504 = vmatprep.mubr.bf16.mxu0 0
        %7505 = vmatmul.mubr.bf16.gmra.mrb[0].mxu0 %v6355
        %v7506 = vpop.f32.mrb[0].mxu0
        %v7507 = vadd.f32 %v6435, %v7506
        %v7508 = vpop.f32.mrb[0].mxu0
        %v7509 = vpop.f32.mrb[0].mxu0
        %v7510 = vadd.f32 %v6435, %v7509
        %v7511 = vpop.f32.mrb[0].mxu0
        %7512 = vmatprep.mubr.bf16.mxu0 0
        %7513 = vmatmul.mubr.bf16.gmra.mrb[0].mxu0 %v6356
        %v7514 = vpop.f32.mrb[0].mxu0
        %v7515 = vadd.f32 %v6435, %v7514
        %v7516 = vpop.f32.mrb[0].mxu0
        %v7517 = vpop.f32.mrb[0].mxu0
        %v7518 = vadd.f32 %v6435, %v7517
        %v7519 = vpop.f32.mrb[0].mxu0
        %7520 = vmatprep.mubr.bf16.mxu0 0
        %7521 = vmatmul.mubr.bf16.gmra.mrb[0].mxu0 %v6357
        %v7522 = vpop.f32.mrb[0].mxu0
        %v7523 = vadd.f32 %v6435, %v7522
        %v7524 = vpop.f32.mrb[0].mxu0
        %v7525 = vpop.f32.mrb[0].mxu0
        %v7526 = vadd.f32 %v6435, %v7525
        %v7527 = vpop.f32.mrb[0].mxu0
        %7528 = vmatprep.mubr.bf16.mxu0 0
        %7529 = vmatmul.mubr.bf16.gmra.mrb[0].mxu0 %v6358
        %v7530 = vpop.f32.mrb[0].mxu0
        %v7531 = vadd.f32 %v6435, %v7530
        %v7532 = vpop.f32.mrb[0].mxu0
        %v7533 = vpop.f32.mrb[0].mxu0
        %v7534 = vadd.f32 %v6435, %v7533
        %v7535 = vpop.f32.mrb[0].mxu0
        %7536 = vmatprep.mubr.bf16.mxu0 0
        %7537 = vmatmul.mubr.bf16.gmra.mrb[0].mxu0 %v6359
        %v7538 = vpop.f32.mrb[0].mxu0
        %v7539 = vadd.f32 %v6435, %v7538
        %v7540 = vpop.f32.mrb[0].mxu0
        %v7541 = vpop.f32.mrb[0].mxu0
        %v7542 = vadd.f32 %v6435, %v7541
        %v7543 = vpop.f32.mrb[0].mxu0
        %7544 = vmatprep.mubr.bf16.mxu0 0
        %7545 = vmatmul.mubr.bf16.gmra.mrb[0].mxu0 %v6360
        %v7546 = vpop.f32.mrb[0].mxu0
        %v7547 = vadd.f32 %v6435, %v7546
        %v7548 = vpop.f32.mrb[0].mxu0
        %v7549 = vpop.f32.mrb[0].mxu0
        %v7550 = vadd.f32 %v6435, %v7549
        %v7551 = vpop.f32.mrb[0].mxu0
        %7552 = vmatprep.mubr.bf16.mxu0 0
        %7553 = vmatmul.mubr.bf16.gmra.mrb[0].mxu0 %v6361
        %v7554 = vpop.f32.mrb[0].mxu0
        %v7555 = vadd.f32 %v6435, %v7554
        %v7556 = vpop.f32.mrb[0].mxu0
        %v7557 = vpop.f32.mrb[0].mxu0
        %v7558 = vadd.f32 %v6435, %v7557
        %v7559 = vpop.f32.mrb[0].mxu0
        %7560 = vmatprep.mubr.bf16.mxu0 0
        %7561 = vmatmul.mubr.bf16.gmra.mrb[0].mxu0 %v6362
        %v7562 = vpop.f32.mrb[0].mxu0
        %v7563 = vadd.f32 %v6435, %v7562
        %v7564 = vpop.f32.mrb[0].mxu0
        %v7565 = vpop.f32.mrb[0].mxu0
        %v7566 = vadd.f32 %v6435, %v7565
        %v7567 = vpop.f32.mrb[0].mxu0
        %7568 = vmatprep.mubr.bf16.mxu0 0
        %7569 = vmatmul.mubr.bf16.gmra.mrb[0].mxu0 %v6363
        %v7570 = vpop.f32.mrb[0].mxu0
        %v7571 = vadd.f32 %v6435, %v7570
        %v7572 = vpop.f32.mrb[0].mxu0
        %v7573 = vpop.f32.mrb[0].mxu0
        %v7574 = vadd.f32 %v6435, %v7573
        %v7575 = vpop.f32.mrb[0].mxu0
        %7576 = vmatprep.mubr.bf16.mxu0 0
        %7577 = vmatmul.mubr.bf16.gmra.mrb[0].mxu0 %v6364
        %v7578 = vpop.f32.mrb[0].mxu0
        %v7579 = vadd.f32 %v6435, %v7578
        %v7580 = vpop.f32.mrb[0].mxu0
        %v7581 = vpop.f32.mrb[0].mxu0
        %v7582 = vadd.f32 %v6435, %v7581
        %v7583 = vpop.f32.mrb[0].mxu0
        %7584 = vmatprep.mubr.bf16.mxu0 0
        %7585 = vmatmul.mubr.bf16.gmra.mrb[0].mxu0 %v6365
        %v7586 = vpop.f32.mrb[0].mxu0
        %v7587 = vadd.f32 %v6435, %v7586
        %v7588 = vpop.f32.mrb[0].mxu0
        %v7589 = vpop.f32.mrb[0].mxu0
        %v7590 = vadd.f32 %v6435, %v7589
        %v7591 = vpop.f32.mrb[0].mxu0
        %7592 = vmatprep.mubr.bf16.mxu0 0
        %7593 = vmatmul.mubr.bf16.gmra.mrb[0].mxu0 %v6366
        %v7594 = vpop.f32.mrb[0].mxu0
        %v7595 = vadd.f32 %v6435, %v7594
        %v7596 = vpop.f32.mrb[0].mxu0
        %v7597 = vpop.f32.mrb[0].mxu0
        %v7598 = vadd.f32 %v6435, %v7597
        %v7599 = vpop.f32.mrb[0].mxu0
        %7600 = vmatprep.mubr.bf16.mxu0 0
        %7601 = vmatmul.mubr.bf16.gmra.mrb[0].mxu0 %v6367
        %v7602 = vpop.f32.mrb[0].mxu0
        %v7603 = vadd.f32 %v6435, %v7602
        %v7604 = vpop.f32.mrb[0].mxu0
        %v7605 = vpop.f32.mrb[0].mxu0
        %v7606 = vadd.f32 %v6435, %v7605
        %v7607 = vpop.f32.mrb[0].mxu0
        %7608 = vmatprep.mubr.bf16.mxu0 0
        %7609 = vmatmul.mubr.bf16.gmra.mrb[0].mxu0 %v6368
        %v7610 = vpop.f32.mrb[0].mxu0
        %v7611 = vadd.f32 %v6435, %v7610
        %v7612 = vpop.f32.mrb[0].mxu0
        %v7613 = vpop.f32.mrb[0].mxu0
        %v7614 = vadd.f32 %v6435, %v7613
        %v7615 = vpop.f32.mrb[0].mxu0
        %7616 = vmatprep.mubr.bf16.mxu0 0
        %7617 = vmatmul.mubr.bf16.gmra.mrb[0].mxu0 %v6369
        %v7618 = vpop.f32.mrb[0].mxu0
        %v7619 = vadd.f32 %v6435, %v7618
        %v7620 = vpop.f32.mrb[0].mxu0
        %v7621 = vpop.f32.mrb[0].mxu0
        %v7622 = vadd.f32 %v6435, %v7621
        %v7623 = vpop.f32.mrb[0].mxu0
        %7624 = vmatprep.mubr.bf16.mxu0 0
        %7625 = vmatmul.mubr.bf16.gmra.mrb[0].mxu0 %v6370
        %v7626 = vpop.f32.mrb[0].mxu0
        %v7627 = vadd.f32 %v6435, %v7626
        %v7628 = vpop.f32.mrb[0].mxu0
        %v7629 = vpop.f32.mrb[0].mxu0
        %v7630 = vadd.f32 %v6435, %v7629
        %v7631 = vpop.f32.mrb[0].mxu0
        %7632 = vmatprep.mubr.bf16.mxu0 0
        %7633 = vmatmul.mubr.bf16.gmra.mrb[0].mxu0 %v6371
        %v7634 = vpop.f32.mrb[0].mxu0
        %v7635 = vadd.f32 %v6435, %v7634
        %v7636 = vpop.f32.mrb[0].mxu0
        %v7637 = vpop.f32.mrb[0].mxu0
        %v7638 = vadd.f32 %v6435, %v7637
        %v7639 = vpop.f32.mrb[0].mxu0
        %7640 = vmatprep.mubr.bf16.mxu0 0
        %7641 = vmatmul.mubr.bf16.gmra.mrb[0].mxu0 %v6372
        %v7642 = vpop.f32.mrb[0].mxu0
        %v7643 = vadd.f32 %v6435, %v7642
        %v7644 = vpop.f32.mrb[0].mxu0
        %v7645 = vpop.f32.mrb[0].mxu0
        %v7646 = vadd.f32 %v6435, %v7645
        %v7647 = vpop.f32.mrb[0].mxu0
        %7648 = vmatprep.mubr.bf16.mxu0 0
        %7649 = vmatmul.mubr.bf16.gmra.mrb[0].mxu0 %v6373
        %v7650 = vpop.f32.mrb[0].mxu0
        %v7651 = vadd.f32 %v6435, %v7650
        %v7652 = vpop.f32.mrb[0].mxu0
        %v7653 = vpop.f32.mrb[0].mxu0
        %v7654 = vadd.f32 %v6435, %v7653
        %v7655 = vpop.f32.mrb[0].mxu0
        %7656 = vmatprep.mubr.bf16.mxu0 0
        %7657 = vmatmul.mubr.bf16.gmra.mrb[0].mxu0 %v6374
        %v7658 = vpop.f32.mrb[0].mxu0
        %v7659 = vadd.f32 %v6435, %v7658
        %v7660 = vpop.f32.mrb[0].mxu0
        %v7661 = vpop.f32.mrb[0].mxu0
        %v7662 = vadd.f32 %v6435, %v7661
        %v7663 = vpop.f32.mrb[0].mxu0
        %7664 = vmatprep.mubr.bf16.mxu0 0
        %7665 = vmatmul.mubr.bf16.gmra.mrb[0].mxu0 %v6375
        %v7666 = vpop.f32.mrb[0].mxu0
        %v7667 = vadd.f32 %v6435, %v7666
        %v7668 = vpop.f32.mrb[0].mxu0
        %v7669 = vpop.f32.mrb[0].mxu0
        %v7670 = vadd.f32 %v6435, %v7669
        %v7671 = vpop.f32.mrb[0].mxu0
        %7672 = vmatprep.mubr.bf16.mxu0 0
        %7673 = vmatmul.mubr.bf16.gmra.mrb[0].mxu0 %v6376
        %v7674 = vpop.f32.mrb[0].mxu0
        %v7675 = vadd.f32 %v6435, %v7674
        %v7676 = vpop.f32.mrb[0].mxu0
        %v7677 = vpop.f32.mrb[0].mxu0
        %v7678 = vadd.f32 %v6435, %v7677
        %v7679 = vpop.f32.mrb[0].mxu0
        %7680 = vmatprep.mubr.bf16.mxu0 0
        %7681 = vmatmul.mubr.bf16.gmra.mrb[0].mxu0 %v6377
        %v7682 = vpop.f32.mrb[0].mxu0
        %v7683 = vadd.f32 %v6435, %v7682
        %v7684 = vpop.f32.mrb[0].mxu0
        %v7685 = vpop.f32.mrb[0].mxu0
        %v7686 = vadd.f32 %v6435, %v7685
        %v7687 = vpop.f32.mrb[0].mxu0
        %7688 = vmatprep.mubr.bf16.mxu0 0
        %7689 = vmatmul.mubr.bf16.gmra.mrb[0].mxu0 %v6378
        %v7690 = vpop.f32.mrb[0].mxu0
        %v7691 = vadd.f32 %v6435, %v7690
        %v7692 = vpop.f32.mrb[0].mxu0
        %v7693 = vpop.f32.mrb[0].mxu0
        %v7694 = vadd.f32 %v6435, %v7693
        %v7695 = vpop.f32.mrb[0].mxu0
        %7696 = vmatprep.mubr.bf16.mxu0 0
        %7697 = vmatmul.mubr.bf16.gmra.mrb[0].mxu0 %v6379
        %v7698 = vpop.f32.mrb[0].mxu0
        %v7699 = vadd.f32 %v6435, %v7698
        %v7700 = vpop.f32.mrb[0].mxu0
        %v7701 = vpop.f32.mrb[0].mxu0
        %v7702 = vadd.f32 %v6435, %v7701
        %v7703 = vpop.f32.mrb[0].mxu0
        %7704 = vmatprep.mubr.bf16.mxu0 0
        %7705 = vmatmul.mubr.bf16.gmra.mrb[0].mxu0 %v6380
        %v7706 = vpop.f32.mrb[0].mxu0
        %v7707 = vadd.f32 %v6435, %v7706
        %v7708 = vpop.f32.mrb[0].mxu0
        %v7709 = vpop.f32.mrb[0].mxu0
        %v7710 = vadd.f32 %v6435, %v7709
        %v7711 = vpop.f32.mrb[0].mxu0
        %7712 = vmatprep.mubr.bf16.mxu0 0
        %7713 = vmatmul.mubr.bf16.gmra.mrb[0].mxu0 %v6381
        %v7714 = vpop.f32.mrb[0].mxu0
        %v7715 = vadd.f32 %v6435, %v7714
        %v7716 = vpop.f32.mrb[0].mxu0
        %v7717 = vpop.f32.mrb[0].mxu0
        %v7718 = vadd.f32 %v6435, %v7717
        %v7719 = vpop.f32.mrb[0].mxu0
        %7720 = vmatprep.mubr.bf16.mxu0 0
        %7721 = vmatmul.mubr.bf16.gmra.mrb[0].mxu0 %v6382
        %v7722 = vpop.f32.mrb[0].mxu0
        %v7723 = vadd.f32 %v6435, %v7722
        %v7724 = vpop.f32.mrb[0].mxu0
        %v7725 = vpop.f32.mrb[0].mxu0
        %v7726 = vadd.f32 %v6435, %v7725
        %v7727 = vpop.f32.mrb[0].mxu0
        %7728 = vmatprep.mubr.bf16.mxu0 0
        %7729 = vmatmul.mubr.bf16.gmra.mrb[0].mxu0 %v6383
        %v7730 = vpop.f32.mrb[0].mxu0
        %v7731 = vadd.f32 %v6435, %v7730
        %v7732 = vpop.f32.mrb[0].mxu0
        %v7733 = vpop.f32.mrb[0].mxu0
        %v7734 = vadd.f32 %v6435, %v7733
        %v7735 = vpop.f32.mrb[0].mxu0
        %7736 = vmatprep.mubr.bf16.mxu0 0
        %7737 = vmatmul.mubr.bf16.gmra.mrb[0].mxu0 %v6384
        %v7738 = vpop.f32.mrb[0].mxu0
        %v7739 = vadd.f32 %v6435, %v7738
        %v7740 = vpop.f32.mrb[0].mxu0
        %v7741 = vpop.f32.mrb[0].mxu0
        %v7742 = vadd.f32 %v6435, %v7741
        %v7743 = vpop.f32.mrb[0].mxu0
        %7744 = vmatprep.mubr.bf16.mxu0 0
        %7745 = vmatmul.mubr.bf16.gmra.mrb[0].mxu0 %v6385
        %v7746 = vpop.f32.mrb[0].mxu0
        %v7747 = vadd.f32 %v6435, %v7746
        %v7748 = vpop.f32.mrb[0].mxu0
        %v7749 = vpop.f32.mrb[0].mxu0
        %v7750 = vadd.f32 %v6435, %v7749
        %v7751 = vpop.f32.mrb[0].mxu0
        %7752 = vmatprep.mubr.bf16.mxu0 0
        %7753 = vmatmul.mubr.bf16.gmra.mrb[0].mxu0 %v6386
        %v7754 = vpop.f32.mrb[0].mxu0
        %v7755 = vadd.f32 %v6435, %v7754
        %v7756 = vpop.f32.mrb[0].mxu0
        %v7757 = vpop.f32.mrb[0].mxu0
        %v7758 = vadd.f32 %v6435, %v7757
        %v7759 = vpop.f32.mrb[0].mxu0
        %7760 = vmatprep.mubr.bf16.mxu0 0
        %7761 = vmatmul.mubr.bf16.gmra.mrb[0].mxu0 %v6387
        %v7762 = vpop.f32.mrb[0].mxu0
        %v7763 = vadd.f32 %v6435, %v7762
        %v7764 = vpop.f32.mrb[0].mxu0
        %v7765 = vpop.f32.mrb[0].mxu0
        %v7766 = vadd.f32 %v6435, %v7765
        %v7767 = vpop.f32.mrb[0].mxu0
        %7768 = vmatprep.mubr.bf16.mxu0 0
        %7769 = vmatmul.mubr.bf16.gmra.mrb[0].mxu0 %v6388
        %v7770 = vpop.f32.mrb[0].mxu0
        %v7771 = vadd.f32 %v6435, %v7770
        %v7772 = vpop.f32.mrb[0].mxu0
        %v7773 = vpop.f32.mrb[0].mxu0
        %v7774 = vadd.f32 %v6435, %v7773
        %v7775 = vpop.f32.mrb[0].mxu0
        %7776 = vmatprep.mubr.bf16.mxu0 0
        %7777 = vmatmul.mubr.bf16.gmra.mrb[0].mxu0 %v6389
        %v7778 = vpop.f32.mrb[0].mxu0
        %v7779 = vadd.f32 %v6435, %v7778
        %v7780 = vpop.f32.mrb[0].mxu0
        %v7781 = vpop.f32.mrb[0].mxu0
        %v7782 = vadd.f32 %v6435, %v7781
        %v7783 = vpop.f32.mrb[0].mxu0
        %7784 = vdwg.mxu0
        %v7785 = vpack.c.bf16 %v6606, %v6602
        %v7786 = vpack.c.bf16 %v6608, %v6604
        %v7787 = vpack.c.bf16 %v7278, %v7275
        %v7788 = vpack.c.bf16 %v6616, %v6612
        %v7789 = vpack.c.bf16 %v6618, %v6614
        %v7790 = vpack.c.bf16 %v7286, %v7283
        %v7791 = vpack.c.bf16 %v6626, %v6622
        %v7792 = vpack.c.bf16 %v6628, %v6624
        %v7793 = vpack.c.bf16 %v7294, %v7291
        %v7794 = vpack.c.bf16 %v6636, %v6632
        %v7795 = vpack.c.bf16 %v6638, %v6634
        %v7796 = vpack.c.bf16 %v7302, %v7299
        %v7797 = vpack.c.bf16 %v6646, %v6642
        %v7798 = vpack.c.bf16 %v6648, %v6644
        %v7799 = vpack.c.bf16 %v7310, %v7307
        %v7800 = vpack.c.bf16 %v6656, %v6652
        %v7801 = vpack.c.bf16 %v6658, %v6654
        %v7802 = vpack.c.bf16 %v7318, %v7315
        %v7803 = vpack.c.bf16 %v6666, %v6662
        %v7804 = vpack.c.bf16 %v6668, %v6664
        %v7805 = vpack.c.bf16 %v7326, %v7323
        %v7806 = vpack.c.bf16 %v6676, %v6672
        %v7807 = vpack.c.bf16 %v6678, %v6674
        %v7808 = vpack.c.bf16 %v7334, %v7331
        %v7809 = vpack.c.bf16 %v6686, %v6682
        %v7810 = vpack.c.bf16 %v6688, %v6684
        %v7811 = vpack.c.bf16 %v7342, %v7339
        %v7812 = vpack.c.bf16 %v6696, %v6692
        %v7813 = vpack.c.bf16 %v6698, %v6694
        %v7814 = vpack.c.bf16 %v7350, %v7347
        %v7815 = vpack.c.bf16 %v6706, %v6702
        %v7816 = vpack.c.bf16 %v6708, %v6704
        %v7817 = vpack.c.bf16 %v7358, %v7355
        %v7818 = vpack.c.bf16 %v6716, %v6712
        %v7819 = vpack.c.bf16 %v6718, %v6714
        %v7820 = vpack.c.bf16 %v7366, %v7363
        %v7821 = vpack.c.bf16 %v6726, %v6722
        %v7822 = vpack.c.bf16 %v6728, %v6724
        %v7823 = vpack.c.bf16 %v7374, %v7371
        %v7824 = vpack.c.bf16 %v6736, %v6732
        %v7825 = vpack.c.bf16 %v6738, %v6734
        %v7826 = vpack.c.bf16 %v7382, %v7379
        %v7827 = vpack.c.bf16 %v6746, %v6742
        %v7828 = vpack.c.bf16 %v6748, %v6744
        %v7829 = vpack.c.bf16 %v7390, %v7387
        %v7830 = vpack.c.bf16 %v6756, %v6752
        %v7831 = vpack.c.bf16 %v6758, %v6754
        %v7832 = vpack.c.bf16 %v7398, %v7395
        %v7833 = vpack.c.bf16 %v6766, %v6762
        %v7834 = vpack.c.bf16 %v6768, %v6764
        %v7835 = vpack.c.bf16 %v7406, %v7403
        %v7836 = vpack.c.bf16 %v6776, %v6772
        %v7837 = vpack.c.bf16 %v6778, %v6774
        %v7838 = vpack.c.bf16 %v7414, %v7411
        %v7839 = vpack.c.bf16 %v6786, %v6782
        %v7840 = vpack.c.bf16 %v6788, %v6784
        %v7841 = vpack.c.bf16 %v7422, %v7419
        %v7842 = vpack.c.bf16 %v6796, %v6792
        %v7843 = vpack.c.bf16 %v6798, %v6794
        %v7844 = vpack.c.bf16 %v7430, %v7427
        %v7845 = vpack.c.bf16 %v6806, %v6802
        %v7846 = vpack.c.bf16 %v6808, %v6804
        %v7847 = vpack.c.bf16 %v7438, %v7435
        %v7848 = vpack.c.bf16 %v6816, %v6812
        %v7849 = vpack.c.bf16 %v6818, %v6814
        %v7850 = vpack.c.bf16 %v7446, %v7443
        %v7851 = vpack.c.bf16 %v6826, %v6822
        %v7852 = vpack.c.bf16 %v6828, %v6824
        %v7853 = vpack.c.bf16 %v7454, %v7451
        %v7854 = vpack.c.bf16 %v6836, %v6832
        %v7855 = vpack.c.bf16 %v6838, %v6834
        %v7856 = vpack.c.bf16 %v7462, %v7459
        %v7857 = vpack.c.bf16 %v6846, %v6842
        %v7858 = vpack.c.bf16 %v6848, %v6844
        %v7859 = vpack.c.bf16 %v7470, %v7467
        %v7860 = vpack.c.bf16 %v6856, %v6852
        %v7861 = vpack.c.bf16 %v6858, %v6854
        %v7862 = vpack.c.bf16 %v7478, %v7475
        %v7863 = vpack.c.bf16 %v6866, %v6862
        %v7864 = vpack.c.bf16 %v6868, %v6864
        %v7865 = vpack.c.bf16 %v7486, %v7483
        %v7866 = vpack.c.bf16 %v6876, %v6872
        %v7867 = vpack.c.bf16 %v6878, %v6874
        %v7868 = vpack.c.bf16 %v7494, %v7491
        %v7869 = vpack.c.bf16 %v6886, %v6882
        %v7870 = vpack.c.bf16 %v6888, %v6884
        %v7871 = vpack.c.bf16 %v7502, %v7499
        %v7872 = vpack.c.bf16 %v6896, %v6892
        %v7873 = vpack.c.bf16 %v6898, %v6894
        %v7874 = vpack.c.bf16 %v7510, %v7507
        %v7875 = vpack.c.bf16 %v6906, %v6902
        %v7876 = vpack.c.bf16 %v6908, %v6904
        %v7877 = vpack.c.bf16 %v7518, %v7515
        %v7878 = vpack.c.bf16 %v6916, %v6912
        %v7879 = vpack.c.bf16 %v6918, %v6914
        %v7880 = vpack.c.bf16 %v7526, %v7523
        %v7881 = vpack.c.bf16 %v6926, %v6922
        %v7882 = vpack.c.bf16 %v6928, %v6924
        %v7883 = vpack.c.bf16 %v7534, %v7531
        %v7884 = vpack.c.bf16 %v6936, %v6932
        %v7885 = vpack.c.bf16 %v6938, %v6934
        %v7886 = vpack.c.bf16 %v7542, %v7539
        %v7887 = vpack.c.bf16 %v6946, %v6942
        %v7888 = vpack.c.bf16 %v6948, %v6944
        %v7889 = vpack.c.bf16 %v7550, %v7547
        %v7890 = vpack.c.bf16 %v6956, %v6952
        %v7891 = vpack.c.bf16 %v6958, %v6954
        %v7892 = vpack.c.bf16 %v7558, %v7555
        %v7893 = vpack.c.bf16 %v6966, %v6962
        %v7894 = vpack.c.bf16 %v6968, %v6964
        %v7895 = vpack.c.bf16 %v7566, %v7563
        %v7896 = vpack.c.bf16 %v6976, %v6972
        %v7897 = vpack.c.bf16 %v6978, %v6974
        %v7898 = vpack.c.bf16 %v7574, %v7571
        %v7899 = vpack.c.bf16 %v6986, %v6982
        %v7900 = vpack.c.bf16 %v6988, %v6984
        %v7901 = vpack.c.bf16 %v7582, %v7579
        %v7902 = vpack.c.bf16 %v6996, %v6992
        %v7903 = vpack.c.bf16 %v6998, %v6994
        %v7904 = vpack.c.bf16 %v7590, %v7587
        %v7905 = vpack.c.bf16 %v7006, %v7002
        %v7906 = vpack.c.bf16 %v7008, %v7004
        %v7907 = vpack.c.bf16 %v7598, %v7595
        %v7908 = vpack.c.bf16 %v7016, %v7012
        %v7909 = vpack.c.bf16 %v7018, %v7014
        %v7910 = vpack.c.bf16 %v7606, %v7603
        %v7911 = vpack.c.bf16 %v7026, %v7022
        %v7912 = vpack.c.bf16 %v7028, %v7024
        %v7913 = vpack.c.bf16 %v7614, %v7611
        %v7914 = vpack.c.bf16 %v7036, %v7032
        %v7915 = vpack.c.bf16 %v7038, %v7034
        %v7916 = vpack.c.bf16 %v7622, %v7619
        %v7917 = vpack.c.bf16 %v7046, %v7042
        %v7918 = vpack.c.bf16 %v7048, %v7044
        %v7919 = vpack.c.bf16 %v7630, %v7627
        %v7920 = vpack.c.bf16 %v7056, %v7052
        %v7921 = vpack.c.bf16 %v7058, %v7054
        %v7922 = vpack.c.bf16 %v7638, %v7635
        %v7923 = vpack.c.bf16 %v7066, %v7062
        %v7924 = vpack.c.bf16 %v7068, %v7064
        %v7925 = vpack.c.bf16 %v7646, %v7643
        %v7926 = vpack.c.bf16 %v7076, %v7072
        %v7927 = vpack.c.bf16 %v7078, %v7074
        %v7928 = vpack.c.bf16 %v7654, %v7651
        %v7929 = vpack.c.bf16 %v7086, %v7082
        %v7930 = vpack.c.bf16 %v7088, %v7084
        %v7931 = vpack.c.bf16 %v7662, %v7659
        %v7932 = vpack.c.bf16 %v7096, %v7092
        %v7933 = vpack.c.bf16 %v7098, %v7094
        %v7934 = vpack.c.bf16 %v7670, %v7667
        %v7935 = vpack.c.bf16 %v7106, %v7102
        %v7936 = vpack.c.bf16 %v7108, %v7104
        %v7937 = vpack.c.bf16 %v7678, %v7675
        %v7938 = vpack.c.bf16 %v7116, %v7112
        %v7939 = vpack.c.bf16 %v7118, %v7114
        %v7940 = vpack.c.bf16 %v7686, %v7683
        %v7941 = vpack.c.bf16 %v7126, %v7122
        %v7942 = vpack.c.bf16 %v7128, %v7124
        %v7943 = vpack.c.bf16 %v7694, %v7691
        %v7944 = vpack.c.bf16 %v7136, %v7132
        %v7945 = vpack.c.bf16 %v7138, %v7134
        %v7946 = vpack.c.bf16 %v7702, %v7699
        %v7947 = vpack.c.bf16 %v7146, %v7142
        %v7948 = vpack.c.bf16 %v7148, %v7144
        %v7949 = vpack.c.bf16 %v7710, %v7707
        %v7950 = vpack.c.bf16 %v7156, %v7152
        %v7951 = vpack.c.bf16 %v7158, %v7154
        %v7952 = vpack.c.bf16 %v7718, %v7715
        %v7953 = vpack.c.bf16 %v7166, %v7162
        %v7954 = vpack.c.bf16 %v7168, %v7164
        %v7955 = vpack.c.bf16 %v7726, %v7723
        %v7956 = vpack.c.bf16 %v7176, %v7172
        %v7957 = vpack.c.bf16 %v7178, %v7174
        %v7958 = vpack.c.bf16 %v7734, %v7731
        %v7959 = vpack.c.bf16 %v7186, %v7182
        %v7960 = vpack.c.bf16 %v7188, %v7184
        %v7961 = vpack.c.bf16 %v7742, %v7739
        %v7962 = vpack.c.bf16 %v7196, %v7192
        %v7963 = vpack.c.bf16 %v7198, %v7194
        %v7964 = vpack.c.bf16 %v7750, %v7747
        %v7965 = vpack.c.bf16 %v7206, %v7202
        %v7966 = vpack.c.bf16 %v7208, %v7204
        %v7967 = vpack.c.bf16 %v7758, %v7755
        %v7968 = vpack.c.bf16 %v7216, %v7212
        %v7969 = vpack.c.bf16 %v7218, %v7214
        %v7970 = vpack.c.bf16 %v7766, %v7763
        %v7971 = vpack.c.bf16 %v7226, %v7222
        %v7972 = vpack.c.bf16 %v7228, %v7224
        %v7973 = vpack.c.bf16 %v7774, %v7771
        %v7974 = vpack.c.bf16 %v7236, %v7232
        %v7975 = vpack.c.bf16 %v7238, %v7234
        %v7976 = vpack.c.bf16 %v7782, %v7779
        %v8169 = vunpack.c.l.b16 %v7785
        %v8170 = vunpack.c.l.b16 %v7786
        %v8171 = vunpack.c.l.b16 %v7787
        %v8172 = vunpack.c.h.b16 %v7785
        %v8173 = vunpack.c.h.b16 %v7786
        %v8174 = vunpack.c.h.b16 %v7787
        %v8175 = vunpack.c.l.b16 %v7788
        %v8176 = vunpack.c.l.b16 %v7789
        %v8177 = vunpack.c.l.b16 %v7790
        %v8178 = vunpack.c.h.b16 %v7788
        %v8179 = vunpack.c.h.b16 %v7789
        %v8180 = vunpack.c.h.b16 %v7790
        %v8181 = vunpack.c.l.b16 %v7791
        %v8182 = vunpack.c.l.b16 %v7792
        %v8183 = vunpack.c.l.b16 %v7793
        %v8184 = vunpack.c.h.b16 %v7791
        %v8185 = vunpack.c.h.b16 %v7792
        %v8186 = vunpack.c.h.b16 %v7793
        %v8187 = vunpack.c.l.b16 %v7794
        %v8188 = vunpack.c.l.b16 %v7795
        %v8189 = vunpack.c.l.b16 %v7796
        %v8190 = vunpack.c.h.b16 %v7794
        %v8191 = vunpack.c.h.b16 %v7795
        %v8192 = vunpack.c.h.b16 %v7796
        %v8193 = vunpack.c.l.b16 %v7797
        %v8194 = vunpack.c.l.b16 %v7798
        %v8195 = vunpack.c.l.b16 %v7799
        %v8196 = vunpack.c.h.b16 %v7797
        %v8197 = vunpack.c.h.b16 %v7798
        %v8198 = vunpack.c.h.b16 %v7799
        %v8199 = vunpack.c.l.b16 %v7800
        %v8200 = vunpack.c.l.b16 %v7801
        %v8201 = vunpack.c.l.b16 %v7802
        %v8202 = vunpack.c.h.b16 %v7800
        %v8203 = vunpack.c.h.b16 %v7801
        %v8204 = vunpack.c.h.b16 %v7802
        %v8205 = vunpack.c.l.b16 %v7803
        %v8206 = vunpack.c.l.b16 %v7804
        %v8207 = vunpack.c.l.b16 %v7805
        %v8208 = vunpack.c.h.b16 %v7803
        %v8209 = vunpack.c.h.b16 %v7804
        %v8210 = vunpack.c.h.b16 %v7805
        %v8211 = vunpack.c.l.b16 %v7806
        %v8212 = vunpack.c.l.b16 %v7807
        %v8213 = vunpack.c.l.b16 %v7808
        %v8214 = vunpack.c.h.b16 %v7806
        %v8215 = vunpack.c.h.b16 %v7807
        %v8216 = vunpack.c.h.b16 %v7808
        %v8217 = vunpack.c.l.b16 %v7809
        %v8218 = vunpack.c.l.b16 %v7810
        %v8219 = vunpack.c.l.b16 %v7811
        %v8220 = vunpack.c.h.b16 %v7809
        %v8221 = vunpack.c.h.b16 %v7810
        %v8222 = vunpack.c.h.b16 %v7811
        %v8223 = vunpack.c.l.b16 %v7812
        %v8224 = vunpack.c.l.b16 %v7813
        %v8225 = vunpack.c.l.b16 %v7814
        %v8226 = vunpack.c.h.b16 %v7812
        %v8227 = vunpack.c.h.b16 %v7813
        %v8228 = vunpack.c.h.b16 %v7814
        %v8229 = vunpack.c.l.b16 %v7815
        %v8230 = vunpack.c.l.b16 %v7816
        %v8231 = vunpack.c.l.b16 %v7817
        %v8232 = vunpack.c.h.b16 %v7815
        %v8233 = vunpack.c.h.b16 %v7816
        %v8234 = vunpack.c.h.b16 %v7817
        %v8235 = vunpack.c.l.b16 %v7818
        %v8236 = vunpack.c.l.b16 %v7819
        %v8237 = vunpack.c.l.b16 %v7820
        %v8238 = vunpack.c.h.b16 %v7818
        %v8239 = vunpack.c.h.b16 %v7819
        %v8240 = vunpack.c.h.b16 %v7820
        %v8241 = vunpack.c.l.b16 %v7821
        %v8242 = vunpack.c.l.b16 %v7822
        %v8243 = vunpack.c.l.b16 %v7823
        %v8244 = vunpack.c.h.b16 %v7821
        %v8245 = vunpack.c.h.b16 %v7822
        %v8246 = vunpack.c.h.b16 %v7823
        %v8247 = vunpack.c.l.b16 %v7824
        %v8248 = vunpack.c.l.b16 %v7825
        %v8249 = vunpack.c.l.b16 %v7826
        %v8250 = vunpack.c.h.b16 %v7824
        %v8251 = vunpack.c.h.b16 %v7825
        %v8252 = vunpack.c.h.b16 %v7826
        %v8253 = vunpack.c.l.b16 %v7827
        %v8254 = vunpack.c.l.b16 %v7828
        %v8255 = vunpack.c.l.b16 %v7829
        %v8256 = vunpack.c.h.b16 %v7827
        %v8257 = vunpack.c.h.b16 %v7828
        %v8258 = vunpack.c.h.b16 %v7829
        %v8259 = vunpack.c.l.b16 %v7830
        %v8260 = vunpack.c.l.b16 %v7831
        %v8261 = vunpack.c.l.b16 %v7832
        %v8262 = vunpack.c.h.b16 %v7830
        %v8263 = vunpack.c.h.b16 %v7831
        %v8264 = vunpack.c.h.b16 %v7832
        %v8265 = vunpack.c.l.b16 %v7833
        %v8266 = vunpack.c.l.b16 %v7834
        %v8267 = vunpack.c.l.b16 %v7835
        %v8268 = vunpack.c.h.b16 %v7833
        %v8269 = vunpack.c.h.b16 %v7834
        %v8270 = vunpack.c.h.b16 %v7835
        %v8271 = vunpack.c.l.b16 %v7836
        %v8272 = vunpack.c.l.b16 %v7837
        %v8273 = vunpack.c.l.b16 %v7838
        %v8274 = vunpack.c.h.b16 %v7836
        %v8275 = vunpack.c.h.b16 %v7837
        %v8276 = vunpack.c.h.b16 %v7838
        %v8277 = vunpack.c.l.b16 %v7839
        %v8278 = vunpack.c.l.b16 %v7840
        %v8279 = vunpack.c.l.b16 %v7841
        %v8280 = vunpack.c.h.b16 %v7839
        %v8281 = vunpack.c.h.b16 %v7840
        %v8282 = vunpack.c.h.b16 %v7841
        %v8283 = vunpack.c.l.b16 %v7842
        %v8284 = vunpack.c.l.b16 %v7843
        %v8285 = vunpack.c.l.b16 %v7844
        %v8286 = vunpack.c.h.b16 %v7842
        %v8287 = vunpack.c.h.b16 %v7843
        %v8288 = vunpack.c.h.b16 %v7844
        %v8289 = vunpack.c.l.b16 %v7845
        %v8290 = vunpack.c.l.b16 %v7846
        %v8291 = vunpack.c.l.b16 %v7847
        %v8292 = vunpack.c.h.b16 %v7845
        %v8293 = vunpack.c.h.b16 %v7846
        %v8294 = vunpack.c.h.b16 %v7847
        %v8295 = vunpack.c.l.b16 %v7848
        %v8296 = vunpack.c.l.b16 %v7849
        %v8297 = vunpack.c.l.b16 %v7850
        %v8298 = vunpack.c.h.b16 %v7848
        %v8299 = vunpack.c.h.b16 %v7849
        %v8300 = vunpack.c.h.b16 %v7850
        %v8301 = vunpack.c.l.b16 %v7851
        %v8302 = vunpack.c.l.b16 %v7852
        %v8303 = vunpack.c.l.b16 %v7853
        %v8304 = vunpack.c.h.b16 %v7851
        %v8305 = vunpack.c.h.b16 %v7852
        %v8306 = vunpack.c.h.b16 %v7853
        %v8307 = vunpack.c.l.b16 %v7854
        %v8308 = vunpack.c.l.b16 %v7855
        %v8309 = vunpack.c.l.b16 %v7856
        %v8310 = vunpack.c.h.b16 %v7854
        %v8311 = vunpack.c.h.b16 %v7855
        %v8312 = vunpack.c.h.b16 %v7856
        %v8313 = vunpack.c.l.b16 %v7857
        %v8314 = vunpack.c.l.b16 %v7858
        %v8315 = vunpack.c.l.b16 %v7859
        %v8316 = vunpack.c.h.b16 %v7857
        %v8317 = vunpack.c.h.b16 %v7858
        %v8318 = vunpack.c.h.b16 %v7859
        %v8319 = vunpack.c.l.b16 %v7860
        %v8320 = vunpack.c.l.b16 %v7861
        %v8321 = vunpack.c.l.b16 %v7862
        %v8322 = vunpack.c.h.b16 %v7860
        %v8323 = vunpack.c.h.b16 %v7861
        %v8324 = vunpack.c.h.b16 %v7862
        %v8325 = vunpack.c.l.b16 %v7863
        %v8326 = vunpack.c.l.b16 %v7864
        %v8327 = vunpack.c.l.b16 %v7865
        %v8328 = vunpack.c.h.b16 %v7863
        %v8329 = vunpack.c.h.b16 %v7864
        %v8330 = vunpack.c.h.b16 %v7865
        %v8331 = vunpack.c.l.b16 %v7866
        %v8332 = vunpack.c.l.b16 %v7867
        %v8333 = vunpack.c.l.b16 %v7868
        %v8334 = vunpack.c.h.b16 %v7866
        %v8335 = vunpack.c.h.b16 %v7867
        %v8336 = vunpack.c.h.b16 %v7868
        %v8337 = vunpack.c.l.b16 %v7869
        %v8338 = vunpack.c.l.b16 %v7870
        %v8339 = vunpack.c.l.b16 %v7871
        %v8340 = vunpack.c.h.b16 %v7869
        %v8341 = vunpack.c.h.b16 %v7870
        %v8342 = vunpack.c.h.b16 %v7871
        %v8343 = vunpack.c.l.b16 %v7872
        %v8344 = vunpack.c.l.b16 %v7873
        %v8345 = vunpack.c.l.b16 %v7874
        %v8346 = vunpack.c.h.b16 %v7872
        %v8347 = vunpack.c.h.b16 %v7873
        %v8348 = vunpack.c.h.b16 %v7874
        %v8349 = vunpack.c.l.b16 %v7875
        %v8350 = vunpack.c.l.b16 %v7876
        %v8351 = vunpack.c.l.b16 %v7877
        %v8352 = vunpack.c.h.b16 %v7875
        %v8353 = vunpack.c.h.b16 %v7876
        %v8354 = vunpack.c.h.b16 %v7877
        %v8355 = vunpack.c.l.b16 %v7878
        %v8356 = vunpack.c.l.b16 %v7879
        %v8357 = vunpack.c.l.b16 %v7880
        %v8358 = vunpack.c.h.b16 %v7878
        %v8359 = vunpack.c.h.b16 %v7879
        %v8360 = vunpack.c.h.b16 %v7880
        %v8361 = vunpack.c.l.b16 %v7881
        %v8362 = vunpack.c.l.b16 %v7882
        %v8363 = vunpack.c.l.b16 %v7883
        %v8364 = vunpack.c.h.b16 %v7881
        %v8365 = vunpack.c.h.b16 %v7882
        %v8366 = vunpack.c.h.b16 %v7883
        %v8367 = vunpack.c.l.b16 %v7884
        %v8368 = vunpack.c.l.b16 %v7885
        %v8369 = vunpack.c.l.b16 %v7886
        %v8370 = vunpack.c.h.b16 %v7884
        %v8371 = vunpack.c.h.b16 %v7885
        %v8372 = vunpack.c.h.b16 %v7886
        %v8373 = vunpack.c.l.b16 %v7887
        %v8374 = vunpack.c.l.b16 %v7888
        %v8375 = vunpack.c.l.b16 %v7889
        %v8376 = vunpack.c.h.b16 %v7887
        %v8377 = vunpack.c.h.b16 %v7888
        %v8378 = vunpack.c.h.b16 %v7889
        %v8379 = vunpack.c.l.b16 %v7890
        %v8380 = vunpack.c.l.b16 %v7891
        %v8381 = vunpack.c.l.b16 %v7892
        %v8382 = vunpack.c.h.b16 %v7890
        %v8383 = vunpack.c.h.b16 %v7891
        %v8384 = vunpack.c.h.b16 %v7892
        %v8385 = vunpack.c.l.b16 %v7893
        %v8386 = vunpack.c.l.b16 %v7894
        %v8387 = vunpack.c.l.b16 %v7895
        %v8388 = vunpack.c.h.b16 %v7893
        %v8389 = vunpack.c.h.b16 %v7894
        %v8390 = vunpack.c.h.b16 %v7895
        %v8391 = vunpack.c.l.b16 %v7896
        %v8392 = vunpack.c.l.b16 %v7897
        %v8393 = vunpack.c.l.b16 %v7898
        %v8394 = vunpack.c.h.b16 %v7896
        %v8395 = vunpack.c.h.b16 %v7897
        %v8396 = vunpack.c.h.b16 %v7898
        %v8397 = vunpack.c.l.b16 %v7899
        %v8398 = vunpack.c.l.b16 %v7900
        %v8399 = vunpack.c.l.b16 %v7901
        %v8400 = vunpack.c.h.b16 %v7899
        %v8401 = vunpack.c.h.b16 %v7900
        %v8402 = vunpack.c.h.b16 %v7901
        %v8403 = vunpack.c.l.b16 %v7902
        %v8404 = vunpack.c.l.b16 %v7903
        %v8405 = vunpack.c.l.b16 %v7904
        %v8406 = vunpack.c.h.b16 %v7902
        %v8407 = vunpack.c.h.b16 %v7903
        %v8408 = vunpack.c.h.b16 %v7904
        %v8409 = vunpack.c.l.b16 %v7905
        %v8410 = vunpack.c.l.b16 %v7906
        %v8411 = vunpack.c.l.b16 %v7907
        %v8412 = vunpack.c.h.b16 %v7905
        %v8413 = vunpack.c.h.b16 %v7906
        %v8414 = vunpack.c.h.b16 %v7907
        %v8415 = vunpack.c.l.b16 %v7908
        %v8416 = vunpack.c.l.b16 %v7909
        %v8417 = vunpack.c.l.b16 %v7910
        %v8418 = vunpack.c.h.b16 %v7908
        %v8419 = vunpack.c.h.b16 %v7909
        %v8420 = vunpack.c.h.b16 %v7910
        %v8421 = vunpack.c.l.b16 %v7911
        %v8422 = vunpack.c.l.b16 %v7912
        %v8423 = vunpack.c.l.b16 %v7913
        %v8424 = vunpack.c.h.b16 %v7911
        %v8425 = vunpack.c.h.b16 %v7912
        %v8426 = vunpack.c.h.b16 %v7913
        %v8427 = vunpack.c.l.b16 %v7914
        %v8428 = vunpack.c.l.b16 %v7915
        %v8429 = vunpack.c.l.b16 %v7916
        %v8430 = vunpack.c.h.b16 %v7914
        %v8431 = vunpack.c.h.b16 %v7915
        %v8432 = vunpack.c.h.b16 %v7916
        %v8433 = vunpack.c.l.b16 %v7917
        %v8434 = vunpack.c.l.b16 %v7918
        %v8435 = vunpack.c.l.b16 %v7919
        %v8436 = vunpack.c.h.b16 %v7917
        %v8437 = vunpack.c.h.b16 %v7918
        %v8438 = vunpack.c.h.b16 %v7919
        %v8439 = vunpack.c.l.b16 %v7920
        %v8440 = vunpack.c.l.b16 %v7921
        %v8441 = vunpack.c.l.b16 %v7922
        %v8442 = vunpack.c.h.b16 %v7920
        %v8443 = vunpack.c.h.b16 %v7921
        %v8444 = vunpack.c.h.b16 %v7922
        %v8445 = vunpack.c.l.b16 %v7923
        %v8446 = vunpack.c.l.b16 %v7924
        %v8447 = vunpack.c.l.b16 %v7925
        %v8448 = vunpack.c.h.b16 %v7923
        %v8449 = vunpack.c.h.b16 %v7924
        %v8450 = vunpack.c.h.b16 %v7925
        %v8451 = vunpack.c.l.b16 %v7926
        %v8452 = vunpack.c.l.b16 %v7927
        %v8453 = vunpack.c.l.b16 %v7928
        %v8454 = vunpack.c.h.b16 %v7926
        %v8455 = vunpack.c.h.b16 %v7927
        %v8456 = vunpack.c.h.b16 %v7928
        %v8457 = vunpack.c.l.b16 %v7929
        %v8458 = vunpack.c.l.b16 %v7930
        %v8459 = vunpack.c.l.b16 %v7931
        %v8460 = vunpack.c.h.b16 %v7929
        %v8461 = vunpack.c.h.b16 %v7930
        %v8462 = vunpack.c.h.b16 %v7931
        %v8463 = vunpack.c.l.b16 %v7932
        %v8464 = vunpack.c.l.b16 %v7933
        %v8465 = vunpack.c.l.b16 %v7934
        %v8466 = vunpack.c.h.b16 %v7932
        %v8467 = vunpack.c.h.b16 %v7933
        %v8468 = vunpack.c.h.b16 %v7934
        %v8469 = vunpack.c.l.b16 %v7935
        %v8470 = vunpack.c.l.b16 %v7936
        %v8471 = vunpack.c.l.b16 %v7937
        %v8472 = vunpack.c.h.b16 %v7935
        %v8473 = vunpack.c.h.b16 %v7936
        %v8474 = vunpack.c.h.b16 %v7937
        %v8475 = vunpack.c.l.b16 %v7938
        %v8476 = vunpack.c.l.b16 %v7939
        %v8477 = vunpack.c.l.b16 %v7940
        %v8478 = vunpack.c.h.b16 %v7938
        %v8479 = vunpack.c.h.b16 %v7939
        %v8480 = vunpack.c.h.b16 %v7940
        %v8481 = vunpack.c.l.b16 %v7941
        %v8482 = vunpack.c.l.b16 %v7942
        %v8483 = vunpack.c.l.b16 %v7943
        %v8484 = vunpack.c.h.b16 %v7941
        %v8485 = vunpack.c.h.b16 %v7942
        %v8486 = vunpack.c.h.b16 %v7943
        %v8487 = vunpack.c.l.b16 %v7944
        %v8488 = vunpack.c.l.b16 %v7945
        %v8489 = vunpack.c.l.b16 %v7946
        %v8490 = vunpack.c.h.b16 %v7944
        %v8491 = vunpack.c.h.b16 %v7945
        %v8492 = vunpack.c.h.b16 %v7946
        %v8493 = vunpack.c.l.b16 %v7947
        %v8494 = vunpack.c.l.b16 %v7948
        %v8495 = vunpack.c.l.b16 %v7949
        %v8496 = vunpack.c.h.b16 %v7947
        %v8497 = vunpack.c.h.b16 %v7948
        %v8498 = vunpack.c.h.b16 %v7949
        %v8499 = vunpack.c.l.b16 %v7950
        %v8500 = vunpack.c.l.b16 %v7951
        %v8501 = vunpack.c.l.b16 %v7952
        %v8502 = vunpack.c.h.b16 %v7950
        %v8503 = vunpack.c.h.b16 %v7951
        %v8504 = vunpack.c.h.b16 %v7952
        %v8505 = vunpack.c.l.b16 %v7953
        %v8506 = vunpack.c.l.b16 %v7954
        %v8507 = vunpack.c.l.b16 %v7955
        %v8508 = vunpack.c.h.b16 %v7953
        %v8509 = vunpack.c.h.b16 %v7954
        %v8510 = vunpack.c.h.b16 %v7955
        %v8511 = vunpack.c.l.b16 %v7956
        %v8512 = vunpack.c.l.b16 %v7957
        %v8513 = vunpack.c.l.b16 %v7958
        %v8514 = vunpack.c.h.b16 %v7956
        %v8515 = vunpack.c.h.b16 %v7957
        %v8516 = vunpack.c.h.b16 %v7958
        %v8517 = vunpack.c.l.b16 %v7959
        %v8518 = vunpack.c.l.b16 %v7960
        %v8519 = vunpack.c.l.b16 %v7961
        %v8520 = vunpack.c.h.b16 %v7959
        %v8521 = vunpack.c.h.b16 %v7960
        %v8522 = vunpack.c.h.b16 %v7961
        %v8523 = vunpack.c.l.b16 %v7962
        %v8524 = vunpack.c.l.b16 %v7963
        %v8525 = vunpack.c.l.b16 %v7964
        %v8526 = vunpack.c.h.b16 %v7962
        %v8527 = vunpack.c.h.b16 %v7963
        %v8528 = vunpack.c.h.b16 %v7964
        %v8529 = vunpack.c.l.b16 %v7965
        %v8530 = vunpack.c.l.b16 %v7966
        %v8531 = vunpack.c.l.b16 %v7967
        %v8532 = vunpack.c.h.b16 %v7965
        %v8533 = vunpack.c.h.b16 %v7966
        %v8534 = vunpack.c.h.b16 %v7967
        %v8535 = vunpack.c.l.b16 %v7968
        %v8536 = vunpack.c.l.b16 %v7969
        %v8537 = vunpack.c.l.b16 %v7970
        %v8538 = vunpack.c.h.b16 %v7968
        %v8539 = vunpack.c.h.b16 %v7969
        %v8540 = vunpack.c.h.b16 %v7970
        %v8541 = vunpack.c.l.b16 %v7971
        %v8542 = vunpack.c.l.b16 %v7972
        %v8543 = vunpack.c.l.b16 %v7973
        %v8544 = vunpack.c.h.b16 %v7971
        %v8545 = vunpack.c.h.b16 %v7972
        %v8546 = vunpack.c.h.b16 %v7973
        %v8547 = vunpack.c.l.b16 %v7974
        %v8548 = vunpack.c.l.b16 %v7975
        %v8549 = vunpack.c.l.b16 %v7976
        %v8550 = vunpack.c.h.b16 %v7974
        %v8551 = vunpack.c.h.b16 %v7975
        %v8552 = vunpack.c.h.b16 %v7976
        %v8553 = vpack.c.b16 %v8170, %v8169
        %v8554 = vpack.c.b16 %v8171, %v8171
        %v8555 = vpack.c.b16 %v8173, %v8172
        %v8556 = vpack.c.b16 %v8174, %v8174
        %v8557 = vpack.c.b16 %v8176, %v8175
        %v8558 = vpack.c.b16 %v8177, %v8177
        %v8559 = vpack.c.b16 %v8179, %v8178
        %v8560 = vpack.c.b16 %v8180, %v8180
        %v8561 = vpack.c.b16 %v8182, %v8181
        %v8562 = vpack.c.b16 %v8183, %v8183
        %v8563 = vpack.c.b16 %v8185, %v8184
        %v8564 = vpack.c.b16 %v8186, %v8186
        %v8565 = vpack.c.b16 %v8188, %v8187
        %v8566 = vpack.c.b16 %v8189, %v8189
        %v8567 = vpack.c.b16 %v8191, %v8190
        %v8568 = vpack.c.b16 %v8192, %v8192
        %v8569 = vpack.c.b16 %v8194, %v8193
        %v8570 = vpack.c.b16 %v8195, %v8195
        %v8571 = vpack.c.b16 %v8197, %v8196
        %v8572 = vpack.c.b16 %v8198, %v8198
        %v8573 = vpack.c.b16 %v8200, %v8199
        %v8574 = vpack.c.b16 %v8201, %v8201
        %v8575 = vpack.c.b16 %v8203, %v8202
        %v8576 = vpack.c.b16 %v8204, %v8204
        %v8577 = vpack.c.b16 %v8206, %v8205
        %v8578 = vpack.c.b16 %v8207, %v8207
        %v8579 = vpack.c.b16 %v8209, %v8208
        %v8580 = vpack.c.b16 %v8210, %v8210
        %v8581 = vpack.c.b16 %v8212, %v8211
        %v8582 = vpack.c.b16 %v8213, %v8213
        %v8583 = vpack.c.b16 %v8215, %v8214
        %v8584 = vpack.c.b16 %v8216, %v8216
        %v8585 = vpack.c.b16 %v8218, %v8217
        %v8586 = vpack.c.b16 %v8219, %v8219
        %v8587 = vpack.c.b16 %v8221, %v8220
        %v8588 = vpack.c.b16 %v8222, %v8222
        %v8589 = vpack.c.b16 %v8224, %v8223
        %v8590 = vpack.c.b16 %v8225, %v8225
        %v8591 = vpack.c.b16 %v8227, %v8226
        %v8592 = vpack.c.b16 %v8228, %v8228
        %v8593 = vpack.c.b16 %v8230, %v8229
        %v8594 = vpack.c.b16 %v8231, %v8231
        %v8595 = vpack.c.b16 %v8233, %v8232
        %v8596 = vpack.c.b16 %v8234, %v8234
        %v8597 = vpack.c.b16 %v8236, %v8235
        %v8598 = vpack.c.b16 %v8237, %v8237
        %v8599 = vpack.c.b16 %v8239, %v8238
        %v8600 = vpack.c.b16 %v8240, %v8240
        %v8601 = vpack.c.b16 %v8242, %v8241
        %v8602 = vpack.c.b16 %v8243, %v8243
        %v8603 = vpack.c.b16 %v8245, %v8244
        %v8604 = vpack.c.b16 %v8246, %v8246
        %v8605 = vpack.c.b16 %v8248, %v8247
        %v8606 = vpack.c.b16 %v8249, %v8249
        %v8607 = vpack.c.b16 %v8251, %v8250
        %v8608 = vpack.c.b16 %v8252, %v8252
        %v8609 = vpack.c.b16 %v8254, %v8253
        %v8610 = vpack.c.b16 %v8255, %v8255
        %v8611 = vpack.c.b16 %v8257, %v8256
        %v8612 = vpack.c.b16 %v8258, %v8258
        %v8613 = vpack.c.b16 %v8260, %v8259
        %v8614 = vpack.c.b16 %v8261, %v8261
        %v8615 = vpack.c.b16 %v8263, %v8262
        %v8616 = vpack.c.b16 %v8264, %v8264
        %v8617 = vpack.c.b16 %v8266, %v8265
        %v8618 = vpack.c.b16 %v8267, %v8267
        %v8619 = vpack.c.b16 %v8269, %v8268
        %v8620 = vpack.c.b16 %v8270, %v8270
        %v8621 = vpack.c.b16 %v8272, %v8271
        %v8622 = vpack.c.b16 %v8273, %v8273
        %v8623 = vpack.c.b16 %v8275, %v8274
        %v8624 = vpack.c.b16 %v8276, %v8276
        %v8625 = vpack.c.b16 %v8278, %v8277
        %v8626 = vpack.c.b16 %v8279, %v8279
        %v8627 = vpack.c.b16 %v8281, %v8280
        %v8628 = vpack.c.b16 %v8282, %v8282
        %v8629 = vpack.c.b16 %v8284, %v8283
        %v8630 = vpack.c.b16 %v8285, %v8285
        %v8631 = vpack.c.b16 %v8287, %v8286
        %v8632 = vpack.c.b16 %v8288, %v8288
        %v8633 = vpack.c.b16 %v8290, %v8289
        %v8634 = vpack.c.b16 %v8291, %v8291
        %v8635 = vpack.c.b16 %v8293, %v8292
        %v8636 = vpack.c.b16 %v8294, %v8294
        %v8637 = vpack.c.b16 %v8296, %v8295
        %v8638 = vpack.c.b16 %v8297, %v8297
        %v8639 = vpack.c.b16 %v8299, %v8298
        %v8640 = vpack.c.b16 %v8300, %v8300
        %v8641 = vpack.c.b16 %v8302, %v8301
        %v8642 = vpack.c.b16 %v8303, %v8303
        %v8643 = vpack.c.b16 %v8305, %v8304
        %v8644 = vpack.c.b16 %v8306, %v8306
        %v8645 = vpack.c.b16 %v8308, %v8307
        %v8646 = vpack.c.b16 %v8309, %v8309
        %v8647 = vpack.c.b16 %v8311, %v8310
        %v8648 = vpack.c.b16 %v8312, %v8312
        %v8649 = vpack.c.b16 %v8314, %v8313
        %v8650 = vpack.c.b16 %v8315, %v8315
        %v8651 = vpack.c.b16 %v8317, %v8316
        %v8652 = vpack.c.b16 %v8318, %v8318
        %v8653 = vpack.c.b16 %v8320, %v8319
        %v8654 = vpack.c.b16 %v8321, %v8321
        %v8655 = vpack.c.b16 %v8323, %v8322
        %v8656 = vpack.c.b16 %v8324, %v8324
        %v8657 = vpack.c.b16 %v8326, %v8325
        %v8658 = vpack.c.b16 %v8327, %v8327
        %v8659 = vpack.c.b16 %v8329, %v8328
        %v8660 = vpack.c.b16 %v8330, %v8330
        %v8661 = vpack.c.b16 %v8332, %v8331
        %v8662 = vpack.c.b16 %v8333, %v8333
        %v8663 = vpack.c.b16 %v8335, %v8334
        %v8664 = vpack.c.b16 %v8336, %v8336
        %v8665 = vpack.c.b16 %v8338, %v8337
        %v8666 = vpack.c.b16 %v8339, %v8339
        %v8667 = vpack.c.b16 %v8341, %v8340
        %v8668 = vpack.c.b16 %v8342, %v8342
        %v8669 = vpack.c.b16 %v8344, %v8343
        %v8670 = vpack.c.b16 %v8345, %v8345
        %v8671 = vpack.c.b16 %v8347, %v8346
        %v8672 = vpack.c.b16 %v8348, %v8348
        %v8673 = vpack.c.b16 %v8350, %v8349
        %v8674 = vpack.c.b16 %v8351, %v8351
        %v8675 = vpack.c.b16 %v8353, %v8352
        %v8676 = vpack.c.b16 %v8354, %v8354
        %v8677 = vpack.c.b16 %v8356, %v8355
        %v8678 = vpack.c.b16 %v8357, %v8357
        %v8679 = vpack.c.b16 %v8359, %v8358
        %v8680 = vpack.c.b16 %v8360, %v8360
        %v8681 = vpack.c.b16 %v8362, %v8361
        %v8682 = vpack.c.b16 %v8363, %v8363
        %v8683 = vpack.c.b16 %v8365, %v8364
        %v8684 = vpack.c.b16 %v8366, %v8366
        %v8685 = vpack.c.b16 %v8368, %v8367
        %v8686 = vpack.c.b16 %v8369, %v8369
        %v8687 = vpack.c.b16 %v8371, %v8370
        %v8688 = vpack.c.b16 %v8372, %v8372
        %v8689 = vpack.c.b16 %v8374, %v8373
        %v8690 = vpack.c.b16 %v8375, %v8375
        %v8691 = vpack.c.b16 %v8377, %v8376
        %v8692 = vpack.c.b16 %v8378, %v8378
        %v8693 = vpack.c.b16 %v8380, %v8379
        %v8694 = vpack.c.b16 %v8381, %v8381
        %v8695 = vpack.c.b16 %v8383, %v8382
        %v8696 = vpack.c.b16 %v8384, %v8384
        %v8697 = vpack.c.b16 %v8386, %v8385
        %v8698 = vpack.c.b16 %v8387, %v8387
        %v8699 = vpack.c.b16 %v8389, %v8388
        %v8700 = vpack.c.b16 %v8390, %v8390
        %v8701 = vpack.c.b16 %v8392, %v8391
        %v8702 = vpack.c.b16 %v8393, %v8393
        %v8703 = vpack.c.b16 %v8395, %v8394
        %v8704 = vpack.c.b16 %v8396, %v8396
        %v8705 = vpack.c.b16 %v8398, %v8397
        %v8706 = vpack.c.b16 %v8399, %v8399
        %v8707 = vpack.c.b16 %v8401, %v8400
        %v8708 = vpack.c.b16 %v8402, %v8402
        %v8709 = vpack.c.b16 %v8404, %v8403
        %v8710 = vpack.c.b16 %v8405, %v8405
        %v8711 = vpack.c.b16 %v8407, %v8406
        %v8712 = vpack.c.b16 %v8408, %v8408
        %v8713 = vpack.c.b16 %v8410, %v8409
        %v8714 = vpack.c.b16 %v8411, %v8411
        %v8715 = vpack.c.b16 %v8413, %v8412
        %v8716 = vpack.c.b16 %v8414, %v8414
        %v8717 = vpack.c.b16 %v8416, %v8415
        %v8718 = vpack.c.b16 %v8417, %v8417
        %v8719 = vpack.c.b16 %v8419, %v8418
        %v8720 = vpack.c.b16 %v8420, %v8420
        %v8721 = vpack.c.b16 %v8422, %v8421
        %v8722 = vpack.c.b16 %v8423, %v8423
        %v8723 = vpack.c.b16 %v8425, %v8424
        %v8724 = vpack.c.b16 %v8426, %v8426
        %v8725 = vpack.c.b16 %v8428, %v8427
        %v8726 = vpack.c.b16 %v8429, %v8429
        %v8727 = vpack.c.b16 %v8431, %v8430
        %v8728 = vpack.c.b16 %v8432, %v8432
        %v8729 = vpack.c.b16 %v8434, %v8433
        %v8730 = vpack.c.b16 %v8435, %v8435
        %v8731 = vpack.c.b16 %v8437, %v8436
        %v8732 = vpack.c.b16 %v8438, %v8438
        %v8733 = vpack.c.b16 %v8440, %v8439
        %v8734 = vpack.c.b16 %v8441, %v8441
        %v8735 = vpack.c.b16 %v8443, %v8442
        %v8736 = vpack.c.b16 %v8444, %v8444
        %v8737 = vpack.c.b16 %v8446, %v8445
        %v8738 = vpack.c.b16 %v8447, %v8447
        %v8739 = vpack.c.b16 %v8449, %v8448
        %v8740 = vpack.c.b16 %v8450, %v8450
        %v8741 = vpack.c.b16 %v8452, %v8451
        %v8742 = vpack.c.b16 %v8453, %v8453
        %v8743 = vpack.c.b16 %v8455, %v8454
        %v8744 = vpack.c.b16 %v8456, %v8456
        %v8745 = vpack.c.b16 %v8458, %v8457
        %v8746 = vpack.c.b16 %v8459, %v8459
        %v8747 = vpack.c.b16 %v8461, %v8460
        %v8748 = vpack.c.b16 %v8462, %v8462
        %v8749 = vpack.c.b16 %v8464, %v8463
        %v8750 = vpack.c.b16 %v8465, %v8465
        %v8751 = vpack.c.b16 %v8467, %v8466
        %v8752 = vpack.c.b16 %v8468, %v8468
        %v8753 = vpack.c.b16 %v8470, %v8469
        %v8754 = vpack.c.b16 %v8471, %v8471
        %v8755 = vpack.c.b16 %v8473, %v8472
        %v8756 = vpack.c.b16 %v8474, %v8474
        %v8757 = vpack.c.b16 %v8476, %v8475
        %v8758 = vpack.c.b16 %v8477, %v8477
        %v8759 = vpack.c.b16 %v8479, %v8478
        %v8760 = vpack.c.b16 %v8480, %v8480
        %v8761 = vpack.c.b16 %v8482, %v8481
        %v8762 = vpack.c.b16 %v8483, %v8483
        %v8763 = vpack.c.b16 %v8485, %v8484
        %v8764 = vpack.c.b16 %v8486, %v8486
        %v8765 = vpack.c.b16 %v8488, %v8487
        %v8766 = vpack.c.b16 %v8489, %v8489
        %v8767 = vpack.c.b16 %v8491, %v8490
        %v8768 = vpack.c.b16 %v8492, %v8492
        %v8769 = vpack.c.b16 %v8494, %v8493
        %v8770 = vpack.c.b16 %v8495, %v8495
        %v8771 = vpack.c.b16 %v8497, %v8496
        %v8772 = vpack.c.b16 %v8498, %v8498
        %v8773 = vpack.c.b16 %v8500, %v8499
        %v8774 = vpack.c.b16 %v8501, %v8501
        %v8775 = vpack.c.b16 %v8503, %v8502
        %v8776 = vpack.c.b16 %v8504, %v8504
        %v8777 = vpack.c.b16 %v8506, %v8505
        %v8778 = vpack.c.b16 %v8507, %v8507
        %v8779 = vpack.c.b16 %v8509, %v8508
        %v8780 = vpack.c.b16 %v8510, %v8510
        %v8781 = vpack.c.b16 %v8512, %v8511
        %v8782 = vpack.c.b16 %v8513, %v8513
        %v8783 = vpack.c.b16 %v8515, %v8514
        %v8784 = vpack.c.b16 %v8516, %v8516
        %v8785 = vpack.c.b16 %v8518, %v8517
        %v8786 = vpack.c.b16 %v8519, %v8519
        %v8787 = vpack.c.b16 %v8521, %v8520
        %v8788 = vpack.c.b16 %v8522, %v8522
        %v8789 = vpack.c.b16 %v8524, %v8523
        %v8790 = vpack.c.b16 %v8525, %v8525
        %v8791 = vpack.c.b16 %v8527, %v8526
        %v8792 = vpack.c.b16 %v8528, %v8528
        %v8793 = vpack.c.b16 %v8530, %v8529
        %v8794 = vpack.c.b16 %v8531, %v8531
        %v8795 = vpack.c.b16 %v8533, %v8532
        %v8796 = vpack.c.b16 %v8534, %v8534
        %v8797 = vpack.c.b16 %v8536, %v8535
        %v8798 = vpack.c.b16 %v8537, %v8537
        %v8799 = vpack.c.b16 %v8539, %v8538
        %v8800 = vpack.c.b16 %v8540, %v8540
        %v8801 = vpack.c.b16 %v8542, %v8541
        %v8802 = vpack.c.b16 %v8543, %v8543
        %v8803 = vpack.c.b16 %v8545, %v8544
        %v8804 = vpack.c.b16 %v8546, %v8546
        %v8805 = vpack.c.b16 %v8548, %v8547
        %v8806 = vpack.c.b16 %v8549, %v8549
        %v8807 = vpack.c.b16 %v8551, %v8550
        %v8808 = vpack.c.b16 %v8552, %v8552
        %9065 = vst [vmem:[%s425] sm:$0xff] %v8553
        %vm9066 = vcmask 519168
        %9067 = vst.msk [vmem:[%s425 + $0x8] sm:$0xf] %vm9066, %v8554
        %9068 = vst [vmem:[%s425 + $0xc] sm:$0xff] %v8555
        %9069 = vst.msk [vmem:[%s425 + $0x14] sm:$0xf] %vm9066, %v8556
        %9070 = vst [vmem:[%s425 + $0x18] sm:$0xff] %v8557
        %9071 = vst.msk [vmem:[%s425 + $0x20] sm:$0xf] %vm9066, %v8558
        %9072 = vst [vmem:[%s425 + $0x24] sm:$0xff] %v8559
        %9073 = vst.msk [vmem:[%s425 + $0x2c] sm:$0xf] %vm9066, %v8560
        %9074 = vst [vmem:[%s425 + $0x30] sm:$0xff] %v8561
        %9075 = vst.msk [vmem:[%s425 + $0x38] sm:$0xf] %vm9066, %v8562
        %9076 = vst [vmem:[%s425 + $0x3c] sm:$0xff] %v8563
        %9077 = vst.msk [vmem:[%s425 + $0x44] sm:$0xf] %vm9066, %v8564
        %9078 = vst [vmem:[%s425 + $0x48] sm:$0xff] %v8565
        %9079 = vst.msk [vmem:[%s425 + $0x50] sm:$0xf] %vm9066, %v8566
        %9080 = vst [vmem:[%s425 + $0x54] sm:$0xff] %v8567
        %9081 = vst.msk [vmem:[%s425 + $0x5c] sm:$0xf] %vm9066, %v8568
        %9082 = vst [vmem:[%s425 + $0x60] sm:$0xff] %v8569
        %9083 = vst.msk [vmem:[%s425 + $0x68] sm:$0xf] %vm9066, %v8570
        %9084 = vst [vmem:[%s425 + $0x6c] sm:$0xff] %v8571
        %9085 = vst.msk [vmem:[%s425 + $0x74] sm:$0xf] %vm9066, %v8572
        %9086 = vst [vmem:[%s425 + $0x78] sm:$0xff] %v8573
        %9087 = vst.msk [vmem:[%s425 + $0x80] sm:$0xf] %vm9066, %v8574
        %9088 = vst [vmem:[%s425 + $0x84] sm:$0xff] %v8575
        %9089 = vst.msk [vmem:[%s425 + $0x8c] sm:$0xf] %vm9066, %v8576
        %9090 = vst [vmem:[%s425 + $0x90] sm:$0xff] %v8577
        %9091 = vst.msk [vmem:[%s425 + $0x98] sm:$0xf] %vm9066, %v8578
        %9092 = vst [vmem:[%s425 + $0x9c] sm:$0xff] %v8579
        %9093 = vst.msk [vmem:[%s425 + $0xa4] sm:$0xf] %vm9066, %v8580
        %9094 = vst [vmem:[%s425 + $0xa8] sm:$0xff] %v8581
        %9095 = vst.msk [vmem:[%s425 + $0xb0] sm:$0xf] %vm9066, %v8582
        %9096 = vst [vmem:[%s425 + $0xb4] sm:$0xff] %v8583
        %9097 = vst.msk [vmem:[%s425 + $0xbc] sm:$0xf] %vm9066, %v8584
        %9098 = vst [vmem:[%s425 + $0xc0] sm:$0xff] %v8585
        %9099 = vst.msk [vmem:[%s425 + $0xc8] sm:$0xf] %vm9066, %v8586
        %9100 = vst [vmem:[%s425 + $0xcc] sm:$0xff] %v8587
        %9101 = vst.msk [vmem:[%s425 + $0xd4] sm:$0xf] %vm9066, %v8588
        %9102 = vst [vmem:[%s425 + $0xd8] sm:$0xff] %v8589
        %9103 = vst.msk [vmem:[%s425 + $0xe0] sm:$0xf] %vm9066, %v8590
        %9104 = vst [vmem:[%s425 + $0xe4] sm:$0xff] %v8591
        %9105 = vst.msk [vmem:[%s425 + $0xec] sm:$0xf] %vm9066, %v8592
        %9106 = vst [vmem:[%s425 + $0xf0] sm:$0xff] %v8593
        %9107 = vst.msk [vmem:[%s425 + $0xf8] sm:$0xf] %vm9066, %v8594
        %9108 = vst [vmem:[%s425 + $0xfc] sm:$0xff] %v8595
        %9109 = vst.msk [vmem:[%s425 + $0x104] sm:$0xf] %vm9066, %v8596
        %9110 = vst [vmem:[%s425 + $0x108] sm:$0xff] %v8597
        %9111 = vst.msk [vmem:[%s425 + $0x110] sm:$0xf] %vm9066, %v8598
        %9112 = vst [vmem:[%s425 + $0x114] sm:$0xff] %v8599
        %9113 = vst.msk [vmem:[%s425 + $0x11c] sm:$0xf] %vm9066, %v8600
        %9114 = vst [vmem:[%s425 + $0x120] sm:$0xff] %v8601
        %9115 = vst.msk [vmem:[%s425 + $0x128] sm:$0xf] %vm9066, %v8602
        %9116 = vst [vmem:[%s425 + $0x12c] sm:$0xff] %v8603
        %9117 = vst.msk [vmem:[%s425 + $0x134] sm:$0xf] %vm9066, %v8604
        %9118 = vst [vmem:[%s425 + $0x138] sm:$0xff] %v8605
        %9119 = vst.msk [vmem:[%s425 + $0x140] sm:$0xf] %vm9066, %v8606
        %9120 = vst [vmem:[%s425 + $0x144] sm:$0xff] %v8607
        %9121 = vst.msk [vmem:[%s425 + $0x14c] sm:$0xf] %vm9066, %v8608
        %9122 = vst [vmem:[%s425 + $0x150] sm:$0xff] %v8609
        %9123 = vst.msk [vmem:[%s425 + $0x158] sm:$0xf] %vm9066, %v8610
        %9124 = vst [vmem:[%s425 + $0x15c] sm:$0xff] %v8611
        %9125 = vst.msk [vmem:[%s425 + $0x164] sm:$0xf] %vm9066, %v8612
        %9126 = vst [vmem:[%s425 + $0x168] sm:$0xff] %v8613
        %9127 = vst.msk [vmem:[%s425 + $0x170] sm:$0xf] %vm9066, %v8614
        %9128 = vst [vmem:[%s425 + $0x174] sm:$0xff] %v8615
        %9129 = vst.msk [vmem:[%s425 + $0x17c] sm:$0xf] %vm9066, %v8616
        %9130 = vst [vmem:[%s425 + $0x180] sm:$0xff] %v8617
        %9131 = vst.msk [vmem:[%s425 + $0x188] sm:$0xf] %vm9066, %v8618
        %9132 = vst [vmem:[%s425 + $0x18c] sm:$0xff] %v8619
        %9133 = vst.msk [vmem:[%s425 + $0x194] sm:$0xf] %vm9066, %v8620
        %9134 = vst [vmem:[%s425 + $0x198] sm:$0xff] %v8621
        %9135 = vst.msk [vmem:[%s425 + $0x1a0] sm:$0xf] %vm9066, %v8622
        %9136 = vst [vmem:[%s425 + $0x1a4] sm:$0xff] %v8623
        %9137 = vst.msk [vmem:[%s425 + $0x1ac] sm:$0xf] %vm9066, %v8624
        %9138 = vst [vmem:[%s425 + $0x1b0] sm:$0xff] %v8625
        %9139 = vst.msk [vmem:[%s425 + $0x1b8] sm:$0xf] %vm9066, %v8626
        %9140 = vst [vmem:[%s425 + $0x1bc] sm:$0xff] %v8627
        %9141 = vst.msk [vmem:[%s425 + $0x1c4] sm:$0xf] %vm9066, %v8628
        %9142 = vst [vmem:[%s425 + $0x1c8] sm:$0xff] %v8629
        %9143 = vst.msk [vmem:[%s425 + $0x1d0] sm:$0xf] %vm9066, %v8630
        %9144 = vst [vmem:[%s425 + $0x1d4] sm:$0xff] %v8631
        %9145 = vst.msk [vmem:[%s425 + $0x1dc] sm:$0xf] %vm9066, %v8632
        %9146 = vst [vmem:[%s425 + $0x1e0] sm:$0xff] %v8633
        %9147 = vst.msk [vmem:[%s425 + $0x1e8] sm:$0xf] %vm9066, %v8634
        %9148 = vst [vmem:[%s425 + $0x1ec] sm:$0xff] %v8635
        %9149 = vst.msk [vmem:[%s425 + $0x1f4] sm:$0xf] %vm9066, %v8636
        %9150 = vst [vmem:[%s425 + $0x1f8] sm:$0xff] %v8637
        %9151 = vst.msk [vmem:[%s425 + $0x200] sm:$0xf] %vm9066, %v8638
        %9152 = vst [vmem:[%s425 + $0x204] sm:$0xff] %v8639
        %9153 = vst.msk [vmem:[%s425 + $0x20c] sm:$0xf] %vm9066, %v8640
        %9154 = vst [vmem:[%s425 + $0x210] sm:$0xff] %v8641
        %9155 = vst.msk [vmem:[%s425 + $0x218] sm:$0xf] %vm9066, %v8642
        %9156 = vst [vmem:[%s425 + $0x21c] sm:$0xff] %v8643
        %9157 = vst.msk [vmem:[%s425 + $0x224] sm:$0xf] %vm9066, %v8644
        %9158 = vst [vmem:[%s425 + $0x228] sm:$0xff] %v8645
        %9159 = vst.msk [vmem:[%s425 + $0x230] sm:$0xf] %vm9066, %v8646
        %9160 = vst [vmem:[%s425 + $0x234] sm:$0xff] %v8647
        %9161 = vst.msk [vmem:[%s425 + $0x23c] sm:$0xf] %vm9066, %v8648
        %9162 = vst [vmem:[%s425 + $0x240] sm:$0xff] %v8649
        %9163 = vst.msk [vmem:[%s425 + $0x248] sm:$0xf] %vm9066, %v8650
        %9164 = vst [vmem:[%s425 + $0x24c] sm:$0xff] %v8651
        %9165 = vst.msk [vmem:[%s425 + $0x254] sm:$0xf] %vm9066, %v8652
        %9166 = vst [vmem:[%s425 + $0x258] sm:$0xff] %v8653
        %9167 = vst.msk [vmem:[%s425 + $0x260] sm:$0xf] %vm9066, %v8654
        %9168 = vst [vmem:[%s425 + $0x264] sm:$0xff] %v8655
        %9169 = vst.msk [vmem:[%s425 + $0x26c] sm:$0xf] %vm9066, %v8656
        %9170 = vst [vmem:[%s425 + $0x270] sm:$0xff] %v8657
        %9171 = vst.msk [vmem:[%s425 + $0x278] sm:$0xf] %vm9066, %v8658
        %9172 = vst [vmem:[%s425 + $0x27c] sm:$0xff] %v8659
        %9173 = vst.msk [vmem:[%s425 + $0x284] sm:$0xf] %vm9066, %v8660
        %9174 = vst [vmem:[%s425 + $0x288] sm:$0xff] %v8661
        %9175 = vst.msk [vmem:[%s425 + $0x290] sm:$0xf] %vm9066, %v8662
        %9176 = vst [vmem:[%s425 + $0x294] sm:$0xff] %v8663
        %9177 = vst.msk [vmem:[%s425 + $0x29c] sm:$0xf] %vm9066, %v8664
        %9178 = vst [vmem:[%s425 + $0x2a0] sm:$0xff] %v8665
        %9179 = vst.msk [vmem:[%s425 + $0x2a8] sm:$0xf] %vm9066, %v8666
        %9180 = vst [vmem:[%s425 + $0x2ac] sm:$0xff] %v8667
        %9181 = vst.msk [vmem:[%s425 + $0x2b4] sm:$0xf] %vm9066, %v8668
        %9182 = vst [vmem:[%s425 + $0x2b8] sm:$0xff] %v8669
        %9183 = vst.msk [vmem:[%s425 + $0x2c0] sm:$0xf] %vm9066, %v8670
        %9184 = vst [vmem:[%s425 + $0x2c4] sm:$0xff] %v8671
        %9185 = vst.msk [vmem:[%s425 + $0x2cc] sm:$0xf] %vm9066, %v8672
        %9186 = vst [vmem:[%s425 + $0x2d0] sm:$0xff] %v8673
        %9187 = vst.msk [vmem:[%s425 + $0x2d8] sm:$0xf] %vm9066, %v8674
        %9188 = vst [vmem:[%s425 + $0x2dc] sm:$0xff] %v8675
        %9189 = vst.msk [vmem:[%s425 + $0x2e4] sm:$0xf] %vm9066, %v8676
        %9190 = vst [vmem:[%s425 + $0x2e8] sm:$0xff] %v8677
        %9191 = vst.msk [vmem:[%s425 + $0x2f0] sm:$0xf] %vm9066, %v8678
        %9192 = vst [vmem:[%s425 + $0x2f4] sm:$0xff] %v8679
        %9193 = vst.msk [vmem:[%s425 + $0x2fc] sm:$0xf] %vm9066, %v8680
        %9194 = vst [vmem:[%s425 + $0x300] sm:$0xff] %v8681
        %9195 = vst.msk [vmem:[%s425 + $0x308] sm:$0xf] %vm9066, %v8682
        %9196 = vst [vmem:[%s425 + $0x30c] sm:$0xff] %v8683
        %9197 = vst.msk [vmem:[%s425 + $0x314] sm:$0xf] %vm9066, %v8684
        %9198 = vst [vmem:[%s425 + $0x318] sm:$0xff] %v8685
        %9199 = vst.msk [vmem:[%s425 + $0x320] sm:$0xf] %vm9066, %v8686
        %9200 = vst [vmem:[%s425 + $0x324] sm:$0xff] %v8687
        %9201 = vst.msk [vmem:[%s425 + $0x32c] sm:$0xf] %vm9066, %v8688
        %9202 = vst [vmem:[%s425 + $0x330] sm:$0xff] %v8689
        %9203 = vst.msk [vmem:[%s425 + $0x338] sm:$0xf] %vm9066, %v8690
        %9204 = vst [vmem:[%s425 + $0x33c] sm:$0xff] %v8691
        %9205 = vst.msk [vmem:[%s425 + $0x344] sm:$0xf] %vm9066, %v8692
        %9206 = vst [vmem:[%s425 + $0x348] sm:$0xff] %v8693
        %9207 = vst.msk [vmem:[%s425 + $0x350] sm:$0xf] %vm9066, %v8694
        %9208 = vst [vmem:[%s425 + $0x354] sm:$0xff] %v8695
        %9209 = vst.msk [vmem:[%s425 + $0x35c] sm:$0xf] %vm9066, %v8696
        %9210 = vst [vmem:[%s425 + $0x360] sm:$0xff] %v8697
        %9211 = vst.msk [vmem:[%s425 + $0x368] sm:$0xf] %vm9066, %v8698
        %9212 = vst [vmem:[%s425 + $0x36c] sm:$0xff] %v8699
        %9213 = vst.msk [vmem:[%s425 + $0x374] sm:$0xf] %vm9066, %v8700
        %9214 = vst [vmem:[%s425 + $0x378] sm:$0xff] %v8701
        %9215 = vst.msk [vmem:[%s425 + $0x380] sm:$0xf] %vm9066, %v8702
        %9216 = vst [vmem:[%s425 + $0x384] sm:$0xff] %v8703
        %9217 = vst.msk [vmem:[%s425 + $0x38c] sm:$0xf] %vm9066, %v8704
        %9218 = vst [vmem:[%s425 + $0x390] sm:$0xff] %v8705
        %9219 = vst.msk [vmem:[%s425 + $0x398] sm:$0xf] %vm9066, %v8706
        %9220 = vst [vmem:[%s425 + $0x39c] sm:$0xff] %v8707
        %9221 = vst.msk [vmem:[%s425 + $0x3a4] sm:$0xf] %vm9066, %v8708
        %9222 = vst [vmem:[%s425 + $0x3a8] sm:$0xff] %v8709
        %9223 = vst.msk [vmem:[%s425 + $0x3b0] sm:$0xf] %vm9066, %v8710
        %9224 = vst [vmem:[%s425 + $0x3b4] sm:$0xff] %v8711
        %9225 = vst.msk [vmem:[%s425 + $0x3bc] sm:$0xf] %vm9066, %v8712
        %9226 = vst [vmem:[%s425 + $0x3c0] sm:$0xff] %v8713
        %9227 = vst.msk [vmem:[%s425 + $0x3c8] sm:$0xf] %vm9066, %v8714
        %9228 = vst [vmem:[%s425 + $0x3cc] sm:$0xff] %v8715
        %9229 = vst.msk [vmem:[%s425 + $0x3d4] sm:$0xf] %vm9066, %v8716
        %9230 = vst [vmem:[%s425 + $0x3d8] sm:$0xff] %v8717
        %9231 = vst.msk [vmem:[%s425 + $0x3e0] sm:$0xf] %vm9066, %v8718
        %9232 = vst [vmem:[%s425 + $0x3e4] sm:$0xff] %v8719
        %9233 = vst.msk [vmem:[%s425 + $0x3ec] sm:$0xf] %vm9066, %v8720
        %9234 = vst [vmem:[%s425 + $0x3f0] sm:$0xff] %v8721
        %9235 = vst.msk [vmem:[%s425 + $0x3f8] sm:$0xf] %vm9066, %v8722
        %9236 = vst [vmem:[%s425 + $0x3fc] sm:$0xff] %v8723
        %9237 = vst.msk [vmem:[%s425 + $0x404] sm:$0xf] %vm9066, %v8724
        %9238 = vst [vmem:[%s425 + $0x408] sm:$0xff] %v8725
        %9239 = vst.msk [vmem:[%s425 + $0x410] sm:$0xf] %vm9066, %v8726
        %9240 = vst [vmem:[%s425 + $0x414] sm:$0xff] %v8727
        %9241 = vst.msk [vmem:[%s425 + $0x41c] sm:$0xf] %vm9066, %v8728
        %9242 = vst [vmem:[%s425 + $0x420] sm:$0xff] %v8729
        %9243 = vst.msk [vmem:[%s425 + $0x428] sm:$0xf] %vm9066, %v8730
        %9244 = vst [vmem:[%s425 + $0x42c] sm:$0xff] %v8731
        %9245 = vst.msk [vmem:[%s425 + $0x434] sm:$0xf] %vm9066, %v8732
        %9246 = vst [vmem:[%s425 + $0x438] sm:$0xff] %v8733
        %9247 = vst.msk [vmem:[%s425 + $0x440] sm:$0xf] %vm9066, %v8734
        %9248 = vst [vmem:[%s425 + $0x444] sm:$0xff] %v8735
        %9249 = vst.msk [vmem:[%s425 + $0x44c] sm:$0xf] %vm9066, %v8736
        %9250 = vst [vmem:[%s425 + $0x450] sm:$0xff] %v8737
        %9251 = vst.msk [vmem:[%s425 + $0x458] sm:$0xf] %vm9066, %v8738
        %9252 = vst [vmem:[%s425 + $0x45c] sm:$0xff] %v8739
        %9253 = vst.msk [vmem:[%s425 + $0x464] sm:$0xf] %vm9066, %v8740
        %9254 = vst [vmem:[%s425 + $0x468] sm:$0xff] %v8741
        %9255 = vst.msk [vmem:[%s425 + $0x470] sm:$0xf] %vm9066, %v8742
        %9256 = vst [vmem:[%s425 + $0x474] sm:$0xff] %v8743
        %9257 = vst.msk [vmem:[%s425 + $0x47c] sm:$0xf] %vm9066, %v8744
        %9258 = vst [vmem:[%s425 + $0x480] sm:$0xff] %v8745
        %9259 = vst.msk [vmem:[%s425 + $0x488] sm:$0xf] %vm9066, %v8746
        %9260 = vst [vmem:[%s425 + $0x48c] sm:$0xff] %v8747
        %9261 = vst.msk [vmem:[%s425 + $0x494] sm:$0xf] %vm9066, %v8748
        %9262 = vst [vmem:[%s425 + $0x498] sm:$0xff] %v8749
        %9263 = vst.msk [vmem:[%s425 + $0x4a0] sm:$0xf] %vm9066, %v8750
        %9264 = vst [vmem:[%s425 + $0x4a4] sm:$0xff] %v8751
        %9265 = vst.msk [vmem:[%s425 + $0x4ac] sm:$0xf] %vm9066, %v8752
        %9266 = vst [vmem:[%s425 + $0x4b0] sm:$0xff] %v8753
        %9267 = vst.msk [vmem:[%s425 + $0x4b8] sm:$0xf] %vm9066, %v8754
        %9268 = vst [vmem:[%s425 + $0x4bc] sm:$0xff] %v8755
        %9269 = vst.msk [vmem:[%s425 + $0x4c4] sm:$0xf] %vm9066, %v8756
        %9270 = vst [vmem:[%s425 + $0x4c8] sm:$0xff] %v8757
        %9271 = vst.msk [vmem:[%s425 + $0x4d0] sm:$0xf] %vm9066, %v8758
        %9272 = vst [vmem:[%s425 + $0x4d4] sm:$0xff] %v8759
        %9273 = vst.msk [vmem:[%s425 + $0x4dc] sm:$0xf] %vm9066, %v8760
        %9274 = vst [vmem:[%s425 + $0x4e0] sm:$0xff] %v8761
        %9275 = vst.msk [vmem:[%s425 + $0x4e8] sm:$0xf] %vm9066, %v8762
        %9276 = vst [vmem:[%s425 + $0x4ec] sm:$0xff] %v8763
        %9277 = vst.msk [vmem:[%s425 + $0x4f4] sm:$0xf] %vm9066, %v8764
        %9278 = vst [vmem:[%s425 + $0x4f8] sm:$0xff] %v8765
        %9279 = vst.msk [vmem:[%s425 + $0x500] sm:$0xf] %vm9066, %v8766
        %9280 = vst [vmem:[%s425 + $0x504] sm:$0xff] %v8767
        %9281 = vst.msk [vmem:[%s425 + $0x50c] sm:$0xf] %vm9066, %v8768
        %9282 = vst [vmem:[%s425 + $0x510] sm:$0xff] %v8769
        %9283 = vst.msk [vmem:[%s425 + $0x518] sm:$0xf] %vm9066, %v8770
        %9284 = vst [vmem:[%s425 + $0x51c] sm:$0xff] %v8771
        %9285 = vst.msk [vmem:[%s425 + $0x524] sm:$0xf] %vm9066, %v8772
        %9286 = vst [vmem:[%s425 + $0x528] sm:$0xff] %v8773
        %9287 = vst.msk [vmem:[%s425 + $0x530] sm:$0xf] %vm9066, %v8774
        %9288 = vst [vmem:[%s425 + $0x534] sm:$0xff] %v8775
        %9289 = vst.msk [vmem:[%s425 + $0x53c] sm:$0xf] %vm9066, %v8776
        %9290 = vst [vmem:[%s425 + $0x540] sm:$0xff] %v8777
        %9291 = vst.msk [vmem:[%s425 + $0x548] sm:$0xf] %vm9066, %v8778
        %9292 = vst [vmem:[%s425 + $0x54c] sm:$0xff] %v8779
        %9293 = vst.msk [vmem:[%s425 + $0x554] sm:$0xf] %vm9066, %v8780
        %9294 = vst [vmem:[%s425 + $0x558] sm:$0xff] %v8781
        %9295 = vst.msk [vmem:[%s425 + $0x560] sm:$0xf] %vm9066, %v8782
        %9296 = vst [vmem:[%s425 + $0x564] sm:$0xff] %v8783
        %9297 = vst.msk [vmem:[%s425 + $0x56c] sm:$0xf] %vm9066, %v8784
        %9298 = vst [vmem:[%s425 + $0x570] sm:$0xff] %v8785
        %9299 = vst.msk [vmem:[%s425 + $0x578] sm:$0xf] %vm9066, %v8786
        %9300 = vst [vmem:[%s425 + $0x57c] sm:$0xff] %v8787
        %9301 = vst.msk [vmem:[%s425 + $0x584] sm:$0xf] %vm9066, %v8788
        %9302 = vst [vmem:[%s425 + $0x588] sm:$0xff] %v8789
        %9303 = vst.msk [vmem:[%s425 + $0x590] sm:$0xf] %vm9066, %v8790
        %9304 = vst [vmem:[%s425 + $0x594] sm:$0xff] %v8791
        %9305 = vst.msk [vmem:[%s425 + $0x59c] sm:$0xf] %vm9066, %v8792
        %9306 = vst [vmem:[%s425 + $0x5a0] sm:$0xff] %v8793
        %9307 = vst.msk [vmem:[%s425 + $0x5a8] sm:$0xf] %vm9066, %v8794
        %9308 = vst [vmem:[%s425 + $0x5ac] sm:$0xff] %v8795
        %9309 = vst.msk [vmem:[%s425 + $0x5b4] sm:$0xf] %vm9066, %v8796
        %9310 = vst [vmem:[%s425 + $0x5b8] sm:$0xff] %v8797
        %9311 = vst.msk [vmem:[%s425 + $0x5c0] sm:$0xf] %vm9066, %v8798
        %9312 = vst [vmem:[%s425 + $0x5c4] sm:$0xff] %v8799
        %9313 = vst.msk [vmem:[%s425 + $0x5cc] sm:$0xf] %vm9066, %v8800
        %9314 = vst [vmem:[%s425 + $0x5d0] sm:$0xff] %v8801
        %9315 = vst.msk [vmem:[%s425 + $0x5d8] sm:$0xf] %vm9066, %v8802
        %9316 = vst [vmem:[%s425 + $0x5dc] sm:$0xff] %v8803
        %9317 = vst.msk [vmem:[%s425 + $0x5e4] sm:$0xf] %vm9066, %v8804
        %9318 = vst [vmem:[%s425 + $0x5e8] sm:$0xff] %v8805
        %9319 = vst.msk [vmem:[%s425 + $0x5f0] sm:$0xf] %vm9066, %v8806
        %9320 = vst [vmem:[%s425 + $0x5f4] sm:$0xff] %v8807
        %9321 = vst.msk [vmem:[%s425 + $0x5fc] sm:$0xf] %vm9066, %v8808
        %9322 = vst [vmem:[%s432] sm:$0xff] %v3440
        %9323 = vst [vmem:[%s432 + $0x8] sm:$0xff] %v3443
        %9324 = vst [vmem:[%s432 + $0x10] sm:$0xff] %v3448
        %9325 = vst [vmem:[%s432 + $0x18] sm:$0xff] %v3451
        %9326 = vst [vmem:[%s432 + $0x20] sm:$0xff] %v3456
        %9327 = vst [vmem:[%s432 + $0x28] sm:$0xff] %v3459
        %9328 = vst [vmem:[%s432 + $0x30] sm:$0xff] %v3464
        %9329 = vst [vmem:[%s432 + $0x38] sm:$0xff] %v3467
        %9330 = vst [vmem:[%s432 + $0x40] sm:$0xff] %v3472
        %9331 = vst [vmem:[%s432 + $0x48] sm:$0xff] %v3475
        %9332 = vst [vmem:[%s432 + $0x50] sm:$0xff] %v3480
        %9333 = vst [vmem:[%s432 + $0x58] sm:$0xff] %v3483
        %9334 = vst [vmem:[%s432 + $0x60] sm:$0xff] %v3488
        %9335 = vst [vmem:[%s432 + $0x68] sm:$0xff] %v3491
        %9336 = vst [vmem:[%s432 + $0x70] sm:$0xff] %v3496
        %9337 = vst [vmem:[%s432 + $0x78] sm:$0xff] %v3499
        %9338 = vst [vmem:[%s432 + $0x80] sm:$0xff] %v3504
        %9339 = vst [vmem:[%s432 + $0x88] sm:$0xff] %v3507
        %9340 = vst [vmem:[%s432 + $0x90] sm:$0xff] %v3512
        %9341 = vst [vmem:[%s432 + $0x98] sm:$0xff] %v3515
        %9342 = vst [vmem:[%s432 + $0xa0] sm:$0xff] %v3520
        %9343 = vst [vmem:[%s432 + $0xa8] sm:$0xff] %v3523
        %9344 = vst [vmem:[%s432 + $0xb0] sm:$0xff] %v3528
        %9345 = vst [vmem:[%s432 + $0xb8] sm:$0xff] %v3531
        %9346 = vst [vmem:[%s432 + $0xc0] sm:$0xff] %v3536
        %9347 = vst [vmem:[%s432 + $0xc8] sm:$0xff] %v3539
        %9348 = vst [vmem:[%s432 + $0xd0] sm:$0xff] %v3544
        %9349 = vst [vmem:[%s432 + $0xd8] sm:$0xff] %v3547
        %9350 = vst [vmem:[%s432 + $0xe0] sm:$0xff] %v3552
        %9351 = vst [vmem:[%s432 + $0xe8] sm:$0xff] %v3555
        %9352 = vst [vmem:[%s432 + $0xf0] sm:$0xff] %v3560
        %9353 = vst [vmem:[%s432 + $0xf8] sm:$0xff] %v3563
        %9354 = vst [vmem:[%s432 + $0x100] sm:$0xff] %v3568
        %9355 = vst [vmem:[%s432 + $0x108] sm:$0xff] %v3571
        %9356 = vst [vmem:[%s432 + $0x110] sm:$0xff] %v3576
        %9357 = vst [vmem:[%s432 + $0x118] sm:$0xff] %v3579
        %9358 = vst [vmem:[%s432 + $0x120] sm:$0xff] %v3584
        %9359 = vst [vmem:[%s432 + $0x128] sm:$0xff] %v3587
        %9360 = vst [vmem:[%s432 + $0x130] sm:$0xff] %v3592
        %9361 = vst [vmem:[%s432 + $0x138] sm:$0xff] %v3595
        %9362 = vst [vmem:[%s432 + $0x140] sm:$0xff] %v3600
        %9363 = vst [vmem:[%s432 + $0x148] sm:$0xff] %v3603
        %9364 = vst [vmem:[%s432 + $0x150] sm:$0xff] %v3608
        %9365 = vst [vmem:[%s432 + $0x158] sm:$0xff] %v3611
        %9366 = vst [vmem:[%s432 + $0x160] sm:$0xff] %v3616
        %9367 = vst [vmem:[%s432 + $0x168] sm:$0xff] %v3619
        %9368 = vst [vmem:[%s432 + $0x170] sm:$0xff] %v3624
        %9369 = vst [vmem:[%s432 + $0x178] sm:$0xff] %v3627
        %9370 = vst [vmem:[%s432 + $0x180] sm:$0xff] %v3632
        %9371 = vst [vmem:[%s432 + $0x188] sm:$0xff] %v3635
        %9372 = vst [vmem:[%s432 + $0x190] sm:$0xff] %v3640
        %9373 = vst [vmem:[%s432 + $0x198] sm:$0xff] %v3643
        %9374 = vst [vmem:[%s432 + $0x1a0] sm:$0xff] %v3648
        %9375 = vst [vmem:[%s432 + $0x1a8] sm:$0xff] %v3651
        %9376 = vst [vmem:[%s432 + $0x1b0] sm:$0xff] %v3656
        %9377 = vst [vmem:[%s432 + $0x1b8] sm:$0xff] %v3659
        %9378 = vst [vmem:[%s432 + $0x1c0] sm:$0xff] %v3664
        %9379 = vst [vmem:[%s432 + $0x1c8] sm:$0xff] %v3667
        %9380 = vst [vmem:[%s432 + $0x1d0] sm:$0xff] %v3672
        %9381 = vst [vmem:[%s432 + $0x1d8] sm:$0xff] %v3675
        %9382 = vst [vmem:[%s432 + $0x1e0] sm:$0xff] %v3680
        %9383 = vst [vmem:[%s432 + $0x1e8] sm:$0xff] %v3683
        %9384 = vst [vmem:[%s432 + $0x1f0] sm:$0xff] %v3688
        %9385 = vst [vmem:[%s432 + $0x1f8] sm:$0xff] %v3691
        %9386 = vst [vmem:[%s432 + $0x200] sm:$0xff] %v3696
        %9387 = vst [vmem:[%s432 + $0x208] sm:$0xff] %v3699
        %9388 = vst [vmem:[%s432 + $0x210] sm:$0xff] %v3704
        %9389 = vst [vmem:[%s432 + $0x218] sm:$0xff] %v3707
        %9390 = vst [vmem:[%s432 + $0x220] sm:$0xff] %v3712
        %9391 = vst [vmem:[%s432 + $0x228] sm:$0xff] %v3715
        %9392 = vst [vmem:[%s432 + $0x230] sm:$0xff] %v3720
        %9393 = vst [vmem:[%s432 + $0x238] sm:$0xff] %v3723
        %9394 = vst [vmem:[%s432 + $0x240] sm:$0xff] %v3728
        %9395 = vst [vmem:[%s432 + $0x248] sm:$0xff] %v3731
        %9396 = vst [vmem:[%s432 + $0x250] sm:$0xff] %v3736
        %9397 = vst [vmem:[%s432 + $0x258] sm:$0xff] %v3739
        %9398 = vst [vmem:[%s432 + $0x260] sm:$0xff] %v3744
        %9399 = vst [vmem:[%s432 + $0x268] sm:$0xff] %v3747
        %9400 = vst [vmem:[%s432 + $0x270] sm:$0xff] %v3752
        %9401 = vst [vmem:[%s432 + $0x278] sm:$0xff] %v3755
        %9402 = vst [vmem:[%s432 + $0x280] sm:$0xff] %v3760
        %9403 = vst [vmem:[%s432 + $0x288] sm:$0xff] %v3763
        %9404 = vst [vmem:[%s432 + $0x290] sm:$0xff] %v3768
        %9405 = vst [vmem:[%s432 + $0x298] sm:$0xff] %v3771
        %9406 = vst [vmem:[%s432 + $0x2a0] sm:$0xff] %v3776
        %9407 = vst [vmem:[%s432 + $0x2a8] sm:$0xff] %v3779
        %9408 = vst [vmem:[%s432 + $0x2b0] sm:$0xff] %v3784
        %9409 = vst [vmem:[%s432 + $0x2b8] sm:$0xff] %v3787
        %9410 = vst [vmem:[%s432 + $0x2c0] sm:$0xff] %v3792
        %9411 = vst [vmem:[%s432 + $0x2c8] sm:$0xff] %v3795
        %9412 = vst [vmem:[%s432 + $0x2d0] sm:$0xff] %v3800
        %9413 = vst [vmem:[%s432 + $0x2d8] sm:$0xff] %v3803
        %9414 = vst [vmem:[%s432 + $0x2e0] sm:$0xff] %v3808
        %9415 = vst [vmem:[%s432 + $0x2e8] sm:$0xff] %v3811
        %9416 = vst [vmem:[%s432 + $0x2f0] sm:$0xff] %v3816
        %9417 = vst [vmem:[%s432 + $0x2f8] sm:$0xff] %v3819
        %9418 = vst [vmem:[%s432 + $0x300] sm:$0xff] %v3824
        %9419 = vst [vmem:[%s432 + $0x308] sm:$0xff] %v3827
        %9420 = vst [vmem:[%s432 + $0x310] sm:$0xff] %v3832
        %9421 = vst [vmem:[%s432 + $0x318] sm:$0xff] %v3835
        %9422 = vst [vmem:[%s432 + $0x320] sm:$0xff] %v3840
        %9423 = vst [vmem:[%s432 + $0x328] sm:$0xff] %v3843
        %9424 = vst [vmem:[%s432 + $0x330] sm:$0xff] %v3848
        %9425 = vst [vmem:[%s432 + $0x338] sm:$0xff] %v3851
        %9426 = vst [vmem:[%s432 + $0x340] sm:$0xff] %v3856
        %9427 = vst [vmem:[%s432 + $0x348] sm:$0xff] %v3859
        %9428 = vst [vmem:[%s432 + $0x350] sm:$0xff] %v3864
        %9429 = vst [vmem:[%s432 + $0x358] sm:$0xff] %v3867
        %9430 = vst [vmem:[%s432 + $0x360] sm:$0xff] %v3872
        %9431 = vst [vmem:[%s432 + $0x368] sm:$0xff] %v3875
        %9432 = vst [vmem:[%s432 + $0x370] sm:$0xff] %v3880
        %9433 = vst [vmem:[%s432 + $0x378] sm:$0xff] %v3883
        %9434 = vst [vmem:[%s432 + $0x380] sm:$0xff] %v3888
        %9435 = vst [vmem:[%s432 + $0x388] sm:$0xff] %v3891
        %9436 = vst [vmem:[%s432 + $0x390] sm:$0xff] %v3896
        %9437 = vst [vmem:[%s432 + $0x398] sm:$0xff] %v3899
        %9438 = vst [vmem:[%s432 + $0x3a0] sm:$0xff] %v3904
        %9439 = vst [vmem:[%s432 + $0x3a8] sm:$0xff] %v3907
        %9440 = vst [vmem:[%s432 + $0x3b0] sm:$0xff] %v3912
        %9441 = vst [vmem:[%s432 + $0x3b8] sm:$0xff] %v3915
        %9442 = vst [vmem:[%s432 + $0x3c0] sm:$0xff] %v3920
        %9443 = vst [vmem:[%s432 + $0x3c8] sm:$0xff] %v3923
        %9444 = vst [vmem:[%s432 + $0x3d0] sm:$0xff] %v3928
        %9445 = vst [vmem:[%s432 + $0x3d8] sm:$0xff] %v3931
        %9446 = vst [vmem:[%s432 + $0x3e0] sm:$0xff] %v3936
        %9447 = vst [vmem:[%s432 + $0x3e8] sm:$0xff] %v3939
        %9448 = vst [vmem:[%s432 + $0x3f0] sm:$0xff] %v3944
        %9449 = vst [vmem:[%s432 + $0x3f8] sm:$0xff] %v3947
        %s9450 = sand.u32 %s254, 1
        %s9451 = sand.u32 %s254, 1
        %s9452 = smul.addr %s9451, 1536
        %s9453 = scalar_lea.vmem [#allocation2], %s9452
        %s9454 = sand.u32 %s280, 1
        %s9455 = scalar_lea.sflag [#allocation4], %s9454
        %s9456 = sand.u32 %s280, 1
        %s9457 = smul.addr %s9456, 1024
        %s9458 = scalar_lea.vmem [#allocation3], %s9457
        // Predicated region
        $region61: #{tpu_custom_call.1} parent=59 // pred_check
          %p9459 = pneg %p264
        $region62: #{tpu_custom_call.1} parent=59 // pred_check_branch
          %9461 = sbr.rel (%p9459) target = $region64
        $region63: #{tpu_custom_call.1} parent=59 // pred_region
          %s9462 = smul.u32 128, %s26
          %s9463 = ssub.s32 280, %s9462
          %p9464 = scmp.lt.s32.totalorder %s9463, 128
          %s9465 = scalar_select %p9464, %s9463, 128
          %s9466 = smul.u32 64, %s9465
          %s9467 = smul.u32 %s9466, 3
          %p9468 = scmp.ne.s32.totalorder 0, %s9467
          %s9469 = smul.addr %s9462, 3
          %s9470 = smul.addr %s9469, 4
          %s9471 = scalar_lea.vmem %s10, %s9470
          // Predicated region
          $region65: #{tpu_custom_call.1} parent=63 // pred_check
            %p9472 = pneg %p9468
          $region66: #{tpu_custom_call.1} parent=63 // pred_check_branch
            %9474 = sbr.rel (%p9472) target = $region68
          $region67: #{tpu_custom_call.1} parent=63 // pred_region
            // Predicated region
            $region69: #{tpu_custom_call.1} parent=67 // pred_check
              _
            $region70: #{tpu_custom_call.1} parent=67 // pred_check_branch
              %9476 = sbr.rel (0) target = $region72
            $region71: #{tpu_custom_call.1} parent=67 // pred_region
              %s9477 = scalar_lea.vmem %s9453, 8 [#allocation2]
              %s9478 = scalar_lea.vmem %s9471, 8
              %s9479 = sshrl.u32 %s9465, 6
              // While loop
              $region73: #{tpu_custom_call.1} parent=71 // loop_pre_header
                _
              $region74: #{tpu_custom_call.1} parent=71 // loop_header
                %s9481 = sphi 0, %s9483
                %p9482 = scmp.ge.s32.totalorder %s9481, %s9479
                %s9486 = sphi 0, %s9619
                %s9487 = sphi %s9453, %s9622
                %s9488 = sphi %s9471, %s9623
              $region75: #{tpu_custom_call.1} parent=71 // loop_header_branch
                %9485 = sbr.rel (%p9482) target = $region79
              $region76: #{tpu_custom_call.1} parent=71 // loop_body
                %v9489 = vld [vmem:[%s9487] sm:$0xff]
                %9490 = vst [vmem:[%s9488] sm:$0xff] %v9489
                %v9491 = vld [vmem:[%s9487 + $0xc] sm:$0xff]
                %9492 = vst [vmem:[%s9488 + $0xc] sm:$0xff] %v9491
                %v9493 = vld [vmem:[%s9487 + $0x18] sm:$0xff]
                %9494 = vst [vmem:[%s9488 + $0x18] sm:$0xff] %v9493
                %v9495 = vld [vmem:[%s9487 + $0x24] sm:$0xff]
                %9496 = vst [vmem:[%s9488 + $0x24] sm:$0xff] %v9495
                %v9497 = vld [vmem:[%s9487 + $0x30] sm:$0xff]
                %9498 = vst [vmem:[%s9488 + $0x30] sm:$0xff] %v9497
                %v9499 = vld [vmem:[%s9487 + $0x3c] sm:$0xff]
                %9500 = vst [vmem:[%s9488 + $0x3c] sm:$0xff] %v9499
                %v9501 = vld [vmem:[%s9487 + $0x48] sm:$0xff]
                %9502 = vst [vmem:[%s9488 + $0x48] sm:$0xff] %v9501
                %v9503 = vld [vmem:[%s9487 + $0x54] sm:$0xff]
                %9504 = vst [vmem:[%s9488 + $0x54] sm:$0xff] %v9503
                %v9505 = vld [vmem:[%s9487 + $0x60] sm:$0xff]
                %9506 = vst [vmem:[%s9488 + $0x60] sm:$0xff] %v9505
                %v9507 = vld [vmem:[%s9487 + $0x6c] sm:$0xff]
                %9508 = vst [vmem:[%s9488 + $0x6c] sm:$0xff] %v9507
                %v9509 = vld [vmem:[%s9487 + $0x78] sm:$0xff]
                %9510 = vst [vmem:[%s9488 + $0x78] sm:$0xff] %v9509
                %v9511 = vld [vmem:[%s9487 + $0x84] sm:$0xff]
                %9512 = vst [vmem:[%s9488 + $0x84] sm:$0xff] %v9511
                %v9513 = vld [vmem:[%s9487 + $0x90] sm:$0xff]
                %9514 = vst [vmem:[%s9488 + $0x90] sm:$0xff] %v9513
                %v9515 = vld [vmem:[%s9487 + $0x9c] sm:$0xff]
                %9516 = vst [vmem:[%s9488 + $0x9c] sm:$0xff] %v9515
                %v9517 = vld [vmem:[%s9487 + $0xa8] sm:$0xff]
                %9518 = vst [vmem:[%s9488 + $0xa8] sm:$0xff] %v9517
                %v9519 = vld [vmem:[%s9487 + $0xb4] sm:$0xff]
                %9520 = vst [vmem:[%s9488 + $0xb4] sm:$0xff] %v9519
                %v9521 = vld [vmem:[%s9487 + $0xc0] sm:$0xff]
                %9522 = vst [vmem:[%s9488 + $0xc0] sm:$0xff] %v9521
                %v9523 = vld [vmem:[%s9487 + $0xcc] sm:$0xff]
                %9524 = vst [vmem:[%s9488 + $0xcc] sm:$0xff] %v9523
                %v9525 = vld [vmem:[%s9487 + $0xd8] sm:$0xff]
                %9526 = vst [vmem:[%s9488 + $0xd8] sm:$0xff] %v9525
                %v9527 = vld [vmem:[%s9487 + $0xe4] sm:$0xff]
                %9528 = vst [vmem:[%s9488 + $0xe4] sm:$0xff] %v9527
                %v9529 = vld [vmem:[%s9487 + $0xf0] sm:$0xff]
                %9530 = vst [vmem:[%s9488 + $0xf0] sm:$0xff] %v9529
                %v9531 = vld [vmem:[%s9487 + $0xfc] sm:$0xff]
                %9532 = vst [vmem:[%s9488 + $0xfc] sm:$0xff] %v9531
                %v9533 = vld [vmem:[%s9487 + $0x108] sm:$0xff]
                %9534 = vst [vmem:[%s9488 + $0x108] sm:$0xff] %v9533
                %v9535 = vld [vmem:[%s9487 + $0x114] sm:$0xff]
                %9536 = vst [vmem:[%s9488 + $0x114] sm:$0xff] %v9535
                %v9537 = vld [vmem:[%s9487 + $0x120] sm:$0xff]
                %9538 = vst [vmem:[%s9488 + $0x120] sm:$0xff] %v9537
                %v9539 = vld [vmem:[%s9487 + $0x12c] sm:$0xff]
                %9540 = vst [vmem:[%s9488 + $0x12c] sm:$0xff] %v9539
                %v9541 = vld [vmem:[%s9487 + $0x138] sm:$0xff]
                %9542 = vst [vmem:[%s9488 + $0x138] sm:$0xff] %v9541
                %v9543 = vld [vmem:[%s9487 + $0x144] sm:$0xff]
                %9544 = vst [vmem:[%s9488 + $0x144] sm:$0xff] %v9543
                %v9545 = vld [vmem:[%s9487 + $0x150] sm:$0xff]
                %9546 = vst [vmem:[%s9488 + $0x150] sm:$0xff] %v9545
                %v9547 = vld [vmem:[%s9487 + $0x15c] sm:$0xff]
                %9548 = vst [vmem:[%s9488 + $0x15c] sm:$0xff] %v9547
                %v9549 = vld [vmem:[%s9487 + $0x168] sm:$0xff]
                %9550 = vst [vmem:[%s9488 + $0x168] sm:$0xff] %v9549
                %v9551 = vld [vmem:[%s9487 + $0x174] sm:$0xff]
                %9552 = vst [vmem:[%s9488 + $0x174] sm:$0xff] %v9551
                %v9553 = vld [vmem:[%s9487 + $0x180] sm:$0xff]
                %9554 = vst [vmem:[%s9488 + $0x180] sm:$0xff] %v9553
                %v9555 = vld [vmem:[%s9487 + $0x18c] sm:$0xff]
                %9556 = vst [vmem:[%s9488 + $0x18c] sm:$0xff] %v9555
                %v9557 = vld [vmem:[%s9487 + $0x198] sm:$0xff]
                %9558 = vst [vmem:[%s9488 + $0x198] sm:$0xff] %v9557
                %v9559 = vld [vmem:[%s9487 + $0x1a4] sm:$0xff]
                %9560 = vst [vmem:[%s9488 + $0x1a4] sm:$0xff] %v9559
                %v9561 = vld [vmem:[%s9487 + $0x1b0] sm:$0xff]
                %9562 = vst [vmem:[%s9488 + $0x1b0] sm:$0xff] %v9561
                %v9563 = vld [vmem:[%s9487 + $0x1bc] sm:$0xff]
                %9564 = vst [vmem:[%s9488 + $0x1bc] sm:$0xff] %v9563
                %v9565 = vld [vmem:[%s9487 + $0x1c8] sm:$0xff]
                %9566 = vst [vmem:[%s9488 + $0x1c8] sm:$0xff] %v9565
                %v9567 = vld [vmem:[%s9487 + $0x1d4] sm:$0xff]
                %9568 = vst [vmem:[%s9488 + $0x1d4] sm:$0xff] %v9567
                %v9569 = vld [vmem:[%s9487 + $0x1e0] sm:$0xff]
                %9570 = vst [vmem:[%s9488 + $0x1e0] sm:$0xff] %v9569
                %v9571 = vld [vmem:[%s9487 + $0x1ec] sm:$0xff]
                %9572 = vst [vmem:[%s9488 + $0x1ec] sm:$0xff] %v9571
                %v9573 = vld [vmem:[%s9487 + $0x1f8] sm:$0xff]
                %9574 = vst [vmem:[%s9488 + $0x1f8] sm:$0xff] %v9573
                %v9575 = vld [vmem:[%s9487 + $0x204] sm:$0xff]
                %9576 = vst [vmem:[%s9488 + $0x204] sm:$0xff] %v9575
                %v9577 = vld [vmem:[%s9487 + $0x210] sm:$0xff]
                %9578 = vst [vmem:[%s9488 + $0x210] sm:$0xff] %v9577
                %v9579 = vld [vmem:[%s9487 + $0x21c] sm:$0xff]
                %9580 = vst [vmem:[%s9488 + $0x21c] sm:$0xff] %v9579
                %v9581 = vld [vmem:[%s9487 + $0x228] sm:$0xff]
                %9582 = vst [vmem:[%s9488 + $0x228] sm:$0xff] %v9581
                %v9583 = vld [vmem:[%s9487 + $0x234] sm:$0xff]
                %9584 = vst [vmem:[%s9488 + $0x234] sm:$0xff] %v9583
                %v9585 = vld [vmem:[%s9487 + $0x240] sm:$0xff]
                %9586 = vst [vmem:[%s9488 + $0x240] sm:$0xff] %v9585
                %v9587 = vld [vmem:[%s9487 + $0x24c] sm:$0xff]
                %9588 = vst [vmem:[%s9488 + $0x24c] sm:$0xff] %v9587
                %v9589 = vld [vmem:[%s9487 + $0x258] sm:$0xff]
                %9590 = vst [vmem:[%s9488 + $0x258] sm:$0xff] %v9589
                %v9591 = vld [vmem:[%s9487 + $0x264] sm:$0xff]
                %9592 = vst [vmem:[%s9488 + $0x264] sm:$0xff] %v9591
                %v9593 = vld [vmem:[%s9487 + $0x270] sm:$0xff]
                %9594 = vst [vmem:[%s9488 + $0x270] sm:$0xff] %v9593
                %v9595 = vld [vmem:[%s9487 + $0x27c] sm:$0xff]
                %9596 = vst [vmem:[%s9488 + $0x27c] sm:$0xff] %v9595
                %v9597 = vld [vmem:[%s9487 + $0x288] sm:$0xff]
                %9598 = vst [vmem:[%s9488 + $0x288] sm:$0xff] %v9597
                %v9599 = vld [vmem:[%s9487 + $0x294] sm:$0xff]
                %9600 = vst [vmem:[%s9488 + $0x294] sm:$0xff] %v9599
                %v9601 = vld [vmem:[%s9487 + $0x2a0] sm:$0xff]
                %9602 = vst [vmem:[%s9488 + $0x2a0] sm:$0xff] %v9601
                %v9603 = vld [vmem:[%s9487 + $0x2ac] sm:$0xff]
                %9604 = vst [vmem:[%s9488 + $0x2ac] sm:$0xff] %v9603
                %v9605 = vld [vmem:[%s9487 + $0x2b8] sm:$0xff]
                %9606 = vst [vmem:[%s9488 + $0x2b8] sm:$0xff] %v9605
                %v9607 = vld [vmem:[%s9487 + $0x2c4] sm:$0xff]
                %9608 = vst [vmem:[%s9488 + $0x2c4] sm:$0xff] %v9607
                %v9609 = vld [vmem:[%s9487 + $0x2d0] sm:$0xff]
                %9610 = vst [vmem:[%s9488 + $0x2d0] sm:$0xff] %v9609
                %v9611 = vld [vmem:[%s9487 + $0x2dc] sm:$0xff]
                %9612 = vst [vmem:[%s9488 + $0x2dc] sm:$0xff] %v9611
                %v9613 = vld [vmem:[%s9487 + $0x2e8] sm:$0xff]
                %9614 = vst [vmem:[%s9488 + $0x2e8] sm:$0xff] %v9613
                %v9615 = vld [vmem:[%s9487 + $0x2f4] sm:$0xff]
                %9616 = vst [vmem:[%s9488 + $0x2f4] sm:$0xff] %v9615
                %s9617 = sadd.s32 1, %s9486
                %p9618 = scmp.ge.s32.totalorder %s9617, %s9479
                %s9619 = scalar_select %p9618, 0, %s9617
                %s9620 = smul.u32 %s9619, 768
                %s9621 = smul.u32 %s9619, 768
                %s9622 = scalar_lea.vmem %s9453, %s9620 [#allocation2]
                %s9623 = scalar_lea.vmem %s9471, %s9621
              $region77: #{tpu_custom_call.1} parent=71 // loop_footer
                %s9483 = sadd.s32 %s9481, 1
              $region78: #{tpu_custom_call.1} parent=71 // loop_footer_branch
                %9480 = sbr.rel target = $region74
              $region79: #{tpu_custom_call.1} parent=71 // loop_exit
                _
              %s9624 = sshrl.u32 %s9465, 6
              %s9625 = sand.u32 %s9465, 63
              %s9626 = smul.u32 %s9624, 64
              %s9627 = smul.u32 12, %s9626
              %s9628 = scalar_lea.vmem %s9453, %s9627 [#allocation2]
              %s9629 = smul.u32 12, %s9626
              %s9630 = scalar_lea.vmem %s9471, %s9629
              // While loop
              $region80: #{tpu_custom_call.1} parent=71 // loop_pre_header
                _
              $region81: #{tpu_custom_call.1} parent=71 // loop_header
                %s9632 = sphi 0, %s9634
                %p9633 = scmp.ge.s32.totalorder %s9632, %s9625
                %s9637 = sphi 0, %s9644
                %s9638 = sphi %s9628, %s9647
                %s9639 = sphi %s9630, %s9648
              $region82: #{tpu_custom_call.1} parent=71 // loop_header_branch
                %9636 = sbr.rel (%p9633) target = $region86
              $region83: #{tpu_custom_call.1} parent=71 // loop_body
                %v9640 = vld [vmem:[%s9638] sm:$0xff]
                %9641 = vst [vmem:[%s9639] sm:$0xff] %v9640
                %s9642 = sadd.s32 1, %s9637
                %p9643 = scmp.ge.s32.totalorder %s9642, %s9625
                %s9644 = scalar_select %p9643, 0, %s9642
                %s9645 = smul.u32 %s9644, 12
                %s9646 = smul.u32 %s9644, 12
                %s9647 = scalar_lea.vmem %s9628, %s9645 [#allocation2]
                %s9648 = scalar_lea.vmem %s9630, %s9646
              $region84: #{tpu_custom_call.1} parent=71 // loop_footer
                %s9634 = sadd.s32 %s9632, 1
              $region85: #{tpu_custom_call.1} parent=71 // loop_footer_branch
                %9631 = sbr.rel target = $region81
              $region86: #{tpu_custom_call.1} parent=71 // loop_exit
                _
              %s9650 = sshrl.u32 %s9465, 6
              // While loop
              $region87: #{tpu_custom_call.1} parent=71 // loop_pre_header
                _
              $region88: #{tpu_custom_call.1} parent=71 // loop_header
                %s9652 = sphi 0, %s9654
                %p9653 = scmp.ge.s32.totalorder %s9652, %s9650
                %s9657 = sphi 0, %s9790
                %s9658 = sphi %s9477, %s9793
                %s9659 = sphi %s9478, %s9794
              $region89: #{tpu_custom_call.1} parent=71 // loop_header_branch
                %9656 = sbr.rel (%p9653) target = $region93
              $region90: #{tpu_custom_call.1} parent=71 // loop_body
                %v9660 = vld [vmem:[%s9658] sm:$0xf]
                %9661 = vst [vmem:[%s9659] sm:$0xf] %v9660
                %v9662 = vld [vmem:[%s9658 + $0xc] sm:$0xf]
                %9663 = vst [vmem:[%s9659 + $0xc] sm:$0xf] %v9662
                %v9664 = vld [vmem:[%s9658 + $0x18] sm:$0xf]
                %9665 = vst [vmem:[%s9659 + $0x18] sm:$0xf] %v9664
                %v9666 = vld [vmem:[%s9658 + $0x24] sm:$0xf]
                %9667 = vst [vmem:[%s9659 + $0x24] sm:$0xf] %v9666
                %v9668 = vld [vmem:[%s9658 + $0x30] sm:$0xf]
                %9669 = vst [vmem:[%s9659 + $0x30] sm:$0xf] %v9668
                %v9670 = vld [vmem:[%s9658 + $0x3c] sm:$0xf]
                %9671 = vst [vmem:[%s9659 + $0x3c] sm:$0xf] %v9670
                %v9672 = vld [vmem:[%s9658 + $0x48] sm:$0xf]
                %9673 = vst [vmem:[%s9659 + $0x48] sm:$0xf] %v9672
                %v9674 = vld [vmem:[%s9658 + $0x54] sm:$0xf]
                %9675 = vst [vmem:[%s9659 + $0x54] sm:$0xf] %v9674
                %v9676 = vld [vmem:[%s9658 + $0x60] sm:$0xf]
                %9677 = vst [vmem:[%s9659 + $0x60] sm:$0xf] %v9676
                %v9678 = vld [vmem:[%s9658 + $0x6c] sm:$0xf]
                %9679 = vst [vmem:[%s9659 + $0x6c] sm:$0xf] %v9678
                %v9680 = vld [vmem:[%s9658 + $0x78] sm:$0xf]
                %9681 = vst [vmem:[%s9659 + $0x78] sm:$0xf] %v9680
                %v9682 = vld [vmem:[%s9658 + $0x84] sm:$0xf]
                %9683 = vst [vmem:[%s9659 + $0x84] sm:$0xf] %v9682
                %v9684 = vld [vmem:[%s9658 + $0x90] sm:$0xf]
                %9685 = vst [vmem:[%s9659 + $0x90] sm:$0xf] %v9684
                %v9686 = vld [vmem:[%s9658 + $0x9c] sm:$0xf]
                %9687 = vst [vmem:[%s9659 + $0x9c] sm:$0xf] %v9686
                %v9688 = vld [vmem:[%s9658 + $0xa8] sm:$0xf]
                %9689 = vst [vmem:[%s9659 + $0xa8] sm:$0xf] %v9688
                %v9690 = vld [vmem:[%s9658 + $0xb4] sm:$0xf]
                %9691 = vst [vmem:[%s9659 + $0xb4] sm:$0xf] %v9690
                %v9692 = vld [vmem:[%s9658 + $0xc0] sm:$0xf]
                %9693 = vst [vmem:[%s9659 + $0xc0] sm:$0xf] %v9692
                %v9694 = vld [vmem:[%s9658 + $0xcc] sm:$0xf]
                %9695 = vst [vmem:[%s9659 + $0xcc] sm:$0xf] %v9694
                %v9696 = vld [vmem:[%s9658 + $0xd8] sm:$0xf]
                %9697 = vst [vmem:[%s9659 + $0xd8] sm:$0xf] %v9696
                %v9698 = vld [vmem:[%s9658 + $0xe4] sm:$0xf]
                %9699 = vst [vmem:[%s9659 + $0xe4] sm:$0xf] %v9698
                %v9700 = vld [vmem:[%s9658 + $0xf0] sm:$0xf]
                %9701 = vst [vmem:[%s9659 + $0xf0] sm:$0xf] %v9700
                %v9702 = vld [vmem:[%s9658 + $0xfc] sm:$0xf]
                %9703 = vst [vmem:[%s9659 + $0xfc] sm:$0xf] %v9702
                %v9704 = vld [vmem:[%s9658 + $0x108] sm:$0xf]
                %9705 = vst [vmem:[%s9659 + $0x108] sm:$0xf] %v9704
                %v9706 = vld [vmem:[%s9658 + $0x114] sm:$0xf]
                %9707 = vst [vmem:[%s9659 + $0x114] sm:$0xf] %v9706
                %v9708 = vld [vmem:[%s9658 + $0x120] sm:$0xf]
                %9709 = vst [vmem:[%s9659 + $0x120] sm:$0xf] %v9708
                %v9710 = vld [vmem:[%s9658 + $0x12c] sm:$0xf]
                %9711 = vst [vmem:[%s9659 + $0x12c] sm:$0xf] %v9710
                %v9712 = vld [vmem:[%s9658 + $0x138] sm:$0xf]
                %9713 = vst [vmem:[%s9659 + $0x138] sm:$0xf] %v9712
                %v9714 = vld [vmem:[%s9658 + $0x144] sm:$0xf]
                %9715 = vst [vmem:[%s9659 + $0x144] sm:$0xf] %v9714
                %v9716 = vld [vmem:[%s9658 + $0x150] sm:$0xf]
                %9717 = vst [vmem:[%s9659 + $0x150] sm:$0xf] %v9716
                %v9718 = vld [vmem:[%s9658 + $0x15c] sm:$0xf]
                %9719 = vst [vmem:[%s9659 + $0x15c] sm:$0xf] %v9718
                %v9720 = vld [vmem:[%s9658 + $0x168] sm:$0xf]
                %9721 = vst [vmem:[%s9659 + $0x168] sm:$0xf] %v9720
                %v9722 = vld [vmem:[%s9658 + $0x174] sm:$0xf]
                %9723 = vst [vmem:[%s9659 + $0x174] sm:$0xf] %v9722
                %v9724 = vld [vmem:[%s9658 + $0x180] sm:$0xf]
                %9725 = vst [vmem:[%s9659 + $0x180] sm:$0xf] %v9724
                %v9726 = vld [vmem:[%s9658 + $0x18c] sm:$0xf]
                %9727 = vst [vmem:[%s9659 + $0x18c] sm:$0xf] %v9726
                %v9728 = vld [vmem:[%s9658 + $0x198] sm:$0xf]
                %9729 = vst [vmem:[%s9659 + $0x198] sm:$0xf] %v9728
                %v9730 = vld [vmem:[%s9658 + $0x1a4] sm:$0xf]
                %9731 = vst [vmem:[%s9659 + $0x1a4] sm:$0xf] %v9730
                %v9732 = vld [vmem:[%s9658 + $0x1b0] sm:$0xf]
                %9733 = vst [vmem:[%s9659 + $0x1b0] sm:$0xf] %v9732
                %v9734 = vld [vmem:[%s9658 + $0x1bc] sm:$0xf]
                %9735 = vst [vmem:[%s9659 + $0x1bc] sm:$0xf] %v9734
                %v9736 = vld [vmem:[%s9658 + $0x1c8] sm:$0xf]
                %9737 = vst [vmem:[%s9659 + $0x1c8] sm:$0xf] %v9736
                %v9738 = vld [vmem:[%s9658 + $0x1d4] sm:$0xf]
                %9739 = vst [vmem:[%s9659 + $0x1d4] sm:$0xf] %v9738
                %v9740 = vld [vmem:[%s9658 + $0x1e0] sm:$0xf]
                %9741 = vst [vmem:[%s9659 + $0x1e0] sm:$0xf] %v9740
                %v9742 = vld [vmem:[%s9658 + $0x1ec] sm:$0xf]
                %9743 = vst [vmem:[%s9659 + $0x1ec] sm:$0xf] %v9742
                %v9744 = vld [vmem:[%s9658 + $0x1f8] sm:$0xf]
                %9745 = vst [vmem:[%s9659 + $0x1f8] sm:$0xf] %v9744
                %v9746 = vld [vmem:[%s9658 + $0x204] sm:$0xf]
                %9747 = vst [vmem:[%s9659 + $0x204] sm:$0xf] %v9746
                %v9748 = vld [vmem:[%s9658 + $0x210] sm:$0xf]
                %9749 = vst [vmem:[%s9659 + $0x210] sm:$0xf] %v9748
                %v9750 = vld [vmem:[%s9658 + $0x21c] sm:$0xf]
                %9751 = vst [vmem:[%s9659 + $0x21c] sm:$0xf] %v9750
                %v9752 = vld [vmem:[%s9658 + $0x228] sm:$0xf]
                %9753 = vst [vmem:[%s9659 + $0x228] sm:$0xf] %v9752
                %v9754 = vld [vmem:[%s9658 + $0x234] sm:$0xf]
                %9755 = vst [vmem:[%s9659 + $0x234] sm:$0xf] %v9754
                %v9756 = vld [vmem:[%s9658 + $0x240] sm:$0xf]
                %9757 = vst [vmem:[%s9659 + $0x240] sm:$0xf] %v9756
                %v9758 = vld [vmem:[%s9658 + $0x24c] sm:$0xf]
                %9759 = vst [vmem:[%s9659 + $0x24c] sm:$0xf] %v9758
                %v9760 = vld [vmem:[%s9658 + $0x258] sm:$0xf]
                %9761 = vst [vmem:[%s9659 + $0x258] sm:$0xf] %v9760
                %v9762 = vld [vmem:[%s9658 + $0x264] sm:$0xf]
                %9763 = vst [vmem:[%s9659 + $0x264] sm:$0xf] %v9762
                %v9764 = vld [vmem:[%s9658 + $0x270] sm:$0xf]
                %9765 = vst [vmem:[%s9659 + $0x270] sm:$0xf] %v9764
                %v9766 = vld [vmem:[%s9658 + $0x27c] sm:$0xf]
                %9767 = vst [vmem:[%s9659 + $0x27c] sm:$0xf] %v9766
                %v9768 = vld [vmem:[%s9658 + $0x288] sm:$0xf]
                %9769 = vst [vmem:[%s9659 + $0x288] sm:$0xf] %v9768
                %v9770 = vld [vmem:[%s9658 + $0x294] sm:$0xf]
                %9771 = vst [vmem:[%s9659 + $0x294] sm:$0xf] %v9770
                %v9772 = vld [vmem:[%s9658 + $0x2a0] sm:$0xf]
                %9773 = vst [vmem:[%s9659 + $0x2a0] sm:$0xf] %v9772
                %v9774 = vld [vmem:[%s9658 + $0x2ac] sm:$0xf]
                %9775 = vst [vmem:[%s9659 + $0x2ac] sm:$0xf] %v9774
                %v9776 = vld [vmem:[%s9658 + $0x2b8] sm:$0xf]
                %9777 = vst [vmem:[%s9659 + $0x2b8] sm:$0xf] %v9776
                %v9778 = vld [vmem:[%s9658 + $0x2c4] sm:$0xf]
                %9779 = vst [vmem:[%s9659 + $0x2c4] sm:$0xf] %v9778
                %v9780 = vld [vmem:[%s9658 + $0x2d0] sm:$0xf]
                %9781 = vst [vmem:[%s9659 + $0x2d0] sm:$0xf] %v9780
                %v9782 = vld [vmem:[%s9658 + $0x2dc] sm:$0xf]
                %9783 = vst [vmem:[%s9659 + $0x2dc] sm:$0xf] %v9782
                %v9784 = vld [vmem:[%s9658 + $0x2e8] sm:$0xf]
                %9785 = vst [vmem:[%s9659 + $0x2e8] sm:$0xf] %v9784
                %v9786 = vld [vmem:[%s9658 + $0x2f4] sm:$0xf]
                %9787 = vst [vmem:[%s9659 + $0x2f4] sm:$0xf] %v9786
                %s9788 = sadd.s32 1, %s9657
                %p9789 = scmp.ge.s32.totalorder %s9788, %s9650
                %s9790 = scalar_select %p9789, 0, %s9788
                %s9791 = smul.u32 %s9790, 768
                %s9792 = smul.u32 %s9790, 768
                %s9793 = scalar_lea.vmem %s9477, %s9791 [#allocation2]
                %s9794 = scalar_lea.vmem %s9478, %s9792
              $region91: #{tpu_custom_call.1} parent=71 // loop_footer
                %s9654 = sadd.s32 %s9652, 1
              $region92: #{tpu_custom_call.1} parent=71 // loop_footer_branch
                %9651 = sbr.rel target = $region88
              $region93: #{tpu_custom_call.1} parent=71 // loop_exit
                _
              %s9795 = sshrl.u32 %s9465, 6
              %s9796 = sand.u32 %s9465, 63
              %s9797 = smul.u32 %s9795, 64
              %s9798 = smul.u32 12, %s9797
              %s9799 = scalar_lea.vmem %s9477, %s9798 [#allocation2]
              %s9800 = smul.u32 12, %s9797
              %s9801 = scalar_lea.vmem %s9478, %s9800
              // While loop
              $region94: #{tpu_custom_call.1} parent=71 // loop_pre_header
                _
              $region95: #{tpu_custom_call.1} parent=71 // loop_header
                %s9803 = sphi 0, %s9805
                %p9804 = scmp.ge.s32.totalorder %s9803, %s9796
                %s9808 = sphi 0, %s9815
                %s9809 = sphi %s9799, %s9818
                %s9810 = sphi %s9801, %s9819
              $region96: #{tpu_custom_call.1} parent=71 // loop_header_branch
                %9807 = sbr.rel (%p9804) target = $region100
              $region97: #{tpu_custom_call.1} parent=71 // loop_body
                %v9811 = vld [vmem:[%s9809] sm:$0xf]
                %9812 = vst [vmem:[%s9810] sm:$0xf] %v9811
                %s9813 = sadd.s32 1, %s9808
                %p9814 = scmp.ge.s32.totalorder %s9813, %s9796
                %s9815 = scalar_select %p9814, 0, %s9813
                %s9816 = smul.u32 %s9815, 12
                %s9817 = smul.u32 %s9815, 12
                %s9818 = scalar_lea.vmem %s9799, %s9816 [#allocation2]
                %s9819 = scalar_lea.vmem %s9801, %s9817
              $region98: #{tpu_custom_call.1} parent=71 // loop_footer
                %s9805 = sadd.s32 %s9803, 1
              $region99: #{tpu_custom_call.1} parent=71 // loop_footer_branch
                %9802 = sbr.rel target = $region95
              $region100: #{tpu_custom_call.1} parent=71 // loop_exit
                _
            $region72: #{tpu_custom_call.1} parent=67 // pred_fallthru
              _
          $region68: #{tpu_custom_call.1} parent=63 // pred_fallthru
            _
          %9820 = vnop
        $region64: #{tpu_custom_call.1} parent=59 // pred_fallthru
          _
        // Predicated region
        $region101: #{tpu_custom_call.1} parent=59 // pred_check
          %p9821 = pneg %p290
        $region102: #{tpu_custom_call.1} parent=59 // pred_check_branch
          %9823 = sbr.rel (%p9821) target = $region104
        $region103: #{tpu_custom_call.1} parent=59 // pred_region
          %s9824 = smul.u32 128, %s26
          %s9825 = ssub.s32 280, %s9824
          %p9826 = scmp.lt.s32.totalorder %s9825, 128
          %s9827 = scalar_select %p9826, %s9825, 128
          %s9828 = smul.u32 128, %s9827
          %s9830 = ssub.s32 16384, %s9828
          %9831 = vsyncadd %s9455, %s9830
          %p9832 = scmp.ne.s32.totalorder 0, %s9828
          %s9833 = smul.addr %s9824, 128
          %s9834 = scalar_lea.hbm %s11, %s9833
          %s9835 = smul.u32 8, %s9827
          %s9836 = sshll.u32 %s9458, 4
          %s9837 = int_to_ptr.vmem [resolvable:$true] %s9836
          %s9838 = sshll.u32 %s9835, 4
          %9842 = dma.vmem_to_hbm [thread:$0]  (%p9832), %s9837, %s9838, %s9834, %s9455, 128, 128, 8
        $region104: #{tpu_custom_call.1} parent=59 // pred_fallthru
          _
      $region60: #{tpu_custom_call.1} parent=5 // pred_fallthru
        _
      %p9843 = scmp.le.s32.totalorder 2, %s21
      // Predicated region
      $region105: #{tpu_custom_call.1} parent=5 // pred_check
        %p9844 = pneg %p9843
      $region106: #{tpu_custom_call.1} parent=5 // pred_check_branch
        %9846 = sbr.rel (%p9844) target = $region108
      $region107: #{tpu_custom_call.1} parent=5 // pred_region
        %s9847 = ssub.s32 %s21, 2
        // Predicated region
        $region109: #{tpu_custom_call.1} parent=107 // pred_check
          %p9848 = pneg %p270
        $region110: #{tpu_custom_call.1} parent=107 // pred_check_branch
          %9850 = sbr.rel (%p9848) target = $region112
        $region111: #{tpu_custom_call.1} parent=107 // pred_region
          %s9851 = sand.u32 %s255, 1
          %s9852 = sand.u32 %s255, 1
          %s9853 = smul.addr %s9852, 1536
          %s9854 = scalar_lea.vmem [#allocation2], %s9853
        $region112: #{tpu_custom_call.1} parent=107 // pred_fallthru
          _
        // Predicated region
        $region113: #{tpu_custom_call.1} parent=107 // pred_check
          %p9855 = pneg %p296
        $region114: #{tpu_custom_call.1} parent=107 // pred_check_branch
          %9857 = sbr.rel (%p9855) target = $region116
        $region115: #{tpu_custom_call.1} parent=107 // pred_region
          %s9858 = sand.u32 %s281, 1
          %s9859 = scalar_lea.sflag [#allocation4], %s9858
          %s9860 = sand.u32 %s281, 1
          %s9861 = smul.addr %s9860, 1024
          %s9862 = scalar_lea.vmem [#allocation3], %s9861
          %9863 = dma.done %s9859, 16384
        $region116: #{tpu_custom_call.1} parent=107 // pred_fallthru
          _
      $region108: #{tpu_custom_call.1} parent=5 // pred_fallthru
        _
    $region6: #{tpu_custom_call.1} parent=1 // loop_footer
      %s25 = sadd.s32 1, %s21
    $region7: #{tpu_custom_call.1} parent=1 // loop_footer_branch
      %20 = sbr.rel target = $region3
    $region8: #{tpu_custom_call.1} parent=1 // loop_exit
      _
    %9864 = vsyncpa [#allocation4], 1
    %s9865 = scalar_lea.sflag [#allocation4], 1
    %9866 = vsyncpa %s9865, 1

</llo_original>
